<compile_context>
chip_gen: v5e
topology: v5e:2x2
jax: 0.10.0
libtpu: 0.0.40
codegen_flags: <defaults>
</compile_context>

<pallas_src>
import numpy as np
import jax
import jax.numpy as jnp
from jax import lax
from jax.experimental import pallas as pl
from jax.experimental.pallas import tpu as pltpu

SUBLANE_BF16 = 16  # bf16 sublane tile -> aligned interior-store offset


def _vmem_cap_bytes():
    try:
        return int(pltpu.get_tpu_info().vmem_capacity_bytes)
    except Exception:
        return 64 << 20  # conservative fallback (v7x per-core VMEM)


# ----------------------------------------------------------------------------
# Fused Pallas kernel: (3x3 conv + folded BN + ReLU) x 2, one batch element per
# grid step.  Input is unpadded; halos live in VMEM scratches.
# ----------------------------------------------------------------------------
def double_conv_bn_relu(x, w1, s1, b1, w2, s2, b2):
    """x: (N,H,W,Cin) float NHWC (unpadded); w1:(3,3,Cin,Cmid) HWIO;
    w2:(3,3,Cmid,Cmid); s*/b*: (Cmid,) folded BN scale/bias.
    Returns (N,H,W,Cmid) bfloat16."""
    N, H, W, Cin = x.shape
    Cmid = w1.shape[-1]
    LP = SUBLANE_BF16              # aligned left halo (columns [0,LP-1) unused)
    WP = LP + W + 1                # scratch width: LP-1 / LP+W are the real halo
    RB = max(1, min(H, max(1, 128 // W)))   # rows per chunk -> acc stays small

    xb = x.astype(jnp.bfloat16)
    w1b = w1.astype(jnp.bfloat16)
    w2b = w2.astype(jnp.bfloat16)
    s1f = s1.astype(jnp.float32).reshape(1, Cmid)
    b1f = b1.astype(jnp.float32).reshape(1, Cmid)
    s2f = s2.astype(jnp.float32).reshape(1, Cmid)
    b2f = b2.astype(jnp.float32).reshape(1, Cmid)

    def kernel(x_ref, w1_ref, s1_ref, b1_ref, w2_ref, s2_ref, b2_ref,
               o_ref, xpad_ref, hpad_ref):
        # x_ref:   (1, H, W, Cin)   bf16  unpadded input tile
        # w*_ref:  (3, 3, K, Cmid)  bf16  HWIO weights
        # s*/b*:   (1, Cmid)        f32   folded BN scale / bias
        # o_ref:   (1, H, W, Cmid)  bf16
        # xpad_ref:(H+2, WP, Cin)   bf16  scratch: input + zero halo
        # hpad_ref:(H+2, WP, Cmid)  bf16  scratch: conv1 activation + zero halo
        cin = x_ref.shape[-1]
        cmid = o_ref.shape[-1]

        # --- zero only the halo ring (every step: megacore-safe; interior is
        #     fully overwritten each iteration) -------------------------------
        def zero_halo(ref, c):
            zc = jnp.zeros((H + 2, 1, c), ref.dtype)
            ref[:, LP - 1:LP, :] = zc
            ref[:, LP + W:LP + W + 1, :] = zc
            zr = jnp.zeros((1, W + 2, c), ref.dtype)
            ref[0:1, LP - 1:LP + W + 1, :] = zr
            ref[H + 1:H + 2, LP - 1:LP + W + 1, :] = zr

        zero_halo(xpad_ref, cin)
        zero_halo(hpad_ref, cmid)

        # stage the input interior (sublane-aligned store at column LP)
        xpad_ref[1:H + 1, LP:LP + W, :] = x_ref[0]

        def conv3x3(src_ref, w_ref, s_ref, b_ref, r0, rb, kdim):
            acc = jnp.zeros((rb * W, cmid), jnp.float32)
            for ky in range(3):                 # 9 MXU matmuls, K = real channels
                for kx in range(3):
                    patch = src_ref[r0 + ky:r0 + ky + rb,
                                    LP - 1 + kx:LP - 1 + kx + W, :]
                    acc = acc + jnp.dot(patch.reshape(rb * W, kdim),
                                        w_ref[ky, kx, :, :],
                                        preferred_element_type=jnp.float32)
            return jnp.maximum(acc * s_ref[...] + b_ref[...], 0.0)

        # ---- conv1 + BN + ReLU (row-chunked); activation staged in VMEM -----
        for r0 in range(0, H, RB):
            rb = min(RB, H - r0)
            h = conv3x3(xpad_ref, w1_ref, s1_ref, b1_ref, r0, rb, cin)
            hpad_ref[1 + r0:1 + r0 + rb, LP:LP + W, :] = (
                h.reshape(rb, W, cmid).astype(hpad_ref.dtype))

        # ---- conv2 + BN + ReLU (row-chunked); bf16 straight to HBM ----------
        for r0 in range(0, H, RB):
            rb = min(RB, H - r0)
            y = conv3x3(hpad_ref, w2_ref, s2_ref, b2_ref, r0, rb, cmid)
            o_ref[:, r0:r0 + rb, :, :] = (
                y.reshape(1, rb, W, cmid).astype(o_ref.dtype))

    # --- VMEM budget (lane-padded estimate), capped at 75% of physical VMEM --
    cin_p = (Cin + 127) // 128 * 128
    cmid_p = (Cmid + 127) // 128 * 128
    blk_bytes = (H * W * cin_p * 2 + H * W * cmid_p * 2
                 + 9 * 16 * cmid_p * 2 * 2 + 8 * cmid_p * 4)
    scratch_bytes = (H + 2) * WP * (cin_p + cmid_p) * 2
    vmem_limit = int(min(0.75 * _vmem_cap_bytes(),
                         max(4 * blk_bytes + scratch_bytes + (4 << 20),
                             16 << 20)))

    return pl.pallas_call(
        kernel,
        out_shape=jax.ShapeDtypeStruct((N, H, W, Cmid), jnp.bfloat16),
        grid_spec=pltpu.PrefetchScalarGridSpec(
            num_scalar_prefetch=0,
            grid=(N,),
            in_specs=[
                pl.BlockSpec((1, H, W, Cin), lambda n: (n, 0, 0, 0)),
                pl.BlockSpec((3, 3, Cin, Cmid), lambda n: (0, 0, 0, 0)),
                pl.BlockSpec((1, Cmid), lambda n: (0, 0)),
                pl.BlockSpec((1, Cmid), lambda n: (0, 0)),
                pl.BlockSpec((3, 3, Cmid, Cmid), lambda n: (0, 0, 0, 0)),
                pl.BlockSpec((1, Cmid), lambda n: (0, 0)),
                pl.BlockSpec((1, Cmid), lambda n: (0, 0)),
            ],
            out_specs=pl.BlockSpec((1, H, W, Cmid), lambda n: (n, 0, 0, 0)),
            scratch_shapes=[
                pltpu.VMEM((H + 2, WP, Cin), jnp.bfloat16),
                pltpu.VMEM((H + 2, WP, Cmid), jnp.bfloat16),
            ],
        ),
        compiler_params=pltpu.CompilerParams(
            dimension_semantics=("parallel",),
            vmem_limit_bytes=vmem_limit,
        ),
    )(xb, w1b, s1f, b1f, w2b, s2f, b2f)


# ----------------------------------------------------------------------------
# Glue (plain JAX): matrix-based bilinear x2 upsample (align_corners=True),
# module-exact padding, concat, layout transposes.
# ----------------------------------------------------------------------------
def _interp_matrix(n_in, n_out):
    if n_in == 1:
        return jnp.ones((n_out, 1), jnp.float32)
    pos = np.arange(n_out, dtype=np.float64) * (n_in - 1) / (n_out - 1)
    lo = np.minimum(np.floor(pos).astype(np.int64), n_in - 2)
    frac = (pos - lo).astype(np.float32)
    m = np.zeros((n_out, n_in), np.float32)
    m[np.arange(n_out), lo] = 1.0 - frac
    m[np.arange(n_out), lo + 1] = frac
    return jnp.asarray(m)


def upsample_bilinear_x2_align_corners(x):
    """x: (N,H,W,C) -> (N,2H,2W,C); matches nn.UpsamplingBilinear2d(2)."""
    _, H, W, _ = x.shape
    ah = _interp_matrix(H, 2 * H)
    aw = _interp_matrix(W, 2 * W)
    y = jnp.einsum('oh,nhwc->nowc', ah, x)   # default precision is plenty here
    y = jnp.einsum('pw,nowc->nopc', aw, y)
    return y


def _build_cat_input(x1_nchw, x2_nchw):
    """upsample(x1), pad(x2) exactly like the module, concat -> NHWC f32."""
    x1 = jnp.transpose(x1_nchw, (0, 2, 3, 1)).astype(jnp.float32)
    x2 = jnp.transpose(x2_nchw, (0, 2, 3, 1)).astype(jnp.float32)
    x1 = upsample_bilinear_x2_align_corners(x1)
    # Replicate the module's (X/Y-swapped) pad arithmetic (assumes diffs >= 0):
    #   diffX = x1.size(2) - x2.size(2)  (height diff) -> pads W
    #   diffY = x1.size(3) - x2.size(3)  (width diff)  -> pads H
    diffX = x1.shape[1] - x2.shape[1]
    diffY = x1.shape[2] - x2.shape[2]
    x2 = jnp.pad(x2, ((0, 0),
                      (diffY // 2, int(diffY / 2)),
                      (diffX // 2, int(diffX / 2)),
                      (0, 0)))
    return jnp.concatenate([x2, x1], axis=-1)   # torch.cat([x2, x1], dim=1)


def up_forward(x1_nchw, x2_nchw, params):
    """Semantics of up.forward(x1, x2); inputs/outputs NCHW like PyTorch."""
    x = _build_cat_input(x1_nchw, x2_nchw)
    h = double_conv_bn_relu(x, params["w1"], params["s1"], params["b1"],
                            params["w2"], params["s2"], params["b2"])
    return jnp.transpose(h, (0, 3, 1, 2)).astype(jnp.float32)


# ----------------------------------------------------------------------------
# Deterministic parameter construction (BatchNorm in eval mode, folded).
# ----------------------------------------------------------------------------
def make_params(key, in_ch, out_ch, eps=1e-5):
    def conv_bn(key, cin, cout):
        kw, kb, kg, kbe, km, kv = jax.random.split(key, 6)
        w = jax.random.normal(kw, (3, 3, cin, cout), jnp.float32) * 0.1  # HWIO
        conv_b = jax.random.normal(kb, (cout,), jnp.float32) * 0.1
        gamma = 1.0 + 0.1 * jax.random.normal(kg, (cout,), jnp.float32)
        beta = 0.1 * jax.random.normal(kbe, (cout,), jnp.float32)
        r_mean = 0.1 * jax.random.normal(km, (cout,), jnp.float32)
        r_var = 1.0 + 0.1 * jax.random.uniform(kv, (cout,), jnp.float32)
        scale = gamma / jnp.sqrt(r_var + eps)
        bias = beta + scale * (conv_b - r_mean)
        return w, scale, bias

    k1, k2 = jax.random.split(key)
    w1, s1, b1 = conv_bn(k1, in_ch, out_ch)
    w2, s2, b2 = conv_bn(k2, out_ch, out_ch)
    return {"w1": w1, "s1": s1, "b1": b1, "w2": w2, "s2": s2, "b2": b2}


# ----------------------------------------------------------------------------
# Reference with the SAME precision choices as the kernel: bf16 operands,
# f32 accumulation, f32 affine+ReLU, bf16 stage outputs.
# ----------------------------------------------------------------------------
def _ref_conv3x3_bn_relu(x, w, scale, bias):
    y = lax.conv_general_dilated(
        x.astype(jnp.bfloat16), w.astype(jnp.bfloat16),
        window_strides=(1, 1), padding="SAME",
        dimension_numbers=("NHWC", "HWIO", "NHWC"),
        preferred_element_type=jnp.float32)
    y = jnp.maximum(y * scale[None, None, None, :] + bias[None, None, None, :],
                    0.0)
    return y.astype(jnp.bfloat16)


if __name__ == "__main__":
    in_ch, out_ch = 8, 4          # double_conv(in_ch=8, out_ch=4)
    N, H1, W1 = 2, 8, 8           # x1: decoder feature (in_ch//2 channels)
    H2, W2 = 16, 16               # x2: skip connection (in_ch//2 channels)

    key = jax.random.PRNGKey(0)
    kx1, kx2, kp = jax.random.split(key, 3)
    x1 = jax.random.normal(kx1, (N, in_ch // 2, H1, W1), jnp.float32)   # NCHW
    x2 = jax.random.normal(kx2, (N, in_ch // 2, H2, W2), jnp.float32)   # NCHW
    params = make_params(kp, in_ch, out_ch)

    up_fn = jax.jit(up_forward)
    out = jax.block_until_ready(up_fn(x1, x2, params))
    assert out.shape == (N, out_ch, H2, W2), out.shape

    # Tight check: fused Pallas double-conv vs XLA convs on identical inputs.
    x_cat = _build_cat_input(x1, x2)
    got = double_conv_bn_relu(x_cat, params["w1"], params["s1"], params["b1"],
                              params["w2"], params["s2"], params["b2"])
    ref = _ref_conv3x3_bn_relu(x_cat, params["w1"], params["s1"], params["b1"])
    ref = _ref_conv3x3_bn_relu(ref, params["w2"], params["s2"], params["b2"])
    np.testing.assert_allclose(np.asarray(got.astype(jnp.float32)),
                               np.asarray(ref.astype(jnp.float32)),
                               rtol=2e-2, atol=2e-2)

    # End-to-end (through jit + glue) against the same reference, NCHW.
    ref_nchw = np.asarray(jnp.transpose(ref, (0, 3, 1, 2)).astype(jnp.float32))
    np.testing.assert_allclose(np.asarray(out), ref_nchw, rtol=2e-2, atol=2e-2)

    print("KERNEL_OK")
</pallas_src>

<mosaic_0001>
module attributes {stable_mosaic.version = 11 : i64} {
  func.func @kernel(%arg0: i32, %arg1: memref<1x16x16x8xbf16, #tpu.memory_space<vmem>>, %arg2: memref<3x3x8x4xbf16, #tpu.memory_space<vmem>>, %arg3: memref<1x4xf32, #tpu.memory_space<vmem>>, %arg4: memref<1x4xf32, #tpu.memory_space<vmem>>, %arg5: memref<3x3x4x4xbf16, #tpu.memory_space<vmem>>, %arg6: memref<1x4xf32, #tpu.memory_space<vmem>>, %arg7: memref<1x4xf32, #tpu.memory_space<vmem>>, %arg8: memref<1x16x16x4xbf16, #tpu.memory_space<vmem>>, %arg9: memref<18x33x8xbf16, #tpu.memory_space<vmem>>, %arg10: memref<18x33x4xbf16, #tpu.memory_space<vmem>>) attributes {dimension_semantics = [#tpu.dimension_semantics<parallel>], iteration_bounds = array<i64: 2>, scalar_prefetch = 0 : i64, scratch_operands = 2 : i64, tpu.core_type = #tpu.core_type<tc>, window_params = [{transform_indices = @transform_0, window_bounds = array<i64: 1, 16, 16, 8>}, {pipeline_mode = #tpu.pipeline_mode<synchronous>, transform_indices = @transform_1, window_bounds = array<i64: 3, 3, 8, 4>}, {pipeline_mode = #tpu.pipeline_mode<synchronous>, transform_indices = @transform_2, window_bounds = array<i64: 1, 4>}, {pipeline_mode = #tpu.pipeline_mode<synchronous>, transform_indices = @transform_3, window_bounds = array<i64: 1, 4>}, {pipeline_mode = #tpu.pipeline_mode<synchronous>, transform_indices = @transform_4, window_bounds = array<i64: 3, 3, 4, 4>}, {pipeline_mode = #tpu.pipeline_mode<synchronous>, transform_indices = @transform_5, window_bounds = array<i64: 1, 4>}, {pipeline_mode = #tpu.pipeline_mode<synchronous>, transform_indices = @transform_6, window_bounds = array<i64: 1, 4>}, {transform_indices = @transform_7, window_bounds = array<i64: 1, 16, 16, 4>}]} {
    %cst = arith.constant 0.000000e+00 : bf16
    %0 = vector.broadcast %cst : bf16 to vector<18x1x8xbf16>
    %c0 = arith.constant 0 : index
    %c15 = arith.constant 15 : index
    %c0_0 = arith.constant 0 : index
    %1 = vector.load %arg9[%c0, %c15, %c0_0] : memref<18x33x8xbf16, #tpu.memory_space<vmem>>, vector<18x1x8xbf16>
    tpu.vector_store %arg9[%c0, %c15, %c0_0], %0 {strides = array<i32>} : memref<18x33x8xbf16, #tpu.memory_space<vmem>>, vector<18x1x8xbf16>,
    %c0_1 = arith.constant 0 : index
    %c32 = arith.constant 32 : index
    %c0_2 = arith.constant 0 : index
    %2 = vector.load %arg9[%c0_1, %c32, %c0_2] : memref<18x33x8xbf16, #tpu.memory_space<vmem>>, vector<18x1x8xbf16>
    tpu.vector_store %arg9[%c0_1, %c32, %c0_2], %0 {strides = array<i32>} : memref<18x33x8xbf16, #tpu.memory_space<vmem>>, vector<18x1x8xbf16>,
    %cst_3 = arith.constant 0.000000e+00 : bf16
    %3 = vector.broadcast %cst_3 : bf16 to vector<1x18x8xbf16>
    %c0_4 = arith.constant 0 : index
    %c15_5 = arith.constant 15 : index
    %c0_6 = arith.constant 0 : index
    %4 = vector.load %arg9[%c0_4, %c15_5, %c0_6] : memref<18x33x8xbf16, #tpu.memory_space<vmem>>, vector<1x18x8xbf16>
    tpu.vector_store %arg9[%c0_4, %c15_5, %c0_6], %3 {strides = array<i32>} : memref<18x33x8xbf16, #tpu.memory_space<vmem>>, vector<1x18x8xbf16>,
    %c17 = arith.constant 17 : index
    %c15_7 = arith.constant 15 : index
    %c0_8 = arith.constant 0 : index
    %5 = vector.load %arg9[%c17, %c15_7, %c0_8] : memref<18x33x8xbf16, #tpu.memory_space<vmem>>, vector<1x18x8xbf16>
    tpu.vector_store %arg9[%c17, %c15_7, %c0_8], %3 {strides = array<i32>} : memref<18x33x8xbf16, #tpu.memory_space<vmem>>, vector<1x18x8xbf16>,
    %cst_9 = arith.constant 0.000000e+00 : bf16
    %6 = vector.broadcast %cst_9 : bf16 to vector<18x1x4xbf16>
    %c0_10 = arith.constant 0 : index
    %c15_11 = arith.constant 15 : index
    %c0_12 = arith.constant 0 : index
    %7 = vector.load %arg10[%c0_10, %c15_11, %c0_12] : memref<18x33x4xbf16, #tpu.memory_space<vmem>>, vector<18x1x4xbf16>
    tpu.vector_store %arg10[%c0_10, %c15_11, %c0_12], %6 {strides = array<i32>} : memref<18x33x4xbf16, #tpu.memory_space<vmem>>, vector<18x1x4xbf16>,
    %c0_13 = arith.constant 0 : index
    %c32_14 = arith.constant 32 : index
    %c0_15 = arith.constant 0 : index
    %8 = vector.load %arg10[%c0_13, %c32_14, %c0_15] : memref<18x33x4xbf16, #tpu.memory_space<vmem>>, vector<18x1x4xbf16>
    tpu.vector_store %arg10[%c0_13, %c32_14, %c0_15], %6 {strides = array<i32>} : memref<18x33x4xbf16, #tpu.memory_space<vmem>>, vector<18x1x4xbf16>,
    %cst_16 = arith.constant 0.000000e+00 : bf16
    %9 = vector.broadcast %cst_16 : bf16 to vector<1x18x4xbf16>
    %c0_17 = arith.constant 0 : index
    %c15_18 = arith.constant 15 : index
    %c0_19 = arith.constant 0 : index
    %10 = vector.load %arg10[%c0_17, %c15_18, %c0_19] : memref<18x33x4xbf16, #tpu.memory_space<vmem>>, vector<1x18x4xbf16>
    tpu.vector_store %arg10[%c0_17, %c15_18, %c0_19], %9 {strides = array<i32>} : memref<18x33x4xbf16, #tpu.memory_space<vmem>>, vector<1x18x4xbf16>,
    %c17_20 = arith.constant 17 : index
    %c15_21 = arith.constant 15 : index
    %c0_22 = arith.constant 0 : index
    %11 = vector.load %arg10[%c17_20, %c15_21, %c0_22] : memref<18x33x4xbf16, #tpu.memory_space<vmem>>, vector<1x18x4xbf16>
    tpu.vector_store %arg10[%c17_20, %c15_21, %c0_22], %9 {strides = array<i32>} : memref<18x33x4xbf16, #tpu.memory_space<vmem>>, vector<1x18x4xbf16>,
    %c0_23 = arith.constant 0 : index
    %c0_24 = arith.constant 0 : index
    %c0_25 = arith.constant 0 : index
    %c0_26 = arith.constant 0 : index
    %12 = vector.load %arg1[%c0_23, %c0_24, %c0_25, %c0_26] : memref<1x16x16x8xbf16, #tpu.memory_space<vmem>>, vector<1x16x16x8xbf16>
    %13 = vector.shape_cast %12 : vector<1x16x16x8xbf16> to vector<16x16x8xbf16>
    %c1 = arith.constant 1 : index
    %c16 = arith.constant 16 : index
    %c0_27 = arith.constant 0 : index
    %14 = vector.load %arg9[%c1, %c16, %c0_27] : memref<18x33x8xbf16, #tpu.memory_space<vmem>>, vector<16x16x8xbf16>
    tpu.vector_store %arg9[%c1, %c16, %c0_27], %13 {strides = array<i32>} : memref<18x33x8xbf16, #tpu.memory_space<vmem>>, vector<16x16x8xbf16>,
    %cst_28 = arith.constant 0.000000e+00 : f32
    %15 = vector.broadcast %cst_28 : f32 to vector<128x4xf32>
    %c0_29 = arith.constant 0 : index
    %c15_30 = arith.constant 15 : index
    %c0_31 = arith.constant 0 : index
    %16 = vector.load %arg9[%c0_29, %c15_30, %c0_31] : memref<18x33x8xbf16, #tpu.memory_space<vmem>>, vector<8x16x8xbf16>
    %17 = vector.shape_cast %16 : vector<8x16x8xbf16> to vector<128x8xbf16>
    %c0_32 = arith.constant 0 : index
    %c0_33 = arith.constant 0 : index
    %c0_34 = arith.constant 0 : index
    %c0_35 = arith.constant 0 : index
    %18 = vector.load %arg2[%c0_32, %c0_33, %c0_34, %c0_35] : memref<3x3x8x4xbf16, #tpu.memory_space<vmem>>, vector<1x1x8x4xbf16>
    %19 = vector.shape_cast %18 : vector<1x1x8x4xbf16> to vector<8x4xbf16>
    %cst_36 = arith.constant dense<0.000000e+00> : vector<128x4xf32>
    %20 = tpu.matmul %17, %19, %cst_36 {dimension_numbers = #tpu.dot_dimension_numbers<[1], [0], [0], [1], [0, 0, 1, 1], [], []>} : vector<128x8xbf16>, vector<8x4xbf16>, vector<128x4xf32> -> vector<128x4xf32>
    %21 = arith.addf %15, %20 : vector<128x4xf32>
    %c0_37 = arith.constant 0 : index
    %c16_38 = arith.constant 16 : index
    %c0_39 = arith.constant 0 : index
    %22 = vector.load %arg9[%c0_37, %c16_38, %c0_39] : memref<18x33x8xbf16, #tpu.memory_space<vmem>>, vector<8x16x8xbf16>
    %23 = vector.shape_cast %22 : vector<8x16x8xbf16> to vector<128x8xbf16>
    %c0_40 = arith.constant 0 : index
    %c1_41 = arith.constant 1 : index
    %c0_42 = arith.constant 0 : index
    %c0_43 = arith.constant 0 : index
    %24 = vector.load %arg2[%c0_40, %c1_41, %c0_42, %c0_43] : memref<3x3x8x4xbf16, #tpu.memory_space<vmem>>, vector<1x1x8x4xbf16>
    %25 = vector.shape_cast %24 : vector<1x1x8x4xbf16> to vector<8x4xbf16>
    %cst_44 = arith.constant dense<0.000000e+00> : vector<128x4xf32>
    %26 = tpu.matmul %23, %25, %cst_44 {dimension_numbers = #tpu.dot_dimension_numbers<[1], [0], [0], [1], [0, 0, 1, 1], [], []>} : vector<128x8xbf16>, vector<8x4xbf16>, vector<128x4xf32> -> vector<128x4xf32>
    %27 = arith.addf %21, %26 : vector<128x4xf32>
    %c0_45 = arith.constant 0 : index
    %c17_46 = arith.constant 17 : index
    %c0_47 = arith.constant 0 : index
    %28 = vector.load %arg9[%c0_45, %c17_46, %c0_47] : memref<18x33x8xbf16, #tpu.memory_space<vmem>>, vector<8x16x8xbf16>
    %29 = vector.shape_cast %28 : vector<8x16x8xbf16> to vector<128x8xbf16>
    %c0_48 = arith.constant 0 : index
    %c2 = arith.constant 2 : index
    %c0_49 = arith.constant 0 : index
    %c0_50 = arith.constant 0 : index
    %30 = vector.load %arg2[%c0_48, %c2, %c0_49, %c0_50] : memref<3x3x8x4xbf16, #tpu.memory_space<vmem>>, vector<1x1x8x4xbf16>
    %31 = vector.shape_cast %30 : vector<1x1x8x4xbf16> to vector<8x4xbf16>
    %cst_51 = arith.constant dense<0.000000e+00> : vector<128x4xf32>
    %32 = tpu.matmul %29, %31, %cst_51 {dimension_numbers = #tpu.dot_dimension_numbers<[1], [0], [0], [1], [0, 0, 1, 1], [], []>} : vector<128x8xbf16>, vector<8x4xbf16>, vector<128x4xf32> -> vector<128x4xf32>
    %33 = arith.addf %27, %32 : vector<128x4xf32>
    %c1_52 = arith.constant 1 : index
    %c15_53 = arith.constant 15 : index
    %c0_54 = arith.constant 0 : index
    %34 = vector.load %arg9[%c1_52, %c15_53, %c0_54] : memref<18x33x8xbf16, #tpu.memory_space<vmem>>, vector<8x16x8xbf16>
    %35 = vector.shape_cast %34 : vector<8x16x8xbf16> to vector<128x8xbf16>
    %c1_55 = arith.constant 1 : index
    %c0_56 = arith.constant 0 : index
    %c0_57 = arith.constant 0 : index
    %c0_58 = arith.constant 0 : index
    %36 = vector.load %arg2[%c1_55, %c0_56, %c0_57, %c0_58] : memref<3x3x8x4xbf16, #tpu.memory_space<vmem>>, vector<1x1x8x4xbf16>
    %37 = vector.shape_cast %36 : vector<1x1x8x4xbf16> to vector<8x4xbf16>
    %cst_59 = arith.constant dense<0.000000e+00> : vector<128x4xf32>
    %38 = tpu.matmul %35, %37, %cst_59 {dimension_numbers = #tpu.dot_dimension_numbers<[1], [0], [0], [1], [0, 0, 1, 1], [], []>} : vector<128x8xbf16>, vector<8x4xbf16>, vector<128x4xf32> -> vector<128x4xf32>
    %39 = arith.addf %33, %38 : vector<128x4xf32>
    %c1_60 = arith.constant 1 : index
    %c16_61 = arith.constant 16 : index
    %c0_62 = arith.constant 0 : index
    %40 = vector.load %arg9[%c1_60, %c16_61, %c0_62] : memref<18x33x8xbf16, #tpu.memory_space<vmem>>, vector<8x16x8xbf16>
    %41 = vector.shape_cast %40 : vector<8x16x8xbf16> to vector<128x8xbf16>
    %c1_63 = arith.constant 1 : index
    %c1_64 = arith.constant 1 : index
    %c0_65 = arith.constant 0 : index
    %c0_66 = arith.constant 0 : index
    %42 = vector.load %arg2[%c1_63, %c1_64, %c0_65, %c0_66] : memref<3x3x8x4xbf16, #tpu.memory_space<vmem>>, vector<1x1x8x4xbf16>
    %43 = vector.shape_cast %42 : vector<1x1x8x4xbf16> to vector<8x4xbf16>
    %cst_67 = arith.constant dense<0.000000e+00> : vector<128x4xf32>
    %44 = tpu.matmul %41, %43, %cst_67 {dimension_numbers = #tpu.dot_dimension_numbers<[1], [0], [0], [1], [0, 0, 1, 1], [], []>} : vector<128x8xbf16>, vector<8x4xbf16>, vector<128x4xf32> -> vector<128x4xf32>
    %45 = arith.addf %39, %44 : vector<128x4xf32>
    %c1_68 = arith.constant 1 : index
    %c17_69 = arith.constant 17 : index
    %c0_70 = arith.constant 0 : index
    %46 = vector.load %arg9[%c1_68, %c17_69, %c0_70] : memref<18x33x8xbf16, #tpu.memory_space<vmem>>, vector<8x16x8xbf16>
    %47 = vector.shape_cast %46 : vector<8x16x8xbf16> to vector<128x8xbf16>
    %c1_71 = arith.constant 1 : index
    %c2_72 = arith.constant 2 : index
    %c0_73 = arith.constant 0 : index
    %c0_74 = arith.constant 0 : index
    %48 = vector.load %arg2[%c1_71, %c2_72, %c0_73, %c0_74] : memref<3x3x8x4xbf16, #tpu.memory_space<vmem>>, vector<1x1x8x4xbf16>
    %49 = vector.shape_cast %48 : vector<1x1x8x4xbf16> to vector<8x4xbf16>
    %cst_75 = arith.constant dense<0.000000e+00> : vector<128x4xf32>
    %50 = tpu.matmul %47, %49, %cst_75 {dimension_numbers = #tpu.dot_dimension_numbers<[1], [0], [0], [1], [0, 0, 1, 1], [], []>} : vector<128x8xbf16>, vector<8x4xbf16>, vector<128x4xf32> -> vector<128x4xf32>
    %51 = arith.addf %45, %50 : vector<128x4xf32>
    %c2_76 = arith.constant 2 : index
    %c15_77 = arith.constant 15 : index
    %c0_78 = arith.constant 0 : index
    %52 = vector.load %arg9[%c2_76, %c15_77, %c0_78] : memref<18x33x8xbf16, #tpu.memory_space<vmem>>, vector<8x16x8xbf16>
    %53 = vector.shape_cast %52 : vector<8x16x8xbf16> to vector<128x8xbf16>
    %c2_79 = arith.constant 2 : index
    %c0_80 = arith.constant 0 : index
    %c0_81 = arith.constant 0 : index
    %c0_82 = arith.constant 0 : index
    %54 = vector.load %arg2[%c2_79, %c0_80, %c0_81, %c0_82] : memref<3x3x8x4xbf16, #tpu.memory_space<vmem>>, vector<1x1x8x4xbf16>
    %55 = vector.shape_cast %54 : vector<1x1x8x4xbf16> to vector<8x4xbf16>
    %cst_83 = arith.constant dense<0.000000e+00> : vector<128x4xf32>
    %56 = tpu.matmul %53, %55, %cst_83 {dimension_numbers = #tpu.dot_dimension_numbers<[1], [0], [0], [1], [0, 0, 1, 1], [], []>} : vector<128x8xbf16>, vector<8x4xbf16>, vector<128x4xf32> -> vector<128x4xf32>
    %57 = arith.addf %51, %56 : vector<128x4xf32>
    %c2_84 = arith.constant 2 : index
    %c16_85 = arith.constant 16 : index
    %c0_86 = arith.constant 0 : index
    %58 = vector.load %arg9[%c2_84, %c16_85, %c0_86] : memref<18x33x8xbf16, #tpu.memory_space<vmem>>, vector<8x16x8xbf16>
    %59 = vector.shape_cast %58 : vector<8x16x8xbf16> to vector<128x8xbf16>
    %c2_87 = arith.constant 2 : index
    %c1_88 = arith.constant 1 : index
    %c0_89 = arith.constant 0 : index
    %c0_90 = arith.constant 0 : index
    %60 = vector.load %arg2[%c2_87, %c1_88, %c0_89, %c0_90] : memref<3x3x8x4xbf16, #tpu.memory_space<vmem>>, vector<1x1x8x4xbf16>
    %61 = vector.shape_cast %60 : vector<1x1x8x4xbf16> to vector<8x4xbf16>
    %cst_91 = arith.constant dense<0.000000e+00> : vector<128x4xf32>
    %62 = tpu.matmul %59, %61, %cst_91 {dimension_numbers = #tpu.dot_dimension_numbers<[1], [0], [0], [1], [0, 0, 1, 1], [], []>} : vector<128x8xbf16>, vector<8x4xbf16>, vector<128x4xf32> -> vector<128x4xf32>
    %63 = arith.addf %57, %62 : vector<128x4xf32>
    %c2_92 = arith.constant 2 : index
    %c17_93 = arith.constant 17 : index
    %c0_94 = arith.constant 0 : index
    %64 = vector.load %arg9[%c2_92, %c17_93, %c0_94] : memref<18x33x8xbf16, #tpu.memory_space<vmem>>, vector<8x16x8xbf16>
    %65 = vector.shape_cast %64 : vector<8x16x8xbf16> to vector<128x8xbf16>
    %c2_95 = arith.constant 2 : index
    %c2_96 = arith.constant 2 : index
    %c0_97 = arith.constant 0 : index
    %c0_98 = arith.constant 0 : index
    %66 = vector.load %arg2[%c2_95, %c2_96, %c0_97, %c0_98] : memref<3x3x8x4xbf16, #tpu.memory_space<vmem>>, vector<1x1x8x4xbf16>
    %67 = vector.shape_cast %66 : vector<1x1x8x4xbf16> to vector<8x4xbf16>
    %cst_99 = arith.constant dense<0.000000e+00> : vector<128x4xf32>
    %68 = tpu.matmul %65, %67, %cst_99 {dimension_numbers = #tpu.dot_dimension_numbers<[1], [0], [0], [1], [0, 0, 1, 1], [], []>} : vector<128x8xbf16>, vector<8x4xbf16>, vector<128x4xf32> -> vector<128x4xf32>
    %69 = arith.addf %63, %68 : vector<128x4xf32>
    %c0_100 = arith.constant 0 : index
    %c0_101 = arith.constant 0 : index
    %70 = vector.load %arg3[%c0_100, %c0_101] : memref<1x4xf32, #tpu.memory_space<vmem>>, vector<1x4xf32>
    %71 = vector.broadcast %70 : vector<1x4xf32> to vector<128x4xf32>
    %72 = arith.mulf %69, %71 : vector<128x4xf32>
    %c0_102 = arith.constant 0 : index
    %c0_103 = arith.constant 0 : index
    %73 = vector.load %arg4[%c0_102, %c0_103] : memref<1x4xf32, #tpu.memory_space<vmem>>, vector<1x4xf32>
    %74 = vector.broadcast %73 : vector<1x4xf32> to vector<128x4xf32>
    %75 = arith.addf %72, %74 : vector<128x4xf32>
    %cst_104 = arith.constant 0.000000e+00 : f32
    %76 = vector.broadcast %cst_104 : f32 to vector<128x4xf32>
    %77 = arith.maximumf %75, %76 : vector<128x4xf32>
    %78 = vector.shape_cast %77 : vector<128x4xf32> to vector<8x16x4xf32>
    %79 = arith.truncf %78 : vector<8x16x4xf32> to vector<8x16x4xbf16>
    %c1_105 = arith.constant 1 : index
    %c16_106 = arith.constant 16 : index
    %c0_107 = arith.constant 0 : index
    %80 = vector.load %arg10[%c1_105, %c16_106, %c0_107] : memref<18x33x4xbf16, #tpu.memory_space<vmem>>, vector<8x16x4xbf16>
    tpu.vector_store %arg10[%c1_105, %c16_106, %c0_107], %79 {strides = array<i32>} : memref<18x33x4xbf16, #tpu.memory_space<vmem>>, vector<8x16x4xbf16>,
    %cst_108 = arith.constant 0.000000e+00 : f32
    %81 = vector.broadcast %cst_108 : f32 to vector<128x4xf32>
    %c8 = arith.constant 8 : index
    %c15_109 = arith.constant 15 : index
    %c0_110 = arith.constant 0 : index
    %82 = vector.load %arg9[%c8, %c15_109, %c0_110] : memref<18x33x8xbf16, #tpu.memory_space<vmem>>, vector<8x16x8xbf16>
    %83 = vector.shape_cast %82 : vector<8x16x8xbf16> to vector<128x8xbf16>
    %c0_111 = arith.constant 0 : index
    %c0_112 = arith.constant 0 : index
    %c0_113 = arith.constant 0 : index
    %c0_114 = arith.constant 0 : index
    %84 = vector.load %arg2[%c0_111, %c0_112, %c0_113, %c0_114] : memref<3x3x8x4xbf16, #tpu.memory_space<vmem>>, vector<1x1x8x4xbf16>
    %85 = vector.shape_cast %84 : vector<1x1x8x4xbf16> to vector<8x4xbf16>
    %cst_115 = arith.constant dense<0.000000e+00> : vector<128x4xf32>
    %86 = tpu.matmul %83, %85, %cst_115 {dimension_numbers = #tpu.dot_dimension_numbers<[1], [0], [0], [1], [0, 0, 1, 1], [], []>} : vector<128x8xbf16>, vector<8x4xbf16>, vector<128x4xf32> -> vector<128x4xf32>
    %87 = arith.addf %81, %86 : vector<128x4xf32>
    %c8_116 = arith.constant 8 : index
    %c16_117 = arith.constant 16 : index
    %c0_118 = arith.constant 0 : index
    %88 = vector.load %arg9[%c8_116, %c16_117, %c0_118] : memref<18x33x8xbf16, #tpu.memory_space<vmem>>, vector<8x16x8xbf16>
    %89 = vector.shape_cast %88 : vector<8x16x8xbf16> to vector<128x8xbf16>
    %c0_119 = arith.constant 0 : index
    %c1_120 = arith.constant 1 : index
    %c0_121 = arith.constant 0 : index
    %c0_122 = arith.constant 0 : index
    %90 = vector.load %arg2[%c0_119, %c1_120, %c0_121, %c0_122] : memref<3x3x8x4xbf16, #tpu.memory_space<vmem>>, vector<1x1x8x4xbf16>
    %91 = vector.shape_cast %90 : vector<1x1x8x4xbf16> to vector<8x4xbf16>
    %cst_123 = arith.constant dense<0.000000e+00> : vector<128x4xf32>
    %92 = tpu.matmul %89, %91, %cst_123 {dimension_numbers = #tpu.dot_dimension_numbers<[1], [0], [0], [1], [0, 0, 1, 1], [], []>} : vector<128x8xbf16>, vector<8x4xbf16>, vector<128x4xf32> -> vector<128x4xf32>
    %93 = arith.addf %87, %92 : vector<128x4xf32>
    %c8_124 = arith.constant 8 : index
    %c17_125 = arith.constant 17 : index
    %c0_126 = arith.constant 0 : index
    %94 = vector.load %arg9[%c8_124, %c17_125, %c0_126] : memref<18x33x8xbf16, #tpu.memory_space<vmem>>, vector<8x16x8xbf16>
    %95 = vector.shape_cast %94 : vector<8x16x8xbf16> to vector<128x8xbf16>
    %c0_127 = arith.constant 0 : index
    %c2_128 = arith.constant 2 : index
    %c0_129 = arith.constant 0 : index
    %c0_130 = arith.constant 0 : index
    %96 = vector.load %arg2[%c0_127, %c2_128, %c0_129, %c0_130] : memref<3x3x8x4xbf16, #tpu.memory_space<vmem>>, vector<1x1x8x4xbf16>
    %97 = vector.shape_cast %96 : vector<1x1x8x4xbf16> to vector<8x4xbf16>
    %cst_131 = arith.constant dense<0.000000e+00> : vector<128x4xf32>
    %98 = tpu.matmul %95, %97, %cst_131 {dimension_numbers = #tpu.dot_dimension_numbers<[1], [0], [0], [1], [0, 0, 1, 1], [], []>} : vector<128x8xbf16>, vector<8x4xbf16>, vector<128x4xf32> -> vector<128x4xf32>
    %99 = arith.addf %93, %98 : vector<128x4xf32>
    %c9 = arith.constant 9 : index
    %c15_132 = arith.constant 15 : index
    %c0_133 = arith.constant 0 : index
    %100 = vector.load %arg9[%c9, %c15_132, %c0_133] : memref<18x33x8xbf16, #tpu.memory_space<vmem>>, vector<8x16x8xbf16>
    %101 = vector.shape_cast %100 : vector<8x16x8xbf16> to vector<128x8xbf16>
    %c1_134 = arith.constant 1 : index
    %c0_135 = arith.constant 0 : index
    %c0_136 = arith.constant 0 : index
    %c0_137 = arith.constant 0 : index
    %102 = vector.load %arg2[%c1_134, %c0_135, %c0_136, %c0_137] : memref<3x3x8x4xbf16, #tpu.memory_space<vmem>>, vector<1x1x8x4xbf16>
    %103 = vector.shape_cast %102 : vector<1x1x8x4xbf16> to vector<8x4xbf16>
    %cst_138 = arith.constant dense<0.000000e+00> : vector<128x4xf32>
    %104 = tpu.matmul %101, %103, %cst_138 {dimension_numbers = #tpu.dot_dimension_numbers<[1], [0], [0], [1], [0, 0, 1, 1], [], []>} : vector<128x8xbf16>, vector<8x4xbf16>, vector<128x4xf32> -> vector<128x4xf32>
    %105 = arith.addf %99, %104 : vector<128x4xf32>
    %c9_139 = arith.constant 9 : index
    %c16_140 = arith.constant 16 : index
    %c0_141 = arith.constant 0 : index
    %106 = vector.load %arg9[%c9_139, %c16_140, %c0_141] : memref<18x33x8xbf16, #tpu.memory_space<vmem>>, vector<8x16x8xbf16>
    %107 = vector.shape_cast %106 : vector<8x16x8xbf16> to vector<128x8xbf16>
    %c1_142 = arith.constant 1 : index
    %c1_143 = arith.constant 1 : index
    %c0_144 = arith.constant 0 : index
    %c0_145 = arith.constant 0 : index
    %108 = vector.load %arg2[%c1_142, %c1_143, %c0_144, %c0_145] : memref<3x3x8x4xbf16, #tpu.memory_space<vmem>>, vector<1x1x8x4xbf16>
    %109 = vector.shape_cast %108 : vector<1x1x8x4xbf16> to vector<8x4xbf16>
    %cst_146 = arith.constant dense<0.000000e+00> : vector<128x4xf32>
    %110 = tpu.matmul %107, %109, %cst_146 {dimension_numbers = #tpu.dot_dimension_numbers<[1], [0], [0], [1], [0, 0, 1, 1], [], []>} : vector<128x8xbf16>, vector<8x4xbf16>, vector<128x4xf32> -> vector<128x4xf32>
    %111 = arith.addf %105, %110 : vector<128x4xf32>
    %c9_147 = arith.constant 9 : index
    %c17_148 = arith.constant 17 : index
    %c0_149 = arith.constant 0 : index
    %112 = vector.load %arg9[%c9_147, %c17_148, %c0_149] : memref<18x33x8xbf16, #tpu.memory_space<vmem>>, vector<8x16x8xbf16>
    %113 = vector.shape_cast %112 : vector<8x16x8xbf16> to vector<128x8xbf16>
    %c1_150 = arith.constant 1 : index
    %c2_151 = arith.constant 2 : index
    %c0_152 = arith.constant 0 : index
    %c0_153 = arith.constant 0 : index
    %114 = vector.load %arg2[%c1_150, %c2_151, %c0_152, %c0_153] : memref<3x3x8x4xbf16, #tpu.memory_space<vmem>>, vector<1x1x8x4xbf16>
    %115 = vector.shape_cast %114 : vector<1x1x8x4xbf16> to vector<8x4xbf16>
    %cst_154 = arith.constant dense<0.000000e+00> : vector<128x4xf32>
    %116 = tpu.matmul %113, %115, %cst_154 {dimension_numbers = #tpu.dot_dimension_numbers<[1], [0], [0], [1], [0, 0, 1, 1], [], []>} : vector<128x8xbf16>, vector<8x4xbf16>, vector<128x4xf32> -> vector<128x4xf32>
    %117 = arith.addf %111, %116 : vector<128x4xf32>
    %c10 = arith.constant 10 : index
    %c15_155 = arith.constant 15 : index
    %c0_156 = arith.constant 0 : index
    %118 = vector.load %arg9[%c10, %c15_155, %c0_156] : memref<18x33x8xbf16, #tpu.memory_space<vmem>>, vector<8x16x8xbf16>
    %119 = vector.shape_cast %118 : vector<8x16x8xbf16> to vector<128x8xbf16>
    %c2_157 = arith.constant 2 : index
    %c0_158 = arith.constant 0 : index
    %c0_159 = arith.constant 0 : index
    %c0_160 = arith.constant 0 : index
    %120 = vector.load %arg2[%c2_157, %c0_158, %c0_159, %c0_160] : memref<3x3x8x4xbf16, #tpu.memory_space<vmem>>, vector<1x1x8x4xbf16>
    %121 = vector.shape_cast %120 : vector<1x1x8x4xbf16> to vector<8x4xbf16>
    %cst_161 = arith.constant dense<0.000000e+00> : vector<128x4xf32>
    %122 = tpu.matmul %119, %121, %cst_161 {dimension_numbers = #tpu.dot_dimension_numbers<[1], [0], [0], [1], [0, 0, 1, 1], [], []>} : vector<128x8xbf16>, vector<8x4xbf16>, vector<128x4xf32> -> vector<128x4xf32>
    %123 = arith.addf %117, %122 : vector<128x4xf32>
    %c10_162 = arith.constant 10 : index
    %c16_163 = arith.constant 16 : index
    %c0_164 = arith.constant 0 : index
    %124 = vector.load %arg9[%c10_162, %c16_163, %c0_164] : memref<18x33x8xbf16, #tpu.memory_space<vmem>>, vector<8x16x8xbf16>
    %125 = vector.shape_cast %124 : vector<8x16x8xbf16> to vector<128x8xbf16>
    %c2_165 = arith.constant 2 : index
    %c1_166 = arith.constant 1 : index
    %c0_167 = arith.constant 0 : index
    %c0_168 = arith.constant 0 : index
    %126 = vector.load %arg2[%c2_165, %c1_166, %c0_167, %c0_168] : memref<3x3x8x4xbf16, #tpu.memory_space<vmem>>, vector<1x1x8x4xbf16>
    %127 = vector.shape_cast %126 : vector<1x1x8x4xbf16> to vector<8x4xbf16>
    %cst_169 = arith.constant dense<0.000000e+00> : vector<128x4xf32>
    %128 = tpu.matmul %125, %127, %cst_169 {dimension_numbers = #tpu.dot_dimension_numbers<[1], [0], [0], [1], [0, 0, 1, 1], [], []>} : vector<128x8xbf16>, vector<8x4xbf16>, vector<128x4xf32> -> vector<128x4xf32>
    %129 = arith.addf %123, %128 : vector<128x4xf32>
    %c10_170 = arith.constant 10 : index
    %c17_171 = arith.constant 17 : index
    %c0_172 = arith.constant 0 : index
    %130 = vector.load %arg9[%c10_170, %c17_171, %c0_172] : memref<18x33x8xbf16, #tpu.memory_space<vmem>>, vector<8x16x8xbf16>
    %131 = vector.shape_cast %130 : vector<8x16x8xbf16> to vector<128x8xbf16>
    %c2_173 = arith.constant 2 : index
    %c2_174 = arith.constant 2 : index
    %c0_175 = arith.constant 0 : index
    %c0_176 = arith.constant 0 : index
    %132 = vector.load %arg2[%c2_173, %c2_174, %c0_175, %c0_176] : memref<3x3x8x4xbf16, #tpu.memory_space<vmem>>, vector<1x1x8x4xbf16>
    %133 = vector.shape_cast %132 : vector<1x1x8x4xbf16> to vector<8x4xbf16>
    %cst_177 = arith.constant dense<0.000000e+00> : vector<128x4xf32>
    %134 = tpu.matmul %131, %133, %cst_177 {dimension_numbers = #tpu.dot_dimension_numbers<[1], [0], [0], [1], [0, 0, 1, 1], [], []>} : vector<128x8xbf16>, vector<8x4xbf16>, vector<128x4xf32> -> vector<128x4xf32>
    %135 = arith.addf %129, %134 : vector<128x4xf32>
    %c0_178 = arith.constant 0 : index
    %c0_179 = arith.constant 0 : index
    %136 = vector.load %arg3[%c0_178, %c0_179] : memref<1x4xf32, #tpu.memory_space<vmem>>, vector<1x4xf32>
    %137 = vector.broadcast %136 : vector<1x4xf32> to vector<128x4xf32>
    %138 = arith.mulf %135, %137 : vector<128x4xf32>
    %c0_180 = arith.constant 0 : index
    %c0_181 = arith.constant 0 : index
    %139 = vector.load %arg4[%c0_180, %c0_181] : memref<1x4xf32, #tpu.memory_space<vmem>>, vector<1x4xf32>
    %140 = vector.broadcast %139 : vector<1x4xf32> to vector<128x4xf32>
    %141 = arith.addf %138, %140 : vector<128x4xf32>
    %cst_182 = arith.constant 0.000000e+00 : f32
    %142 = vector.broadcast %cst_182 : f32 to vector<128x4xf32>
    %143 = arith.maximumf %141, %142 : vector<128x4xf32>
    %144 = vector.shape_cast %143 : vector<128x4xf32> to vector<8x16x4xf32>
    %145 = arith.truncf %144 : vector<8x16x4xf32> to vector<8x16x4xbf16>
    %c9_183 = arith.constant 9 : index
    %c16_184 = arith.constant 16 : index
    %c0_185 = arith.constant 0 : index
    %146 = vector.load %arg10[%c9_183, %c16_184, %c0_185] : memref<18x33x4xbf16, #tpu.memory_space<vmem>>, vector<8x16x4xbf16>
    tpu.vector_store %arg10[%c9_183, %c16_184, %c0_185], %145 {strides = array<i32>} : memref<18x33x4xbf16, #tpu.memory_space<vmem>>, vector<8x16x4xbf16>,
    %cst_186 = arith.constant 0.000000e+00 : f32
    %147 = vector.broadcast %cst_186 : f32 to vector<128x4xf32>
    %c0_187 = arith.constant 0 : index
    %c15_188 = arith.constant 15 : index
    %c0_189 = arith.constant 0 : index
    %148 = vector.load %arg10[%c0_187, %c15_188, %c0_189] : memref<18x33x4xbf16, #tpu.memory_space<vmem>>, vector<8x16x4xbf16>
    %149 = vector.shape_cast %148 : vector<8x16x4xbf16> to vector<128x4xbf16>
    %c0_190 = arith.constant 0 : index
    %c0_191 = arith.constant 0 : index
    %c0_192 = arith.constant 0 : index
    %c0_193 = arith.constant 0 : index
    %150 = vector.load %arg5[%c0_190, %c0_191, %c0_192, %c0_193] : memref<3x3x4x4xbf16, #tpu.memory_space<vmem>>, vector<1x1x4x4xbf16>
    %151 = vector.shape_cast %150 : vector<1x1x4x4xbf16> to vector<4x4xbf16>
    %cst_194 = arith.constant dense<0.000000e+00> : vector<128x4xf32>
    %152 = tpu.matmul %149, %151, %cst_194 {dimension_numbers = #tpu.dot_dimension_numbers<[1], [0], [0], [1], [0, 0, 1, 1], [], []>} : vector<128x4xbf16>, vector<4x4xbf16>, vector<128x4xf32> -> vector<128x4xf32>
    %153 = arith.addf %147, %152 : vector<128x4xf32>
    %c0_195 = arith.constant 0 : index
    %c16_196 = arith.constant 16 : index
    %c0_197 = arith.constant 0 : index
    %154 = vector.load %arg10[%c0_195, %c16_196, %c0_197] : memref<18x33x4xbf16, #tpu.memory_space<vmem>>, vector<8x16x4xbf16>
    %155 = vector.shape_cast %154 : vector<8x16x4xbf16> to vector<128x4xbf16>
    %c0_198 = arith.constant 0 : index
    %c1_199 = arith.constant 1 : index
    %c0_200 = arith.constant 0 : index
    %c0_201 = arith.constant 0 : index
    %156 = vector.load %arg5[%c0_198, %c1_199, %c0_200, %c0_201] : memref<3x3x4x4xbf16, #tpu.memory_space<vmem>>, vector<1x1x4x4xbf16>
    %157 = vector.shape_cast %156 : vector<1x1x4x4xbf16> to vector<4x4xbf16>
    %cst_202 = arith.constant dense<0.000000e+00> : vector<128x4xf32>
    %158 = tpu.matmul %155, %157, %cst_202 {dimension_numbers = #tpu.dot_dimension_numbers<[1], [0], [0], [1], [0, 0, 1, 1], [], []>} : vector<128x4xbf16>, vector<4x4xbf16>, vector<128x4xf32> -> vector<128x4xf32>
    %159 = arith.addf %153, %158 : vector<128x4xf32>
    %c0_203 = arith.constant 0 : index
    %c17_204 = arith.constant 17 : index
    %c0_205 = arith.constant 0 : index
    %160 = vector.load %arg10[%c0_203, %c17_204, %c0_205] : memref<18x33x4xbf16, #tpu.memory_space<vmem>>, vector<8x16x4xbf16>
    %161 = vector.shape_cast %160 : vector<8x16x4xbf16> to vector<128x4xbf16>
    %c0_206 = arith.constant 0 : index
    %c2_207 = arith.constant 2 : index
    %c0_208 = arith.constant 0 : index
    %c0_209 = arith.constant 0 : index
    %162 = vector.load %arg5[%c0_206, %c2_207, %c0_208, %c0_209] : memref<3x3x4x4xbf16, #tpu.memory_space<vmem>>, vector<1x1x4x4xbf16>
    %163 = vector.shape_cast %162 : vector<1x1x4x4xbf16> to vector<4x4xbf16>
    %cst_210 = arith.constant dense<0.000000e+00> : vector<128x4xf32>
    %164 = tpu.matmul %161, %163, %cst_210 {dimension_numbers = #tpu.dot_dimension_numbers<[1], [0], [0], [1], [0, 0, 1, 1], [], []>} : vector<128x4xbf16>, vector<4x4xbf16>, vector<128x4xf32> -> vector<128x4xf32>
    %165 = arith.addf %159, %164 : vector<128x4xf32>
    %c1_211 = arith.constant 1 : index
    %c15_212 = arith.constant 15 : index
    %c0_213 = arith.constant 0 : index
    %166 = vector.load %arg10[%c1_211, %c15_212, %c0_213] : memref<18x33x4xbf16, #tpu.memory_space<vmem>>, vector<8x16x4xbf16>
    %167 = vector.shape_cast %166 : vector<8x16x4xbf16> to vector<128x4xbf16>
    %c1_214 = arith.constant 1 : index
    %c0_215 = arith.constant 0 : index
    %c0_216 = arith.constant 0 : index
    %c0_217 = arith.constant 0 : index
    %168 = vector.load %arg5[%c1_214, %c0_215, %c0_216, %c0_217] : memref<3x3x4x4xbf16, #tpu.memory_space<vmem>>, vector<1x1x4x4xbf16>
    %169 = vector.shape_cast %168 : vector<1x1x4x4xbf16> to vector<4x4xbf16>
    %cst_218 = arith.constant dense<0.000000e+00> : vector<128x4xf32>
    %170 = tpu.matmul %167, %169, %cst_218 {dimension_numbers = #tpu.dot_dimension_numbers<[1], [0], [0], [1], [0, 0, 1, 1], [], []>} : vector<128x4xbf16>, vector<4x4xbf16>, vector<128x4xf32> -> vector<128x4xf32>
    %171 = arith.addf %165, %170 : vector<128x4xf32>
    %c1_219 = arith.constant 1 : index
    %c16_220 = arith.constant 16 : index
    %c0_221 = arith.constant 0 : index
    %172 = vector.load %arg10[%c1_219, %c16_220, %c0_221] : memref<18x33x4xbf16, #tpu.memory_space<vmem>>, vector<8x16x4xbf16>
    %173 = vector.shape_cast %172 : vector<8x16x4xbf16> to vector<128x4xbf16>
    %c1_222 = arith.constant 1 : index
    %c1_223 = arith.constant 1 : index
    %c0_224 = arith.constant 0 : index
    %c0_225 = arith.constant 0 : index
    %174 = vector.load %arg5[%c1_222, %c1_223, %c0_224, %c0_225] : memref<3x3x4x4xbf16, #tpu.memory_space<vmem>>, vector<1x1x4x4xbf16>
    %175 = vector.shape_cast %174 : vector<1x1x4x4xbf16> to vector<4x4xbf16>
    %cst_226 = arith.constant dense<0.000000e+00> : vector<128x4xf32>
    %176 = tpu.matmul %173, %175, %cst_226 {dimension_numbers = #tpu.dot_dimension_numbers<[1], [0], [0], [1], [0, 0, 1, 1], [], []>} : vector<128x4xbf16>, vector<4x4xbf16>, vector<128x4xf32> -> vector<128x4xf32>
    %177 = arith.addf %171, %176 : vector<128x4xf32>
    %c1_227 = arith.constant 1 : index
    %c17_228 = arith.constant 17 : index
    %c0_229 = arith.constant 0 : index
    %178 = vector.load %arg10[%c1_227, %c17_228, %c0_229] : memref<18x33x4xbf16, #tpu.memory_space<vmem>>, vector<8x16x4xbf16>
    %179 = vector.shape_cast %178 : vector<8x16x4xbf16> to vector<128x4xbf16>
    %c1_230 = arith.constant 1 : index
    %c2_231 = arith.constant 2 : index
    %c0_232 = arith.constant 0 : index
    %c0_233 = arith.constant 0 : index
    %180 = vector.load %arg5[%c1_230, %c2_231, %c0_232, %c0_233] : memref<3x3x4x4xbf16, #tpu.memory_space<vmem>>, vector<1x1x4x4xbf16>
    %181 = vector.shape_cast %180 : vector<1x1x4x4xbf16> to vector<4x4xbf16>
    %cst_234 = arith.constant dense<0.000000e+00> : vector<128x4xf32>
    %182 = tpu.matmul %179, %181, %cst_234 {dimension_numbers = #tpu.dot_dimension_numbers<[1], [0], [0], [1], [0, 0, 1, 1], [], []>} : vector<128x4xbf16>, vector<4x4xbf16>, vector<128x4xf32> -> vector<128x4xf32>
    %183 = arith.addf %177, %182 : vector<128x4xf32>
    %c2_235 = arith.constant 2 : index
    %c15_236 = arith.constant 15 : index
    %c0_237 = arith.constant 0 : index
    %184 = vector.load %arg10[%c2_235, %c15_236, %c0_237] : memref<18x33x4xbf16, #tpu.memory_space<vmem>>, vector<8x16x4xbf16>
    %185 = vector.shape_cast %184 : vector<8x16x4xbf16> to vector<128x4xbf16>
    %c2_238 = arith.constant 2 : index
    %c0_239 = arith.constant 0 : index
    %c0_240 = arith.constant 0 : index
    %c0_241 = arith.constant 0 : index
    %186 = vector.load %arg5[%c2_238, %c0_239, %c0_240, %c0_241] : memref<3x3x4x4xbf16, #tpu.memory_space<vmem>>, vector<1x1x4x4xbf16>
    %187 = vector.shape_cast %186 : vector<1x1x4x4xbf16> to vector<4x4xbf16>
    %cst_242 = arith.constant dense<0.000000e+00> : vector<128x4xf32>
    %188 = tpu.matmul %185, %187, %cst_242 {dimension_numbers = #tpu.dot_dimension_numbers<[1], [0], [0], [1], [0, 0, 1, 1], [], []>} : vector<128x4xbf16>, vector<4x4xbf16>, vector<128x4xf32> -> vector<128x4xf32>
    %189 = arith.addf %183, %188 : vector<128x4xf32>
    %c2_243 = arith.constant 2 : index
    %c16_244 = arith.constant 16 : index
    %c0_245 = arith.constant 0 : index
    %190 = vector.load %arg10[%c2_243, %c16_244, %c0_245] : memref<18x33x4xbf16, #tpu.memory_space<vmem>>, vector<8x16x4xbf16>
    %191 = vector.shape_cast %190 : vector<8x16x4xbf16> to vector<128x4xbf16>
    %c2_246 = arith.constant 2 : index
    %c1_247 = arith.constant 1 : index
    %c0_248 = arith.constant 0 : index
    %c0_249 = arith.constant 0 : index
    %192 = vector.load %arg5[%c2_246, %c1_247, %c0_248, %c0_249] : memref<3x3x4x4xbf16, #tpu.memory_space<vmem>>, vector<1x1x4x4xbf16>
    %193 = vector.shape_cast %192 : vector<1x1x4x4xbf16> to vector<4x4xbf16>
    %cst_250 = arith.constant dense<0.000000e+00> : vector<128x4xf32>
    %194 = tpu.matmul %191, %193, %cst_250 {dimension_numbers = #tpu.dot_dimension_numbers<[1], [0], [0], [1], [0, 0, 1, 1], [], []>} : vector<128x4xbf16>, vector<4x4xbf16>, vector<128x4xf32> -> vector<128x4xf32>
    %195 = arith.addf %189, %194 : vector<128x4xf32>
    %c2_251 = arith.constant 2 : index
    %c17_252 = arith.constant 17 : index
    %c0_253 = arith.constant 0 : index
    %196 = vector.load %arg10[%c2_251, %c17_252, %c0_253] : memref<18x33x4xbf16, #tpu.memory_space<vmem>>, vector<8x16x4xbf16>
    %197 = vector.shape_cast %196 : vector<8x16x4xbf16> to vector<128x4xbf16>
    %c2_254 = arith.constant 2 : index
    %c2_255 = arith.constant 2 : index
    %c0_256 = arith.constant 0 : index
    %c0_257 = arith.constant 0 : index
    %198 = vector.load %arg5[%c2_254, %c2_255, %c0_256, %c0_257] : memref<3x3x4x4xbf16, #tpu.memory_space<vmem>>, vector<1x1x4x4xbf16>
    %199 = vector.shape_cast %198 : vector<1x1x4x4xbf16> to vector<4x4xbf16>
    %cst_258 = arith.constant dense<0.000000e+00> : vector<128x4xf32>
    %200 = tpu.matmul %197, %199, %cst_258 {dimension_numbers = #tpu.dot_dimension_numbers<[1], [0], [0], [1], [0, 0, 1, 1], [], []>} : vector<128x4xbf16>, vector<4x4xbf16>, vector<128x4xf32> -> vector<128x4xf32>
    %201 = arith.addf %195, %200 : vector<128x4xf32>
    %c0_259 = arith.constant 0 : index
    %c0_260 = arith.constant 0 : index
    %202 = vector.load %arg6[%c0_259, %c0_260] : memref<1x4xf32, #tpu.memory_space<vmem>>, vector<1x4xf32>
    %203 = vector.broadcast %202 : vector<1x4xf32> to vector<128x4xf32>
    %204 = arith.mulf %201, %203 : vector<128x4xf32>
    %c0_261 = arith.constant 0 : index
    %c0_262 = arith.constant 0 : index
    %205 = vector.load %arg7[%c0_261, %c0_262] : memref<1x4xf32, #tpu.memory_space<vmem>>, vector<1x4xf32>
    %206 = vector.broadcast %205 : vector<1x4xf32> to vector<128x4xf32>
    %207 = arith.addf %204, %206 : vector<128x4xf32>
    %cst_263 = arith.constant 0.000000e+00 : f32
    %208 = vector.broadcast %cst_263 : f32 to vector<128x4xf32>
    %209 = arith.maximumf %207, %208 : vector<128x4xf32>
    %210 = vector.shape_cast %209 : vector<128x4xf32> to vector<1x8x16x4xf32>
    %211 = arith.truncf %210 : vector<1x8x16x4xf32> to vector<1x8x16x4xbf16>
    %c0_264 = arith.constant 0 : index
    %c0_265 = arith.constant 0 : index
    %c0_266 = arith.constant 0 : index
    %c0_267 = arith.constant 0 : index
    %212 = vector.load %arg8[%c0_264, %c0_265, %c0_266, %c0_267] : memref<1x16x16x4xbf16, #tpu.memory_space<vmem>>, vector<1x8x16x4xbf16>
    tpu.vector_store %arg8[%c0_264, %c0_265, %c0_266, %c0_267], %211 {strides = array<i32>} : memref<1x16x16x4xbf16, #tpu.memory_space<vmem>>, vector<1x8x16x4xbf16>,
    %cst_268 = arith.constant 0.000000e+00 : f32
    %213 = vector.broadcast %cst_268 : f32 to vector<128x4xf32>
    %c8_269 = arith.constant 8 : index
    %c15_270 = arith.constant 15 : index
    %c0_271 = arith.constant 0 : index
    %214 = vector.load %arg10[%c8_269, %c15_270, %c0_271] : memref<18x33x4xbf16, #tpu.memory_space<vmem>>, vector<8x16x4xbf16>
    %215 = vector.shape_cast %214 : vector<8x16x4xbf16> to vector<128x4xbf16>
    %c0_272 = arith.constant 0 : index
    %c0_273 = arith.constant 0 : index
    %c0_274 = arith.constant 0 : index
    %c0_275 = arith.constant 0 : index
    %216 = vector.load %arg5[%c0_272, %c0_273, %c0_274, %c0_275] : memref<3x3x4x4xbf16, #tpu.memory_space<vmem>>, vector<1x1x4x4xbf16>
    %217 = vector.shape_cast %216 : vector<1x1x4x4xbf16> to vector<4x4xbf16>
    %cst_276 = arith.constant dense<0.000000e+00> : vector<128x4xf32>
    %218 = tpu.matmul %215, %217, %cst_276 {dimension_numbers = #tpu.dot_dimension_numbers<[1], [0], [0], [1], [0, 0, 1, 1], [], []>} : vector<128x4xbf16>, vector<4x4xbf16>, vector<128x4xf32> -> vector<128x4xf32>
    %219 = arith.addf %213, %218 : vector<128x4xf32>
    %c8_277 = arith.constant 8 : index
    %c16_278 = arith.constant 16 : index
    %c0_279 = arith.constant 0 : index
    %220 = vector.load %arg10[%c8_277, %c16_278, %c0_279] : memref<18x33x4xbf16, #tpu.memory_space<vmem>>, vector<8x16x4xbf16>
    %221 = vector.shape_cast %220 : vector<8x16x4xbf16> to vector<128x4xbf16>
    %c0_280 = arith.constant 0 : index
    %c1_281 = arith.constant 1 : index
    %c0_282 = arith.constant 0 : index
    %c0_283 = arith.constant 0 : index
    %222 = vector.load %arg5[%c0_280, %c1_281, %c0_282, %c0_283] : memref<3x3x4x4xbf16, #tpu.memory_space<vmem>>, vector<1x1x4x4xbf16>
    %223 = vector.shape_cast %222 : vector<1x1x4x4xbf16> to vector<4x4xbf16>
    %cst_284 = arith.constant dense<0.000000e+00> : vector<128x4xf32>
    %224 = tpu.matmul %221, %223, %cst_284 {dimension_numbers = #tpu.dot_dimension_numbers<[1], [0], [0], [1], [0, 0, 1, 1], [], []>} : vector<128x4xbf16>, vector<4x4xbf16>, vector<128x4xf32> -> vector<128x4xf32>
    %225 = arith.addf %219, %224 : vector<128x4xf32>
    %c8_285 = arith.constant 8 : index
    %c17_286 = arith.constant 17 : index
    %c0_287 = arith.constant 0 : index
    %226 = vector.load %arg10[%c8_285, %c17_286, %c0_287] : memref<18x33x4xbf16, #tpu.memory_space<vmem>>, vector<8x16x4xbf16>
    %227 = vector.shape_cast %226 : vector<8x16x4xbf16> to vector<128x4xbf16>
    %c0_288 = arith.constant 0 : index
    %c2_289 = arith.constant 2 : index
    %c0_290 = arith.constant 0 : index
    %c0_291 = arith.constant 0 : index
    %228 = vector.load %arg5[%c0_288, %c2_289, %c0_290, %c0_291] : memref<3x3x4x4xbf16, #tpu.memory_space<vmem>>, vector<1x1x4x4xbf16>
    %229 = vector.shape_cast %228 : vector<1x1x4x4xbf16> to vector<4x4xbf16>
    %cst_292 = arith.constant dense<0.000000e+00> : vector<128x4xf32>
    %230 = tpu.matmul %227, %229, %cst_292 {dimension_numbers = #tpu.dot_dimension_numbers<[1], [0], [0], [1], [0, 0, 1, 1], [], []>} : vector<128x4xbf16>, vector<4x4xbf16>, vector<128x4xf32> -> vector<128x4xf32>
    %231 = arith.addf %225, %230 : vector<128x4xf32>
    %c9_293 = arith.constant 9 : index
    %c15_294 = arith.constant 15 : index
    %c0_295 = arith.constant 0 : index
    %232 = vector.load %arg10[%c9_293, %c15_294, %c0_295] : memref<18x33x4xbf16, #tpu.memory_space<vmem>>, vector<8x16x4xbf16>
    %233 = vector.shape_cast %232 : vector<8x16x4xbf16> to vector<128x4xbf16>
    %c1_296 = arith.constant 1 : index
    %c0_297 = arith.constant 0 : index
    %c0_298 = arith.constant 0 : index
    %c0_299 = arith.constant 0 : index
    %234 = vector.load %arg5[%c1_296, %c0_297, %c0_298, %c0_299] : memref<3x3x4x4xbf16, #tpu.memory_space<vmem>>, vector<1x1x4x4xbf16>
    %235 = vector.shape_cast %234 : vector<1x1x4x4xbf16> to vector<4x4xbf16>
    %cst_300 = arith.constant dense<0.000000e+00> : vector<128x4xf32>
    %236 = tpu.matmul %233, %235, %cst_300 {dimension_numbers = #tpu.dot_dimension_numbers<[1], [0], [0], [1], [0, 0, 1, 1], [], []>} : vector<128x4xbf16>, vector<4x4xbf16>, vector<128x4xf32> -> vector<128x4xf32>
    %237 = arith.addf %231, %236 : vector<128x4xf32>
    %c9_301 = arith.constant 9 : index
    %c16_302 = arith.constant 16 : index
    %c0_303 = arith.constant 0 : index
    %238 = vector.load %arg10[%c9_301, %c16_302, %c0_303] : memref<18x33x4xbf16, #tpu.memory_space<vmem>>, vector<8x16x4xbf16>
    %239 = vector.shape_cast %238 : vector<8x16x4xbf16> to vector<128x4xbf16>
    %c1_304 = arith.constant 1 : index
    %c1_305 = arith.constant 1 : index
    %c0_306 = arith.constant 0 : index
    %c0_307 = arith.constant 0 : index
    %240 = vector.load %arg5[%c1_304, %c1_305, %c0_306, %c0_307] : memref<3x3x4x4xbf16, #tpu.memory_space<vmem>>, vector<1x1x4x4xbf16>
    %241 = vector.shape_cast %240 : vector<1x1x4x4xbf16> to vector<4x4xbf16>
    %cst_308 = arith.constant dense<0.000000e+00> : vector<128x4xf32>
    %242 = tpu.matmul %239, %241, %cst_308 {dimension_numbers = #tpu.dot_dimension_numbers<[1], [0], [0], [1], [0, 0, 1, 1], [], []>} : vector<128x4xbf16>, vector<4x4xbf16>, vector<128x4xf32> -> vector<128x4xf32>
    %243 = arith.addf %237, %242 : vector<128x4xf32>
    %c9_309 = arith.constant 9 : index
    %c17_310 = arith.constant 17 : index
    %c0_311 = arith.constant 0 : index
    %244 = vector.load %arg10[%c9_309, %c17_310, %c0_311] : memref<18x33x4xbf16, #tpu.memory_space<vmem>>, vector<8x16x4xbf16>
    %245 = vector.shape_cast %244 : vector<8x16x4xbf16> to vector<128x4xbf16>
    %c1_312 = arith.constant 1 : index
    %c2_313 = arith.constant 2 : index
    %c0_314 = arith.constant 0 : index
    %c0_315 = arith.constant 0 : index
    %246 = vector.load %arg5[%c1_312, %c2_313, %c0_314, %c0_315] : memref<3x3x4x4xbf16, #tpu.memory_space<vmem>>, vector<1x1x4x4xbf16>
    %247 = vector.shape_cast %246 : vector<1x1x4x4xbf16> to vector<4x4xbf16>
    %cst_316 = arith.constant dense<0.000000e+00> : vector<128x4xf32>
    %248 = tpu.matmul %245, %247, %cst_316 {dimension_numbers = #tpu.dot_dimension_numbers<[1], [0], [0], [1], [0, 0, 1, 1], [], []>} : vector<128x4xbf16>, vector<4x4xbf16>, vector<128x4xf32> -> vector<128x4xf32>
    %249 = arith.addf %243, %248 : vector<128x4xf32>
    %c10_317 = arith.constant 10 : index
    %c15_318 = arith.constant 15 : index
    %c0_319 = arith.constant 0 : index
    %250 = vector.load %arg10[%c10_317, %c15_318, %c0_319] : memref<18x33x4xbf16, #tpu.memory_space<vmem>>, vector<8x16x4xbf16>
    %251 = vector.shape_cast %250 : vector<8x16x4xbf16> to vector<128x4xbf16>
    %c2_320 = arith.constant 2 : index
    %c0_321 = arith.constant 0 : index
    %c0_322 = arith.constant 0 : index
    %c0_323 = arith.constant 0 : index
    %252 = vector.load %arg5[%c2_320, %c0_321, %c0_322, %c0_323] : memref<3x3x4x4xbf16, #tpu.memory_space<vmem>>, vector<1x1x4x4xbf16>
    %253 = vector.shape_cast %252 : vector<1x1x4x4xbf16> to vector<4x4xbf16>
    %cst_324 = arith.constant dense<0.000000e+00> : vector<128x4xf32>
    %254 = tpu.matmul %251, %253, %cst_324 {dimension_numbers = #tpu.dot_dimension_numbers<[1], [0], [0], [1], [0, 0, 1, 1], [], []>} : vector<128x4xbf16>, vector<4x4xbf16>, vector<128x4xf32> -> vector<128x4xf32>
    %255 = arith.addf %249, %254 : vector<128x4xf32>
    %c10_325 = arith.constant 10 : index
    %c16_326 = arith.constant 16 : index
    %c0_327 = arith.constant 0 : index
    %256 = vector.load %arg10[%c10_325, %c16_326, %c0_327] : memref<18x33x4xbf16, #tpu.memory_space<vmem>>, vector<8x16x4xbf16>
    %257 = vector.shape_cast %256 : vector<8x16x4xbf16> to vector<128x4xbf16>
    %c2_328 = arith.constant 2 : index
    %c1_329 = arith.constant 1 : index
    %c0_330 = arith.constant 0 : index
    %c0_331 = arith.constant 0 : index
    %258 = vector.load %arg5[%c2_328, %c1_329, %c0_330, %c0_331] : memref<3x3x4x4xbf16, #tpu.memory_space<vmem>>, vector<1x1x4x4xbf16>
    %259 = vector.shape_cast %258 : vector<1x1x4x4xbf16> to vector<4x4xbf16>
    %cst_332 = arith.constant dense<0.000000e+00> : vector<128x4xf32>
    %260 = tpu.matmul %257, %259, %cst_332 {dimension_numbers = #tpu.dot_dimension_numbers<[1], [0], [0], [1], [0, 0, 1, 1], [], []>} : vector<128x4xbf16>, vector<4x4xbf16>, vector<128x4xf32> -> vector<128x4xf32>
    %261 = arith.addf %255, %260 : vector<128x4xf32>
    %c10_333 = arith.constant 10 : index
    %c17_334 = arith.constant 17 : index
    %c0_335 = arith.constant 0 : index
    %262 = vector.load %arg10[%c10_333, %c17_334, %c0_335] : memref<18x33x4xbf16, #tpu.memory_space<vmem>>, vector<8x16x4xbf16>
    %263 = vector.shape_cast %262 : vector<8x16x4xbf16> to vector<128x4xbf16>
    %c2_336 = arith.constant 2 : index
    %c2_337 = arith.constant 2 : index
    %c0_338 = arith.constant 0 : index
    %c0_339 = arith.constant 0 : index
    %264 = vector.load %arg5[%c2_336, %c2_337, %c0_338, %c0_339] : memref<3x3x4x4xbf16, #tpu.memory_space<vmem>>, vector<1x1x4x4xbf16>
    %265 = vector.shape_cast %264 : vector<1x1x4x4xbf16> to vector<4x4xbf16>
    %cst_340 = arith.constant dense<0.000000e+00> : vector<128x4xf32>
    %266 = tpu.matmul %263, %265, %cst_340 {dimension_numbers = #tpu.dot_dimension_numbers<[1], [0], [0], [1], [0, 0, 1, 1], [], []>} : vector<128x4xbf16>, vector<4x4xbf16>, vector<128x4xf32> -> vector<128x4xf32>
    %267 = arith.addf %261, %266 : vector<128x4xf32>
    %c0_341 = arith.constant 0 : index
    %c0_342 = arith.constant 0 : index
    %268 = vector.load %arg6[%c0_341, %c0_342] : memref<1x4xf32, #tpu.memory_space<vmem>>, vector<1x4xf32>
    %269 = vector.broadcast %268 : vector<1x4xf32> to vector<128x4xf32>
    %270 = arith.mulf %267, %269 : vector<128x4xf32>
    %c0_343 = arith.constant 0 : index
    %c0_344 = arith.constant 0 : index
    %271 = vector.load %arg7[%c0_343, %c0_344] : memref<1x4xf32, #tpu.memory_space<vmem>>, vector<1x4xf32>
    %272 = vector.broadcast %271 : vector<1x4xf32> to vector<128x4xf32>
    %273 = arith.addf %270, %272 : vector<128x4xf32>
    %cst_345 = arith.constant 0.000000e+00 : f32
    %274 = vector.broadcast %cst_345 : f32 to vector<128x4xf32>
    %275 = arith.maximumf %273, %274 : vector<128x4xf32>
    %276 = vector.shape_cast %275 : vector<128x4xf32> to vector<1x8x16x4xf32>
    %277 = arith.truncf %276 : vector<1x8x16x4xf32> to vector<1x8x16x4xbf16>
    %c0_346 = arith.constant 0 : index
    %c8_347 = arith.constant 8 : index
    %c0_348 = arith.constant 0 : index
    %c0_349 = arith.constant 0 : index
    %278 = vector.load %arg8[%c0_346, %c8_347, %c0_348, %c0_349] : memref<1x16x16x4xbf16, #tpu.memory_space<vmem>>, vector<1x8x16x4xbf16>
    tpu.vector_store %arg8[%c0_346, %c8_347, %c0_348, %c0_349], %277 {strides = array<i32>} : memref<1x16x16x4xbf16, #tpu.memory_space<vmem>>, vector<1x8x16x4xbf16>,
    return
  }
  func.func @transform_0(%arg0: i32) -> (i32, i32, i32, i32) {
    %c0_i32 = arith.constant 0 : i32
    %c0_i32_0 = arith.constant 0 : i32
    %c0_i32_1 = arith.constant 0 : i32
    %c0_i32_2 = arith.constant 0 : i32
    return %arg0, %c0_i32, %c0_i32_0, %c0_i32_1 : i32, i32, i32, i32
  }
  func.func @transform_1(%arg0: i32) -> (i32, i32, i32, i32) {
    %c0_i32 = arith.constant 0 : i32
    %c0_i32_0 = arith.constant 0 : i32
    %c0_i32_1 = arith.constant 0 : i32
    %c0_i32_2 = arith.constant 0 : i32
    %c0_i32_3 = arith.constant 0 : i32
    return %c0_i32, %c0_i32_0, %c0_i32_1, %c0_i32_2 : i32, i32, i32, i32
  }
  func.func @transform_2(%arg0: i32) -> (i32, i32) {
    %c0_i32 = arith.constant 0 : i32
    %c0_i32_0 = arith.constant 0 : i32
    %c0_i32_1 = arith.constant 0 : i32
    return %c0_i32, %c0_i32_0 : i32, i32
  }
  func.func @transform_3(%arg0: i32) -> (i32, i32) {
    %c0_i32 = arith.constant 0 : i32
    %c0_i32_0 = arith.constant 0 : i32
    %c0_i32_1 = arith.constant 0 : i32
    return %c0_i32, %c0_i32_0 : i32, i32
  }
  func.func @transform_4(%arg0: i32) -> (i32, i32, i32, i32) {
    %c0_i32 = arith.constant 0 : i32
    %c0_i32_0 = arith.constant 0 : i32
    %c0_i32_1 = arith.constant 0 : i32
    %c0_i32_2 = arith.constant 0 : i32
    %c0_i32_3 = arith.constant 0 : i32
    return %c0_i32, %c0_i32_0, %c0_i32_1, %c0_i32_2 : i32, i32, i32, i32
  }
  func.func @transform_5(%arg0: i32) -> (i32, i32) {
    %c0_i32 = arith.constant 0 : i32
    %c0_i32_0 = arith.constant 0 : i32
    %c0_i32_1 = arith.constant 0 : i32
    return %c0_i32, %c0_i32_0 : i32, i32
  }
  func.func @transform_6(%arg0: i32) -> (i32, i32) {
    %c0_i32 = arith.constant 0 : i32
    %c0_i32_0 = arith.constant 0 : i32
    %c0_i32_1 = arith.constant 0 : i32
    return %c0_i32, %c0_i32_0 : i32, i32
  }
  func.func @transform_7(%arg0: i32) -> (i32, i32, i32, i32) {
    %c0_i32 = arith.constant 0 : i32
    %c0_i32_0 = arith.constant 0 : i32
    %c0_i32_1 = arith.constant 0 : i32
    %c0_i32_2 = arith.constant 0 : i32
    return %arg0, %c0_i32, %c0_i32_0, %c0_i32_1 : i32, i32, i32, i32
  }
}

</mosaic_0001>

<llo_original>
// kernel: up_forward.1
$region0: #{up_forward.1}
  #allocation0 [shape = 'u32[]', space=smem, size = 0x4, offset = 0x4, fixed_abs, tag = 'smem constant byte address 0x4 - core index']
  #allocation1 [shape = 'u32[72,128]{1,0:T(1,128)}', space=vmem, size = 0x9000, scoped, tag = 'internal scratch']
  #allocation2 [shape = 'bf16[18,33,8]{2,1,0:T(8,128)(2,1)}', space=vmem, size = 0x2d000, scoped, tag = 'scratch operand']
  #allocation3 [shape = 'bf16[18,33,4]{2,1,0:T(8,128)(2,1)}', space=vmem, size = 0x2d000, scoped, tag = 'scratch operand']
  %s0 = inlined_call_operand.vmem [shape: bf16[2,16,16,8], index: 0, kind: input, shape index: {}]
  %s1 = inlined_call_operand.vmem [shape: bf16[3,3,8,4], index: 1, kind: input, shape index: {}]
  %s2 = inlined_call_operand.vmem [shape: f32[1,4], index: 2, kind: input, shape index: {}]
  %s3 = inlined_call_operand.vmem [shape: f32[1,4], index: 3, kind: input, shape index: {}]
  %s4 = inlined_call_operand.vmem [shape: bf16[3,3,4,4], index: 4, kind: input, shape index: {}]
  %s5 = inlined_call_operand.vmem [shape: f32[1,4], index: 5, kind: input, shape index: {}]
  %s6 = inlined_call_operand.vmem [shape: f32[1,4], index: 6, kind: input, shape index: {}]
  %s7 = inlined_call_operand.vmem [shape: bf16[2,16,16,4], index: 7, kind: output, shape index: {}]
  %s8 = sld [smem:[#allocation0]]
  $region61: #{up_forward.1} parent=0
    _
  %s10 = ssub.s32 1, %s8
  %s11 = scalar_select 0, %s10, %s8
  loop: start=0, step=1, limit=4
  $region2: #{up_forward.1} parent=0 // loop_pre_header
    _
  $region3: #{up_forward.1} parent=0 // loop_header
    %s13 = sphi 0, %s17
    %p14 = scmp.ge.s32.totalorder %s13, 4
    %s23 = sphi 0, %s25
    %s26 = sphi 0, %s23
    %s27 = sphi 0, %s26
    %s43 = sphi 0, %s27
    %s47 = sphi 0, %s47
    %s49 = sphi 0, %s47
    %s50 = sphi 0, %s49
    %s64 = sphi 0, %s50
    %s68 = sphi 0, %s68
    %s70 = sphi 0, %s68
    %s71 = sphi 0, %s70
    %s85 = sphi 0, %s71
    %s89 = sphi 0, %s89
    %s91 = sphi 0, %s89
    %s92 = sphi 0, %s91
    %s106 = sphi 0, %s92
    %s110 = sphi 0, %s110
    %s112 = sphi 0, %s110
    %s113 = sphi 0, %s112
    %s127 = sphi 0, %s113
    %s131 = sphi 0, %s131
    %s133 = sphi 0, %s131
    %s134 = sphi 0, %s133
    %s148 = sphi 0, %s134
    %s152 = sphi 0, %s152
    %s154 = sphi 0, %s152
    %s155 = sphi 0, %s154
    %s169 = sphi 0, %s155
    %s175 = sphi 0, %s177
    %s178 = sphi 0, %s175
    %s179 = sphi 0, %s178
    %s195 = sphi 0, %s179
  $region4: #{up_forward.1} parent=0 // loop_header_branch
    %16 = sbr.rel (%p14) target = $region8
  $region5: #{up_forward.1} parent=0 // loop_body
    %s18 = ssub.s32 %s13, 1
    %s19 = ssub.s32 %s13, 2
    %s20 = sadd.s32 %s13, 1
    %s21 = ssub.s32 %s13, %s20
    %p22 = scmp.eq.s32.totalorder %s21, 0
    %s24 = sadd.s32 %s23, 1
    %s25 = scalar_select %p22, %s23, %s24
    %p28 = pneg %p22
    %p29 = scmp.eq.s32.totalorder %s13, 1
    %p30 = por %p28, %p29
    %p31 = scmp.ne.s32.totalorder %s23, %s26
    %p32 = scmp.eq.s32.totalorder %s13, 0
    %p33 = por %p31, %p32
    %p34 = scmp.ne.s32.totalorder %s23, %s26
    %p35 = scmp.eq.s32.totalorder %s18, 1
    %p36 = por %p34, %p35
    %p37 = scmp.ne.s32.totalorder %s26, %s27
    %p38 = scmp.eq.s32.totalorder %s18, 0
    %p39 = por %p37, %p38
    %p40 = scmp.ne.s32.totalorder %s26, %s27
    %p41 = scmp.eq.s32.totalorder %s19, 1
    %p42 = por %p40, %p41
    %p44 = scmp.ne.s32.totalorder %s27, %s43
    %p45 = scmp.eq.s32.totalorder %s19, 0
    %p46 = por %p44, %p45
    %s48 = sadd.s32 %s47, 1
    %p51 = scmp.eq.s32.totalorder %s13, 1
    %p52 = scmp.ne.s32.totalorder %s47, %s49
    %p53 = scmp.eq.s32.totalorder %s13, 0
    %p54 = por %p52, %p53
    %p55 = scmp.ne.s32.totalorder %s47, %s49
    %p56 = scmp.eq.s32.totalorder %s18, 1
    %p57 = por %p55, %p56
    %p58 = scmp.ne.s32.totalorder %s49, %s50
    %p59 = scmp.eq.s32.totalorder %s18, 0
    %p60 = por %p58, %p59
    %p61 = scmp.ne.s32.totalorder %s49, %s50
    %p62 = scmp.eq.s32.totalorder %s19, 1
    %p63 = por %p61, %p62
    %p65 = scmp.ne.s32.totalorder %s50, %s64
    %p66 = scmp.eq.s32.totalorder %s19, 0
    %p67 = por %p65, %p66
    %s69 = sadd.s32 %s68, 1
    %p72 = scmp.eq.s32.totalorder %s13, 1
    %p73 = scmp.ne.s32.totalorder %s68, %s70
    %p74 = scmp.eq.s32.totalorder %s13, 0
    %p75 = por %p73, %p74
    %p76 = scmp.ne.s32.totalorder %s68, %s70
    %p77 = scmp.eq.s32.totalorder %s18, 1
    %p78 = por %p76, %p77
    %p79 = scmp.ne.s32.totalorder %s70, %s71
    %p80 = scmp.eq.s32.totalorder %s18, 0
    %p81 = por %p79, %p80
    %p82 = scmp.ne.s32.totalorder %s70, %s71
    %p83 = scmp.eq.s32.totalorder %s19, 1
    %p84 = por %p82, %p83
    %p86 = scmp.ne.s32.totalorder %s71, %s85
    %p87 = scmp.eq.s32.totalorder %s19, 0
    %p88 = por %p86, %p87
    %s90 = sadd.s32 %s89, 1
    %p93 = scmp.eq.s32.totalorder %s13, 1
    %p94 = scmp.ne.s32.totalorder %s89, %s91
    %p95 = scmp.eq.s32.totalorder %s13, 0
    %p96 = por %p94, %p95
    %p97 = scmp.ne.s32.totalorder %s89, %s91
    %p98 = scmp.eq.s32.totalorder %s18, 1
    %p99 = por %p97, %p98
    %p100 = scmp.ne.s32.totalorder %s91, %s92
    %p101 = scmp.eq.s32.totalorder %s18, 0
    %p102 = por %p100, %p101
    %p103 = scmp.ne.s32.totalorder %s91, %s92
    %p104 = scmp.eq.s32.totalorder %s19, 1
    %p105 = por %p103, %p104
    %p107 = scmp.ne.s32.totalorder %s92, %s106
    %p108 = scmp.eq.s32.totalorder %s19, 0
    %p109 = por %p107, %p108
    %s111 = sadd.s32 %s110, 1
    %p114 = scmp.eq.s32.totalorder %s13, 1
    %p115 = scmp.ne.s32.totalorder %s110, %s112
    %p116 = scmp.eq.s32.totalorder %s13, 0
    %p117 = por %p115, %p116
    %p118 = scmp.ne.s32.totalorder %s110, %s112
    %p119 = scmp.eq.s32.totalorder %s18, 1
    %p120 = por %p118, %p119
    %p121 = scmp.ne.s32.totalorder %s112, %s113
    %p122 = scmp.eq.s32.totalorder %s18, 0
    %p123 = por %p121, %p122
    %p124 = scmp.ne.s32.totalorder %s112, %s113
    %p125 = scmp.eq.s32.totalorder %s19, 1
    %p126 = por %p124, %p125
    %p128 = scmp.ne.s32.totalorder %s113, %s127
    %p129 = scmp.eq.s32.totalorder %s19, 0
    %p130 = por %p128, %p129
    %s132 = sadd.s32 %s131, 1
    %p135 = scmp.eq.s32.totalorder %s13, 1
    %p136 = scmp.ne.s32.totalorder %s131, %s133
    %p137 = scmp.eq.s32.totalorder %s13, 0
    %p138 = por %p136, %p137
    %p139 = scmp.ne.s32.totalorder %s131, %s133
    %p140 = scmp.eq.s32.totalorder %s18, 1
    %p141 = por %p139, %p140
    %p142 = scmp.ne.s32.totalorder %s133, %s134
    %p143 = scmp.eq.s32.totalorder %s18, 0
    %p144 = por %p142, %p143
    %p145 = scmp.ne.s32.totalorder %s133, %s134
    %p146 = scmp.eq.s32.totalorder %s19, 1
    %p147 = por %p145, %p146
    %p149 = scmp.ne.s32.totalorder %s134, %s148
    %p150 = scmp.eq.s32.totalorder %s19, 0
    %p151 = por %p149, %p150
    %s153 = sadd.s32 %s152, 1
    %p156 = scmp.eq.s32.totalorder %s13, 1
    %p157 = scmp.ne.s32.totalorder %s152, %s154
    %p158 = scmp.eq.s32.totalorder %s13, 0
    %p159 = por %p157, %p158
    %p160 = scmp.ne.s32.totalorder %s152, %s154
    %p161 = scmp.eq.s32.totalorder %s18, 1
    %p162 = por %p160, %p161
    %p163 = scmp.ne.s32.totalorder %s154, %s155
    %p164 = scmp.eq.s32.totalorder %s18, 0
    %p165 = por %p163, %p164
    %p166 = scmp.ne.s32.totalorder %s154, %s155
    %p167 = scmp.eq.s32.totalorder %s19, 1
    %p168 = por %p166, %p167
    %p170 = scmp.ne.s32.totalorder %s155, %s169
    %p171 = scmp.eq.s32.totalorder %s19, 0
    %p172 = por %p170, %p171
    %s173 = ssub.s32 %s13, %s20
    %p174 = scmp.eq.s32.totalorder %s173, 0
    %s176 = sadd.s32 %s175, 1
    %s177 = scalar_select %p174, %s175, %s176
    %p180 = pneg %p174
    %p181 = scmp.eq.s32.totalorder %s13, 1
    %p182 = por %p180, %p181
    %p183 = scmp.ne.s32.totalorder %s175, %s178
    %p184 = scmp.eq.s32.totalorder %s13, 0
    %p185 = por %p183, %p184
    %p186 = scmp.ne.s32.totalorder %s175, %s178
    %p187 = scmp.eq.s32.totalorder %s18, 1
    %p188 = por %p186, %p187
    %p189 = scmp.ne.s32.totalorder %s178, %s179
    %p190 = scmp.eq.s32.totalorder %s18, 0
    %p191 = por %p189, %p190
    %p192 = scmp.ne.s32.totalorder %s178, %s179
    %p193 = scmp.eq.s32.totalorder %s19, 1
    %p194 = por %p192, %p193
    %p196 = scmp.ne.s32.totalorder %s179, %s195
    %p197 = scmp.eq.s32.totalorder %s19, 0
    %p198 = por %p196, %p197
    %p199 = scmp.le.s32.totalorder 1, %s13
    %p200 = scmp.lt.s32.totalorder %s13, 3
    %p201 = pnand %p199, %p200
    %p202 = pneg %p201
    // Predicated region
    $region9: #{up_forward.1} parent=5 // pred_check
      _
    $region10: #{up_forward.1} parent=5 // pred_check_branch
      %204 = sbr.rel (%p201) target = $region12
    $region11: #{up_forward.1} parent=5 // pred_region
      %s205 = ssub.s32 %s13, 1
      // Predicated region
      $region13: #{up_forward.1} parent=11 // pred_check
        %p206 = pneg %p60
      $region14: #{up_forward.1} parent=11 // pred_check_branch
        %208 = sbr.rel (%p206) target = $region16
      $region15: #{up_forward.1} parent=11 // pred_region
        _
      $region16: #{up_forward.1} parent=11 // pred_fallthru
        _
      // Predicated region
      $region17: #{up_forward.1} parent=11 // pred_check
        %p209 = pneg %p81
      $region18: #{up_forward.1} parent=11 // pred_check_branch
        %211 = sbr.rel (%p209) target = $region20
      $region19: #{up_forward.1} parent=11 // pred_region
        _
      $region20: #{up_forward.1} parent=11 // pred_fallthru
        _
      // Predicated region
      $region21: #{up_forward.1} parent=11 // pred_check
        %p212 = pneg %p102
      $region22: #{up_forward.1} parent=11 // pred_check_branch
        %214 = sbr.rel (%p212) target = $region24
      $region23: #{up_forward.1} parent=11 // pred_region
        _
      $region24: #{up_forward.1} parent=11 // pred_fallthru
        _
      // Predicated region
      $region25: #{up_forward.1} parent=11 // pred_check
        %p215 = pneg %p123
      $region26: #{up_forward.1} parent=11 // pred_check_branch
        %217 = sbr.rel (%p215) target = $region28
      $region27: #{up_forward.1} parent=11 // pred_region
        _
      $region28: #{up_forward.1} parent=11 // pred_fallthru
        _
      // Predicated region
      $region29: #{up_forward.1} parent=11 // pred_check
        %p218 = pneg %p144
      $region30: #{up_forward.1} parent=11 // pred_check_branch
        %220 = sbr.rel (%p218) target = $region32
      $region31: #{up_forward.1} parent=11 // pred_region
        _
      $region32: #{up_forward.1} parent=11 // pred_fallthru
        _
      // Predicated region
      $region33: #{up_forward.1} parent=11 // pred_check
        %p221 = pneg %p165
      $region34: #{up_forward.1} parent=11 // pred_check_branch
        %223 = sbr.rel (%p221) target = $region36
      $region35: #{up_forward.1} parent=11 // pred_region
        _
      $region36: #{up_forward.1} parent=11 // pred_fallthru
        _
    $region12: #{up_forward.1} parent=5 // pred_fallthru
      _
    %p224 = scmp.lt.s32.totalorder %s13, 2
    // Predicated region
    $region37: #{up_forward.1} parent=5 // pred_check
      %p225 = pneg %p224
    $region38: #{up_forward.1} parent=5 // pred_check_branch
      %227 = sbr.rel (%p225) target = $region40
    $region39: #{up_forward.1} parent=5 // pred_region
      // Predicated region
      $region41: #{up_forward.1} parent=39 // pred_check
        %p228 = pneg %p33
      $region42: #{up_forward.1} parent=39 // pred_check_branch
        %230 = sbr.rel (%p228) target = $region44
      $region43: #{up_forward.1} parent=39 // pred_region
        %p231 = scmp.lt.s32.totalorder %s13, 1
        %s232 = scalar_select %p231, %s13, 1
        %s233 = smul.addr %s232, 32
        %s234 = smul.addr %s233, 4
        %s235 = scalar_lea.vmem %s0, %s234
      $region44: #{up_forward.1} parent=39 // pred_fallthru
        _
    $region40: #{up_forward.1} parent=5 // pred_fallthru
      _
    %p236 = scmp.le.s32.totalorder 1, %s13
    %p237 = scmp.lt.s32.totalorder %s13, 3
    %p238 = pnand %p236, %p237
    %p239 = pneg %p238
    // Predicated region
    $region45: #{up_forward.1} parent=5 // pred_check
      _
    $region46: #{up_forward.1} parent=5 // pred_check_branch
      %241 = sbr.rel (%p238) target = $region48
    $region47: #{up_forward.1} parent=5 // pred_region
      %s242 = ssub.s32 %s13, 1
      %p243 = scmp.lt.s32.totalorder %s18, 1
      %s244 = scalar_select %p243, %s18, 1
      %s245 = smul.addr %s244, 32
      %s246 = smul.addr %s245, 4
      %s247 = scalar_lea.vmem %s0, %s246
      %p248 = pneg %p39
      %p249 = pneg %p36
      %p250 = pneg %p60
      %p251 = pneg %p57
      %p252 = pneg %p81
      %p253 = pneg %p78
      %p254 = pneg %p102
      %p255 = pneg %p99
      %p256 = pneg %p123
      %p257 = pneg %p120
      %p258 = pneg %p144
      %p259 = pneg %p141
      %p260 = pneg %p165
      %p261 = pneg %p162
      %p262 = pneg %p191
      %p263 = pneg %p188
      %p264 = scmp.lt.s32.totalorder %s18, 1
      %s265 = scalar_select %p264, %s18, 1
      %s266 = smul.addr %s265, 32
      %s267 = smul.addr %s266, 4
      %s268 = scalar_lea.vmem %s7, %s267
      %p269 = scmp.lt.s32.totalorder %s18, 1
      %s270 = scalar_select %p269, %s18, 1
      %s271 = smul.addr %s270, 32
      %s272 = smul.addr %s271, 4
      %s273 = scalar_lea.vmem %s0, %s272
      %p274 = scmp.lt.s32.totalorder %s18, 1
      %s275 = scalar_select %p274, %s18, 1
      %s276 = smul.addr %s275, 32
      %s277 = smul.addr %s276, 4
      %s278 = scalar_lea.vmem %s7, %s277
      %vm280 = vcmask 60419
      %vm281 = vsmask.f32 7950
      %vm282 = vmand %vm280, %vm281
      %v283 = vld [vmem:[#allocation2 + $0x4] sm:$0x8]
      %v284 = vsel %vm282, 0, %v283
      %285 = vst [vmem:[#allocation2 + $0x4] sm:$0x8] %v284
      %v286 = vld [vmem:[#allocation2 + $0x18] sm:$0x8]
      %v287 = vsel %vm282, 0, %v286
      %288 = vst [vmem:[#allocation2 + $0x18] sm:$0x8] %v287
      %v289 = vld [vmem:[#allocation2 + $0x2c] sm:$0x8]
      %v290 = vsel %vm282, 0, %v289
      %291 = vst [vmem:[#allocation2 + $0x2c] sm:$0x8] %v290
      %v292 = vld [vmem:[#allocation2 + $0x40] sm:$0x8]
      %v293 = vsel %vm282, 0, %v292
      %294 = vst [vmem:[#allocation2 + $0x40] sm:$0x8] %v293
      %v295 = vld [vmem:[#allocation2 + $0x54] sm:$0x8]
      %v296 = vsel %vm282, 0, %v295
      %297 = vst [vmem:[#allocation2 + $0x54] sm:$0x8] %v296
      %v298 = vld [vmem:[#allocation2 + $0x68] sm:$0x8]
      %v299 = vsel %vm282, 0, %v298
      %300 = vst [vmem:[#allocation2 + $0x68] sm:$0x8] %v299
      %v301 = vld [vmem:[#allocation2 + $0x7c] sm:$0x8]
      %v302 = vsel %vm282, 0, %v301
      %303 = vst [vmem:[#allocation2 + $0x7c] sm:$0x8] %v302
      %v304 = vld [vmem:[#allocation2 + $0x90] sm:$0x8]
      %v305 = vsel %vm282, 0, %v304
      %306 = vst [vmem:[#allocation2 + $0x90] sm:$0x8] %v305
      %v307 = vld [vmem:[#allocation2 + $0xa4] sm:$0x8]
      %v308 = vsel %vm282, 0, %v307
      %309 = vst [vmem:[#allocation2 + $0xa4] sm:$0x8] %v308
      %v310 = vld [vmem:[#allocation2 + $0xb8] sm:$0x8]
      %v311 = vsel %vm282, 0, %v310
      %312 = vst [vmem:[#allocation2 + $0xb8] sm:$0x8] %v311
      %v313 = vld [vmem:[#allocation2 + $0xcc] sm:$0x8]
      %v314 = vsel %vm282, 0, %v313
      %315 = vst [vmem:[#allocation2 + $0xcc] sm:$0x8] %v314
      %v316 = vld [vmem:[#allocation2 + $0xe0] sm:$0x8]
      %v317 = vsel %vm282, 0, %v316
      %318 = vst [vmem:[#allocation2 + $0xe0] sm:$0x8] %v317
      %v319 = vld [vmem:[#allocation2 + $0xf4] sm:$0x8]
      %v320 = vsel %vm282, 0, %v319
      %321 = vst [vmem:[#allocation2 + $0xf4] sm:$0x8] %v320
      %v322 = vld [vmem:[#allocation2 + $0x108] sm:$0x8]
      %v323 = vsel %vm282, 0, %v322
      %324 = vst [vmem:[#allocation2 + $0x108] sm:$0x8] %v323
      %v325 = vld [vmem:[#allocation2 + $0x11c] sm:$0x8]
      %v326 = vsel %vm282, 0, %v325
      %327 = vst [vmem:[#allocation2 + $0x11c] sm:$0x8] %v326
      %v328 = vld [vmem:[#allocation2 + $0x130] sm:$0x8]
      %v329 = vsel %vm282, 0, %v328
      %330 = vst [vmem:[#allocation2 + $0x130] sm:$0x8] %v329
      %v331 = vld [vmem:[#allocation2 + $0x144] sm:$0x8]
      %v332 = vsel %vm282, 0, %v331
      %333 = vst [vmem:[#allocation2 + $0x144] sm:$0x8] %v332
      %v334 = vld [vmem:[#allocation2 + $0x158] sm:$0x8]
      %v335 = vsel %vm282, 0, %v334
      %336 = vst [vmem:[#allocation2 + $0x158] sm:$0x8] %v335
      %vm337 = vcmask 57344
      %vm338 = vsmask.f32 256
      %vm339 = vmand %vm337, %vm338
      %v340 = vld [vmem:[#allocation2 + $0x10] sm:$0x1]
      %v341 = vsel %vm339, 0, %v340
      %342 = vst [vmem:[#allocation2 + $0x10] sm:$0x1] %v341
      %v343 = vld [vmem:[#allocation2 + $0x24] sm:$0x1]
      %v344 = vsel %vm339, 0, %v343
      %345 = vst [vmem:[#allocation2 + $0x24] sm:$0x1] %v344
      %v346 = vld [vmem:[#allocation2 + $0x38] sm:$0x1]
      %v347 = vsel %vm339, 0, %v346
      %348 = vst [vmem:[#allocation2 + $0x38] sm:$0x1] %v347
      %v349 = vld [vmem:[#allocation2 + $0x4c] sm:$0x1]
      %v350 = vsel %vm339, 0, %v349
      %351 = vst [vmem:[#allocation2 + $0x4c] sm:$0x1] %v350
      %v352 = vld [vmem:[#allocation2 + $0x60] sm:$0x1]
      %v353 = vsel %vm339, 0, %v352
      %354 = vst [vmem:[#allocation2 + $0x60] sm:$0x1] %v353
      %v355 = vld [vmem:[#allocation2 + $0x74] sm:$0x1]
      %v356 = vsel %vm339, 0, %v355
      %357 = vst [vmem:[#allocation2 + $0x74] sm:$0x1] %v356
      %v358 = vld [vmem:[#allocation2 + $0x88] sm:$0x1]
      %v359 = vsel %vm339, 0, %v358
      %360 = vst [vmem:[#allocation2 + $0x88] sm:$0x1] %v359
      %v361 = vld [vmem:[#allocation2 + $0x9c] sm:$0x1]
      %v362 = vsel %vm339, 0, %v361
      %363 = vst [vmem:[#allocation2 + $0x9c] sm:$0x1] %v362
      %v364 = vld [vmem:[#allocation2 + $0xb0] sm:$0x1]
      %v365 = vsel %vm339, 0, %v364
      %366 = vst [vmem:[#allocation2 + $0xb0] sm:$0x1] %v365
      %v367 = vld [vmem:[#allocation2 + $0xc4] sm:$0x1]
      %v368 = vsel %vm339, 0, %v367
      %369 = vst [vmem:[#allocation2 + $0xc4] sm:$0x1] %v368
      %v370 = vld [vmem:[#allocation2 + $0xd8] sm:$0x1]
      %v371 = vsel %vm339, 0, %v370
      %372 = vst [vmem:[#allocation2 + $0xd8] sm:$0x1] %v371
      %v373 = vld [vmem:[#allocation2 + $0xec] sm:$0x1]
      %v374 = vsel %vm339, 0, %v373
      %375 = vst [vmem:[#allocation2 + $0xec] sm:$0x1] %v374
      %v376 = vld [vmem:[#allocation2 + $0x100] sm:$0x1]
      %v377 = vsel %vm339, 0, %v376
      %378 = vst [vmem:[#allocation2 + $0x100] sm:$0x1] %v377
      %v379 = vld [vmem:[#allocation2 + $0x114] sm:$0x1]
      %v380 = vsel %vm339, 0, %v379
      %381 = vst [vmem:[#allocation2 + $0x114] sm:$0x1] %v380
      %v382 = vld [vmem:[#allocation2 + $0x128] sm:$0x1]
      %v383 = vsel %vm339, 0, %v382
      %384 = vst [vmem:[#allocation2 + $0x128] sm:$0x1] %v383
      %v385 = vld [vmem:[#allocation2 + $0x13c] sm:$0x1]
      %v386 = vsel %vm339, 0, %v385
      %387 = vst [vmem:[#allocation2 + $0x13c] sm:$0x1] %v386
      %v388 = vld [vmem:[#allocation2 + $0x150] sm:$0x1]
      %v389 = vsel %vm339, 0, %v388
      %390 = vst [vmem:[#allocation2 + $0x150] sm:$0x1] %v389
      %v391 = vld [vmem:[#allocation2 + $0x164] sm:$0x1]
      %v392 = vsel %vm339, 0, %v391
      %393 = vst [vmem:[#allocation2 + $0x164] sm:$0x1] %v392
      %v394 = vld [vmem:[#allocation2 + $0x4] sm:$0x8]
      %v395 = vsel %vm282, 0, %v394
      %396 = vst [vmem:[#allocation2 + $0x4] sm:$0x8] %v395
      %vm397 = vcmask 60416
      %398 = vst.msk [vmem:[#allocation2 + $0x8] sm:$0xf] %vm397, 0
      %399 = vst.msk [vmem:[#allocation2 + $0xc] sm:$0xf] %vm397, 0
      %v400 = vld [vmem:[#allocation2 + $0x10] sm:$0x1]
      %v401 = vsel %vm339, 0, %v400
      %402 = vst [vmem:[#allocation2 + $0x10] sm:$0x1] %v401
      %s403 = scalar_lea.vmem [#allocation2], 340
      %v404 = vld [vmem:[%s403 + $0x4] sm:$0x8]
      %v405 = vsel %vm282, 0, %v404
      %406 = vst [vmem:[%s403 + $0x4] sm:$0x8] %v405
      %407 = vst.msk [vmem:[%s403 + $0x8] sm:$0xf] %vm397, 0
      %408 = vst.msk [vmem:[%s403 + $0xc] sm:$0xf] %vm397, 0
      %v409 = vld [vmem:[%s403 + $0x10] sm:$0x1]
      %v410 = vsel %vm339, 0, %v409
      %411 = vst [vmem:[%s403 + $0x10] sm:$0x1] %v410
      %vm412 = vcmask 27651
      %vm413 = vmand %vm412, %vm281
      %v414 = vld [vmem:[#allocation3 + $0x4] sm:$0x8]
      %v415 = vsel %vm413, 0, %v414
      %416 = vst [vmem:[#allocation3 + $0x4] sm:$0x8] %v415
      %v417 = vld [vmem:[#allocation3 + $0x18] sm:$0x8]
      %v418 = vsel %vm413, 0, %v417
      %419 = vst [vmem:[#allocation3 + $0x18] sm:$0x8] %v418
      %v420 = vld [vmem:[#allocation3 + $0x2c] sm:$0x8]
      %v421 = vsel %vm413, 0, %v420
      %422 = vst [vmem:[#allocation3 + $0x2c] sm:$0x8] %v421
      %v423 = vld [vmem:[#allocation3 + $0x40] sm:$0x8]
      %v424 = vsel %vm413, 0, %v423
      %425 = vst [vmem:[#allocation3 + $0x40] sm:$0x8] %v424
      %v426 = vld [vmem:[#allocation3 + $0x54] sm:$0x8]
      %v427 = vsel %vm413, 0, %v426
      %428 = vst [vmem:[#allocation3 + $0x54] sm:$0x8] %v427
      %v429 = vld [vmem:[#allocation3 + $0x68] sm:$0x8]
      %v430 = vsel %vm413, 0, %v429
      %431 = vst [vmem:[#allocation3 + $0x68] sm:$0x8] %v430
      %v432 = vld [vmem:[#allocation3 + $0x7c] sm:$0x8]
      %v433 = vsel %vm413, 0, %v432
      %434 = vst [vmem:[#allocation3 + $0x7c] sm:$0x8] %v433
      %v435 = vld [vmem:[#allocation3 + $0x90] sm:$0x8]
      %v436 = vsel %vm413, 0, %v435
      %437 = vst [vmem:[#allocation3 + $0x90] sm:$0x8] %v436
      %v438 = vld [vmem:[#allocation3 + $0xa4] sm:$0x8]
      %v439 = vsel %vm413, 0, %v438
      %440 = vst [vmem:[#allocation3 + $0xa4] sm:$0x8] %v439
      %v441 = vld [vmem:[#allocation3 + $0xb8] sm:$0x8]
      %v442 = vsel %vm413, 0, %v441
      %443 = vst [vmem:[#allocation3 + $0xb8] sm:$0x8] %v442
      %v444 = vld [vmem:[#allocation3 + $0xcc] sm:$0x8]
      %v445 = vsel %vm413, 0, %v444
      %446 = vst [vmem:[#allocation3 + $0xcc] sm:$0x8] %v445
      %v447 = vld [vmem:[#allocation3 + $0xe0] sm:$0x8]
      %v448 = vsel %vm413, 0, %v447
      %449 = vst [vmem:[#allocation3 + $0xe0] sm:$0x8] %v448
      %v450 = vld [vmem:[#allocation3 + $0xf4] sm:$0x8]
      %v451 = vsel %vm413, 0, %v450
      %452 = vst [vmem:[#allocation3 + $0xf4] sm:$0x8] %v451
      %v453 = vld [vmem:[#allocation3 + $0x108] sm:$0x8]
      %v454 = vsel %vm413, 0, %v453
      %455 = vst [vmem:[#allocation3 + $0x108] sm:$0x8] %v454
      %v456 = vld [vmem:[#allocation3 + $0x11c] sm:$0x8]
      %v457 = vsel %vm413, 0, %v456
      %458 = vst [vmem:[#allocation3 + $0x11c] sm:$0x8] %v457
      %v459 = vld [vmem:[#allocation3 + $0x130] sm:$0x8]
      %v460 = vsel %vm413, 0, %v459
      %461 = vst [vmem:[#allocation3 + $0x130] sm:$0x8] %v460
      %v462 = vld [vmem:[#allocation3 + $0x144] sm:$0x8]
      %v463 = vsel %vm413, 0, %v462
      %464 = vst [vmem:[#allocation3 + $0x144] sm:$0x8] %v463
      %v465 = vld [vmem:[#allocation3 + $0x158] sm:$0x8]
      %v466 = vsel %vm413, 0, %v465
      %467 = vst [vmem:[#allocation3 + $0x158] sm:$0x8] %v466
      %vm468 = vcmask 24576
      %vm469 = vmand %vm468, %vm338
      %v470 = vld [vmem:[#allocation3 + $0x10] sm:$0x1]
      %v471 = vsel %vm469, 0, %v470
      %472 = vst [vmem:[#allocation3 + $0x10] sm:$0x1] %v471
      %v473 = vld [vmem:[#allocation3 + $0x24] sm:$0x1]
      %v474 = vsel %vm469, 0, %v473
      %475 = vst [vmem:[#allocation3 + $0x24] sm:$0x1] %v474
      %v476 = vld [vmem:[#allocation3 + $0x38] sm:$0x1]
      %v477 = vsel %vm469, 0, %v476
      %478 = vst [vmem:[#allocation3 + $0x38] sm:$0x1] %v477
      %v479 = vld [vmem:[#allocation3 + $0x4c] sm:$0x1]
      %v480 = vsel %vm469, 0, %v479
      %481 = vst [vmem:[#allocation3 + $0x4c] sm:$0x1] %v480
      %v482 = vld [vmem:[#allocation3 + $0x60] sm:$0x1]
      %v483 = vsel %vm469, 0, %v482
      %484 = vst [vmem:[#allocation3 + $0x60] sm:$0x1] %v483
      %v485 = vld [vmem:[#allocation3 + $0x74] sm:$0x1]
      %v486 = vsel %vm469, 0, %v485
      %487 = vst [vmem:[#allocation3 + $0x74] sm:$0x1] %v486
      %v488 = vld [vmem:[#allocation3 + $0x88] sm:$0x1]
      %v489 = vsel %vm469, 0, %v488
      %490 = vst [vmem:[#allocation3 + $0x88] sm:$0x1] %v489
      %v491 = vld [vmem:[#allocation3 + $0x9c] sm:$0x1]
      %v492 = vsel %vm469, 0, %v491
      %493 = vst [vmem:[#allocation3 + $0x9c] sm:$0x1] %v492
      %v494 = vld [vmem:[#allocation3 + $0xb0] sm:$0x1]
      %v495 = vsel %vm469, 0, %v494
      %496 = vst [vmem:[#allocation3 + $0xb0] sm:$0x1] %v495
      %v497 = vld [vmem:[#allocation3 + $0xc4] sm:$0x1]
      %v498 = vsel %vm469, 0, %v497
      %499 = vst [vmem:[#allocation3 + $0xc4] sm:$0x1] %v498
      %v500 = vld [vmem:[#allocation3 + $0xd8] sm:$0x1]
      %v501 = vsel %vm469, 0, %v500
      %502 = vst [vmem:[#allocation3 + $0xd8] sm:$0x1] %v501
      %v503 = vld [vmem:[#allocation3 + $0xec] sm:$0x1]
      %v504 = vsel %vm469, 0, %v503
      %505 = vst [vmem:[#allocation3 + $0xec] sm:$0x1] %v504
      %v506 = vld [vmem:[#allocation3 + $0x100] sm:$0x1]
      %v507 = vsel %vm469, 0, %v506
      %508 = vst [vmem:[#allocation3 + $0x100] sm:$0x1] %v507
      %v509 = vld [vmem:[#allocation3 + $0x114] sm:$0x1]
      %v510 = vsel %vm469, 0, %v509
      %511 = vst [vmem:[#allocation3 + $0x114] sm:$0x1] %v510
      %v512 = vld [vmem:[#allocation3 + $0x128] sm:$0x1]
      %v513 = vsel %vm469, 0, %v512
      %514 = vst [vmem:[#allocation3 + $0x128] sm:$0x1] %v513
      %v515 = vld [vmem:[#allocation3 + $0x13c] sm:$0x1]
      %v516 = vsel %vm469, 0, %v515
      %517 = vst [vmem:[#allocation3 + $0x13c] sm:$0x1] %v516
      %v518 = vld [vmem:[#allocation3 + $0x150] sm:$0x1]
      %v519 = vsel %vm469, 0, %v518
      %520 = vst [vmem:[#allocation3 + $0x150] sm:$0x1] %v519
      %v521 = vld [vmem:[#allocation3 + $0x164] sm:$0x1]
      %v522 = vsel %vm469, 0, %v521
      %523 = vst [vmem:[#allocation3 + $0x164] sm:$0x1] %v522
      %v524 = vld [vmem:[#allocation3 + $0x4] sm:$0x8]
      %v525 = vsel %vm413, 0, %v524
      %526 = vst [vmem:[#allocation3 + $0x4] sm:$0x8] %v525
      %vm527 = vcmask 27648
      %528 = vst.msk [vmem:[#allocation3 + $0x8] sm:$0xf] %vm527, 0
      %529 = vst.msk [vmem:[#allocation3 + $0xc] sm:$0xf] %vm527, 0
      %v530 = vld [vmem:[#allocation3 + $0x10] sm:$0x1]
      %v531 = vsel %vm469, 0, %v530
      %532 = vst [vmem:[#allocation3 + $0x10] sm:$0x1] %v531
      %s533 = scalar_lea.vmem [#allocation3], 340
      %v534 = vld [vmem:[%s533 + $0x4] sm:$0x8]
      %v535 = vsel %vm413, 0, %v534
      %536 = vst [vmem:[%s533 + $0x4] sm:$0x8] %v535
      %537 = vst.msk [vmem:[%s533 + $0x8] sm:$0xf] %vm527, 0
      %538 = vst.msk [vmem:[%s533 + $0xc] sm:$0xf] %vm527, 0
      %v539 = vld [vmem:[%s533 + $0x10] sm:$0x1]
      %v540 = vsel %vm469, 0, %v539
      %541 = vst [vmem:[%s533 + $0x10] sm:$0x1] %v540
      %v542 = vld [vmem:[%s273] sm:$0xf]
      %v543 = vld [vmem:[%s273 + $0x4] sm:$0xf]
      %v544 = vld [vmem:[%s273 + $0x8] sm:$0xf]
      %v545 = vld [vmem:[%s273 + $0xc] sm:$0xf]
      %v546 = vld [vmem:[%s273 + $0x10] sm:$0xf]
      %v547 = vld [vmem:[%s273 + $0x14] sm:$0xf]
      %v548 = vld [vmem:[%s273 + $0x18] sm:$0xf]
      %v549 = vld [vmem:[%s273 + $0x1c] sm:$0xf]
      %v550 = vld [vmem:[%s273 + $0x20] sm:$0xf]
      %v551 = vld [vmem:[%s273 + $0x24] sm:$0xf]
      %v552 = vld [vmem:[%s273 + $0x28] sm:$0xf]
      %v553 = vld [vmem:[%s273 + $0x2c] sm:$0xf]
      %v554 = vld [vmem:[%s273 + $0x30] sm:$0xf]
      %v555 = vld [vmem:[%s273 + $0x34] sm:$0xf]
      %v556 = vld [vmem:[%s273 + $0x38] sm:$0xf]
      %v557 = vld [vmem:[%s273 + $0x3c] sm:$0xf]
      %v558 = vld [vmem:[%s273 + $0x40] sm:$0xf]
      %v559 = vld [vmem:[%s273 + $0x44] sm:$0xf]
      %v560 = vld [vmem:[%s273 + $0x48] sm:$0xf]
      %v561 = vld [vmem:[%s273 + $0x4c] sm:$0xf]
      %v562 = vld [vmem:[%s273 + $0x50] sm:$0xf]
      %v563 = vld [vmem:[%s273 + $0x54] sm:$0xf]
      %v564 = vld [vmem:[%s273 + $0x58] sm:$0xf]
      %v565 = vld [vmem:[%s273 + $0x5c] sm:$0xf]
      %v566 = vld [vmem:[%s273 + $0x60] sm:$0xf]
      %v567 = vld [vmem:[%s273 + $0x64] sm:$0xf]
      %v568 = vld [vmem:[%s273 + $0x68] sm:$0xf]
      %v569 = vld [vmem:[%s273 + $0x6c] sm:$0xf]
      %v570 = vld [vmem:[%s273 + $0x70] sm:$0xf]
      %v571 = vld [vmem:[%s273 + $0x74] sm:$0xf]
      %v572 = vld [vmem:[%s273 + $0x78] sm:$0xf]
      %v573 = vld [vmem:[%s273 + $0x7c] sm:$0xf]
      %s574 = scalar_lea.vmem [#allocation2], 20
      %575 = vst.msk [vmem:[%s574 + $0x8] sm:$0xf] %vm397, %v542
      %576 = vst.msk [vmem:[%s574 + $0xc] sm:$0xf] %vm397, %v543
      %577 = vst.msk [vmem:[%s574 + $0x1c] sm:$0xf] %vm397, %v544
      %578 = vst.msk [vmem:[%s574 + $0x20] sm:$0xf] %vm397, %v545
      %579 = vst.msk [vmem:[%s574 + $0x30] sm:$0xf] %vm397, %v546
      %580 = vst.msk [vmem:[%s574 + $0x34] sm:$0xf] %vm397, %v547
      %581 = vst.msk [vmem:[%s574 + $0x44] sm:$0xf] %vm397, %v548
      %582 = vst.msk [vmem:[%s574 + $0x48] sm:$0xf] %vm397, %v549
      %583 = vst.msk [vmem:[%s574 + $0x58] sm:$0xf] %vm397, %v550
      %584 = vst.msk [vmem:[%s574 + $0x5c] sm:$0xf] %vm397, %v551
      %585 = vst.msk [vmem:[%s574 + $0x6c] sm:$0xf] %vm397, %v552
      %586 = vst.msk [vmem:[%s574 + $0x70] sm:$0xf] %vm397, %v553
      %587 = vst.msk [vmem:[%s574 + $0x80] sm:$0xf] %vm397, %v554
      %588 = vst.msk [vmem:[%s574 + $0x84] sm:$0xf] %vm397, %v555
      %589 = vst.msk [vmem:[%s574 + $0x94] sm:$0xf] %vm397, %v556
      %590 = vst.msk [vmem:[%s574 + $0x98] sm:$0xf] %vm397, %v557
      %591 = vst.msk [vmem:[%s574 + $0xa8] sm:$0xf] %vm397, %v558
      %592 = vst.msk [vmem:[%s574 + $0xac] sm:$0xf] %vm397, %v559
      %593 = vst.msk [vmem:[%s574 + $0xbc] sm:$0xf] %vm397, %v560
      %594 = vst.msk [vmem:[%s574 + $0xc0] sm:$0xf] %vm397, %v561
      %595 = vst.msk [vmem:[%s574 + $0xd0] sm:$0xf] %vm397, %v562
      %596 = vst.msk [vmem:[%s574 + $0xd4] sm:$0xf] %vm397, %v563
      %597 = vst.msk [vmem:[%s574 + $0xe4] sm:$0xf] %vm397, %v564
      %598 = vst.msk [vmem:[%s574 + $0xe8] sm:$0xf] %vm397, %v565
      %599 = vst.msk [vmem:[%s574 + $0xf8] sm:$0xf] %vm397, %v566
      %600 = vst.msk [vmem:[%s574 + $0xfc] sm:$0xf] %vm397, %v567
      %601 = vst.msk [vmem:[%s574 + $0x10c] sm:$0xf] %vm397, %v568
      %602 = vst.msk [vmem:[%s574 + $0x110] sm:$0xf] %vm397, %v569
      %603 = vst.msk [vmem:[%s574 + $0x120] sm:$0xf] %vm397, %v570
      %604 = vst.msk [vmem:[%s574 + $0x124] sm:$0xf] %vm397, %v571
      %605 = vst.msk [vmem:[%s574 + $0x134] sm:$0xf] %vm397, %v572
      %606 = vst.msk [vmem:[%s574 + $0x138] sm:$0xf] %vm397, %v573
      %v607 = vld [vmem:[#allocation2 + $0x4] sm:$0x8]
      %v608 = vld [vmem:[#allocation2 + $0x8] sm:$0xf]
      %v609 = vld [vmem:[#allocation2 + $0xc] sm:$0xf]
      %v610 = vld [vmem:[#allocation2 + $0x18] sm:$0x8]
      %v611 = vld [vmem:[#allocation2 + $0x1c] sm:$0xf]
      %v612 = vld [vmem:[#allocation2 + $0x20] sm:$0xf]
      %v613 = vld [vmem:[#allocation2 + $0x2c] sm:$0x8]
      %v614 = vld [vmem:[#allocation2 + $0x30] sm:$0xf]
      %v615 = vld [vmem:[#allocation2 + $0x34] sm:$0xf]
      %v616 = vld [vmem:[#allocation2 + $0x40] sm:$0x8]
      %v617 = vld [vmem:[#allocation2 + $0x44] sm:$0xf]
      %v618 = vld [vmem:[#allocation2 + $0x48] sm:$0xf]
      %v619 = vld [vmem:[#allocation2 + $0x54] sm:$0x8]
      %v620 = vld [vmem:[#allocation2 + $0x58] sm:$0xf]
      %v621 = vld [vmem:[#allocation2 + $0x5c] sm:$0xf]
      %v622 = vld [vmem:[#allocation2 + $0x68] sm:$0x8]
      %v623 = vld [vmem:[#allocation2 + $0x6c] sm:$0xf]
      %v624 = vld [vmem:[#allocation2 + $0x70] sm:$0xf]
      %v625 = vld [vmem:[#allocation2 + $0x7c] sm:$0x8]
      %v626 = vld [vmem:[#allocation2 + $0x80] sm:$0xf]
      %v627 = vld [vmem:[#allocation2 + $0x84] sm:$0xf]
      %v628 = vld [vmem:[#allocation2 + $0x90] sm:$0x8]
      %v629 = vld [vmem:[#allocation2 + $0x94] sm:$0xf]
      %v630 = vld [vmem:[#allocation2 + $0x98] sm:$0xf]
      %vm631 = vsmask.f32 4368
      %vm632 = vmor %vm338, %vm631
      %v634 = vshrl.u32 %v607, 16
      %v636 = vrot.slane %v634, 7
      %v637 = vrot.slane %v636, 4
      %v639 = vshrl.u32 %v608, 16
      %v641 = vrot.slane %v639, 7
      %v642 = vshll.u32 %v608, 16
      %v644 = vor.u32 %v641, %v642
      %v645 = vsel %vm632, %v637, %v644
      %v646 = vrot.slane %v641, 4
      %v648 = vshrl.u32 %v609, 16
      %v650 = vrot.slane %v648, 7
      %v651 = vshll.u32 %v609, 16
      %v653 = vor.u32 %v650, %v651
      %v654 = vsel %vm632, %v646, %v653
      %v656 = vshrl.u32 %v610, 16
      %v658 = vrot.slane %v656, 7
      %v659 = vrot.slane %v658, 4
      %v661 = vshrl.u32 %v611, 16
      %v663 = vrot.slane %v661, 7
      %v664 = vshll.u32 %v611, 16
      %v666 = vor.u32 %v663, %v664
      %v667 = vsel %vm632, %v659, %v666
      %v668 = vrot.slane %v663, 4
      %v670 = vshrl.u32 %v612, 16
      %v672 = vrot.slane %v670, 7
      %v673 = vshll.u32 %v612, 16
      %v675 = vor.u32 %v672, %v673
      %v676 = vsel %vm632, %v668, %v675
      %v678 = vshrl.u32 %v613, 16
      %v680 = vrot.slane %v678, 7
      %v681 = vrot.slane %v680, 4
      %v683 = vshrl.u32 %v614, 16
      %v685 = vrot.slane %v683, 7
      %v686 = vshll.u32 %v614, 16
      %v688 = vor.u32 %v685, %v686
      %v689 = vsel %vm632, %v681, %v688
      %v690 = vrot.slane %v685, 4
      %v692 = vshrl.u32 %v615, 16
      %v694 = vrot.slane %v692, 7
      %v695 = vshll.u32 %v615, 16
      %v697 = vor.u32 %v694, %v695
      %v698 = vsel %vm632, %v690, %v697
      %v700 = vshrl.u32 %v616, 16
      %v702 = vrot.slane %v700, 7
      %v703 = vrot.slane %v702, 4
      %v705 = vshrl.u32 %v617, 16
      %v707 = vrot.slane %v705, 7
      %v708 = vshll.u32 %v617, 16
      %v710 = vor.u32 %v707, %v708
      %v711 = vsel %vm632, %v703, %v710
      %v712 = vrot.slane %v707, 4
      %v714 = vshrl.u32 %v618, 16
      %v716 = vrot.slane %v714, 7
      %v717 = vshll.u32 %v618, 16
      %v719 = vor.u32 %v716, %v717
      %v720 = vsel %vm632, %v712, %v719
      %v722 = vshrl.u32 %v619, 16
      %v724 = vrot.slane %v722, 7
      %v725 = vrot.slane %v724, 4
      %v727 = vshrl.u32 %v620, 16
      %v729 = vrot.slane %v727, 7
      %v730 = vshll.u32 %v620, 16
      %v732 = vor.u32 %v729, %v730
      %v733 = vsel %vm632, %v725, %v732
      %v734 = vrot.slane %v729, 4
      %v736 = vshrl.u32 %v621, 16
      %v738 = vrot.slane %v736, 7
      %v739 = vshll.u32 %v621, 16
      %v741 = vor.u32 %v738, %v739
      %v742 = vsel %vm632, %v734, %v741
      %v744 = vshrl.u32 %v622, 16
      %v746 = vrot.slane %v744, 7
      %v747 = vrot.slane %v746, 4
      %v749 = vshrl.u32 %v623, 16
      %v751 = vrot.slane %v749, 7
      %v752 = vshll.u32 %v623, 16
      %v754 = vor.u32 %v751, %v752
      %v755 = vsel %vm632, %v747, %v754
      %v756 = vrot.slane %v751, 4
      %v758 = vshrl.u32 %v624, 16
      %v760 = vrot.slane %v758, 7
      %v761 = vshll.u32 %v624, 16
      %v763 = vor.u32 %v760, %v761
      %v764 = vsel %vm632, %v756, %v763
      %v766 = vshrl.u32 %v625, 16
      %v768 = vrot.slane %v766, 7
      %v769 = vrot.slane %v768, 4
      %v771 = vshrl.u32 %v626, 16
      %v773 = vrot.slane %v771, 7
      %v774 = vshll.u32 %v626, 16
      %v776 = vor.u32 %v773, %v774
      %v777 = vsel %vm632, %v769, %v776
      %v778 = vrot.slane %v773, 4
      %v780 = vshrl.u32 %v627, 16
      %v782 = vrot.slane %v780, 7
      %v783 = vshll.u32 %v627, 16
      %v785 = vor.u32 %v782, %v783
      %v786 = vsel %vm632, %v778, %v785
      %v788 = vshrl.u32 %v628, 16
      %v790 = vrot.slane %v788, 7
      %v791 = vrot.slane %v790, 4
      %v793 = vshrl.u32 %v629, 16
      %v795 = vrot.slane %v793, 7
      %v796 = vshll.u32 %v629, 16
      %v798 = vor.u32 %v795, %v796
      %v799 = vsel %vm632, %v791, %v798
      %v800 = vrot.slane %v795, 4
      %v802 = vshrl.u32 %v630, 16
      %v804 = vrot.slane %v802, 7
      %v805 = vshll.u32 %v630, 16
      %v807 = vor.u32 %v804, %v805
      %v808 = vsel %vm632, %v800, %v807
      %v809 = vld [vmem:[%s1] sm:$0xf]
      %s810 = scalar_lea.vmem %s1, 4
      %v811 = vld [vmem:[%s810] sm:$0xf]
      %v828 = vunpack.c.l.b16 %v608
      %v829 = vunpack.c.l.b16 %v609
      %v830 = vunpack.c.l.b16 %v611
      %v831 = vunpack.c.l.b16 %v612
      %v832 = vunpack.c.l.b16 %v614
      %v833 = vunpack.c.l.b16 %v615
      %v834 = vunpack.c.l.b16 %v617
      %v835 = vunpack.c.l.b16 %v618
      %v836 = vunpack.c.l.b16 %v620
      %v837 = vunpack.c.l.b16 %v621
      %v838 = vunpack.c.l.b16 %v623
      %v839 = vunpack.c.l.b16 %v624
      %v840 = vunpack.c.l.b16 %v626
      %v841 = vunpack.c.l.b16 %v627
      %v842 = vunpack.c.l.b16 %v629
      %v843 = vunpack.c.l.b16 %v630
      %v844 = vpack.c.b16 %v829, %v828
      %v845 = vpack.c.b16 %v831, %v830
      %v846 = vpack.c.b16 %v833, %v832
      %v847 = vpack.c.b16 %v835, %v834
      %v848 = vpack.c.b16 %v837, %v836
      %v849 = vpack.c.b16 %v839, %v838
      %v850 = vpack.c.b16 %v841, %v840
      %v851 = vpack.c.b16 %v843, %v842
      %vm852 = vcmask 64512
      %v854 = vsel %vm852, %v844, 0
      %v857 = vsel %vm852, %v845, 0
      %v860 = vsel %vm852, %v846, 0
      %v863 = vsel %vm852, %v847, 0
      %v866 = vsel %vm852, %v848, 0
      %v869 = vsel %vm852, %v849, 0
      %v872 = vsel %vm852, %v850, 0
      %v875 = vsel %vm852, %v851, 0
      %vm877 = vcmask 1043456
      %v879 = vsel %vm877, %v811, 0
      %881 = vmatpush.bf16.msra.mxu0 0
      %882 = vmatpush.bf16.msra.mxu0 0
      %883 = vmatpush.bf16.msra.mxu0 0
      %884 = vmatpush.bf16.msra.mxu0 0
      %885 = vmatpush.bf16.msra.mxu0 0
      %886 = vmatpush.bf16.msra.mxu0 0
      %887 = vmatpush.bf16.msra.mxu0 0
      %888 = vmatpush.bf16.msra.mxu0 %v879
      %889 = vmatmul.bf16.gmra.mxu0 %v854
      %v890 = vpop.f32.mrf.mxu0
      %v891 = vadd.f32 0.0, %v890
      %v892 = vpop.f32.mrf.mxu0
      %v893 = vadd.f32 0.0, %v892
      %894 = vmatmul.bf16.gmra.mxu0 %v857
      %v895 = vpop.f32.mrf.mxu0
      %v896 = vadd.f32 0.0, %v895
      %v897 = vpop.f32.mrf.mxu0
      %v898 = vadd.f32 0.0, %v897
      %899 = vmatmul.bf16.gmra.mxu0 %v860
      %v900 = vpop.f32.mrf.mxu0
      %v901 = vadd.f32 0.0, %v900
      %v902 = vpop.f32.mrf.mxu0
      %v903 = vadd.f32 0.0, %v902
      %904 = vmatmul.bf16.gmra.mxu0 %v863
      %v905 = vpop.f32.mrf.mxu0
      %v906 = vadd.f32 0.0, %v905
      %v907 = vpop.f32.mrf.mxu0
      %v908 = vadd.f32 0.0, %v907
      %909 = vmatmul.bf16.gmra.mxu0 %v866
      %v910 = vpop.f32.mrf.mxu0
      %v911 = vadd.f32 0.0, %v910
      %v912 = vpop.f32.mrf.mxu0
      %v913 = vadd.f32 0.0, %v912
      %914 = vmatmul.bf16.gmra.mxu0 %v869
      %v915 = vpop.f32.mrf.mxu0
      %v916 = vadd.f32 0.0, %v915
      %v917 = vpop.f32.mrf.mxu0
      %v918 = vadd.f32 0.0, %v917
      %919 = vmatmul.bf16.gmra.mxu0 %v872
      %v920 = vpop.f32.mrf.mxu0
      %v921 = vadd.f32 0.0, %v920
      %v922 = vpop.f32.mrf.mxu0
      %v923 = vadd.f32 0.0, %v922
      %924 = vmatmul.bf16.gmra.mxu0 %v875
      %v925 = vpop.f32.mrf.mxu0
      %v926 = vadd.f32 0.0, %v925
      %v927 = vpop.f32.mrf.mxu0
      %v928 = vadd.f32 0.0, %v927
      %929 = vdwg.mxu0
      %v930 = vunpack.c.l.b16 %v645
      %v931 = vunpack.c.l.b16 %v654
      %v932 = vunpack.c.l.b16 %v667
      %v933 = vunpack.c.l.b16 %v676
      %v934 = vunpack.c.l.b16 %v689
      %v935 = vunpack.c.l.b16 %v698
      %v936 = vunpack.c.l.b16 %v711
      %v937 = vunpack.c.l.b16 %v720
      %v938 = vunpack.c.l.b16 %v733
      %v939 = vunpack.c.l.b16 %v742
      %v940 = vunpack.c.l.b16 %v755
      %v941 = vunpack.c.l.b16 %v764
      %v942 = vunpack.c.l.b16 %v777
      %v943 = vunpack.c.l.b16 %v786
      %v944 = vunpack.c.l.b16 %v799
      %v945 = vunpack.c.l.b16 %v808
      %v946 = vpack.c.b16 %v931, %v930
      %v947 = vpack.c.b16 %v933, %v932
      %v948 = vpack.c.b16 %v935, %v934
      %v949 = vpack.c.b16 %v937, %v936
      %v950 = vpack.c.b16 %v939, %v938
      %v951 = vpack.c.b16 %v941, %v940
      %v952 = vpack.c.b16 %v943, %v942
      %v953 = vpack.c.b16 %v945, %v944
      %v955 = vsel %vm852, %v946, 0
      %v958 = vsel %vm852, %v947, 0
      %v961 = vsel %vm852, %v948, 0
      %v964 = vsel %vm852, %v949, 0
      %v967 = vsel %vm852, %v950, 0
      %v970 = vsel %vm852, %v951, 0
      %v973 = vsel %vm852, %v952, 0
      %v976 = vsel %vm852, %v953, 0
      %v979 = vsel %vm877, %v809, 0
      %981 = vmatpush.bf16.msra.mxu0 0
      %982 = vmatpush.bf16.msra.mxu0 0
      %983 = vmatpush.bf16.msra.mxu0 0
      %984 = vmatpush.bf16.msra.mxu0 0
      %985 = vmatpush.bf16.msra.mxu0 0
      %986 = vmatpush.bf16.msra.mxu0 0
      %987 = vmatpush.bf16.msra.mxu0 0
      %988 = vmatpush.bf16.msra.mxu0 %v979
      %989 = vmatmul.bf16.gmra.mxu0 %v955
      %v990 = vpop.f32.mrf.mxu0
      %v991 = vadd.f32 %v891, %v990
      %v992 = vpop.f32.mrf.mxu0
      %v993 = vadd.f32 %v893, %v992
      %994 = vmatmul.bf16.gmra.mxu0 %v958
      %v995 = vpop.f32.mrf.mxu0
      %v996 = vadd.f32 %v896, %v995
      %v997 = vpop.f32.mrf.mxu0
      %v998 = vadd.f32 %v898, %v997
      %999 = vmatmul.bf16.gmra.mxu0 %v961
      %v1000 = vpop.f32.mrf.mxu0
      %v1001 = vadd.f32 %v901, %v1000
      %v1002 = vpop.f32.mrf.mxu0
      %v1003 = vadd.f32 %v903, %v1002
      %1004 = vmatmul.bf16.gmra.mxu0 %v964
      %v1005 = vpop.f32.mrf.mxu0
      %v1006 = vadd.f32 %v906, %v1005
      %v1007 = vpop.f32.mrf.mxu0
      %v1008 = vadd.f32 %v908, %v1007
      %1009 = vmatmul.bf16.gmra.mxu0 %v967
      %v1010 = vpop.f32.mrf.mxu0
      %v1011 = vadd.f32 %v911, %v1010
      %v1012 = vpop.f32.mrf.mxu0
      %v1013 = vadd.f32 %v913, %v1012
      %1014 = vmatmul.bf16.gmra.mxu0 %v970
      %v1015 = vpop.f32.mrf.mxu0
      %v1016 = vadd.f32 %v916, %v1015
      %v1017 = vpop.f32.mrf.mxu0
      %v1018 = vadd.f32 %v918, %v1017
      %1019 = vmatmul.bf16.gmra.mxu0 %v973
      %v1020 = vpop.f32.mrf.mxu0
      %v1021 = vadd.f32 %v921, %v1020
      %v1022 = vpop.f32.mrf.mxu0
      %v1023 = vadd.f32 %v923, %v1022
      %1024 = vmatmul.bf16.gmra.mxu0 %v976
      %v1025 = vpop.f32.mrf.mxu0
      %v1026 = vadd.f32 %v926, %v1025
      %v1027 = vpop.f32.mrf.mxu0
      %v1028 = vadd.f32 %v928, %v1027
      %1029 = vdwg.mxu0
      %v1030 = vld [vmem:[#allocation2 + $0x8] sm:$0xf]
      %v1031 = vld [vmem:[#allocation2 + $0xc] sm:$0xf]
      %v1032 = vld [vmem:[#allocation2 + $0x10] sm:$0x1]
      %v1033 = vld [vmem:[#allocation2 + $0x1c] sm:$0xf]
      %v1034 = vld [vmem:[#allocation2 + $0x20] sm:$0xf]
      %v1035 = vld [vmem:[#allocation2 + $0x24] sm:$0x1]
      %v1036 = vld [vmem:[#allocation2 + $0x30] sm:$0xf]
      %v1037 = vld [vmem:[#allocation2 + $0x34] sm:$0xf]
      %v1038 = vld [vmem:[#allocation2 + $0x38] sm:$0x1]
      %v1039 = vld [vmem:[#allocation2 + $0x44] sm:$0xf]
      %v1040 = vld [vmem:[#allocation2 + $0x48] sm:$0xf]
      %v1041 = vld [vmem:[#allocation2 + $0x4c] sm:$0x1]
      %v1042 = vld [vmem:[#allocation2 + $0x58] sm:$0xf]
      %v1043 = vld [vmem:[#allocation2 + $0x5c] sm:$0xf]
      %v1044 = vld [vmem:[#allocation2 + $0x60] sm:$0x1]
      %v1045 = vld [vmem:[#allocation2 + $0x6c] sm:$0xf]
      %v1046 = vld [vmem:[#allocation2 + $0x70] sm:$0xf]
      %v1047 = vld [vmem:[#allocation2 + $0x74] sm:$0x1]
      %v1048 = vld [vmem:[#allocation2 + $0x80] sm:$0xf]
      %v1049 = vld [vmem:[#allocation2 + $0x84] sm:$0xf]
      %v1050 = vld [vmem:[#allocation2 + $0x88] sm:$0x1]
      %v1051 = vld [vmem:[#allocation2 + $0x94] sm:$0xf]
      %v1052 = vld [vmem:[#allocation2 + $0x98] sm:$0xf]
      %v1053 = vld [vmem:[#allocation2 + $0x9c] sm:$0x1]
      %vm1054 = vsmask.f32 3328
      %vm1055 = vsmask.f32 7440
      %vm1056 = vmor %vm1054, %vm1055
      %v1058 = vshrl.u32 %v1030, 16
      %v1060 = vrot.slane %v1058, 4
      %v1061 = vshll.u32 %v1030, 16
      %v1063 = vrot.slane %v1061, 5
      %v1064 = vor.u32 %v1060, %v1063
      %v1065 = vrot.slane %v1064, 4
      %v1067 = vshll.u32 %v1031, 16
      %v1069 = vrot.slane %v1067, 5
      %v1070 = vsel %vm1056, %v1065, %v1069
      %v1071 = vshrl.u32 %v1031, 16
      %v1073 = vrot.slane %v1071, 4
      %v1074 = vor.u32 %v1073, %v1069
      %v1075 = vrot.slane %v1074, 4
      %v1077 = vshll.u32 %v1032, 16
      %v1079 = vrot.slane %v1077, 5
      %v1080 = vsel %vm1056, %v1075, %v1079
      %v1082 = vshrl.u32 %v1033, 16
      %v1084 = vrot.slane %v1082, 4
      %v1085 = vshll.u32 %v1033, 16
      %v1087 = vrot.slane %v1085, 5
      %v1088 = vor.u32 %v1084, %v1087
      %v1089 = vrot.slane %v1088, 4
      %v1091 = vshll.u32 %v1034, 16
      %v1093 = vrot.slane %v1091, 5
      %v1094 = vsel %vm1056, %v1089, %v1093
      %v1095 = vshrl.u32 %v1034, 16
      %v1097 = vrot.slane %v1095, 4
      %v1098 = vor.u32 %v1097, %v1093
      %v1099 = vrot.slane %v1098, 4
      %v1101 = vshll.u32 %v1035, 16
      %v1103 = vrot.slane %v1101, 5
      %v1104 = vsel %vm1056, %v1099, %v1103
      %v1106 = vshrl.u32 %v1036, 16
      %v1108 = vrot.slane %v1106, 4
      %v1109 = vshll.u32 %v1036, 16
      %v1111 = vrot.slane %v1109, 5
      %v1112 = vor.u32 %v1108, %v1111
      %v1113 = vrot.slane %v1112, 4
      %v1115 = vshll.u32 %v1037, 16
      %v1117 = vrot.slane %v1115, 5
      %v1118 = vsel %vm1056, %v1113, %v1117
      %v1119 = vshrl.u32 %v1037, 16
      %v1121 = vrot.slane %v1119, 4
      %v1122 = vor.u32 %v1121, %v1117
      %v1123 = vrot.slane %v1122, 4
      %v1125 = vshll.u32 %v1038, 16
      %v1127 = vrot.slane %v1125, 5
      %v1128 = vsel %vm1056, %v1123, %v1127
      %v1130 = vshrl.u32 %v1039, 16
      %v1132 = vrot.slane %v1130, 4
      %v1133 = vshll.u32 %v1039, 16
      %v1135 = vrot.slane %v1133, 5
      %v1136 = vor.u32 %v1132, %v1135
      %v1137 = vrot.slane %v1136, 4
      %v1139 = vshll.u32 %v1040, 16
      %v1141 = vrot.slane %v1139, 5
      %v1142 = vsel %vm1056, %v1137, %v1141
      %v1143 = vshrl.u32 %v1040, 16
      %v1145 = vrot.slane %v1143, 4
      %v1146 = vor.u32 %v1145, %v1141
      %v1147 = vrot.slane %v1146, 4
      %v1149 = vshll.u32 %v1041, 16
      %v1151 = vrot.slane %v1149, 5
      %v1152 = vsel %vm1056, %v1147, %v1151
      %v1154 = vshrl.u32 %v1042, 16
      %v1156 = vrot.slane %v1154, 4
      %v1157 = vshll.u32 %v1042, 16
      %v1159 = vrot.slane %v1157, 5
      %v1160 = vor.u32 %v1156, %v1159
      %v1161 = vrot.slane %v1160, 4
      %v1163 = vshll.u32 %v1043, 16
      %v1165 = vrot.slane %v1163, 5
      %v1166 = vsel %vm1056, %v1161, %v1165
      %v1167 = vshrl.u32 %v1043, 16
      %v1169 = vrot.slane %v1167, 4
      %v1170 = vor.u32 %v1169, %v1165
      %v1171 = vrot.slane %v1170, 4
      %v1173 = vshll.u32 %v1044, 16
      %v1175 = vrot.slane %v1173, 5
      %v1176 = vsel %vm1056, %v1171, %v1175
      %v1178 = vshrl.u32 %v1045, 16
      %v1180 = vrot.slane %v1178, 4
      %v1181 = vshll.u32 %v1045, 16
      %v1183 = vrot.slane %v1181, 5
      %v1184 = vor.u32 %v1180, %v1183
      %v1185 = vrot.slane %v1184, 4
      %v1187 = vshll.u32 %v1046, 16
      %v1189 = vrot.slane %v1187, 5
      %v1190 = vsel %vm1056, %v1185, %v1189
      %v1191 = vshrl.u32 %v1046, 16
      %v1193 = vrot.slane %v1191, 4
      %v1194 = vor.u32 %v1193, %v1189
      %v1195 = vrot.slane %v1194, 4
      %v1197 = vshll.u32 %v1047, 16
      %v1199 = vrot.slane %v1197, 5
      %v1200 = vsel %vm1056, %v1195, %v1199
      %v1202 = vshrl.u32 %v1048, 16
      %v1204 = vrot.slane %v1202, 4
      %v1205 = vshll.u32 %v1048, 16
      %v1207 = vrot.slane %v1205, 5
      %v1208 = vor.u32 %v1204, %v1207
      %v1209 = vrot.slane %v1208, 4
      %v1211 = vshll.u32 %v1049, 16
      %v1213 = vrot.slane %v1211, 5
      %v1214 = vsel %vm1056, %v1209, %v1213
      %v1215 = vshrl.u32 %v1049, 16
      %v1217 = vrot.slane %v1215, 4
      %v1218 = vor.u32 %v1217, %v1213
      %v1219 = vrot.slane %v1218, 4
      %v1221 = vshll.u32 %v1050, 16
      %v1223 = vrot.slane %v1221, 5
      %v1224 = vsel %vm1056, %v1219, %v1223
      %v1226 = vshrl.u32 %v1051, 16
      %v1228 = vrot.slane %v1226, 4
      %v1229 = vshll.u32 %v1051, 16
      %v1231 = vrot.slane %v1229, 5
      %v1232 = vor.u32 %v1228, %v1231
      %v1233 = vrot.slane %v1232, 4
      %v1235 = vshll.u32 %v1052, 16
      %v1237 = vrot.slane %v1235, 5
      %v1238 = vsel %vm1056, %v1233, %v1237
      %v1239 = vshrl.u32 %v1052, 16
      %v1241 = vrot.slane %v1239, 4
      %v1242 = vor.u32 %v1241, %v1237
      %v1243 = vrot.slane %v1242, 4
      %v1245 = vshll.u32 %v1053, 16
      %v1247 = vrot.slane %v1245, 5
      %v1248 = vsel %vm1056, %v1243, %v1247
      %s1249 = scalar_lea.vmem %s1, 8
      %v1250 = vld [vmem:[%s1249] sm:$0xf]
      %v1251 = vunpack.c.l.b16 %v1070
      %v1252 = vunpack.c.l.b16 %v1080
      %v1253 = vunpack.c.l.b16 %v1094
      %v1254 = vunpack.c.l.b16 %v1104
      %v1255 = vunpack.c.l.b16 %v1118
      %v1256 = vunpack.c.l.b16 %v1128
      %v1257 = vunpack.c.l.b16 %v1142
      %v1258 = vunpack.c.l.b16 %v1152
      %v1259 = vunpack.c.l.b16 %v1166
      %v1260 = vunpack.c.l.b16 %v1176
      %v1261 = vunpack.c.l.b16 %v1190
      %v1262 = vunpack.c.l.b16 %v1200
      %v1263 = vunpack.c.l.b16 %v1214
      %v1264 = vunpack.c.l.b16 %v1224
      %v1265 = vunpack.c.l.b16 %v1238
      %v1266 = vunpack.c.l.b16 %v1248
      %v1267 = vpack.c.b16 %v1252, %v1251
      %v1268 = vpack.c.b16 %v1254, %v1253
      %v1269 = vpack.c.b16 %v1256, %v1255
      %v1270 = vpack.c.b16 %v1258, %v1257
      %v1271 = vpack.c.b16 %v1260, %v1259
      %v1272 = vpack.c.b16 %v1262, %v1261
      %v1273 = vpack.c.b16 %v1264, %v1263
      %v1274 = vpack.c.b16 %v1266, %v1265
      %v1276 = vsel %vm852, %v1267, 0
      %v1279 = vsel %vm852, %v1268, 0
      %v1282 = vsel %vm852, %v1269, 0
      %v1285 = vsel %vm852, %v1270, 0
      %v1288 = vsel %vm852, %v1271, 0
      %v1291 = vsel %vm852, %v1272, 0
      %v1294 = vsel %vm852, %v1273, 0
      %v1297 = vsel %vm852, %v1274, 0
      %v1300 = vsel %vm877, %v1250, 0
      %1302 = vmatpush.bf16.msra.mxu0 0
      %1303 = vmatpush.bf16.msra.mxu0 0
      %1304 = vmatpush.bf16.msra.mxu0 0
      %1305 = vmatpush.bf16.msra.mxu0 0
      %1306 = vmatpush.bf16.msra.mxu0 0
      %1307 = vmatpush.bf16.msra.mxu0 0
      %1308 = vmatpush.bf16.msra.mxu0 0
      %1309 = vmatpush.bf16.msra.mxu0 %v1300
      %1310 = vmatmul.bf16.gmra.mxu0 %v1276
      %v1311 = vpop.f32.mrf.mxu0
      %v1312 = vadd.f32 0.0, %v1311
      %v1313 = vpop.f32.mrf.mxu0
      %v1314 = vadd.f32 0.0, %v1313
      %1315 = vmatmul.bf16.gmra.mxu0 %v1279
      %v1316 = vpop.f32.mrf.mxu0
      %v1317 = vadd.f32 0.0, %v1316
      %v1318 = vpop.f32.mrf.mxu0
      %v1319 = vadd.f32 0.0, %v1318
      %1320 = vmatmul.bf16.gmra.mxu0 %v1282
      %v1321 = vpop.f32.mrf.mxu0
      %v1322 = vadd.f32 0.0, %v1321
      %v1323 = vpop.f32.mrf.mxu0
      %v1324 = vadd.f32 0.0, %v1323
      %1325 = vmatmul.bf16.gmra.mxu0 %v1285
      %v1326 = vpop.f32.mrf.mxu0
      %v1327 = vadd.f32 0.0, %v1326
      %v1328 = vpop.f32.mrf.mxu0
      %v1329 = vadd.f32 0.0, %v1328
      %1330 = vmatmul.bf16.gmra.mxu0 %v1288
      %v1331 = vpop.f32.mrf.mxu0
      %v1332 = vadd.f32 0.0, %v1331
      %v1333 = vpop.f32.mrf.mxu0
      %v1334 = vadd.f32 0.0, %v1333
      %1335 = vmatmul.bf16.gmra.mxu0 %v1291
      %v1336 = vpop.f32.mrf.mxu0
      %v1337 = vadd.f32 0.0, %v1336
      %v1338 = vpop.f32.mrf.mxu0
      %v1339 = vadd.f32 0.0, %v1338
      %1340 = vmatmul.bf16.gmra.mxu0 %v1294
      %v1341 = vpop.f32.mrf.mxu0
      %v1342 = vadd.f32 0.0, %v1341
      %v1343 = vpop.f32.mrf.mxu0
      %v1344 = vadd.f32 0.0, %v1343
      %1345 = vmatmul.bf16.gmra.mxu0 %v1297
      %v1346 = vpop.f32.mrf.mxu0
      %v1347 = vadd.f32 0.0, %v1346
      %v1348 = vpop.f32.mrf.mxu0
      %v1349 = vadd.f32 0.0, %v1348
      %1350 = vdwg.mxu0
      %v1351 = vadd.f32 %v991, %v1312
      %v1352 = vadd.f32 %v993, %v1314
      %v1353 = vadd.f32 %v996, %v1317
      %v1354 = vadd.f32 %v998, %v1319
      %v1355 = vadd.f32 %v1001, %v1322
      %v1356 = vadd.f32 %v1003, %v1324
      %v1357 = vadd.f32 %v1006, %v1327
      %v1358 = vadd.f32 %v1008, %v1329
      %v1359 = vadd.f32 %v1011, %v1332
      %v1360 = vadd.f32 %v1013, %v1334
      %v1361 = vadd.f32 %v1016, %v1337
      %v1362 = vadd.f32 %v1018, %v1339
      %v1363 = vadd.f32 %v1021, %v1342
      %v1364 = vadd.f32 %v1023, %v1344
      %v1365 = vadd.f32 %v1026, %v1347
      %v1366 = vadd.f32 %v1028, %v1349
      %v1367 = vld [vmem:[%s574 + $0x4] sm:$0x8]
      %v1368 = vld [vmem:[%s574 + $0x8] sm:$0xf]
      %v1369 = vld [vmem:[%s574 + $0xc] sm:$0xf]
      %v1370 = vld [vmem:[%s574 + $0x18] sm:$0x8]
      %v1371 = vld [vmem:[%s574 + $0x1c] sm:$0xf]
      %v1372 = vld [vmem:[%s574 + $0x20] sm:$0xf]
      %v1373 = vld [vmem:[%s574 + $0x2c] sm:$0x8]
      %v1374 = vld [vmem:[%s574 + $0x30] sm:$0xf]
      %v1375 = vld [vmem:[%s574 + $0x34] sm:$0xf]
      %v1376 = vld [vmem:[%s574 + $0x40] sm:$0x8]
      %v1377 = vld [vmem:[%s574 + $0x44] sm:$0xf]
      %v1378 = vld [vmem:[%s574 + $0x48] sm:$0xf]
      %v1379 = vld [vmem:[%s574 + $0x54] sm:$0x8]
      %v1380 = vld [vmem:[%s574 + $0x58] sm:$0xf]
      %v1381 = vld [vmem:[%s574 + $0x5c] sm:$0xf]
      %v1382 = vld [vmem:[%s574 + $0x68] sm:$0x8]
      %v1383 = vld [vmem:[%s574 + $0x6c] sm:$0xf]
      %v1384 = vld [vmem:[%s574 + $0x70] sm:$0xf]
      %v1385 = vld [vmem:[%s574 + $0x7c] sm:$0x8]
      %v1386 = vld [vmem:[%s574 + $0x80] sm:$0xf]
      %v1387 = vld [vmem:[%s574 + $0x84] sm:$0xf]
      %v1388 = vld [vmem:[%s574 + $0x90] sm:$0x8]
      %v1389 = vld [vmem:[%s574 + $0x94] sm:$0xf]
      %v1390 = vld [vmem:[%s574 + $0x98] sm:$0xf]
      %v1392 = vshrl.u32 %v1367, 16
      %v1394 = vrot.slane %v1392, 7
      %v1395 = vrot.slane %v1394, 4
      %v1397 = vshrl.u32 %v1368, 16
      %v1399 = vrot.slane %v1397, 7
      %v1400 = vshll.u32 %v1368, 16
      %v1402 = vor.u32 %v1399, %v1400
      %v1403 = vsel %vm632, %v1395, %v1402
      %v1404 = vrot.slane %v1399, 4
      %v1406 = vshrl.u32 %v1369, 16
      %v1408 = vrot.slane %v1406, 7
      %v1409 = vshll.u32 %v1369, 16
      %v1411 = vor.u32 %v1408, %v1409
      %v1412 = vsel %vm632, %v1404, %v1411
      %v1414 = vshrl.u32 %v1370, 16
      %v1416 = vrot.slane %v1414, 7
      %v1417 = vrot.slane %v1416, 4
      %v1419 = vshrl.u32 %v1371, 16
      %v1421 = vrot.slane %v1419, 7
      %v1422 = vshll.u32 %v1371, 16
      %v1424 = vor.u32 %v1421, %v1422
      %v1425 = vsel %vm632, %v1417, %v1424
      %v1426 = vrot.slane %v1421, 4
      %v1428 = vshrl.u32 %v1372, 16
      %v1430 = vrot.slane %v1428, 7
      %v1431 = vshll.u32 %v1372, 16
      %v1433 = vor.u32 %v1430, %v1431
      %v1434 = vsel %vm632, %v1426, %v1433
      %v1436 = vshrl.u32 %v1373, 16
      %v1438 = vrot.slane %v1436, 7
      %v1439 = vrot.slane %v1438, 4
      %v1441 = vshrl.u32 %v1374, 16
      %v1443 = vrot.slane %v1441, 7
      %v1444 = vshll.u32 %v1374, 16
      %v1446 = vor.u32 %v1443, %v1444
      %v1447 = vsel %vm632, %v1439, %v1446
      %v1448 = vrot.slane %v1443, 4
      %v1450 = vshrl.u32 %v1375, 16
      %v1452 = vrot.slane %v1450, 7
      %v1453 = vshll.u32 %v1375, 16
      %v1455 = vor.u32 %v1452, %v1453
      %v1456 = vsel %vm632, %v1448, %v1455
      %v1458 = vshrl.u32 %v1376, 16
      %v1460 = vrot.slane %v1458, 7
      %v1461 = vrot.slane %v1460, 4
      %v1463 = vshrl.u32 %v1377, 16
      %v1465 = vrot.slane %v1463, 7
      %v1466 = vshll.u32 %v1377, 16
      %v1468 = vor.u32 %v1465, %v1466
      %v1469 = vsel %vm632, %v1461, %v1468
      %v1470 = vrot.slane %v1465, 4
      %v1472 = vshrl.u32 %v1378, 16
      %v1474 = vrot.slane %v1472, 7
      %v1475 = vshll.u32 %v1378, 16
      %v1477 = vor.u32 %v1474, %v1475
      %v1478 = vsel %vm632, %v1470, %v1477
      %v1480 = vshrl.u32 %v1379, 16
      %v1482 = vrot.slane %v1480, 7
      %v1483 = vrot.slane %v1482, 4
      %v1485 = vshrl.u32 %v1380, 16
      %v1487 = vrot.slane %v1485, 7
      %v1488 = vshll.u32 %v1380, 16
      %v1490 = vor.u32 %v1487, %v1488
      %v1491 = vsel %vm632, %v1483, %v1490
      %v1492 = vrot.slane %v1487, 4
      %v1494 = vshrl.u32 %v1381, 16
      %v1496 = vrot.slane %v1494, 7
      %v1497 = vshll.u32 %v1381, 16
      %v1499 = vor.u32 %v1496, %v1497
      %v1500 = vsel %vm632, %v1492, %v1499
      %v1502 = vshrl.u32 %v1382, 16
      %v1504 = vrot.slane %v1502, 7
      %v1505 = vrot.slane %v1504, 4
      %v1507 = vshrl.u32 %v1383, 16
      %v1509 = vrot.slane %v1507, 7
      %v1510 = vshll.u32 %v1383, 16
      %v1512 = vor.u32 %v1509, %v1510
      %v1513 = vsel %vm632, %v1505, %v1512
      %v1514 = vrot.slane %v1509, 4
      %v1516 = vshrl.u32 %v1384, 16
      %v1518 = vrot.slane %v1516, 7
      %v1519 = vshll.u32 %v1384, 16
      %v1521 = vor.u32 %v1518, %v1519
      %v1522 = vsel %vm632, %v1514, %v1521
      %v1524 = vshrl.u32 %v1385, 16
      %v1526 = vrot.slane %v1524, 7
      %v1527 = vrot.slane %v1526, 4
      %v1529 = vshrl.u32 %v1386, 16
      %v1531 = vrot.slane %v1529, 7
      %v1532 = vshll.u32 %v1386, 16
      %v1534 = vor.u32 %v1531, %v1532
      %v1535 = vsel %vm632, %v1527, %v1534
      %v1536 = vrot.slane %v1531, 4
      %v1538 = vshrl.u32 %v1387, 16
      %v1540 = vrot.slane %v1538, 7
      %v1541 = vshll.u32 %v1387, 16
      %v1543 = vor.u32 %v1540, %v1541
      %v1544 = vsel %vm632, %v1536, %v1543
      %v1546 = vshrl.u32 %v1388, 16
      %v1548 = vrot.slane %v1546, 7
      %v1549 = vrot.slane %v1548, 4
      %v1551 = vshrl.u32 %v1389, 16
      %v1553 = vrot.slane %v1551, 7
      %v1554 = vshll.u32 %v1389, 16
      %v1556 = vor.u32 %v1553, %v1554
      %v1557 = vsel %vm632, %v1549, %v1556
      %v1558 = vrot.slane %v1553, 4
      %v1560 = vshrl.u32 %v1390, 16
      %v1562 = vrot.slane %v1560, 7
      %v1563 = vshll.u32 %v1390, 16
      %v1565 = vor.u32 %v1562, %v1563
      %v1566 = vsel %vm632, %v1558, %v1565
      %s1567 = scalar_lea.vmem %s1, 12
      %v1568 = vld [vmem:[%s1567] sm:$0xf]
      %v1569 = vunpack.c.l.b16 %v1403
      %v1570 = vunpack.c.l.b16 %v1412
      %v1571 = vunpack.c.l.b16 %v1425
      %v1572 = vunpack.c.l.b16 %v1434
      %v1573 = vunpack.c.l.b16 %v1447
      %v1574 = vunpack.c.l.b16 %v1456
      %v1575 = vunpack.c.l.b16 %v1469
      %v1576 = vunpack.c.l.b16 %v1478
      %v1577 = vunpack.c.l.b16 %v1491
      %v1578 = vunpack.c.l.b16 %v1500
      %v1579 = vunpack.c.l.b16 %v1513
      %v1580 = vunpack.c.l.b16 %v1522
      %v1581 = vunpack.c.l.b16 %v1535
      %v1582 = vunpack.c.l.b16 %v1544
      %v1583 = vunpack.c.l.b16 %v1557
      %v1584 = vunpack.c.l.b16 %v1566
      %v1585 = vpack.c.b16 %v1570, %v1569
      %v1586 = vpack.c.b16 %v1572, %v1571
      %v1587 = vpack.c.b16 %v1574, %v1573
      %v1588 = vpack.c.b16 %v1576, %v1575
      %v1589 = vpack.c.b16 %v1578, %v1577
      %v1590 = vpack.c.b16 %v1580, %v1579
      %v1591 = vpack.c.b16 %v1582, %v1581
      %v1592 = vpack.c.b16 %v1584, %v1583
      %v1594 = vsel %vm852, %v1585, 0
      %v1597 = vsel %vm852, %v1586, 0
      %v1600 = vsel %vm852, %v1587, 0
      %v1603 = vsel %vm852, %v1588, 0
      %v1606 = vsel %vm852, %v1589, 0
      %v1609 = vsel %vm852, %v1590, 0
      %v1612 = vsel %vm852, %v1591, 0
      %v1615 = vsel %vm852, %v1592, 0
      %v1618 = vsel %vm877, %v1568, 0
      %1620 = vmatpush.bf16.msra.mxu0 0
      %1621 = vmatpush.bf16.msra.mxu0 0
      %1622 = vmatpush.bf16.msra.mxu0 0
      %1623 = vmatpush.bf16.msra.mxu0 0
      %1624 = vmatpush.bf16.msra.mxu0 0
      %1625 = vmatpush.bf16.msra.mxu0 0
      %1626 = vmatpush.bf16.msra.mxu0 0
      %1627 = vmatpush.bf16.msra.mxu0 %v1618
      %1628 = vmatmul.bf16.gmra.mxu0 %v1594
      %v1629 = vpop.f32.mrf.mxu0
      %v1630 = vadd.f32 0.0, %v1629
      %v1631 = vpop.f32.mrf.mxu0
      %v1632 = vadd.f32 0.0, %v1631
      %1633 = vmatmul.bf16.gmra.mxu0 %v1597
      %v1634 = vpop.f32.mrf.mxu0
      %v1635 = vadd.f32 0.0, %v1634
      %v1636 = vpop.f32.mrf.mxu0
      %v1637 = vadd.f32 0.0, %v1636
      %1638 = vmatmul.bf16.gmra.mxu0 %v1600
      %v1639 = vpop.f32.mrf.mxu0
      %v1640 = vadd.f32 0.0, %v1639
      %v1641 = vpop.f32.mrf.mxu0
      %v1642 = vadd.f32 0.0, %v1641
      %1643 = vmatmul.bf16.gmra.mxu0 %v1603
      %v1644 = vpop.f32.mrf.mxu0
      %v1645 = vadd.f32 0.0, %v1644
      %v1646 = vpop.f32.mrf.mxu0
      %v1647 = vadd.f32 0.0, %v1646
      %1648 = vmatmul.bf16.gmra.mxu0 %v1606
      %v1649 = vpop.f32.mrf.mxu0
      %v1650 = vadd.f32 0.0, %v1649
      %v1651 = vpop.f32.mrf.mxu0
      %v1652 = vadd.f32 0.0, %v1651
      %1653 = vmatmul.bf16.gmra.mxu0 %v1609
      %v1654 = vpop.f32.mrf.mxu0
      %v1655 = vadd.f32 0.0, %v1654
      %v1656 = vpop.f32.mrf.mxu0
      %v1657 = vadd.f32 0.0, %v1656
      %1658 = vmatmul.bf16.gmra.mxu0 %v1612
      %v1659 = vpop.f32.mrf.mxu0
      %v1660 = vadd.f32 0.0, %v1659
      %v1661 = vpop.f32.mrf.mxu0
      %v1662 = vadd.f32 0.0, %v1661
      %1663 = vmatmul.bf16.gmra.mxu0 %v1615
      %v1664 = vpop.f32.mrf.mxu0
      %v1665 = vadd.f32 0.0, %v1664
      %v1666 = vpop.f32.mrf.mxu0
      %v1667 = vadd.f32 0.0, %v1666
      %1668 = vdwg.mxu0
      %v1669 = vadd.f32 %v1351, %v1630
      %v1670 = vadd.f32 %v1352, %v1632
      %v1671 = vadd.f32 %v1353, %v1635
      %v1672 = vadd.f32 %v1354, %v1637
      %v1673 = vadd.f32 %v1355, %v1640
      %v1674 = vadd.f32 %v1356, %v1642
      %v1675 = vadd.f32 %v1357, %v1645
      %v1676 = vadd.f32 %v1358, %v1647
      %v1677 = vadd.f32 %v1359, %v1650
      %v1678 = vadd.f32 %v1360, %v1652
      %v1679 = vadd.f32 %v1361, %v1655
      %v1680 = vadd.f32 %v1362, %v1657
      %v1681 = vadd.f32 %v1363, %v1660
      %v1682 = vadd.f32 %v1364, %v1662
      %v1683 = vadd.f32 %v1365, %v1665
      %v1684 = vadd.f32 %v1366, %v1667
      %s1685 = scalar_lea.vmem %s1, 16
      %v1686 = vld [vmem:[%s1685] sm:$0xf]
      %v1703 = vunpack.c.l.b16 %v1368
      %v1704 = vunpack.c.l.b16 %v1369
      %v1705 = vunpack.c.l.b16 %v1371
      %v1706 = vunpack.c.l.b16 %v1372
      %v1707 = vunpack.c.l.b16 %v1374
      %v1708 = vunpack.c.l.b16 %v1375
      %v1709 = vunpack.c.l.b16 %v1377
      %v1710 = vunpack.c.l.b16 %v1378
      %v1711 = vunpack.c.l.b16 %v1380
      %v1712 = vunpack.c.l.b16 %v1381
      %v1713 = vunpack.c.l.b16 %v1383
      %v1714 = vunpack.c.l.b16 %v1384
      %v1715 = vunpack.c.l.b16 %v1386
      %v1716 = vunpack.c.l.b16 %v1387
      %v1717 = vunpack.c.l.b16 %v1389
      %v1718 = vunpack.c.l.b16 %v1390
      %v1719 = vpack.c.b16 %v1704, %v1703
      %v1720 = vpack.c.b16 %v1706, %v1705
      %v1721 = vpack.c.b16 %v1708, %v1707
      %v1722 = vpack.c.b16 %v1710, %v1709
      %v1723 = vpack.c.b16 %v1712, %v1711
      %v1724 = vpack.c.b16 %v1714, %v1713
      %v1725 = vpack.c.b16 %v1716, %v1715
      %v1726 = vpack.c.b16 %v1718, %v1717
      %v1728 = vsel %vm852, %v1719, 0
      %v1731 = vsel %vm852, %v1720, 0
      %v1734 = vsel %vm852, %v1721, 0
      %v1737 = vsel %vm852, %v1722, 0
      %v1740 = vsel %vm852, %v1723, 0
      %v1743 = vsel %vm852, %v1724, 0
      %v1746 = vsel %vm852, %v1725, 0
      %v1749 = vsel %vm852, %v1726, 0
      %v1752 = vsel %vm877, %v1686, 0
      %1754 = vmatpush.bf16.msra.mxu0 0
      %1755 = vmatpush.bf16.msra.mxu0 0
      %1756 = vmatpush.bf16.msra.mxu0 0
      %1757 = vmatpush.bf16.msra.mxu0 0
      %1758 = vmatpush.bf16.msra.mxu0 0
      %1759 = vmatpush.bf16.msra.mxu0 0
      %1760 = vmatpush.bf16.msra.mxu0 0
      %1761 = vmatpush.bf16.msra.mxu0 %v1752
      %1762 = vmatmul.bf16.gmra.mxu0 %v1728
      %v1763 = vpop.f32.mrf.mxu0
      %v1764 = vadd.f32 0.0, %v1763
      %v1765 = vpop.f32.mrf.mxu0
      %v1766 = vadd.f32 0.0, %v1765
      %1767 = vmatmul.bf16.gmra.mxu0 %v1731
      %v1768 = vpop.f32.mrf.mxu0
      %v1769 = vadd.f32 0.0, %v1768
      %v1770 = vpop.f32.mrf.mxu0
      %v1771 = vadd.f32 0.0, %v1770
      %1772 = vmatmul.bf16.gmra.mxu0 %v1734
      %v1773 = vpop.f32.mrf.mxu0
      %v1774 = vadd.f32 0.0, %v1773
      %v1775 = vpop.f32.mrf.mxu0
      %v1776 = vadd.f32 0.0, %v1775
      %1777 = vmatmul.bf16.gmra.mxu0 %v1737
      %v1778 = vpop.f32.mrf.mxu0
      %v1779 = vadd.f32 0.0, %v1778
      %v1780 = vpop.f32.mrf.mxu0
      %v1781 = vadd.f32 0.0, %v1780
      %1782 = vmatmul.bf16.gmra.mxu0 %v1740
      %v1783 = vpop.f32.mrf.mxu0
      %v1784 = vadd.f32 0.0, %v1783
      %v1785 = vpop.f32.mrf.mxu0
      %v1786 = vadd.f32 0.0, %v1785
      %1787 = vmatmul.bf16.gmra.mxu0 %v1743
      %v1788 = vpop.f32.mrf.mxu0
      %v1789 = vadd.f32 0.0, %v1788
      %v1790 = vpop.f32.mrf.mxu0
      %v1791 = vadd.f32 0.0, %v1790
      %1792 = vmatmul.bf16.gmra.mxu0 %v1746
      %v1793 = vpop.f32.mrf.mxu0
      %v1794 = vadd.f32 0.0, %v1793
      %v1795 = vpop.f32.mrf.mxu0
      %v1796 = vadd.f32 0.0, %v1795
      %1797 = vmatmul.bf16.gmra.mxu0 %v1749
      %v1798 = vpop.f32.mrf.mxu0
      %v1799 = vadd.f32 0.0, %v1798
      %v1800 = vpop.f32.mrf.mxu0
      %v1801 = vadd.f32 0.0, %v1800
      %1802 = vdwg.mxu0
      %v1803 = vadd.f32 %v1669, %v1764
      %v1804 = vadd.f32 %v1670, %v1766
      %v1805 = vadd.f32 %v1671, %v1769
      %v1806 = vadd.f32 %v1672, %v1771
      %v1807 = vadd.f32 %v1673, %v1774
      %v1808 = vadd.f32 %v1674, %v1776
      %v1809 = vadd.f32 %v1675, %v1779
      %v1810 = vadd.f32 %v1676, %v1781
      %v1811 = vadd.f32 %v1677, %v1784
      %v1812 = vadd.f32 %v1678, %v1786
      %v1813 = vadd.f32 %v1679, %v1789
      %v1814 = vadd.f32 %v1680, %v1791
      %v1815 = vadd.f32 %v1681, %v1794
      %v1816 = vadd.f32 %v1682, %v1796
      %v1817 = vadd.f32 %v1683, %v1799
      %v1818 = vadd.f32 %v1684, %v1801
      %v1819 = vld [vmem:[%s574 + $0x8] sm:$0xf]
      %v1820 = vld [vmem:[%s574 + $0xc] sm:$0xf]
      %v1821 = vld [vmem:[%s574 + $0x10] sm:$0x1]
      %v1822 = vld [vmem:[%s574 + $0x1c] sm:$0xf]
      %v1823 = vld [vmem:[%s574 + $0x20] sm:$0xf]
      %v1824 = vld [vmem:[%s574 + $0x24] sm:$0x1]
      %v1825 = vld [vmem:[%s574 + $0x30] sm:$0xf]
      %v1826 = vld [vmem:[%s574 + $0x34] sm:$0xf]
      %v1827 = vld [vmem:[%s574 + $0x38] sm:$0x1]
      %v1828 = vld [vmem:[%s574 + $0x44] sm:$0xf]
      %v1829 = vld [vmem:[%s574 + $0x48] sm:$0xf]
      %v1830 = vld [vmem:[%s574 + $0x4c] sm:$0x1]
      %v1831 = vld [vmem:[%s574 + $0x58] sm:$0xf]
      %v1832 = vld [vmem:[%s574 + $0x5c] sm:$0xf]
      %v1833 = vld [vmem:[%s574 + $0x60] sm:$0x1]
      %v1834 = vld [vmem:[%s574 + $0x6c] sm:$0xf]
      %v1835 = vld [vmem:[%s574 + $0x70] sm:$0xf]
      %v1836 = vld [vmem:[%s574 + $0x74] sm:$0x1]
      %v1837 = vld [vmem:[%s574 + $0x80] sm:$0xf]
      %v1838 = vld [vmem:[%s574 + $0x84] sm:$0xf]
      %v1839 = vld [vmem:[%s574 + $0x88] sm:$0x1]
      %v1840 = vld [vmem:[%s574 + $0x94] sm:$0xf]
      %v1841 = vld [vmem:[%s574 + $0x98] sm:$0xf]
      %v1842 = vld [vmem:[%s574 + $0x9c] sm:$0x1]
      %v1844 = vshrl.u32 %v1819, 16
      %v1846 = vrot.slane %v1844, 4
      %v1847 = vshll.u32 %v1819, 16
      %v1849 = vrot.slane %v1847, 5
      %v1850 = vor.u32 %v1846, %v1849
      %v1851 = vrot.slane %v1850, 4
      %v1853 = vshll.u32 %v1820, 16
      %v1855 = vrot.slane %v1853, 5
      %v1856 = vsel %vm1056, %v1851, %v1855
      %v1857 = vshrl.u32 %v1820, 16
      %v1859 = vrot.slane %v1857, 4
      %v1860 = vor.u32 %v1859, %v1855
      %v1861 = vrot.slane %v1860, 4
      %v1863 = vshll.u32 %v1821, 16
      %v1865 = vrot.slane %v1863, 5
      %v1866 = vsel %vm1056, %v1861, %v1865
      %v1868 = vshrl.u32 %v1822, 16
      %v1870 = vrot.slane %v1868, 4
      %v1871 = vshll.u32 %v1822, 16
      %v1873 = vrot.slane %v1871, 5
      %v1874 = vor.u32 %v1870, %v1873
      %v1875 = vrot.slane %v1874, 4
      %v1877 = vshll.u32 %v1823, 16
      %v1879 = vrot.slane %v1877, 5
      %v1880 = vsel %vm1056, %v1875, %v1879
      %v1881 = vshrl.u32 %v1823, 16
      %v1883 = vrot.slane %v1881, 4
      %v1884 = vor.u32 %v1883, %v1879
      %v1885 = vrot.slane %v1884, 4
      %v1887 = vshll.u32 %v1824, 16
      %v1889 = vrot.slane %v1887, 5
      %v1890 = vsel %vm1056, %v1885, %v1889
      %v1892 = vshrl.u32 %v1825, 16
      %v1894 = vrot.slane %v1892, 4
      %v1895 = vshll.u32 %v1825, 16
      %v1897 = vrot.slane %v1895, 5
      %v1898 = vor.u32 %v1894, %v1897
      %v1899 = vrot.slane %v1898, 4
      %v1901 = vshll.u32 %v1826, 16
      %v1903 = vrot.slane %v1901, 5
      %v1904 = vsel %vm1056, %v1899, %v1903
      %v1905 = vshrl.u32 %v1826, 16
      %v1907 = vrot.slane %v1905, 4
      %v1908 = vor.u32 %v1907, %v1903
      %v1909 = vrot.slane %v1908, 4
      %v1911 = vshll.u32 %v1827, 16
      %v1913 = vrot.slane %v1911, 5
      %v1914 = vsel %vm1056, %v1909, %v1913
      %v1916 = vshrl.u32 %v1828, 16
      %v1918 = vrot.slane %v1916, 4
      %v1919 = vshll.u32 %v1828, 16
      %v1921 = vrot.slane %v1919, 5
      %v1922 = vor.u32 %v1918, %v1921
      %v1923 = vrot.slane %v1922, 4
      %v1925 = vshll.u32 %v1829, 16
      %v1927 = vrot.slane %v1925, 5
      %v1928 = vsel %vm1056, %v1923, %v1927
      %v1929 = vshrl.u32 %v1829, 16
      %v1931 = vrot.slane %v1929, 4
      %v1932 = vor.u32 %v1931, %v1927
      %v1933 = vrot.slane %v1932, 4
      %v1935 = vshll.u32 %v1830, 16
      %v1937 = vrot.slane %v1935, 5
      %v1938 = vsel %vm1056, %v1933, %v1937
      %v1940 = vshrl.u32 %v1831, 16
      %v1942 = vrot.slane %v1940, 4
      %v1943 = vshll.u32 %v1831, 16
      %v1945 = vrot.slane %v1943, 5
      %v1946 = vor.u32 %v1942, %v1945
      %v1947 = vrot.slane %v1946, 4
      %v1949 = vshll.u32 %v1832, 16
      %v1951 = vrot.slane %v1949, 5
      %v1952 = vsel %vm1056, %v1947, %v1951
      %v1953 = vshrl.u32 %v1832, 16
      %v1955 = vrot.slane %v1953, 4
      %v1956 = vor.u32 %v1955, %v1951
      %v1957 = vrot.slane %v1956, 4
      %v1959 = vshll.u32 %v1833, 16
      %v1961 = vrot.slane %v1959, 5
      %v1962 = vsel %vm1056, %v1957, %v1961
      %v1964 = vshrl.u32 %v1834, 16
      %v1966 = vrot.slane %v1964, 4
      %v1967 = vshll.u32 %v1834, 16
      %v1969 = vrot.slane %v1967, 5
      %v1970 = vor.u32 %v1966, %v1969
      %v1971 = vrot.slane %v1970, 4
      %v1973 = vshll.u32 %v1835, 16
      %v1975 = vrot.slane %v1973, 5
      %v1976 = vsel %vm1056, %v1971, %v1975
      %v1977 = vshrl.u32 %v1835, 16
      %v1979 = vrot.slane %v1977, 4
      %v1980 = vor.u32 %v1979, %v1975
      %v1981 = vrot.slane %v1980, 4
      %v1983 = vshll.u32 %v1836, 16
      %v1985 = vrot.slane %v1983, 5
      %v1986 = vsel %vm1056, %v1981, %v1985
      %v1988 = vshrl.u32 %v1837, 16
      %v1990 = vrot.slane %v1988, 4
      %v1991 = vshll.u32 %v1837, 16
      %v1993 = vrot.slane %v1991, 5
      %v1994 = vor.u32 %v1990, %v1993
      %v1995 = vrot.slane %v1994, 4
      %v1997 = vshll.u32 %v1838, 16
      %v1999 = vrot.slane %v1997, 5
      %v2000 = vsel %vm1056, %v1995, %v1999
      %v2001 = vshrl.u32 %v1838, 16
      %v2003 = vrot.slane %v2001, 4
      %v2004 = vor.u32 %v2003, %v1999
      %v2005 = vrot.slane %v2004, 4
      %v2007 = vshll.u32 %v1839, 16
      %v2009 = vrot.slane %v2007, 5
      %v2010 = vsel %vm1056, %v2005, %v2009
      %v2012 = vshrl.u32 %v1840, 16
      %v2014 = vrot.slane %v2012, 4
      %v2015 = vshll.u32 %v1840, 16
      %v2017 = vrot.slane %v2015, 5
      %v2018 = vor.u32 %v2014, %v2017
      %v2019 = vrot.slane %v2018, 4
      %v2021 = vshll.u32 %v1841, 16
      %v2023 = vrot.slane %v2021, 5
      %v2024 = vsel %vm1056, %v2019, %v2023
      %v2025 = vshrl.u32 %v1841, 16
      %v2027 = vrot.slane %v2025, 4
      %v2028 = vor.u32 %v2027, %v2023
      %v2029 = vrot.slane %v2028, 4
      %v2031 = vshll.u32 %v1842, 16
      %v2033 = vrot.slane %v2031, 5
      %v2034 = vsel %vm1056, %v2029, %v2033
      %s2035 = scalar_lea.vmem %s1, 20
      %v2036 = vld [vmem:[%s2035] sm:$0xf]
      %v2037 = vunpack.c.l.b16 %v1856
      %v2038 = vunpack.c.l.b16 %v1866
      %v2039 = vunpack.c.l.b16 %v1880
      %v2040 = vunpack.c.l.b16 %v1890
      %v2041 = vunpack.c.l.b16 %v1904
      %v2042 = vunpack.c.l.b16 %v1914
      %v2043 = vunpack.c.l.b16 %v1928
      %v2044 = vunpack.c.l.b16 %v1938
      %v2045 = vunpack.c.l.b16 %v1952
      %v2046 = vunpack.c.l.b16 %v1962
      %v2047 = vunpack.c.l.b16 %v1976
      %v2048 = vunpack.c.l.b16 %v1986
      %v2049 = vunpack.c.l.b16 %v2000
      %v2050 = vunpack.c.l.b16 %v2010
      %v2051 = vunpack.c.l.b16 %v2024
      %v2052 = vunpack.c.l.b16 %v2034
      %v2053 = vpack.c.b16 %v2038, %v2037
      %v2054 = vpack.c.b16 %v2040, %v2039
      %v2055 = vpack.c.b16 %v2042, %v2041
      %v2056 = vpack.c.b16 %v2044, %v2043
      %v2057 = vpack.c.b16 %v2046, %v2045
      %v2058 = vpack.c.b16 %v2048, %v2047
      %v2059 = vpack.c.b16 %v2050, %v2049
      %v2060 = vpack.c.b16 %v2052, %v2051
      %v2062 = vsel %vm852, %v2053, 0
      %v2065 = vsel %vm852, %v2054, 0
      %v2068 = vsel %vm852, %v2055, 0
      %v2071 = vsel %vm852, %v2056, 0
      %v2074 = vsel %vm852, %v2057, 0
      %v2077 = vsel %vm852, %v2058, 0
      %v2080 = vsel %vm852, %v2059, 0
      %v2083 = vsel %vm852, %v2060, 0
      %v2086 = vsel %vm877, %v2036, 0
      %2088 = vmatpush.bf16.msra.mxu0 0
      %2089 = vmatpush.bf16.msra.mxu0 0
      %2090 = vmatpush.bf16.msra.mxu0 0
      %2091 = vmatpush.bf16.msra.mxu0 0
      %2092 = vmatpush.bf16.msra.mxu0 0
      %2093 = vmatpush.bf16.msra.mxu0 0
      %2094 = vmatpush.bf16.msra.mxu0 0
      %2095 = vmatpush.bf16.msra.mxu0 %v2086
      %2096 = vmatmul.bf16.gmra.mxu0 %v2062
      %v2097 = vpop.f32.mrf.mxu0
      %v2098 = vadd.f32 0.0, %v2097
      %v2099 = vpop.f32.mrf.mxu0
      %v2100 = vadd.f32 0.0, %v2099
      %2101 = vmatmul.bf16.gmra.mxu0 %v2065
      %v2102 = vpop.f32.mrf.mxu0
      %v2103 = vadd.f32 0.0, %v2102
      %v2104 = vpop.f32.mrf.mxu0
      %v2105 = vadd.f32 0.0, %v2104
      %2106 = vmatmul.bf16.gmra.mxu0 %v2068
      %v2107 = vpop.f32.mrf.mxu0
      %v2108 = vadd.f32 0.0, %v2107
      %v2109 = vpop.f32.mrf.mxu0
      %v2110 = vadd.f32 0.0, %v2109
      %2111 = vmatmul.bf16.gmra.mxu0 %v2071
      %v2112 = vpop.f32.mrf.mxu0
      %v2113 = vadd.f32 0.0, %v2112
      %v2114 = vpop.f32.mrf.mxu0
      %v2115 = vadd.f32 0.0, %v2114
      %2116 = vmatmul.bf16.gmra.mxu0 %v2074
      %v2117 = vpop.f32.mrf.mxu0
      %v2118 = vadd.f32 0.0, %v2117
      %v2119 = vpop.f32.mrf.mxu0
      %v2120 = vadd.f32 0.0, %v2119
      %2121 = vmatmul.bf16.gmra.mxu0 %v2077
      %v2122 = vpop.f32.mrf.mxu0
      %v2123 = vadd.f32 0.0, %v2122
      %v2124 = vpop.f32.mrf.mxu0
      %v2125 = vadd.f32 0.0, %v2124
      %2126 = vmatmul.bf16.gmra.mxu0 %v2080
      %v2127 = vpop.f32.mrf.mxu0
      %v2128 = vadd.f32 0.0, %v2127
      %v2129 = vpop.f32.mrf.mxu0
      %v2130 = vadd.f32 0.0, %v2129
      %2131 = vmatmul.bf16.gmra.mxu0 %v2083
      %v2132 = vpop.f32.mrf.mxu0
      %v2133 = vadd.f32 0.0, %v2132
      %v2134 = vpop.f32.mrf.mxu0
      %v2135 = vadd.f32 0.0, %v2134
      %2136 = vdwg.mxu0
      %v2137 = vadd.f32 %v1803, %v2098
      %v2138 = vadd.f32 %v1804, %v2100
      %v2139 = vadd.f32 %v1805, %v2103
      %v2140 = vadd.f32 %v1806, %v2105
      %v2141 = vadd.f32 %v1807, %v2108
      %v2142 = vadd.f32 %v1808, %v2110
      %v2143 = vadd.f32 %v1809, %v2113
      %v2144 = vadd.f32 %v1810, %v2115
      %v2145 = vadd.f32 %v1811, %v2118
      %v2146 = vadd.f32 %v1812, %v2120
      %v2147 = vadd.f32 %v1813, %v2123
      %v2148 = vadd.f32 %v1814, %v2125
      %v2149 = vadd.f32 %v1815, %v2128
      %v2150 = vadd.f32 %v1816, %v2130
      %v2151 = vadd.f32 %v1817, %v2133
      %v2152 = vadd.f32 %v1818, %v2135
      %s2153 = scalar_lea.vmem [#allocation2], 40
      %v2154 = vld [vmem:[%s2153 + $0x4] sm:$0x8]
      %v2155 = vld [vmem:[%s2153 + $0x8] sm:$0xf]
      %v2156 = vld [vmem:[%s2153 + $0xc] sm:$0xf]
      %v2157 = vld [vmem:[%s2153 + $0x18] sm:$0x8]
      %v2158 = vld [vmem:[%s2153 + $0x1c] sm:$0xf]
      %v2159 = vld [vmem:[%s2153 + $0x20] sm:$0xf]
      %v2160 = vld [vmem:[%s2153 + $0x2c] sm:$0x8]
      %v2161 = vld [vmem:[%s2153 + $0x30] sm:$0xf]
      %v2162 = vld [vmem:[%s2153 + $0x34] sm:$0xf]
      %v2163 = vld [vmem:[%s2153 + $0x40] sm:$0x8]
      %v2164 = vld [vmem:[%s2153 + $0x44] sm:$0xf]
      %v2165 = vld [vmem:[%s2153 + $0x48] sm:$0xf]
      %v2166 = vld [vmem:[%s2153 + $0x54] sm:$0x8]
      %v2167 = vld [vmem:[%s2153 + $0x58] sm:$0xf]
      %v2168 = vld [vmem:[%s2153 + $0x5c] sm:$0xf]
      %v2169 = vld [vmem:[%s2153 + $0x68] sm:$0x8]
      %v2170 = vld [vmem:[%s2153 + $0x6c] sm:$0xf]
      %v2171 = vld [vmem:[%s2153 + $0x70] sm:$0xf]
      %v2172 = vld [vmem:[%s2153 + $0x7c] sm:$0x8]
      %v2173 = vld [vmem:[%s2153 + $0x80] sm:$0xf]
      %v2174 = vld [vmem:[%s2153 + $0x84] sm:$0xf]
      %v2175 = vld [vmem:[%s2153 + $0x90] sm:$0x8]
      %v2176 = vld [vmem:[%s2153 + $0x94] sm:$0xf]
      %v2177 = vld [vmem:[%s2153 + $0x98] sm:$0xf]
      %v2179 = vshrl.u32 %v2154, 16
      %v2181 = vrot.slane %v2179, 7
      %v2182 = vrot.slane %v2181, 4
      %v2184 = vshrl.u32 %v2155, 16
      %v2186 = vrot.slane %v2184, 7
      %v2187 = vshll.u32 %v2155, 16
      %v2189 = vor.u32 %v2186, %v2187
      %v2190 = vsel %vm632, %v2182, %v2189
      %v2191 = vrot.slane %v2186, 4
      %v2193 = vshrl.u32 %v2156, 16
      %v2195 = vrot.slane %v2193, 7
      %v2196 = vshll.u32 %v2156, 16
      %v2198 = vor.u32 %v2195, %v2196
      %v2199 = vsel %vm632, %v2191, %v2198
      %v2201 = vshrl.u32 %v2157, 16
      %v2203 = vrot.slane %v2201, 7
      %v2204 = vrot.slane %v2203, 4
      %v2206 = vshrl.u32 %v2158, 16
      %v2208 = vrot.slane %v2206, 7
      %v2209 = vshll.u32 %v2158, 16
      %v2211 = vor.u32 %v2208, %v2209
      %v2212 = vsel %vm632, %v2204, %v2211
      %v2213 = vrot.slane %v2208, 4
      %v2215 = vshrl.u32 %v2159, 16
      %v2217 = vrot.slane %v2215, 7
      %v2218 = vshll.u32 %v2159, 16
      %v2220 = vor.u32 %v2217, %v2218
      %v2221 = vsel %vm632, %v2213, %v2220
      %v2223 = vshrl.u32 %v2160, 16
      %v2225 = vrot.slane %v2223, 7
      %v2226 = vrot.slane %v2225, 4
      %v2228 = vshrl.u32 %v2161, 16
      %v2230 = vrot.slane %v2228, 7
      %v2231 = vshll.u32 %v2161, 16
      %v2233 = vor.u32 %v2230, %v2231
      %v2234 = vsel %vm632, %v2226, %v2233
      %v2235 = vrot.slane %v2230, 4
      %v2237 = vshrl.u32 %v2162, 16
      %v2239 = vrot.slane %v2237, 7
      %v2240 = vshll.u32 %v2162, 16
      %v2242 = vor.u32 %v2239, %v2240
      %v2243 = vsel %vm632, %v2235, %v2242
      %v2245 = vshrl.u32 %v2163, 16
      %v2247 = vrot.slane %v2245, 7
      %v2248 = vrot.slane %v2247, 4
      %v2250 = vshrl.u32 %v2164, 16
      %v2252 = vrot.slane %v2250, 7
      %v2253 = vshll.u32 %v2164, 16
      %v2255 = vor.u32 %v2252, %v2253
      %v2256 = vsel %vm632, %v2248, %v2255
      %v2257 = vrot.slane %v2252, 4
      %v2259 = vshrl.u32 %v2165, 16
      %v2261 = vrot.slane %v2259, 7
      %v2262 = vshll.u32 %v2165, 16
      %v2264 = vor.u32 %v2261, %v2262
      %v2265 = vsel %vm632, %v2257, %v2264
      %v2267 = vshrl.u32 %v2166, 16
      %v2269 = vrot.slane %v2267, 7
      %v2270 = vrot.slane %v2269, 4
      %v2272 = vshrl.u32 %v2167, 16
      %v2274 = vrot.slane %v2272, 7
      %v2275 = vshll.u32 %v2167, 16
      %v2277 = vor.u32 %v2274, %v2275
      %v2278 = vsel %vm632, %v2270, %v2277
      %v2279 = vrot.slane %v2274, 4
      %v2281 = vshrl.u32 %v2168, 16
      %v2283 = vrot.slane %v2281, 7
      %v2284 = vshll.u32 %v2168, 16
      %v2286 = vor.u32 %v2283, %v2284
      %v2287 = vsel %vm632, %v2279, %v2286
      %v2289 = vshrl.u32 %v2169, 16
      %v2291 = vrot.slane %v2289, 7
      %v2292 = vrot.slane %v2291, 4
      %v2294 = vshrl.u32 %v2170, 16
      %v2296 = vrot.slane %v2294, 7
      %v2297 = vshll.u32 %v2170, 16
      %v2299 = vor.u32 %v2296, %v2297
      %v2300 = vsel %vm632, %v2292, %v2299
      %v2301 = vrot.slane %v2296, 4
      %v2303 = vshrl.u32 %v2171, 16
      %v2305 = vrot.slane %v2303, 7
      %v2306 = vshll.u32 %v2171, 16
      %v2308 = vor.u32 %v2305, %v2306
      %v2309 = vsel %vm632, %v2301, %v2308
      %v2311 = vshrl.u32 %v2172, 16
      %v2313 = vrot.slane %v2311, 7
      %v2314 = vrot.slane %v2313, 4
      %v2316 = vshrl.u32 %v2173, 16
      %v2318 = vrot.slane %v2316, 7
      %v2319 = vshll.u32 %v2173, 16
      %v2321 = vor.u32 %v2318, %v2319
      %v2322 = vsel %vm632, %v2314, %v2321
      %v2323 = vrot.slane %v2318, 4
      %v2325 = vshrl.u32 %v2174, 16
      %v2327 = vrot.slane %v2325, 7
      %v2328 = vshll.u32 %v2174, 16
      %v2330 = vor.u32 %v2327, %v2328
      %v2331 = vsel %vm632, %v2323, %v2330
      %v2333 = vshrl.u32 %v2175, 16
      %v2335 = vrot.slane %v2333, 7
      %v2336 = vrot.slane %v2335, 4
      %v2338 = vshrl.u32 %v2176, 16
      %v2340 = vrot.slane %v2338, 7
      %v2341 = vshll.u32 %v2176, 16
      %v2343 = vor.u32 %v2340, %v2341
      %v2344 = vsel %vm632, %v2336, %v2343
      %v2345 = vrot.slane %v2340, 4
      %v2347 = vshrl.u32 %v2177, 16
      %v2349 = vrot.slane %v2347, 7
      %v2350 = vshll.u32 %v2177, 16
      %v2352 = vor.u32 %v2349, %v2350
      %v2353 = vsel %vm632, %v2345, %v2352
      %s2354 = scalar_lea.vmem %s1, 24
      %v2355 = vld [vmem:[%s2354] sm:$0xf]
      %v2356 = vunpack.c.l.b16 %v2190
      %v2357 = vunpack.c.l.b16 %v2199
      %v2358 = vunpack.c.l.b16 %v2212
      %v2359 = vunpack.c.l.b16 %v2221
      %v2360 = vunpack.c.l.b16 %v2234
      %v2361 = vunpack.c.l.b16 %v2243
      %v2362 = vunpack.c.l.b16 %v2256
      %v2363 = vunpack.c.l.b16 %v2265
      %v2364 = vunpack.c.l.b16 %v2278
      %v2365 = vunpack.c.l.b16 %v2287
      %v2366 = vunpack.c.l.b16 %v2300
      %v2367 = vunpack.c.l.b16 %v2309
      %v2368 = vunpack.c.l.b16 %v2322
      %v2369 = vunpack.c.l.b16 %v2331
      %v2370 = vunpack.c.l.b16 %v2344
      %v2371 = vunpack.c.l.b16 %v2353
      %v2372 = vpack.c.b16 %v2357, %v2356
      %v2373 = vpack.c.b16 %v2359, %v2358
      %v2374 = vpack.c.b16 %v2361, %v2360
      %v2375 = vpack.c.b16 %v2363, %v2362
      %v2376 = vpack.c.b16 %v2365, %v2364
      %v2377 = vpack.c.b16 %v2367, %v2366
      %v2378 = vpack.c.b16 %v2369, %v2368
      %v2379 = vpack.c.b16 %v2371, %v2370
      %v2381 = vsel %vm852, %v2372, 0
      %v2384 = vsel %vm852, %v2373, 0
      %v2387 = vsel %vm852, %v2374, 0
      %v2390 = vsel %vm852, %v2375, 0
      %v2393 = vsel %vm852, %v2376, 0
      %v2396 = vsel %vm852, %v2377, 0
      %v2399 = vsel %vm852, %v2378, 0
      %v2402 = vsel %vm852, %v2379, 0
      %v2405 = vsel %vm877, %v2355, 0
      %2407 = vmatpush.bf16.msra.mxu0 0
      %2408 = vmatpush.bf16.msra.mxu0 0
      %2409 = vmatpush.bf16.msra.mxu0 0
      %2410 = vmatpush.bf16.msra.mxu0 0
      %2411 = vmatpush.bf16.msra.mxu0 0
      %2412 = vmatpush.bf16.msra.mxu0 0
      %2413 = vmatpush.bf16.msra.mxu0 0
      %2414 = vmatpush.bf16.msra.mxu0 %v2405
      %2415 = vmatmul.bf16.gmra.mxu0 %v2381
      %v2416 = vpop.f32.mrf.mxu0
      %v2417 = vadd.f32 0.0, %v2416
      %v2418 = vpop.f32.mrf.mxu0
      %v2419 = vadd.f32 0.0, %v2418
      %2420 = vmatmul.bf16.gmra.mxu0 %v2384
      %v2421 = vpop.f32.mrf.mxu0
      %v2422 = vadd.f32 0.0, %v2421
      %v2423 = vpop.f32.mrf.mxu0
      %v2424 = vadd.f32 0.0, %v2423
      %2425 = vmatmul.bf16.gmra.mxu0 %v2387
      %v2426 = vpop.f32.mrf.mxu0
      %v2427 = vadd.f32 0.0, %v2426
      %v2428 = vpop.f32.mrf.mxu0
      %v2429 = vadd.f32 0.0, %v2428
      %2430 = vmatmul.bf16.gmra.mxu0 %v2390
      %v2431 = vpop.f32.mrf.mxu0
      %v2432 = vadd.f32 0.0, %v2431
      %v2433 = vpop.f32.mrf.mxu0
      %v2434 = vadd.f32 0.0, %v2433
      %2435 = vmatmul.bf16.gmra.mxu0 %v2393
      %v2436 = vpop.f32.mrf.mxu0
      %v2437 = vadd.f32 0.0, %v2436
      %v2438 = vpop.f32.mrf.mxu0
      %v2439 = vadd.f32 0.0, %v2438
      %2440 = vmatmul.bf16.gmra.mxu0 %v2396
      %v2441 = vpop.f32.mrf.mxu0
      %v2442 = vadd.f32 0.0, %v2441
      %v2443 = vpop.f32.mrf.mxu0
      %v2444 = vadd.f32 0.0, %v2443
      %2445 = vmatmul.bf16.gmra.mxu0 %v2399
      %v2446 = vpop.f32.mrf.mxu0
      %v2447 = vadd.f32 0.0, %v2446
      %v2448 = vpop.f32.mrf.mxu0
      %v2449 = vadd.f32 0.0, %v2448
      %2450 = vmatmul.bf16.gmra.mxu0 %v2402
      %v2451 = vpop.f32.mrf.mxu0
      %v2452 = vadd.f32 0.0, %v2451
      %v2453 = vpop.f32.mrf.mxu0
      %v2454 = vadd.f32 0.0, %v2453
      %2455 = vdwg.mxu0
      %v2456 = vadd.f32 %v2137, %v2417
      %v2457 = vadd.f32 %v2138, %v2419
      %v2458 = vadd.f32 %v2139, %v2422
      %v2459 = vadd.f32 %v2140, %v2424
      %v2460 = vadd.f32 %v2141, %v2427
      %v2461 = vadd.f32 %v2142, %v2429
      %v2462 = vadd.f32 %v2143, %v2432
      %v2463 = vadd.f32 %v2144, %v2434
      %v2464 = vadd.f32 %v2145, %v2437
      %v2465 = vadd.f32 %v2146, %v2439
      %v2466 = vadd.f32 %v2147, %v2442
      %v2467 = vadd.f32 %v2148, %v2444
      %v2468 = vadd.f32 %v2149, %v2447
      %v2469 = vadd.f32 %v2150, %v2449
      %v2470 = vadd.f32 %v2151, %v2452
      %v2471 = vadd.f32 %v2152, %v2454
      %s2472 = scalar_lea.vmem %s1, 28
      %v2473 = vld [vmem:[%s2472] sm:$0xf]
      %v2490 = vunpack.c.l.b16 %v2155
      %v2491 = vunpack.c.l.b16 %v2156
      %v2492 = vunpack.c.l.b16 %v2158
      %v2493 = vunpack.c.l.b16 %v2159
      %v2494 = vunpack.c.l.b16 %v2161
      %v2495 = vunpack.c.l.b16 %v2162
      %v2496 = vunpack.c.l.b16 %v2164
      %v2497 = vunpack.c.l.b16 %v2165
      %v2498 = vunpack.c.l.b16 %v2167
      %v2499 = vunpack.c.l.b16 %v2168
      %v2500 = vunpack.c.l.b16 %v2170
      %v2501 = vunpack.c.l.b16 %v2171
      %v2502 = vunpack.c.l.b16 %v2173
      %v2503 = vunpack.c.l.b16 %v2174
      %v2504 = vunpack.c.l.b16 %v2176
      %v2505 = vunpack.c.l.b16 %v2177
      %v2506 = vpack.c.b16 %v2491, %v2490
      %v2507 = vpack.c.b16 %v2493, %v2492
      %v2508 = vpack.c.b16 %v2495, %v2494
      %v2509 = vpack.c.b16 %v2497, %v2496
      %v2510 = vpack.c.b16 %v2499, %v2498
      %v2511 = vpack.c.b16 %v2501, %v2500
      %v2512 = vpack.c.b16 %v2503, %v2502
      %v2513 = vpack.c.b16 %v2505, %v2504
      %v2515 = vsel %vm852, %v2506, 0
      %v2518 = vsel %vm852, %v2507, 0
      %v2521 = vsel %vm852, %v2508, 0
      %v2524 = vsel %vm852, %v2509, 0
      %v2527 = vsel %vm852, %v2510, 0
      %v2530 = vsel %vm852, %v2511, 0
      %v2533 = vsel %vm852, %v2512, 0
      %v2536 = vsel %vm852, %v2513, 0
      %v2539 = vsel %vm877, %v2473, 0
      %2541 = vmatpush.bf16.msra.mxu0 0
      %2542 = vmatpush.bf16.msra.mxu0 0
      %2543 = vmatpush.bf16.msra.mxu0 0
      %2544 = vmatpush.bf16.msra.mxu0 0
      %2545 = vmatpush.bf16.msra.mxu0 0
      %2546 = vmatpush.bf16.msra.mxu0 0
      %2547 = vmatpush.bf16.msra.mxu0 0
      %2548 = vmatpush.bf16.msra.mxu0 %v2539
      %2549 = vmatmul.bf16.gmra.mxu0 %v2515
      %v2550 = vpop.f32.mrf.mxu0
      %v2551 = vadd.f32 0.0, %v2550
      %v2552 = vpop.f32.mrf.mxu0
      %v2553 = vadd.f32 0.0, %v2552
      %2554 = vmatmul.bf16.gmra.mxu0 %v2518
      %v2555 = vpop.f32.mrf.mxu0
      %v2556 = vadd.f32 0.0, %v2555
      %v2557 = vpop.f32.mrf.mxu0
      %v2558 = vadd.f32 0.0, %v2557
      %2559 = vmatmul.bf16.gmra.mxu0 %v2521
      %v2560 = vpop.f32.mrf.mxu0
      %v2561 = vadd.f32 0.0, %v2560
      %v2562 = vpop.f32.mrf.mxu0
      %v2563 = vadd.f32 0.0, %v2562
      %2564 = vmatmul.bf16.gmra.mxu0 %v2524
      %v2565 = vpop.f32.mrf.mxu0
      %v2566 = vadd.f32 0.0, %v2565
      %v2567 = vpop.f32.mrf.mxu0
      %v2568 = vadd.f32 0.0, %v2567
      %2569 = vmatmul.bf16.gmra.mxu0 %v2527
      %v2570 = vpop.f32.mrf.mxu0
      %v2571 = vadd.f32 0.0, %v2570
      %v2572 = vpop.f32.mrf.mxu0
      %v2573 = vadd.f32 0.0, %v2572
      %2574 = vmatmul.bf16.gmra.mxu0 %v2530
      %v2575 = vpop.f32.mrf.mxu0
      %v2576 = vadd.f32 0.0, %v2575
      %v2577 = vpop.f32.mrf.mxu0
      %v2578 = vadd.f32 0.0, %v2577
      %2579 = vmatmul.bf16.gmra.mxu0 %v2533
      %v2580 = vpop.f32.mrf.mxu0
      %v2581 = vadd.f32 0.0, %v2580
      %v2582 = vpop.f32.mrf.mxu0
      %v2583 = vadd.f32 0.0, %v2582
      %2584 = vmatmul.bf16.gmra.mxu0 %v2536
      %v2585 = vpop.f32.mrf.mxu0
      %v2586 = vadd.f32 0.0, %v2585
      %v2587 = vpop.f32.mrf.mxu0
      %v2588 = vadd.f32 0.0, %v2587
      %2589 = vdwg.mxu0
      %v2590 = vadd.f32 %v2456, %v2551
      %v2591 = vadd.f32 %v2457, %v2553
      %v2592 = vadd.f32 %v2458, %v2556
      %v2593 = vadd.f32 %v2459, %v2558
      %v2594 = vadd.f32 %v2460, %v2561
      %v2595 = vadd.f32 %v2461, %v2563
      %v2596 = vadd.f32 %v2462, %v2566
      %v2597 = vadd.f32 %v2463, %v2568
      %v2598 = vadd.f32 %v2464, %v2571
      %v2599 = vadd.f32 %v2465, %v2573
      %v2600 = vadd.f32 %v2466, %v2576
      %v2601 = vadd.f32 %v2467, %v2578
      %v2602 = vadd.f32 %v2468, %v2581
      %v2603 = vadd.f32 %v2469, %v2583
      %v2604 = vadd.f32 %v2470, %v2586
      %v2605 = vadd.f32 %v2471, %v2588
      %v2606 = vld [vmem:[%s2153 + $0x8] sm:$0xf]
      %v2607 = vld [vmem:[%s2153 + $0xc] sm:$0xf]
      %v2608 = vld [vmem:[%s2153 + $0x10] sm:$0x1]
      %v2609 = vld [vmem:[%s2153 + $0x1c] sm:$0xf]
      %v2610 = vld [vmem:[%s2153 + $0x20] sm:$0xf]
      %v2611 = vld [vmem:[%s2153 + $0x24] sm:$0x1]
      %v2612 = vld [vmem:[%s2153 + $0x30] sm:$0xf]
      %v2613 = vld [vmem:[%s2153 + $0x34] sm:$0xf]
      %v2614 = vld [vmem:[%s2153 + $0x38] sm:$0x1]
      %v2615 = vld [vmem:[%s2153 + $0x44] sm:$0xf]
      %v2616 = vld [vmem:[%s2153 + $0x48] sm:$0xf]
      %v2617 = vld [vmem:[%s2153 + $0x4c] sm:$0x1]
      %v2618 = vld [vmem:[%s2153 + $0x58] sm:$0xf]
      %v2619 = vld [vmem:[%s2153 + $0x5c] sm:$0xf]
      %v2620 = vld [vmem:[%s2153 + $0x60] sm:$0x1]
      %v2621 = vld [vmem:[%s2153 + $0x6c] sm:$0xf]
      %v2622 = vld [vmem:[%s2153 + $0x70] sm:$0xf]
      %v2623 = vld [vmem:[%s2153 + $0x74] sm:$0x1]
      %v2624 = vld [vmem:[%s2153 + $0x80] sm:$0xf]
      %v2625 = vld [vmem:[%s2153 + $0x84] sm:$0xf]
      %v2626 = vld [vmem:[%s2153 + $0x88] sm:$0x1]
      %v2627 = vld [vmem:[%s2153 + $0x94] sm:$0xf]
      %v2628 = vld [vmem:[%s2153 + $0x98] sm:$0xf]
      %v2629 = vld [vmem:[%s2153 + $0x9c] sm:$0x1]
      %v2631 = vshrl.u32 %v2606, 16
      %v2633 = vrot.slane %v2631, 4
      %v2634 = vshll.u32 %v2606, 16
      %v2636 = vrot.slane %v2634, 5
      %v2637 = vor.u32 %v2633, %v2636
      %v2638 = vrot.slane %v2637, 4
      %v2640 = vshll.u32 %v2607, 16
      %v2642 = vrot.slane %v2640, 5
      %v2643 = vsel %vm1056, %v2638, %v2642
      %v2644 = vshrl.u32 %v2607, 16
      %v2646 = vrot.slane %v2644, 4
      %v2647 = vor.u32 %v2646, %v2642
      %v2648 = vrot.slane %v2647, 4
      %v2650 = vshll.u32 %v2608, 16
      %v2652 = vrot.slane %v2650, 5
      %v2653 = vsel %vm1056, %v2648, %v2652
      %v2655 = vshrl.u32 %v2609, 16
      %v2657 = vrot.slane %v2655, 4
      %v2658 = vshll.u32 %v2609, 16
      %v2660 = vrot.slane %v2658, 5
      %v2661 = vor.u32 %v2657, %v2660
      %v2662 = vrot.slane %v2661, 4
      %v2664 = vshll.u32 %v2610, 16
      %v2666 = vrot.slane %v2664, 5
      %v2667 = vsel %vm1056, %v2662, %v2666
      %v2668 = vshrl.u32 %v2610, 16
      %v2670 = vrot.slane %v2668, 4
      %v2671 = vor.u32 %v2670, %v2666
      %v2672 = vrot.slane %v2671, 4
      %v2674 = vshll.u32 %v2611, 16
      %v2676 = vrot.slane %v2674, 5
      %v2677 = vsel %vm1056, %v2672, %v2676
      %v2679 = vshrl.u32 %v2612, 16
      %v2681 = vrot.slane %v2679, 4
      %v2682 = vshll.u32 %v2612, 16
      %v2684 = vrot.slane %v2682, 5
      %v2685 = vor.u32 %v2681, %v2684
      %v2686 = vrot.slane %v2685, 4
      %v2688 = vshll.u32 %v2613, 16
      %v2690 = vrot.slane %v2688, 5
      %v2691 = vsel %vm1056, %v2686, %v2690
      %v2692 = vshrl.u32 %v2613, 16
      %v2694 = vrot.slane %v2692, 4
      %v2695 = vor.u32 %v2694, %v2690
      %v2696 = vrot.slane %v2695, 4
      %v2698 = vshll.u32 %v2614, 16
      %v2700 = vrot.slane %v2698, 5
      %v2701 = vsel %vm1056, %v2696, %v2700
      %v2703 = vshrl.u32 %v2615, 16
      %v2705 = vrot.slane %v2703, 4
      %v2706 = vshll.u32 %v2615, 16
      %v2708 = vrot.slane %v2706, 5
      %v2709 = vor.u32 %v2705, %v2708
      %v2710 = vrot.slane %v2709, 4
      %v2712 = vshll.u32 %v2616, 16
      %v2714 = vrot.slane %v2712, 5
      %v2715 = vsel %vm1056, %v2710, %v2714
      %v2716 = vshrl.u32 %v2616, 16
      %v2718 = vrot.slane %v2716, 4
      %v2719 = vor.u32 %v2718, %v2714
      %v2720 = vrot.slane %v2719, 4
      %v2722 = vshll.u32 %v2617, 16
      %v2724 = vrot.slane %v2722, 5
      %v2725 = vsel %vm1056, %v2720, %v2724
      %v2727 = vshrl.u32 %v2618, 16
      %v2729 = vrot.slane %v2727, 4
      %v2730 = vshll.u32 %v2618, 16
      %v2732 = vrot.slane %v2730, 5
      %v2733 = vor.u32 %v2729, %v2732
      %v2734 = vrot.slane %v2733, 4
      %v2736 = vshll.u32 %v2619, 16
      %v2738 = vrot.slane %v2736, 5
      %v2739 = vsel %vm1056, %v2734, %v2738
      %v2740 = vshrl.u32 %v2619, 16
      %v2742 = vrot.slane %v2740, 4
      %v2743 = vor.u32 %v2742, %v2738
      %v2744 = vrot.slane %v2743, 4
      %v2746 = vshll.u32 %v2620, 16
      %v2748 = vrot.slane %v2746, 5
      %v2749 = vsel %vm1056, %v2744, %v2748
      %v2751 = vshrl.u32 %v2621, 16
      %v2753 = vrot.slane %v2751, 4
      %v2754 = vshll.u32 %v2621, 16
      %v2756 = vrot.slane %v2754, 5
      %v2757 = vor.u32 %v2753, %v2756
      %v2758 = vrot.slane %v2757, 4
      %v2760 = vshll.u32 %v2622, 16
      %v2762 = vrot.slane %v2760, 5
      %v2763 = vsel %vm1056, %v2758, %v2762
      %v2764 = vshrl.u32 %v2622, 16
      %v2766 = vrot.slane %v2764, 4
      %v2767 = vor.u32 %v2766, %v2762
      %v2768 = vrot.slane %v2767, 4
      %v2770 = vshll.u32 %v2623, 16
      %v2772 = vrot.slane %v2770, 5
      %v2773 = vsel %vm1056, %v2768, %v2772
      %v2775 = vshrl.u32 %v2624, 16
      %v2777 = vrot.slane %v2775, 4
      %v2778 = vshll.u32 %v2624, 16
      %v2780 = vrot.slane %v2778, 5
      %v2781 = vor.u32 %v2777, %v2780
      %v2782 = vrot.slane %v2781, 4
      %v2784 = vshll.u32 %v2625, 16
      %v2786 = vrot.slane %v2784, 5
      %v2787 = vsel %vm1056, %v2782, %v2786
      %v2788 = vshrl.u32 %v2625, 16
      %v2790 = vrot.slane %v2788, 4
      %v2791 = vor.u32 %v2790, %v2786
      %v2792 = vrot.slane %v2791, 4
      %v2794 = vshll.u32 %v2626, 16
      %v2796 = vrot.slane %v2794, 5
      %v2797 = vsel %vm1056, %v2792, %v2796
      %v2799 = vshrl.u32 %v2627, 16
      %v2801 = vrot.slane %v2799, 4
      %v2802 = vshll.u32 %v2627, 16
      %v2804 = vrot.slane %v2802, 5
      %v2805 = vor.u32 %v2801, %v2804
      %v2806 = vrot.slane %v2805, 4
      %v2808 = vshll.u32 %v2628, 16
      %v2810 = vrot.slane %v2808, 5
      %v2811 = vsel %vm1056, %v2806, %v2810
      %v2812 = vshrl.u32 %v2628, 16
      %v2814 = vrot.slane %v2812, 4
      %v2815 = vor.u32 %v2814, %v2810
      %v2816 = vrot.slane %v2815, 4
      %v2818 = vshll.u32 %v2629, 16
      %v2820 = vrot.slane %v2818, 5
      %v2821 = vsel %vm1056, %v2816, %v2820
      %s2822 = scalar_lea.vmem %s1, 32
      %v2823 = vld [vmem:[%s2822] sm:$0xf]
      %v2824 = vunpack.c.l.b16 %v2643
      %v2825 = vunpack.c.l.b16 %v2653
      %v2826 = vunpack.c.l.b16 %v2667
      %v2827 = vunpack.c.l.b16 %v2677
      %v2828 = vunpack.c.l.b16 %v2691
      %v2829 = vunpack.c.l.b16 %v2701
      %v2830 = vunpack.c.l.b16 %v2715
      %v2831 = vunpack.c.l.b16 %v2725
      %v2832 = vunpack.c.l.b16 %v2739
      %v2833 = vunpack.c.l.b16 %v2749
      %v2834 = vunpack.c.l.b16 %v2763
      %v2835 = vunpack.c.l.b16 %v2773
      %v2836 = vunpack.c.l.b16 %v2787
      %v2837 = vunpack.c.l.b16 %v2797
      %v2838 = vunpack.c.l.b16 %v2811
      %v2839 = vunpack.c.l.b16 %v2821
      %v2840 = vpack.c.b16 %v2825, %v2824
      %v2841 = vpack.c.b16 %v2827, %v2826
      %v2842 = vpack.c.b16 %v2829, %v2828
      %v2843 = vpack.c.b16 %v2831, %v2830
      %v2844 = vpack.c.b16 %v2833, %v2832
      %v2845 = vpack.c.b16 %v2835, %v2834
      %v2846 = vpack.c.b16 %v2837, %v2836
      %v2847 = vpack.c.b16 %v2839, %v2838
      %v2849 = vsel %vm852, %v2840, 0
      %v2852 = vsel %vm852, %v2841, 0
      %v2855 = vsel %vm852, %v2842, 0
      %v2858 = vsel %vm852, %v2843, 0
      %v2861 = vsel %vm852, %v2844, 0
      %v2864 = vsel %vm852, %v2845, 0
      %v2867 = vsel %vm852, %v2846, 0
      %v2870 = vsel %vm852, %v2847, 0
      %v2873 = vsel %vm877, %v2823, 0
      %2875 = vmatpush.bf16.msra.mxu0 0
      %2876 = vmatpush.bf16.msra.mxu0 0
      %2877 = vmatpush.bf16.msra.mxu0 0
      %2878 = vmatpush.bf16.msra.mxu0 0
      %2879 = vmatpush.bf16.msra.mxu0 0
      %2880 = vmatpush.bf16.msra.mxu0 0
      %2881 = vmatpush.bf16.msra.mxu0 0
      %2882 = vmatpush.bf16.msra.mxu0 %v2873
      %2883 = vmatmul.bf16.gmra.mxu0 %v2849
      %v2884 = vpop.f32.mrf.mxu0
      %v2885 = vadd.f32 0.0, %v2884
      %v2886 = vpop.f32.mrf.mxu0
      %v2887 = vadd.f32 0.0, %v2886
      %2888 = vmatmul.bf16.gmra.mxu0 %v2852
      %v2889 = vpop.f32.mrf.mxu0
      %v2890 = vadd.f32 0.0, %v2889
      %v2891 = vpop.f32.mrf.mxu0
      %v2892 = vadd.f32 0.0, %v2891
      %2893 = vmatmul.bf16.gmra.mxu0 %v2855
      %v2894 = vpop.f32.mrf.mxu0
      %v2895 = vadd.f32 0.0, %v2894
      %v2896 = vpop.f32.mrf.mxu0
      %v2897 = vadd.f32 0.0, %v2896
      %2898 = vmatmul.bf16.gmra.mxu0 %v2858
      %v2899 = vpop.f32.mrf.mxu0
      %v2900 = vadd.f32 0.0, %v2899
      %v2901 = vpop.f32.mrf.mxu0
      %v2902 = vadd.f32 0.0, %v2901
      %2903 = vmatmul.bf16.gmra.mxu0 %v2861
      %v2904 = vpop.f32.mrf.mxu0
      %v2905 = vadd.f32 0.0, %v2904
      %v2906 = vpop.f32.mrf.mxu0
      %v2907 = vadd.f32 0.0, %v2906
      %2908 = vmatmul.bf16.gmra.mxu0 %v2864
      %v2909 = vpop.f32.mrf.mxu0
      %v2910 = vadd.f32 0.0, %v2909
      %v2911 = vpop.f32.mrf.mxu0
      %v2912 = vadd.f32 0.0, %v2911
      %2913 = vmatmul.bf16.gmra.mxu0 %v2867
      %v2914 = vpop.f32.mrf.mxu0
      %v2915 = vadd.f32 0.0, %v2914
      %v2916 = vpop.f32.mrf.mxu0
      %v2917 = vadd.f32 0.0, %v2916
      %2918 = vmatmul.bf16.gmra.mxu0 %v2870
      %v2919 = vpop.f32.mrf.mxu0
      %v2920 = vadd.f32 0.0, %v2919
      %v2921 = vpop.f32.mrf.mxu0
      %v2922 = vadd.f32 0.0, %v2921
      %2923 = vdwg.mxu0
      %v2924 = vadd.f32 %v2590, %v2885
      %v2925 = vadd.f32 %v2591, %v2887
      %v2926 = vadd.f32 %v2592, %v2890
      %v2927 = vadd.f32 %v2593, %v2892
      %v2928 = vadd.f32 %v2594, %v2895
      %v2929 = vadd.f32 %v2595, %v2897
      %v2930 = vadd.f32 %v2596, %v2900
      %v2931 = vadd.f32 %v2597, %v2902
      %v2932 = vadd.f32 %v2598, %v2905
      %v2933 = vadd.f32 %v2599, %v2907
      %v2934 = vadd.f32 %v2600, %v2910
      %v2935 = vadd.f32 %v2601, %v2912
      %v2936 = vadd.f32 %v2602, %v2915
      %v2937 = vadd.f32 %v2603, %v2917
      %v2938 = vadd.f32 %v2604, %v2920
      %v2939 = vadd.f32 %v2605, %v2922
      %v2940 = vld [vmem:[%s2] sm:$0x1]
      %v2942 = vperm.slane %v2940, 0
      %v2944 = vmul.f32 %v2924, %v2942
      %v2945 = vmul.f32 %v2925, %v2942
      %v2946 = vmul.f32 %v2926, %v2942
      %v2947 = vmul.f32 %v2927, %v2942
      %v2948 = vmul.f32 %v2928, %v2942
      %v2949 = vmul.f32 %v2929, %v2942
      %v2950 = vmul.f32 %v2930, %v2942
      %v2951 = vmul.f32 %v2931, %v2942
      %v2952 = vmul.f32 %v2932, %v2942
      %v2953 = vmul.f32 %v2933, %v2942
      %v2954 = vmul.f32 %v2934, %v2942
      %v2955 = vmul.f32 %v2935, %v2942
      %v2956 = vmul.f32 %v2936, %v2942
      %v2957 = vmul.f32 %v2937, %v2942
      %v2958 = vmul.f32 %v2938, %v2942
      %v2959 = vmul.f32 %v2939, %v2942
      %v2960 = vld [vmem:[%s3] sm:$0x1]
      %v2962 = vperm.slane %v2960, 0
      %v2964 = vadd.f32 %v2944, %v2962
      %v2965 = vadd.f32 %v2945, %v2962
      %v2966 = vadd.f32 %v2946, %v2962
      %v2967 = vadd.f32 %v2947, %v2962
      %v2968 = vadd.f32 %v2948, %v2962
      %v2969 = vadd.f32 %v2949, %v2962
      %v2970 = vadd.f32 %v2950, %v2962
      %v2971 = vadd.f32 %v2951, %v2962
      %v2972 = vadd.f32 %v2952, %v2962
      %v2973 = vadd.f32 %v2953, %v2962
      %v2974 = vadd.f32 %v2954, %v2962
      %v2975 = vadd.f32 %v2955, %v2962
      %v2976 = vadd.f32 %v2956, %v2962
      %v2977 = vadd.f32 %v2957, %v2962
      %v2978 = vadd.f32 %v2958, %v2962
      %v2979 = vadd.f32 %v2959, %v2962
      %v2980 = vmax.f32 %v2964, 0.0
      %v2981 = vmax.f32 %v2965, 0.0
      %v2982 = vmax.f32 %v2966, 0.0
      %v2983 = vmax.f32 %v2967, 0.0
      %v2984 = vmax.f32 %v2968, 0.0
      %v2985 = vmax.f32 %v2969, 0.0
      %v2986 = vmax.f32 %v2970, 0.0
      %v2987 = vmax.f32 %v2971, 0.0
      %v2988 = vmax.f32 %v2972, 0.0
      %v2989 = vmax.f32 %v2973, 0.0
      %v2990 = vmax.f32 %v2974, 0.0
      %v2991 = vmax.f32 %v2975, 0.0
      %v2992 = vmax.f32 %v2976, 0.0
      %v2993 = vmax.f32 %v2977, 0.0
      %v2994 = vmax.f32 %v2978, 0.0
      %v2995 = vmax.f32 %v2979, 0.0
      %v2996 = vpack.c.bf16 %v2980, %v2980
      %v2997 = vpack.c.bf16 %v2981, %v2981
      %v2998 = vpack.c.bf16 %v2982, %v2982
      %v2999 = vpack.c.bf16 %v2983, %v2983
      %v3000 = vpack.c.bf16 %v2984, %v2984
      %v3001 = vpack.c.bf16 %v2985, %v2985
      %v3002 = vpack.c.bf16 %v2986, %v2986
      %v3003 = vpack.c.bf16 %v2987, %v2987
      %v3004 = vpack.c.bf16 %v2988, %v2988
      %v3005 = vpack.c.bf16 %v2989, %v2989
      %v3006 = vpack.c.bf16 %v2990, %v2990
      %v3007 = vpack.c.bf16 %v2991, %v2991
      %v3008 = vpack.c.bf16 %v2992, %v2992
      %v3009 = vpack.c.bf16 %v2993, %v2993
      %v3010 = vpack.c.bf16 %v2994, %v2994
      %v3011 = vpack.c.bf16 %v2995, %v2995
      %s3012 = scalar_lea.vmem [#allocation3], 20
      %3013 = vst.msk [vmem:[%s3012 + $0x8] sm:$0xf] %vm527, %v2996
      %3014 = vst.msk [vmem:[%s3012 + $0xc] sm:$0xf] %vm527, %v2997
      %3015 = vst.msk [vmem:[%s3012 + $0x1c] sm:$0xf] %vm527, %v2998
      %3016 = vst.msk [vmem:[%s3012 + $0x20] sm:$0xf] %vm527, %v2999
      %3017 = vst.msk [vmem:[%s3012 + $0x30] sm:$0xf] %vm527, %v3000
      %3018 = vst.msk [vmem:[%s3012 + $0x34] sm:$0xf] %vm527, %v3001
      %3019 = vst.msk [vmem:[%s3012 + $0x44] sm:$0xf] %vm527, %v3002
      %3020 = vst.msk [vmem:[%s3012 + $0x48] sm:$0xf] %vm527, %v3003
      %3021 = vst.msk [vmem:[%s3012 + $0x58] sm:$0xf] %vm527, %v3004
      %3022 = vst.msk [vmem:[%s3012 + $0x5c] sm:$0xf] %vm527, %v3005
      %3023 = vst.msk [vmem:[%s3012 + $0x6c] sm:$0xf] %vm527, %v3006
      %3024 = vst.msk [vmem:[%s3012 + $0x70] sm:$0xf] %vm527, %v3007
      %3025 = vst.msk [vmem:[%s3012 + $0x80] sm:$0xf] %vm527, %v3008
      %3026 = vst.msk [vmem:[%s3012 + $0x84] sm:$0xf] %vm527, %v3009
      %3027 = vst.msk [vmem:[%s3012 + $0x94] sm:$0xf] %vm527, %v3010
      %3028 = vst.msk [vmem:[%s3012 + $0x98] sm:$0xf] %vm527, %v3011
      %s3029 = scalar_lea.vmem [#allocation2], 160
      %v3030 = vld [vmem:[%s3029 + $0x4] sm:$0x8]
      %v3031 = vld [vmem:[%s3029 + $0x8] sm:$0xf]
      %v3032 = vld [vmem:[%s3029 + $0xc] sm:$0xf]
      %v3033 = vld [vmem:[%s3029 + $0x18] sm:$0x8]
      %v3034 = vld [vmem:[%s3029 + $0x1c] sm:$0xf]
      %v3035 = vld [vmem:[%s3029 + $0x20] sm:$0xf]
      %v3036 = vld [vmem:[%s3029 + $0x2c] sm:$0x8]
      %v3037 = vld [vmem:[%s3029 + $0x30] sm:$0xf]
      %v3038 = vld [vmem:[%s3029 + $0x34] sm:$0xf]
      %v3039 = vld [vmem:[%s3029 + $0x40] sm:$0x8]
      %v3040 = vld [vmem:[%s3029 + $0x44] sm:$0xf]
      %v3041 = vld [vmem:[%s3029 + $0x48] sm:$0xf]
      %v3042 = vld [vmem:[%s3029 + $0x54] sm:$0x8]
      %v3043 = vld [vmem:[%s3029 + $0x58] sm:$0xf]
      %v3044 = vld [vmem:[%s3029 + $0x5c] sm:$0xf]
      %v3045 = vld [vmem:[%s3029 + $0x68] sm:$0x8]
      %v3046 = vld [vmem:[%s3029 + $0x6c] sm:$0xf]
      %v3047 = vld [vmem:[%s3029 + $0x70] sm:$0xf]
      %v3048 = vld [vmem:[%s3029 + $0x7c] sm:$0x8]
      %v3049 = vld [vmem:[%s3029 + $0x80] sm:$0xf]
      %v3050 = vld [vmem:[%s3029 + $0x84] sm:$0xf]
      %v3051 = vld [vmem:[%s3029 + $0x90] sm:$0x8]
      %v3052 = vld [vmem:[%s3029 + $0x94] sm:$0xf]
      %v3053 = vld [vmem:[%s3029 + $0x98] sm:$0xf]
      %v3055 = vshrl.u32 %v3030, 16
      %v3057 = vrot.slane %v3055, 7
      %v3058 = vrot.slane %v3057, 4
      %v3060 = vshrl.u32 %v3031, 16
      %v3062 = vrot.slane %v3060, 7
      %v3063 = vshll.u32 %v3031, 16
      %v3065 = vor.u32 %v3062, %v3063
      %v3066 = vsel %vm632, %v3058, %v3065
      %v3067 = vrot.slane %v3062, 4
      %v3069 = vshrl.u32 %v3032, 16
      %v3071 = vrot.slane %v3069, 7
      %v3072 = vshll.u32 %v3032, 16
      %v3074 = vor.u32 %v3071, %v3072
      %v3075 = vsel %vm632, %v3067, %v3074
      %v3077 = vshrl.u32 %v3033, 16
      %v3079 = vrot.slane %v3077, 7
      %v3080 = vrot.slane %v3079, 4
      %v3082 = vshrl.u32 %v3034, 16
      %v3084 = vrot.slane %v3082, 7
      %v3085 = vshll.u32 %v3034, 16
      %v3087 = vor.u32 %v3084, %v3085
      %v3088 = vsel %vm632, %v3080, %v3087
      %v3089 = vrot.slane %v3084, 4
      %v3091 = vshrl.u32 %v3035, 16
      %v3093 = vrot.slane %v3091, 7
      %v3094 = vshll.u32 %v3035, 16
      %v3096 = vor.u32 %v3093, %v3094
      %v3097 = vsel %vm632, %v3089, %v3096
      %v3099 = vshrl.u32 %v3036, 16
      %v3101 = vrot.slane %v3099, 7
      %v3102 = vrot.slane %v3101, 4
      %v3104 = vshrl.u32 %v3037, 16
      %v3106 = vrot.slane %v3104, 7
      %v3107 = vshll.u32 %v3037, 16
      %v3109 = vor.u32 %v3106, %v3107
      %v3110 = vsel %vm632, %v3102, %v3109
      %v3111 = vrot.slane %v3106, 4
      %v3113 = vshrl.u32 %v3038, 16
      %v3115 = vrot.slane %v3113, 7
      %v3116 = vshll.u32 %v3038, 16
      %v3118 = vor.u32 %v3115, %v3116
      %v3119 = vsel %vm632, %v3111, %v3118
      %v3121 = vshrl.u32 %v3039, 16
      %v3123 = vrot.slane %v3121, 7
      %v3124 = vrot.slane %v3123, 4
      %v3126 = vshrl.u32 %v3040, 16
      %v3128 = vrot.slane %v3126, 7
      %v3129 = vshll.u32 %v3040, 16
      %v3131 = vor.u32 %v3128, %v3129
      %v3132 = vsel %vm632, %v3124, %v3131
      %v3133 = vrot.slane %v3128, 4
      %v3135 = vshrl.u32 %v3041, 16
      %v3137 = vrot.slane %v3135, 7
      %v3138 = vshll.u32 %v3041, 16
      %v3140 = vor.u32 %v3137, %v3138
      %v3141 = vsel %vm632, %v3133, %v3140
      %v3143 = vshrl.u32 %v3042, 16
      %v3145 = vrot.slane %v3143, 7
      %v3146 = vrot.slane %v3145, 4
      %v3148 = vshrl.u32 %v3043, 16
      %v3150 = vrot.slane %v3148, 7
      %v3151 = vshll.u32 %v3043, 16
      %v3153 = vor.u32 %v3150, %v3151
      %v3154 = vsel %vm632, %v3146, %v3153
      %v3155 = vrot.slane %v3150, 4
      %v3157 = vshrl.u32 %v3044, 16
      %v3159 = vrot.slane %v3157, 7
      %v3160 = vshll.u32 %v3044, 16
      %v3162 = vor.u32 %v3159, %v3160
      %v3163 = vsel %vm632, %v3155, %v3162
      %v3165 = vshrl.u32 %v3045, 16
      %v3167 = vrot.slane %v3165, 7
      %v3168 = vrot.slane %v3167, 4
      %v3170 = vshrl.u32 %v3046, 16
      %v3172 = vrot.slane %v3170, 7
      %v3173 = vshll.u32 %v3046, 16
      %v3175 = vor.u32 %v3172, %v3173
      %v3176 = vsel %vm632, %v3168, %v3175
      %v3177 = vrot.slane %v3172, 4
      %v3179 = vshrl.u32 %v3047, 16
      %v3181 = vrot.slane %v3179, 7
      %v3182 = vshll.u32 %v3047, 16
      %v3184 = vor.u32 %v3181, %v3182
      %v3185 = vsel %vm632, %v3177, %v3184
      %v3187 = vshrl.u32 %v3048, 16
      %v3189 = vrot.slane %v3187, 7
      %v3190 = vrot.slane %v3189, 4
      %v3192 = vshrl.u32 %v3049, 16
      %v3194 = vrot.slane %v3192, 7
      %v3195 = vshll.u32 %v3049, 16
      %v3197 = vor.u32 %v3194, %v3195
      %v3198 = vsel %vm632, %v3190, %v3197
      %v3199 = vrot.slane %v3194, 4
      %v3201 = vshrl.u32 %v3050, 16
      %v3203 = vrot.slane %v3201, 7
      %v3204 = vshll.u32 %v3050, 16
      %v3206 = vor.u32 %v3203, %v3204
      %v3207 = vsel %vm632, %v3199, %v3206
      %v3209 = vshrl.u32 %v3051, 16
      %v3211 = vrot.slane %v3209, 7
      %v3212 = vrot.slane %v3211, 4
      %v3214 = vshrl.u32 %v3052, 16
      %v3216 = vrot.slane %v3214, 7
      %v3217 = vshll.u32 %v3052, 16
      %v3219 = vor.u32 %v3216, %v3217
      %v3220 = vsel %vm632, %v3212, %v3219
      %v3221 = vrot.slane %v3216, 4
      %v3223 = vshrl.u32 %v3053, 16
      %v3225 = vrot.slane %v3223, 7
      %v3226 = vshll.u32 %v3053, 16
      %v3228 = vor.u32 %v3225, %v3226
      %v3229 = vsel %vm632, %v3221, %v3228
      %v3230 = vld [vmem:[%s1] sm:$0xf]
      %v3231 = vld [vmem:[%s810] sm:$0xf]
      %v3248 = vunpack.c.l.b16 %v3031
      %v3249 = vunpack.c.l.b16 %v3032
      %v3250 = vunpack.c.l.b16 %v3034
      %v3251 = vunpack.c.l.b16 %v3035
      %v3252 = vunpack.c.l.b16 %v3037
      %v3253 = vunpack.c.l.b16 %v3038
      %v3254 = vunpack.c.l.b16 %v3040
      %v3255 = vunpack.c.l.b16 %v3041
      %v3256 = vunpack.c.l.b16 %v3043
      %v3257 = vunpack.c.l.b16 %v3044
      %v3258 = vunpack.c.l.b16 %v3046
      %v3259 = vunpack.c.l.b16 %v3047
      %v3260 = vunpack.c.l.b16 %v3049
      %v3261 = vunpack.c.l.b16 %v3050
      %v3262 = vunpack.c.l.b16 %v3052
      %v3263 = vunpack.c.l.b16 %v3053
      %v3264 = vpack.c.b16 %v3249, %v3248
      %v3265 = vpack.c.b16 %v3251, %v3250
      %v3266 = vpack.c.b16 %v3253, %v3252
      %v3267 = vpack.c.b16 %v3255, %v3254
      %v3268 = vpack.c.b16 %v3257, %v3256
      %v3269 = vpack.c.b16 %v3259, %v3258
      %v3270 = vpack.c.b16 %v3261, %v3260
      %v3271 = vpack.c.b16 %v3263, %v3262
      %v3273 = vsel %vm852, %v3264, 0
      %v3276 = vsel %vm852, %v3265, 0
      %v3279 = vsel %vm852, %v3266, 0
      %v3282 = vsel %vm852, %v3267, 0
      %v3285 = vsel %vm852, %v3268, 0
      %v3288 = vsel %vm852, %v3269, 0
      %v3291 = vsel %vm852, %v3270, 0
      %v3294 = vsel %vm852, %v3271, 0
      %v3297 = vsel %vm877, %v3231, 0
      %3299 = vmatpush.bf16.msra.mxu0 0
      %3300 = vmatpush.bf16.msra.mxu0 0
      %3301 = vmatpush.bf16.msra.mxu0 0
      %3302 = vmatpush.bf16.msra.mxu0 0
      %3303 = vmatpush.bf16.msra.mxu0 0
      %3304 = vmatpush.bf16.msra.mxu0 0
      %3305 = vmatpush.bf16.msra.mxu0 0
      %3306 = vmatpush.bf16.msra.mxu0 %v3297
      %3307 = vmatmul.bf16.gmra.mxu0 %v3273
      %v3308 = vpop.f32.mrf.mxu0
      %v3309 = vadd.f32 0.0, %v3308
      %v3310 = vpop.f32.mrf.mxu0
      %v3311 = vadd.f32 0.0, %v3310
      %3312 = vmatmul.bf16.gmra.mxu0 %v3276
      %v3313 = vpop.f32.mrf.mxu0
      %v3314 = vadd.f32 0.0, %v3313
      %v3315 = vpop.f32.mrf.mxu0
      %v3316 = vadd.f32 0.0, %v3315
      %3317 = vmatmul.bf16.gmra.mxu0 %v3279
      %v3318 = vpop.f32.mrf.mxu0
      %v3319 = vadd.f32 0.0, %v3318
      %v3320 = vpop.f32.mrf.mxu0
      %v3321 = vadd.f32 0.0, %v3320
      %3322 = vmatmul.bf16.gmra.mxu0 %v3282
      %v3323 = vpop.f32.mrf.mxu0
      %v3324 = vadd.f32 0.0, %v3323
      %v3325 = vpop.f32.mrf.mxu0
      %v3326 = vadd.f32 0.0, %v3325
      %3327 = vmatmul.bf16.gmra.mxu0 %v3285
      %v3328 = vpop.f32.mrf.mxu0
      %v3329 = vadd.f32 0.0, %v3328
      %v3330 = vpop.f32.mrf.mxu0
      %v3331 = vadd.f32 0.0, %v3330
      %3332 = vmatmul.bf16.gmra.mxu0 %v3288
      %v3333 = vpop.f32.mrf.mxu0
      %v3334 = vadd.f32 0.0, %v3333
      %v3335 = vpop.f32.mrf.mxu0
      %v3336 = vadd.f32 0.0, %v3335
      %3337 = vmatmul.bf16.gmra.mxu0 %v3291
      %v3338 = vpop.f32.mrf.mxu0
      %v3339 = vadd.f32 0.0, %v3338
      %v3340 = vpop.f32.mrf.mxu0
      %v3341 = vadd.f32 0.0, %v3340
      %3342 = vmatmul.bf16.gmra.mxu0 %v3294
      %v3343 = vpop.f32.mrf.mxu0
      %v3344 = vadd.f32 0.0, %v3343
      %v3345 = vpop.f32.mrf.mxu0
      %v3346 = vadd.f32 0.0, %v3345
      %3347 = vdwg.mxu0
      %v3348 = vunpack.c.l.b16 %v3066
      %v3349 = vunpack.c.l.b16 %v3075
      %v3350 = vunpack.c.l.b16 %v3088
      %v3351 = vunpack.c.l.b16 %v3097
      %v3352 = vunpack.c.l.b16 %v3110
      %v3353 = vunpack.c.l.b16 %v3119
      %v3354 = vunpack.c.l.b16 %v3132
      %v3355 = vunpack.c.l.b16 %v3141
      %v3356 = vunpack.c.l.b16 %v3154
      %v3357 = vunpack.c.l.b16 %v3163
      %v3358 = vunpack.c.l.b16 %v3176
      %v3359 = vunpack.c.l.b16 %v3185
      %v3360 = vunpack.c.l.b16 %v3198
      %v3361 = vunpack.c.l.b16 %v3207
      %v3362 = vunpack.c.l.b16 %v3220
      %v3363 = vunpack.c.l.b16 %v3229
      %v3364 = vpack.c.b16 %v3349, %v3348
      %v3365 = vpack.c.b16 %v3351, %v3350
      %v3366 = vpack.c.b16 %v3353, %v3352
      %v3367 = vpack.c.b16 %v3355, %v3354
      %v3368 = vpack.c.b16 %v3357, %v3356
      %v3369 = vpack.c.b16 %v3359, %v3358
      %v3370 = vpack.c.b16 %v3361, %v3360
      %v3371 = vpack.c.b16 %v3363, %v3362
      %v3373 = vsel %vm852, %v3364, 0
      %v3376 = vsel %vm852, %v3365, 0
      %v3379 = vsel %vm852, %v3366, 0
      %v3382 = vsel %vm852, %v3367, 0
      %v3385 = vsel %vm852, %v3368, 0
      %v3388 = vsel %vm852, %v3369, 0
      %v3391 = vsel %vm852, %v3370, 0
      %v3394 = vsel %vm852, %v3371, 0
      %v3397 = vsel %vm877, %v3230, 0
      %3399 = vmatpush.bf16.msra.mxu0 0
      %3400 = vmatpush.bf16.msra.mxu0 0
      %3401 = vmatpush.bf16.msra.mxu0 0
      %3402 = vmatpush.bf16.msra.mxu0 0
      %3403 = vmatpush.bf16.msra.mxu0 0
      %3404 = vmatpush.bf16.msra.mxu0 0
      %3405 = vmatpush.bf16.msra.mxu0 0
      %3406 = vmatpush.bf16.msra.mxu0 %v3397
      %3407 = vmatmul.bf16.gmra.mxu0 %v3373
      %v3408 = vpop.f32.mrf.mxu0
      %v3409 = vadd.f32 %v3309, %v3408
      %v3410 = vpop.f32.mrf.mxu0
      %v3411 = vadd.f32 %v3311, %v3410
      %3412 = vmatmul.bf16.gmra.mxu0 %v3376
      %v3413 = vpop.f32.mrf.mxu0
      %v3414 = vadd.f32 %v3314, %v3413
      %v3415 = vpop.f32.mrf.mxu0
      %v3416 = vadd.f32 %v3316, %v3415
      %3417 = vmatmul.bf16.gmra.mxu0 %v3379
      %v3418 = vpop.f32.mrf.mxu0
      %v3419 = vadd.f32 %v3319, %v3418
      %v3420 = vpop.f32.mrf.mxu0
      %v3421 = vadd.f32 %v3321, %v3420
      %3422 = vmatmul.bf16.gmra.mxu0 %v3382
      %v3423 = vpop.f32.mrf.mxu0
      %v3424 = vadd.f32 %v3324, %v3423
      %v3425 = vpop.f32.mrf.mxu0
      %v3426 = vadd.f32 %v3326, %v3425
      %3427 = vmatmul.bf16.gmra.mxu0 %v3385
      %v3428 = vpop.f32.mrf.mxu0
      %v3429 = vadd.f32 %v3329, %v3428
      %v3430 = vpop.f32.mrf.mxu0
      %v3431 = vadd.f32 %v3331, %v3430
      %3432 = vmatmul.bf16.gmra.mxu0 %v3388
      %v3433 = vpop.f32.mrf.mxu0
      %v3434 = vadd.f32 %v3334, %v3433
      %v3435 = vpop.f32.mrf.mxu0
      %v3436 = vadd.f32 %v3336, %v3435
      %3437 = vmatmul.bf16.gmra.mxu0 %v3391
      %v3438 = vpop.f32.mrf.mxu0
      %v3439 = vadd.f32 %v3339, %v3438
      %v3440 = vpop.f32.mrf.mxu0
      %v3441 = vadd.f32 %v3341, %v3440
      %3442 = vmatmul.bf16.gmra.mxu0 %v3394
      %v3443 = vpop.f32.mrf.mxu0
      %v3444 = vadd.f32 %v3344, %v3443
      %v3445 = vpop.f32.mrf.mxu0
      %v3446 = vadd.f32 %v3346, %v3445
      %3447 = vdwg.mxu0
      %v3448 = vld [vmem:[%s3029 + $0x8] sm:$0xf]
      %v3449 = vld [vmem:[%s3029 + $0xc] sm:$0xf]
      %v3450 = vld [vmem:[%s3029 + $0x10] sm:$0x1]
      %v3451 = vld [vmem:[%s3029 + $0x1c] sm:$0xf]
      %v3452 = vld [vmem:[%s3029 + $0x20] sm:$0xf]
      %v3453 = vld [vmem:[%s3029 + $0x24] sm:$0x1]
      %v3454 = vld [vmem:[%s3029 + $0x30] sm:$0xf]
      %v3455 = vld [vmem:[%s3029 + $0x34] sm:$0xf]
      %v3456 = vld [vmem:[%s3029 + $0x38] sm:$0x1]
      %v3457 = vld [vmem:[%s3029 + $0x44] sm:$0xf]
      %v3458 = vld [vmem:[%s3029 + $0x48] sm:$0xf]
      %v3459 = vld [vmem:[%s3029 + $0x4c] sm:$0x1]
      %v3460 = vld [vmem:[%s3029 + $0x58] sm:$0xf]
      %v3461 = vld [vmem:[%s3029 + $0x5c] sm:$0xf]
      %v3462 = vld [vmem:[%s3029 + $0x60] sm:$0x1]
      %v3463 = vld [vmem:[%s3029 + $0x6c] sm:$0xf]
      %v3464 = vld [vmem:[%s3029 + $0x70] sm:$0xf]
      %v3465 = vld [vmem:[%s3029 + $0x74] sm:$0x1]
      %v3466 = vld [vmem:[%s3029 + $0x80] sm:$0xf]
      %v3467 = vld [vmem:[%s3029 + $0x84] sm:$0xf]
      %v3468 = vld [vmem:[%s3029 + $0x88] sm:$0x1]
      %v3469 = vld [vmem:[%s3029 + $0x94] sm:$0xf]
      %v3470 = vld [vmem:[%s3029 + $0x98] sm:$0xf]
      %v3471 = vld [vmem:[%s3029 + $0x9c] sm:$0x1]
      %v3473 = vshrl.u32 %v3448, 16
      %v3475 = vrot.slane %v3473, 4
      %v3476 = vshll.u32 %v3448, 16
      %v3478 = vrot.slane %v3476, 5
      %v3479 = vor.u32 %v3475, %v3478
      %v3480 = vrot.slane %v3479, 4
      %v3482 = vshll.u32 %v3449, 16
      %v3484 = vrot.slane %v3482, 5
      %v3485 = vsel %vm1056, %v3480, %v3484
      %v3486 = vshrl.u32 %v3449, 16
      %v3488 = vrot.slane %v3486, 4
      %v3489 = vor.u32 %v3488, %v3484
      %v3490 = vrot.slane %v3489, 4
      %v3492 = vshll.u32 %v3450, 16
      %v3494 = vrot.slane %v3492, 5
      %v3495 = vsel %vm1056, %v3490, %v3494
      %v3497 = vshrl.u32 %v3451, 16
      %v3499 = vrot.slane %v3497, 4
      %v3500 = vshll.u32 %v3451, 16
      %v3502 = vrot.slane %v3500, 5
      %v3503 = vor.u32 %v3499, %v3502
      %v3504 = vrot.slane %v3503, 4
      %v3506 = vshll.u32 %v3452, 16
      %v3508 = vrot.slane %v3506, 5
      %v3509 = vsel %vm1056, %v3504, %v3508
      %v3510 = vshrl.u32 %v3452, 16
      %v3512 = vrot.slane %v3510, 4
      %v3513 = vor.u32 %v3512, %v3508
      %v3514 = vrot.slane %v3513, 4
      %v3516 = vshll.u32 %v3453, 16
      %v3518 = vrot.slane %v3516, 5
      %v3519 = vsel %vm1056, %v3514, %v3518
      %v3521 = vshrl.u32 %v3454, 16
      %v3523 = vrot.slane %v3521, 4
      %v3524 = vshll.u32 %v3454, 16
      %v3526 = vrot.slane %v3524, 5
      %v3527 = vor.u32 %v3523, %v3526
      %v3528 = vrot.slane %v3527, 4
      %v3530 = vshll.u32 %v3455, 16
      %v3532 = vrot.slane %v3530, 5
      %v3533 = vsel %vm1056, %v3528, %v3532
      %v3534 = vshrl.u32 %v3455, 16
      %v3536 = vrot.slane %v3534, 4
      %v3537 = vor.u32 %v3536, %v3532
      %v3538 = vrot.slane %v3537, 4
      %v3540 = vshll.u32 %v3456, 16
      %v3542 = vrot.slane %v3540, 5
      %v3543 = vsel %vm1056, %v3538, %v3542
      %v3545 = vshrl.u32 %v3457, 16
      %v3547 = vrot.slane %v3545, 4
      %v3548 = vshll.u32 %v3457, 16
      %v3550 = vrot.slane %v3548, 5
      %v3551 = vor.u32 %v3547, %v3550
      %v3552 = vrot.slane %v3551, 4
      %v3554 = vshll.u32 %v3458, 16
      %v3556 = vrot.slane %v3554, 5
      %v3557 = vsel %vm1056, %v3552, %v3556
      %v3558 = vshrl.u32 %v3458, 16
      %v3560 = vrot.slane %v3558, 4
      %v3561 = vor.u32 %v3560, %v3556
      %v3562 = vrot.slane %v3561, 4
      %v3564 = vshll.u32 %v3459, 16
      %v3566 = vrot.slane %v3564, 5
      %v3567 = vsel %vm1056, %v3562, %v3566
      %v3569 = vshrl.u32 %v3460, 16
      %v3571 = vrot.slane %v3569, 4
      %v3572 = vshll.u32 %v3460, 16
      %v3574 = vrot.slane %v3572, 5
      %v3575 = vor.u32 %v3571, %v3574
      %v3576 = vrot.slane %v3575, 4
      %v3578 = vshll.u32 %v3461, 16
      %v3580 = vrot.slane %v3578, 5
      %v3581 = vsel %vm1056, %v3576, %v3580
      %v3582 = vshrl.u32 %v3461, 16
      %v3584 = vrot.slane %v3582, 4
      %v3585 = vor.u32 %v3584, %v3580
      %v3586 = vrot.slane %v3585, 4
      %v3588 = vshll.u32 %v3462, 16
      %v3590 = vrot.slane %v3588, 5
      %v3591 = vsel %vm1056, %v3586, %v3590
      %v3593 = vshrl.u32 %v3463, 16
      %v3595 = vrot.slane %v3593, 4
      %v3596 = vshll.u32 %v3463, 16
      %v3598 = vrot.slane %v3596, 5
      %v3599 = vor.u32 %v3595, %v3598
      %v3600 = vrot.slane %v3599, 4
      %v3602 = vshll.u32 %v3464, 16
      %v3604 = vrot.slane %v3602, 5
      %v3605 = vsel %vm1056, %v3600, %v3604
      %v3606 = vshrl.u32 %v3464, 16
      %v3608 = vrot.slane %v3606, 4
      %v3609 = vor.u32 %v3608, %v3604
      %v3610 = vrot.slane %v3609, 4
      %v3612 = vshll.u32 %v3465, 16
      %v3614 = vrot.slane %v3612, 5
      %v3615 = vsel %vm1056, %v3610, %v3614
      %v3617 = vshrl.u32 %v3466, 16
      %v3619 = vrot.slane %v3617, 4
      %v3620 = vshll.u32 %v3466, 16
      %v3622 = vrot.slane %v3620, 5
      %v3623 = vor.u32 %v3619, %v3622
      %v3624 = vrot.slane %v3623, 4
      %v3626 = vshll.u32 %v3467, 16
      %v3628 = vrot.slane %v3626, 5
      %v3629 = vsel %vm1056, %v3624, %v3628
      %v3630 = vshrl.u32 %v3467, 16
      %v3632 = vrot.slane %v3630, 4
      %v3633 = vor.u32 %v3632, %v3628
      %v3634 = vrot.slane %v3633, 4
      %v3636 = vshll.u32 %v3468, 16
      %v3638 = vrot.slane %v3636, 5
      %v3639 = vsel %vm1056, %v3634, %v3638
      %v3641 = vshrl.u32 %v3469, 16
      %v3643 = vrot.slane %v3641, 4
      %v3644 = vshll.u32 %v3469, 16
      %v3646 = vrot.slane %v3644, 5
      %v3647 = vor.u32 %v3643, %v3646
      %v3648 = vrot.slane %v3647, 4
      %v3650 = vshll.u32 %v3470, 16
      %v3652 = vrot.slane %v3650, 5
      %v3653 = vsel %vm1056, %v3648, %v3652
      %v3654 = vshrl.u32 %v3470, 16
      %v3656 = vrot.slane %v3654, 4
      %v3657 = vor.u32 %v3656, %v3652
      %v3658 = vrot.slane %v3657, 4
      %v3660 = vshll.u32 %v3471, 16
      %v3662 = vrot.slane %v3660, 5
      %v3663 = vsel %vm1056, %v3658, %v3662
      %v3664 = vld [vmem:[%s1249] sm:$0xf]
      %v3665 = vunpack.c.l.b16 %v3485
      %v3666 = vunpack.c.l.b16 %v3495
      %v3667 = vunpack.c.l.b16 %v3509
      %v3668 = vunpack.c.l.b16 %v3519
      %v3669 = vunpack.c.l.b16 %v3533
      %v3670 = vunpack.c.l.b16 %v3543
      %v3671 = vunpack.c.l.b16 %v3557
      %v3672 = vunpack.c.l.b16 %v3567
      %v3673 = vunpack.c.l.b16 %v3581
      %v3674 = vunpack.c.l.b16 %v3591
      %v3675 = vunpack.c.l.b16 %v3605
      %v3676 = vunpack.c.l.b16 %v3615
      %v3677 = vunpack.c.l.b16 %v3629
      %v3678 = vunpack.c.l.b16 %v3639
      %v3679 = vunpack.c.l.b16 %v3653
      %v3680 = vunpack.c.l.b16 %v3663
      %v3681 = vpack.c.b16 %v3666, %v3665
      %v3682 = vpack.c.b16 %v3668, %v3667
      %v3683 = vpack.c.b16 %v3670, %v3669
      %v3684 = vpack.c.b16 %v3672, %v3671
      %v3685 = vpack.c.b16 %v3674, %v3673
      %v3686 = vpack.c.b16 %v3676, %v3675
      %v3687 = vpack.c.b16 %v3678, %v3677
      %v3688 = vpack.c.b16 %v3680, %v3679
      %v3690 = vsel %vm852, %v3681, 0
      %v3693 = vsel %vm852, %v3682, 0
      %v3696 = vsel %vm852, %v3683, 0
      %v3699 = vsel %vm852, %v3684, 0
      %v3702 = vsel %vm852, %v3685, 0
      %v3705 = vsel %vm852, %v3686, 0
      %v3708 = vsel %vm852, %v3687, 0
      %v3711 = vsel %vm852, %v3688, 0
      %v3714 = vsel %vm877, %v3664, 0
      %3716 = vmatpush.bf16.msra.mxu0 0
      %3717 = vmatpush.bf16.msra.mxu0 0
      %3718 = vmatpush.bf16.msra.mxu0 0
      %3719 = vmatpush.bf16.msra.mxu0 0
      %3720 = vmatpush.bf16.msra.mxu0 0
      %3721 = vmatpush.bf16.msra.mxu0 0
      %3722 = vmatpush.bf16.msra.mxu0 0
      %3723 = vmatpush.bf16.msra.mxu0 %v3714
      %3724 = vmatmul.bf16.gmra.mxu0 %v3690
      %v3725 = vpop.f32.mrf.mxu0
      %v3726 = vadd.f32 0.0, %v3725
      %v3727 = vpop.f32.mrf.mxu0
      %v3728 = vadd.f32 0.0, %v3727
      %3729 = vmatmul.bf16.gmra.mxu0 %v3693
      %v3730 = vpop.f32.mrf.mxu0
      %v3731 = vadd.f32 0.0, %v3730
      %v3732 = vpop.f32.mrf.mxu0
      %v3733 = vadd.f32 0.0, %v3732
      %3734 = vmatmul.bf16.gmra.mxu0 %v3696
      %v3735 = vpop.f32.mrf.mxu0
      %v3736 = vadd.f32 0.0, %v3735
      %v3737 = vpop.f32.mrf.mxu0
      %v3738 = vadd.f32 0.0, %v3737
      %3739 = vmatmul.bf16.gmra.mxu0 %v3699
      %v3740 = vpop.f32.mrf.mxu0
      %v3741 = vadd.f32 0.0, %v3740
      %v3742 = vpop.f32.mrf.mxu0
      %v3743 = vadd.f32 0.0, %v3742
      %3744 = vmatmul.bf16.gmra.mxu0 %v3702
      %v3745 = vpop.f32.mrf.mxu0
      %v3746 = vadd.f32 0.0, %v3745
      %v3747 = vpop.f32.mrf.mxu0
      %v3748 = vadd.f32 0.0, %v3747
      %3749 = vmatmul.bf16.gmra.mxu0 %v3705
      %v3750 = vpop.f32.mrf.mxu0
      %v3751 = vadd.f32 0.0, %v3750
      %v3752 = vpop.f32.mrf.mxu0
      %v3753 = vadd.f32 0.0, %v3752
      %3754 = vmatmul.bf16.gmra.mxu0 %v3708
      %v3755 = vpop.f32.mrf.mxu0
      %v3756 = vadd.f32 0.0, %v3755
      %v3757 = vpop.f32.mrf.mxu0
      %v3758 = vadd.f32 0.0, %v3757
      %3759 = vmatmul.bf16.gmra.mxu0 %v3711
      %v3760 = vpop.f32.mrf.mxu0
      %v3761 = vadd.f32 0.0, %v3760
      %v3762 = vpop.f32.mrf.mxu0
      %v3763 = vadd.f32 0.0, %v3762
      %3764 = vdwg.mxu0
      %v3765 = vadd.f32 %v3409, %v3726
      %v3766 = vadd.f32 %v3411, %v3728
      %v3767 = vadd.f32 %v3414, %v3731
      %v3768 = vadd.f32 %v3416, %v3733
      %v3769 = vadd.f32 %v3419, %v3736
      %v3770 = vadd.f32 %v3421, %v3738
      %v3771 = vadd.f32 %v3424, %v3741
      %v3772 = vadd.f32 %v3426, %v3743
      %v3773 = vadd.f32 %v3429, %v3746
      %v3774 = vadd.f32 %v3431, %v3748
      %v3775 = vadd.f32 %v3434, %v3751
      %v3776 = vadd.f32 %v3436, %v3753
      %v3777 = vadd.f32 %v3439, %v3756
      %v3778 = vadd.f32 %v3441, %v3758
      %v3779 = vadd.f32 %v3444, %v3761
      %v3780 = vadd.f32 %v3446, %v3763
      %s3781 = scalar_lea.vmem [#allocation2], 180
      %v3782 = vld [vmem:[%s3781 + $0x4] sm:$0x8]
      %v3783 = vld [vmem:[%s3781 + $0x8] sm:$0xf]
      %v3784 = vld [vmem:[%s3781 + $0xc] sm:$0xf]
      %v3785 = vld [vmem:[%s3781 + $0x18] sm:$0x8]
      %v3786 = vld [vmem:[%s3781 + $0x1c] sm:$0xf]
      %v3787 = vld [vmem:[%s3781 + $0x20] sm:$0xf]
      %v3788 = vld [vmem:[%s3781 + $0x2c] sm:$0x8]
      %v3789 = vld [vmem:[%s3781 + $0x30] sm:$0xf]
      %v3790 = vld [vmem:[%s3781 + $0x34] sm:$0xf]
      %v3791 = vld [vmem:[%s3781 + $0x40] sm:$0x8]
      %v3792 = vld [vmem:[%s3781 + $0x44] sm:$0xf]
      %v3793 = vld [vmem:[%s3781 + $0x48] sm:$0xf]
      %v3794 = vld [vmem:[%s3781 + $0x54] sm:$0x8]
      %v3795 = vld [vmem:[%s3781 + $0x58] sm:$0xf]
      %v3796 = vld [vmem:[%s3781 + $0x5c] sm:$0xf]
      %v3797 = vld [vmem:[%s3781 + $0x68] sm:$0x8]
      %v3798 = vld [vmem:[%s3781 + $0x6c] sm:$0xf]
      %v3799 = vld [vmem:[%s3781 + $0x70] sm:$0xf]
      %v3800 = vld [vmem:[%s3781 + $0x7c] sm:$0x8]
      %v3801 = vld [vmem:[%s3781 + $0x80] sm:$0xf]
      %v3802 = vld [vmem:[%s3781 + $0x84] sm:$0xf]
      %v3803 = vld [vmem:[%s3781 + $0x90] sm:$0x8]
      %v3804 = vld [vmem:[%s3781 + $0x94] sm:$0xf]
      %v3805 = vld [vmem:[%s3781 + $0x98] sm:$0xf]
      %v3807 = vshrl.u32 %v3782, 16
      %v3809 = vrot.slane %v3807, 7
      %v3810 = vrot.slane %v3809, 4
      %v3812 = vshrl.u32 %v3783, 16
      %v3814 = vrot.slane %v3812, 7
      %v3815 = vshll.u32 %v3783, 16
      %v3817 = vor.u32 %v3814, %v3815
      %v3818 = vsel %vm632, %v3810, %v3817
      %v3819 = vrot.slane %v3814, 4
      %v3821 = vshrl.u32 %v3784, 16
      %v3823 = vrot.slane %v3821, 7
      %v3824 = vshll.u32 %v3784, 16
      %v3826 = vor.u32 %v3823, %v3824
      %v3827 = vsel %vm632, %v3819, %v3826
      %v3829 = vshrl.u32 %v3785, 16
      %v3831 = vrot.slane %v3829, 7
      %v3832 = vrot.slane %v3831, 4
      %v3834 = vshrl.u32 %v3786, 16
      %v3836 = vrot.slane %v3834, 7
      %v3837 = vshll.u32 %v3786, 16
      %v3839 = vor.u32 %v3836, %v3837
      %v3840 = vsel %vm632, %v3832, %v3839
      %v3841 = vrot.slane %v3836, 4
      %v3843 = vshrl.u32 %v3787, 16
      %v3845 = vrot.slane %v3843, 7
      %v3846 = vshll.u32 %v3787, 16
      %v3848 = vor.u32 %v3845, %v3846
      %v3849 = vsel %vm632, %v3841, %v3848
      %v3851 = vshrl.u32 %v3788, 16
      %v3853 = vrot.slane %v3851, 7
      %v3854 = vrot.slane %v3853, 4
      %v3856 = vshrl.u32 %v3789, 16
      %v3858 = vrot.slane %v3856, 7
      %v3859 = vshll.u32 %v3789, 16
      %v3861 = vor.u32 %v3858, %v3859
      %v3862 = vsel %vm632, %v3854, %v3861
      %v3863 = vrot.slane %v3858, 4
      %v3865 = vshrl.u32 %v3790, 16
      %v3867 = vrot.slane %v3865, 7
      %v3868 = vshll.u32 %v3790, 16
      %v3870 = vor.u32 %v3867, %v3868
      %v3871 = vsel %vm632, %v3863, %v3870
      %v3873 = vshrl.u32 %v3791, 16
      %v3875 = vrot.slane %v3873, 7
      %v3876 = vrot.slane %v3875, 4
      %v3878 = vshrl.u32 %v3792, 16
      %v3880 = vrot.slane %v3878, 7
      %v3881 = vshll.u32 %v3792, 16
      %v3883 = vor.u32 %v3880, %v3881
      %v3884 = vsel %vm632, %v3876, %v3883
      %v3885 = vrot.slane %v3880, 4
      %v3887 = vshrl.u32 %v3793, 16
      %v3889 = vrot.slane %v3887, 7
      %v3890 = vshll.u32 %v3793, 16
      %v3892 = vor.u32 %v3889, %v3890
      %v3893 = vsel %vm632, %v3885, %v3892
      %v3895 = vshrl.u32 %v3794, 16
      %v3897 = vrot.slane %v3895, 7
      %v3898 = vrot.slane %v3897, 4
      %v3900 = vshrl.u32 %v3795, 16
      %v3902 = vrot.slane %v3900, 7
      %v3903 = vshll.u32 %v3795, 16
      %v3905 = vor.u32 %v3902, %v3903
      %v3906 = vsel %vm632, %v3898, %v3905
      %v3907 = vrot.slane %v3902, 4
      %v3909 = vshrl.u32 %v3796, 16
      %v3911 = vrot.slane %v3909, 7
      %v3912 = vshll.u32 %v3796, 16
      %v3914 = vor.u32 %v3911, %v3912
      %v3915 = vsel %vm632, %v3907, %v3914
      %v3917 = vshrl.u32 %v3797, 16
      %v3919 = vrot.slane %v3917, 7
      %v3920 = vrot.slane %v3919, 4
      %v3922 = vshrl.u32 %v3798, 16
      %v3924 = vrot.slane %v3922, 7
      %v3925 = vshll.u32 %v3798, 16
      %v3927 = vor.u32 %v3924, %v3925
      %v3928 = vsel %vm632, %v3920, %v3927
      %v3929 = vrot.slane %v3924, 4
      %v3931 = vshrl.u32 %v3799, 16
      %v3933 = vrot.slane %v3931, 7
      %v3934 = vshll.u32 %v3799, 16
      %v3936 = vor.u32 %v3933, %v3934
      %v3937 = vsel %vm632, %v3929, %v3936
      %v3939 = vshrl.u32 %v3800, 16
      %v3941 = vrot.slane %v3939, 7
      %v3942 = vrot.slane %v3941, 4
      %v3944 = vshrl.u32 %v3801, 16
      %v3946 = vrot.slane %v3944, 7
      %v3947 = vshll.u32 %v3801, 16
      %v3949 = vor.u32 %v3946, %v3947
      %v3950 = vsel %vm632, %v3942, %v3949
      %v3951 = vrot.slane %v3946, 4
      %v3953 = vshrl.u32 %v3802, 16
      %v3955 = vrot.slane %v3953, 7
      %v3956 = vshll.u32 %v3802, 16
      %v3958 = vor.u32 %v3955, %v3956
      %v3959 = vsel %vm632, %v3951, %v3958
      %v3961 = vshrl.u32 %v3803, 16
      %v3963 = vrot.slane %v3961, 7
      %v3964 = vrot.slane %v3963, 4
      %v3966 = vshrl.u32 %v3804, 16
      %v3968 = vrot.slane %v3966, 7
      %v3969 = vshll.u32 %v3804, 16
      %v3971 = vor.u32 %v3968, %v3969
      %v3972 = vsel %vm632, %v3964, %v3971
      %v3973 = vrot.slane %v3968, 4
      %v3975 = vshrl.u32 %v3805, 16
      %v3977 = vrot.slane %v3975, 7
      %v3978 = vshll.u32 %v3805, 16
      %v3980 = vor.u32 %v3977, %v3978
      %v3981 = vsel %vm632, %v3973, %v3980
      %v3982 = vld [vmem:[%s1567] sm:$0xf]
      %v3983 = vunpack.c.l.b16 %v3818
      %v3984 = vunpack.c.l.b16 %v3827
      %v3985 = vunpack.c.l.b16 %v3840
      %v3986 = vunpack.c.l.b16 %v3849
      %v3987 = vunpack.c.l.b16 %v3862
      %v3988 = vunpack.c.l.b16 %v3871
      %v3989 = vunpack.c.l.b16 %v3884
      %v3990 = vunpack.c.l.b16 %v3893
      %v3991 = vunpack.c.l.b16 %v3906
      %v3992 = vunpack.c.l.b16 %v3915
      %v3993 = vunpack.c.l.b16 %v3928
      %v3994 = vunpack.c.l.b16 %v3937
      %v3995 = vunpack.c.l.b16 %v3950
      %v3996 = vunpack.c.l.b16 %v3959
      %v3997 = vunpack.c.l.b16 %v3972
      %v3998 = vunpack.c.l.b16 %v3981
      %v3999 = vpack.c.b16 %v3984, %v3983
      %v4000 = vpack.c.b16 %v3986, %v3985
      %v4001 = vpack.c.b16 %v3988, %v3987
      %v4002 = vpack.c.b16 %v3990, %v3989
      %v4003 = vpack.c.b16 %v3992, %v3991
      %v4004 = vpack.c.b16 %v3994, %v3993
      %v4005 = vpack.c.b16 %v3996, %v3995
      %v4006 = vpack.c.b16 %v3998, %v3997
      %v4008 = vsel %vm852, %v3999, 0
      %v4011 = vsel %vm852, %v4000, 0
      %v4014 = vsel %vm852, %v4001, 0
      %v4017 = vsel %vm852, %v4002, 0
      %v4020 = vsel %vm852, %v4003, 0
      %v4023 = vsel %vm852, %v4004, 0
      %v4026 = vsel %vm852, %v4005, 0
      %v4029 = vsel %vm852, %v4006, 0
      %v4032 = vsel %vm877, %v3982, 0
      %4034 = vmatpush.bf16.msra.mxu0 0
      %4035 = vmatpush.bf16.msra.mxu0 0
      %4036 = vmatpush.bf16.msra.mxu0 0
      %4037 = vmatpush.bf16.msra.mxu0 0
      %4038 = vmatpush.bf16.msra.mxu0 0
      %4039 = vmatpush.bf16.msra.mxu0 0
      %4040 = vmatpush.bf16.msra.mxu0 0
      %4041 = vmatpush.bf16.msra.mxu0 %v4032
      %4042 = vmatmul.bf16.gmra.mxu0 %v4008
      %v4043 = vpop.f32.mrf.mxu0
      %v4044 = vadd.f32 0.0, %v4043
      %v4045 = vpop.f32.mrf.mxu0
      %v4046 = vadd.f32 0.0, %v4045
      %4047 = vmatmul.bf16.gmra.mxu0 %v4011
      %v4048 = vpop.f32.mrf.mxu0
      %v4049 = vadd.f32 0.0, %v4048
      %v4050 = vpop.f32.mrf.mxu0
      %v4051 = vadd.f32 0.0, %v4050
      %4052 = vmatmul.bf16.gmra.mxu0 %v4014
      %v4053 = vpop.f32.mrf.mxu0
      %v4054 = vadd.f32 0.0, %v4053
      %v4055 = vpop.f32.mrf.mxu0
      %v4056 = vadd.f32 0.0, %v4055
      %4057 = vmatmul.bf16.gmra.mxu0 %v4017
      %v4058 = vpop.f32.mrf.mxu0
      %v4059 = vadd.f32 0.0, %v4058
      %v4060 = vpop.f32.mrf.mxu0
      %v4061 = vadd.f32 0.0, %v4060
      %4062 = vmatmul.bf16.gmra.mxu0 %v4020
      %v4063 = vpop.f32.mrf.mxu0
      %v4064 = vadd.f32 0.0, %v4063
      %v4065 = vpop.f32.mrf.mxu0
      %v4066 = vadd.f32 0.0, %v4065
      %4067 = vmatmul.bf16.gmra.mxu0 %v4023
      %v4068 = vpop.f32.mrf.mxu0
      %v4069 = vadd.f32 0.0, %v4068
      %v4070 = vpop.f32.mrf.mxu0
      %v4071 = vadd.f32 0.0, %v4070
      %4072 = vmatmul.bf16.gmra.mxu0 %v4026
      %v4073 = vpop.f32.mrf.mxu0
      %v4074 = vadd.f32 0.0, %v4073
      %v4075 = vpop.f32.mrf.mxu0
      %v4076 = vadd.f32 0.0, %v4075
      %4077 = vmatmul.bf16.gmra.mxu0 %v4029
      %v4078 = vpop.f32.mrf.mxu0
      %v4079 = vadd.f32 0.0, %v4078
      %v4080 = vpop.f32.mrf.mxu0
      %v4081 = vadd.f32 0.0, %v4080
      %4082 = vdwg.mxu0
      %v4083 = vadd.f32 %v3765, %v4044
      %v4084 = vadd.f32 %v3766, %v4046
      %v4085 = vadd.f32 %v3767, %v4049
      %v4086 = vadd.f32 %v3768, %v4051
      %v4087 = vadd.f32 %v3769, %v4054
      %v4088 = vadd.f32 %v3770, %v4056
      %v4089 = vadd.f32 %v3771, %v4059
      %v4090 = vadd.f32 %v3772, %v4061
      %v4091 = vadd.f32 %v3773, %v4064
      %v4092 = vadd.f32 %v3774, %v4066
      %v4093 = vadd.f32 %v3775, %v4069
      %v4094 = vadd.f32 %v3776, %v4071
      %v4095 = vadd.f32 %v3777, %v4074
      %v4096 = vadd.f32 %v3778, %v4076
      %v4097 = vadd.f32 %v3779, %v4079
      %v4098 = vadd.f32 %v3780, %v4081
      %v4099 = vld [vmem:[%s1685] sm:$0xf]
      %v4116 = vunpack.c.l.b16 %v3783
      %v4117 = vunpack.c.l.b16 %v3784
      %v4118 = vunpack.c.l.b16 %v3786
      %v4119 = vunpack.c.l.b16 %v3787
      %v4120 = vunpack.c.l.b16 %v3789
      %v4121 = vunpack.c.l.b16 %v3790
      %v4122 = vunpack.c.l.b16 %v3792
      %v4123 = vunpack.c.l.b16 %v3793
      %v4124 = vunpack.c.l.b16 %v3795
      %v4125 = vunpack.c.l.b16 %v3796
      %v4126 = vunpack.c.l.b16 %v3798
      %v4127 = vunpack.c.l.b16 %v3799
      %v4128 = vunpack.c.l.b16 %v3801
      %v4129 = vunpack.c.l.b16 %v3802
      %v4130 = vunpack.c.l.b16 %v3804
      %v4131 = vunpack.c.l.b16 %v3805
      %v4132 = vpack.c.b16 %v4117, %v4116
      %v4133 = vpack.c.b16 %v4119, %v4118
      %v4134 = vpack.c.b16 %v4121, %v4120
      %v4135 = vpack.c.b16 %v4123, %v4122
      %v4136 = vpack.c.b16 %v4125, %v4124
      %v4137 = vpack.c.b16 %v4127, %v4126
      %v4138 = vpack.c.b16 %v4129, %v4128
      %v4139 = vpack.c.b16 %v4131, %v4130
      %v4141 = vsel %vm852, %v4132, 0
      %v4144 = vsel %vm852, %v4133, 0
      %v4147 = vsel %vm852, %v4134, 0
      %v4150 = vsel %vm852, %v4135, 0
      %v4153 = vsel %vm852, %v4136, 0
      %v4156 = vsel %vm852, %v4137, 0
      %v4159 = vsel %vm852, %v4138, 0
      %v4162 = vsel %vm852, %v4139, 0
      %v4165 = vsel %vm877, %v4099, 0
      %4167 = vmatpush.bf16.msra.mxu0 0
      %4168 = vmatpush.bf16.msra.mxu0 0
      %4169 = vmatpush.bf16.msra.mxu0 0
      %4170 = vmatpush.bf16.msra.mxu0 0
      %4171 = vmatpush.bf16.msra.mxu0 0
      %4172 = vmatpush.bf16.msra.mxu0 0
      %4173 = vmatpush.bf16.msra.mxu0 0
      %4174 = vmatpush.bf16.msra.mxu0 %v4165
      %4175 = vmatmul.bf16.gmra.mxu0 %v4141
      %v4176 = vpop.f32.mrf.mxu0
      %v4177 = vadd.f32 0.0, %v4176
      %v4178 = vpop.f32.mrf.mxu0
      %v4179 = vadd.f32 0.0, %v4178
      %4180 = vmatmul.bf16.gmra.mxu0 %v4144
      %v4181 = vpop.f32.mrf.mxu0
      %v4182 = vadd.f32 0.0, %v4181
      %v4183 = vpop.f32.mrf.mxu0
      %v4184 = vadd.f32 0.0, %v4183
      %4185 = vmatmul.bf16.gmra.mxu0 %v4147
      %v4186 = vpop.f32.mrf.mxu0
      %v4187 = vadd.f32 0.0, %v4186
      %v4188 = vpop.f32.mrf.mxu0
      %v4189 = vadd.f32 0.0, %v4188
      %4190 = vmatmul.bf16.gmra.mxu0 %v4150
      %v4191 = vpop.f32.mrf.mxu0
      %v4192 = vadd.f32 0.0, %v4191
      %v4193 = vpop.f32.mrf.mxu0
      %v4194 = vadd.f32 0.0, %v4193
      %4195 = vmatmul.bf16.gmra.mxu0 %v4153
      %v4196 = vpop.f32.mrf.mxu0
      %v4197 = vadd.f32 0.0, %v4196
      %v4198 = vpop.f32.mrf.mxu0
      %v4199 = vadd.f32 0.0, %v4198
      %4200 = vmatmul.bf16.gmra.mxu0 %v4156
      %v4201 = vpop.f32.mrf.mxu0
      %v4202 = vadd.f32 0.0, %v4201
      %v4203 = vpop.f32.mrf.mxu0
      %v4204 = vadd.f32 0.0, %v4203
      %4205 = vmatmul.bf16.gmra.mxu0 %v4159
      %v4206 = vpop.f32.mrf.mxu0
      %v4207 = vadd.f32 0.0, %v4206
      %v4208 = vpop.f32.mrf.mxu0
      %v4209 = vadd.f32 0.0, %v4208
      %4210 = vmatmul.bf16.gmra.mxu0 %v4162
      %v4211 = vpop.f32.mrf.mxu0
      %v4212 = vadd.f32 0.0, %v4211
      %v4213 = vpop.f32.mrf.mxu0
      %v4214 = vadd.f32 0.0, %v4213
      %4215 = vdwg.mxu0
      %v4216 = vadd.f32 %v4083, %v4177
      %v4217 = vadd.f32 %v4084, %v4179
      %v4218 = vadd.f32 %v4085, %v4182
      %v4219 = vadd.f32 %v4086, %v4184
      %v4220 = vadd.f32 %v4087, %v4187
      %v4221 = vadd.f32 %v4088, %v4189
      %v4222 = vadd.f32 %v4089, %v4192
      %v4223 = vadd.f32 %v4090, %v4194
      %v4224 = vadd.f32 %v4091, %v4197
      %v4225 = vadd.f32 %v4092, %v4199
      %v4226 = vadd.f32 %v4093, %v4202
      %v4227 = vadd.f32 %v4094, %v4204
      %v4228 = vadd.f32 %v4095, %v4207
      %v4229 = vadd.f32 %v4096, %v4209
      %v4230 = vadd.f32 %v4097, %v4212
      %v4231 = vadd.f32 %v4098, %v4214
      %v4232 = vld [vmem:[%s3781 + $0x8] sm:$0xf]
      %v4233 = vld [vmem:[%s3781 + $0xc] sm:$0xf]
      %v4234 = vld [vmem:[%s3781 + $0x10] sm:$0x1]
      %v4235 = vld [vmem:[%s3781 + $0x1c] sm:$0xf]
      %v4236 = vld [vmem:[%s3781 + $0x20] sm:$0xf]
      %v4237 = vld [vmem:[%s3781 + $0x24] sm:$0x1]
      %v4238 = vld [vmem:[%s3781 + $0x30] sm:$0xf]
      %v4239 = vld [vmem:[%s3781 + $0x34] sm:$0xf]
      %v4240 = vld [vmem:[%s3781 + $0x38] sm:$0x1]
      %v4241 = vld [vmem:[%s3781 + $0x44] sm:$0xf]
      %v4242 = vld [vmem:[%s3781 + $0x48] sm:$0xf]
      %v4243 = vld [vmem:[%s3781 + $0x4c] sm:$0x1]
      %v4244 = vld [vmem:[%s3781 + $0x58] sm:$0xf]
      %v4245 = vld [vmem:[%s3781 + $0x5c] sm:$0xf]
      %v4246 = vld [vmem:[%s3781 + $0x60] sm:$0x1]
      %v4247 = vld [vmem:[%s3781 + $0x6c] sm:$0xf]
      %v4248 = vld [vmem:[%s3781 + $0x70] sm:$0xf]
      %v4249 = vld [vmem:[%s3781 + $0x74] sm:$0x1]
      %v4250 = vld [vmem:[%s3781 + $0x80] sm:$0xf]
      %v4251 = vld [vmem:[%s3781 + $0x84] sm:$0xf]
      %v4252 = vld [vmem:[%s3781 + $0x88] sm:$0x1]
      %v4253 = vld [vmem:[%s3781 + $0x94] sm:$0xf]
      %v4254 = vld [vmem:[%s3781 + $0x98] sm:$0xf]
      %v4255 = vld [vmem:[%s3781 + $0x9c] sm:$0x1]
      %v4257 = vshrl.u32 %v4232, 16
      %v4259 = vrot.slane %v4257, 4
      %v4260 = vshll.u32 %v4232, 16
      %v4262 = vrot.slane %v4260, 5
      %v4263 = vor.u32 %v4259, %v4262
      %v4264 = vrot.slane %v4263, 4
      %v4266 = vshll.u32 %v4233, 16
      %v4268 = vrot.slane %v4266, 5
      %v4269 = vsel %vm1056, %v4264, %v4268
      %v4270 = vshrl.u32 %v4233, 16
      %v4272 = vrot.slane %v4270, 4
      %v4273 = vor.u32 %v4272, %v4268
      %v4274 = vrot.slane %v4273, 4
      %v4276 = vshll.u32 %v4234, 16
      %v4278 = vrot.slane %v4276, 5
      %v4279 = vsel %vm1056, %v4274, %v4278
      %v4281 = vshrl.u32 %v4235, 16
      %v4283 = vrot.slane %v4281, 4
      %v4284 = vshll.u32 %v4235, 16
      %v4286 = vrot.slane %v4284, 5
      %v4287 = vor.u32 %v4283, %v4286
      %v4288 = vrot.slane %v4287, 4
      %v4290 = vshll.u32 %v4236, 16
      %v4292 = vrot.slane %v4290, 5
      %v4293 = vsel %vm1056, %v4288, %v4292
      %v4294 = vshrl.u32 %v4236, 16
      %v4296 = vrot.slane %v4294, 4
      %v4297 = vor.u32 %v4296, %v4292
      %v4298 = vrot.slane %v4297, 4
      %v4300 = vshll.u32 %v4237, 16
      %v4302 = vrot.slane %v4300, 5
      %v4303 = vsel %vm1056, %v4298, %v4302
      %v4305 = vshrl.u32 %v4238, 16
      %v4307 = vrot.slane %v4305, 4
      %v4308 = vshll.u32 %v4238, 16
      %v4310 = vrot.slane %v4308, 5
      %v4311 = vor.u32 %v4307, %v4310
      %v4312 = vrot.slane %v4311, 4
      %v4314 = vshll.u32 %v4239, 16
      %v4316 = vrot.slane %v4314, 5
      %v4317 = vsel %vm1056, %v4312, %v4316
      %v4318 = vshrl.u32 %v4239, 16
      %v4320 = vrot.slane %v4318, 4
      %v4321 = vor.u32 %v4320, %v4316
      %v4322 = vrot.slane %v4321, 4
      %v4324 = vshll.u32 %v4240, 16
      %v4326 = vrot.slane %v4324, 5
      %v4327 = vsel %vm1056, %v4322, %v4326
      %v4329 = vshrl.u32 %v4241, 16
      %v4331 = vrot.slane %v4329, 4
      %v4332 = vshll.u32 %v4241, 16
      %v4334 = vrot.slane %v4332, 5
      %v4335 = vor.u32 %v4331, %v4334
      %v4336 = vrot.slane %v4335, 4
      %v4338 = vshll.u32 %v4242, 16
      %v4340 = vrot.slane %v4338, 5
      %v4341 = vsel %vm1056, %v4336, %v4340
      %v4342 = vshrl.u32 %v4242, 16
      %v4344 = vrot.slane %v4342, 4
      %v4345 = vor.u32 %v4344, %v4340
      %v4346 = vrot.slane %v4345, 4
      %v4348 = vshll.u32 %v4243, 16
      %v4350 = vrot.slane %v4348, 5
      %v4351 = vsel %vm1056, %v4346, %v4350
      %v4353 = vshrl.u32 %v4244, 16
      %v4355 = vrot.slane %v4353, 4
      %v4356 = vshll.u32 %v4244, 16
      %v4358 = vrot.slane %v4356, 5
      %v4359 = vor.u32 %v4355, %v4358
      %v4360 = vrot.slane %v4359, 4
      %v4362 = vshll.u32 %v4245, 16
      %v4364 = vrot.slane %v4362, 5
      %v4365 = vsel %vm1056, %v4360, %v4364
      %v4366 = vshrl.u32 %v4245, 16
      %v4368 = vrot.slane %v4366, 4
      %v4369 = vor.u32 %v4368, %v4364
      %v4370 = vrot.slane %v4369, 4
      %v4372 = vshll.u32 %v4246, 16
      %v4374 = vrot.slane %v4372, 5
      %v4375 = vsel %vm1056, %v4370, %v4374
      %v4377 = vshrl.u32 %v4247, 16
      %v4379 = vrot.slane %v4377, 4
      %v4380 = vshll.u32 %v4247, 16
      %v4382 = vrot.slane %v4380, 5
      %v4383 = vor.u32 %v4379, %v4382
      %v4384 = vrot.slane %v4383, 4
      %v4386 = vshll.u32 %v4248, 16
      %v4388 = vrot.slane %v4386, 5
      %v4389 = vsel %vm1056, %v4384, %v4388
      %v4390 = vshrl.u32 %v4248, 16
      %v4392 = vrot.slane %v4390, 4
      %v4393 = vor.u32 %v4392, %v4388
      %v4394 = vrot.slane %v4393, 4
      %v4396 = vshll.u32 %v4249, 16
      %v4398 = vrot.slane %v4396, 5
      %v4399 = vsel %vm1056, %v4394, %v4398
      %v4401 = vshrl.u32 %v4250, 16
      %v4403 = vrot.slane %v4401, 4
      %v4404 = vshll.u32 %v4250, 16
      %v4406 = vrot.slane %v4404, 5
      %v4407 = vor.u32 %v4403, %v4406
      %v4408 = vrot.slane %v4407, 4
      %v4410 = vshll.u32 %v4251, 16
      %v4412 = vrot.slane %v4410, 5
      %v4413 = vsel %vm1056, %v4408, %v4412
      %v4414 = vshrl.u32 %v4251, 16
      %v4416 = vrot.slane %v4414, 4
      %v4417 = vor.u32 %v4416, %v4412
      %v4418 = vrot.slane %v4417, 4
      %v4420 = vshll.u32 %v4252, 16
      %v4422 = vrot.slane %v4420, 5
      %v4423 = vsel %vm1056, %v4418, %v4422
      %v4425 = vshrl.u32 %v4253, 16
      %v4427 = vrot.slane %v4425, 4
      %v4428 = vshll.u32 %v4253, 16
      %v4430 = vrot.slane %v4428, 5
      %v4431 = vor.u32 %v4427, %v4430
      %v4432 = vrot.slane %v4431, 4
      %v4434 = vshll.u32 %v4254, 16
      %v4436 = vrot.slane %v4434, 5
      %v4437 = vsel %vm1056, %v4432, %v4436
      %v4438 = vshrl.u32 %v4254, 16
      %v4440 = vrot.slane %v4438, 4
      %v4441 = vor.u32 %v4440, %v4436
      %v4442 = vrot.slane %v4441, 4
      %v4444 = vshll.u32 %v4255, 16
      %v4446 = vrot.slane %v4444, 5
      %v4447 = vsel %vm1056, %v4442, %v4446
      %v4448 = vld [vmem:[%s2035] sm:$0xf]
      %v4449 = vunpack.c.l.b16 %v4269
      %v4450 = vunpack.c.l.b16 %v4279
      %v4451 = vunpack.c.l.b16 %v4293
      %v4452 = vunpack.c.l.b16 %v4303
      %v4453 = vunpack.c.l.b16 %v4317
      %v4454 = vunpack.c.l.b16 %v4327
      %v4455 = vunpack.c.l.b16 %v4341
      %v4456 = vunpack.c.l.b16 %v4351
      %v4457 = vunpack.c.l.b16 %v4365
      %v4458 = vunpack.c.l.b16 %v4375
      %v4459 = vunpack.c.l.b16 %v4389
      %v4460 = vunpack.c.l.b16 %v4399
      %v4461 = vunpack.c.l.b16 %v4413
      %v4462 = vunpack.c.l.b16 %v4423
      %v4463 = vunpack.c.l.b16 %v4437
      %v4464 = vunpack.c.l.b16 %v4447
      %v4465 = vpack.c.b16 %v4450, %v4449
      %v4466 = vpack.c.b16 %v4452, %v4451
      %v4467 = vpack.c.b16 %v4454, %v4453
      %v4468 = vpack.c.b16 %v4456, %v4455
      %v4469 = vpack.c.b16 %v4458, %v4457
      %v4470 = vpack.c.b16 %v4460, %v4459
      %v4471 = vpack.c.b16 %v4462, %v4461
      %v4472 = vpack.c.b16 %v4464, %v4463
      %v4474 = vsel %vm852, %v4465, 0
      %v4477 = vsel %vm852, %v4466, 0
      %v4480 = vsel %vm852, %v4467, 0
      %v4483 = vsel %vm852, %v4468, 0
      %v4486 = vsel %vm852, %v4469, 0
      %v4489 = vsel %vm852, %v4470, 0
      %v4492 = vsel %vm852, %v4471, 0
      %v4495 = vsel %vm852, %v4472, 0
      %v4498 = vsel %vm877, %v4448, 0
      %4500 = vmatpush.bf16.msra.mxu0 0
      %4501 = vmatpush.bf16.msra.mxu0 0
      %4502 = vmatpush.bf16.msra.mxu0 0
      %4503 = vmatpush.bf16.msra.mxu0 0
      %4504 = vmatpush.bf16.msra.mxu0 0
      %4505 = vmatpush.bf16.msra.mxu0 0
      %4506 = vmatpush.bf16.msra.mxu0 0
      %4507 = vmatpush.bf16.msra.mxu0 %v4498
      %4508 = vmatmul.bf16.gmra.mxu0 %v4474
      %v4509 = vpop.f32.mrf.mxu0
      %v4510 = vadd.f32 0.0, %v4509
      %v4511 = vpop.f32.mrf.mxu0
      %v4512 = vadd.f32 0.0, %v4511
      %4513 = vmatmul.bf16.gmra.mxu0 %v4477
      %v4514 = vpop.f32.mrf.mxu0
      %v4515 = vadd.f32 0.0, %v4514
      %v4516 = vpop.f32.mrf.mxu0
      %v4517 = vadd.f32 0.0, %v4516
      %4518 = vmatmul.bf16.gmra.mxu0 %v4480
      %v4519 = vpop.f32.mrf.mxu0
      %v4520 = vadd.f32 0.0, %v4519
      %v4521 = vpop.f32.mrf.mxu0
      %v4522 = vadd.f32 0.0, %v4521
      %4523 = vmatmul.bf16.gmra.mxu0 %v4483
      %v4524 = vpop.f32.mrf.mxu0
      %v4525 = vadd.f32 0.0, %v4524
      %v4526 = vpop.f32.mrf.mxu0
      %v4527 = vadd.f32 0.0, %v4526
      %4528 = vmatmul.bf16.gmra.mxu0 %v4486
      %v4529 = vpop.f32.mrf.mxu0
      %v4530 = vadd.f32 0.0, %v4529
      %v4531 = vpop.f32.mrf.mxu0
      %v4532 = vadd.f32 0.0, %v4531
      %4533 = vmatmul.bf16.gmra.mxu0 %v4489
      %v4534 = vpop.f32.mrf.mxu0
      %v4535 = vadd.f32 0.0, %v4534
      %v4536 = vpop.f32.mrf.mxu0
      %v4537 = vadd.f32 0.0, %v4536
      %4538 = vmatmul.bf16.gmra.mxu0 %v4492
      %v4539 = vpop.f32.mrf.mxu0
      %v4540 = vadd.f32 0.0, %v4539
      %v4541 = vpop.f32.mrf.mxu0
      %v4542 = vadd.f32 0.0, %v4541
      %4543 = vmatmul.bf16.gmra.mxu0 %v4495
      %v4544 = vpop.f32.mrf.mxu0
      %v4545 = vadd.f32 0.0, %v4544
      %v4546 = vpop.f32.mrf.mxu0
      %v4547 = vadd.f32 0.0, %v4546
      %4548 = vdwg.mxu0
      %v4549 = vadd.f32 %v4216, %v4510
      %v4550 = vadd.f32 %v4217, %v4512
      %v4551 = vadd.f32 %v4218, %v4515
      %v4552 = vadd.f32 %v4219, %v4517
      %v4553 = vadd.f32 %v4220, %v4520
      %v4554 = vadd.f32 %v4221, %v4522
      %v4555 = vadd.f32 %v4222, %v4525
      %v4556 = vadd.f32 %v4223, %v4527
      %v4557 = vadd.f32 %v4224, %v4530
      %v4558 = vadd.f32 %v4225, %v4532
      %v4559 = vadd.f32 %v4226, %v4535
      %v4560 = vadd.f32 %v4227, %v4537
      %v4561 = vadd.f32 %v4228, %v4540
      %v4562 = vadd.f32 %v4229, %v4542
      %v4563 = vadd.f32 %v4230, %v4545
      %v4564 = vadd.f32 %v4231, %v4547
      %s4565 = scalar_lea.vmem [#allocation2], 200
      %v4566 = vld [vmem:[%s4565 + $0x4] sm:$0x8]
      %v4567 = vld [vmem:[%s4565 + $0x8] sm:$0xf]
      %v4568 = vld [vmem:[%s4565 + $0xc] sm:$0xf]
      %v4569 = vld [vmem:[%s4565 + $0x18] sm:$0x8]
      %v4570 = vld [vmem:[%s4565 + $0x1c] sm:$0xf]
      %v4571 = vld [vmem:[%s4565 + $0x20] sm:$0xf]
      %v4572 = vld [vmem:[%s4565 + $0x2c] sm:$0x8]
      %v4573 = vld [vmem:[%s4565 + $0x30] sm:$0xf]
      %v4574 = vld [vmem:[%s4565 + $0x34] sm:$0xf]
      %v4575 = vld [vmem:[%s4565 + $0x40] sm:$0x8]
      %v4576 = vld [vmem:[%s4565 + $0x44] sm:$0xf]
      %v4577 = vld [vmem:[%s4565 + $0x48] sm:$0xf]
      %v4578 = vld [vmem:[%s4565 + $0x54] sm:$0x8]
      %v4579 = vld [vmem:[%s4565 + $0x58] sm:$0xf]
      %v4580 = vld [vmem:[%s4565 + $0x5c] sm:$0xf]
      %v4581 = vld [vmem:[%s4565 + $0x68] sm:$0x8]
      %v4582 = vld [vmem:[%s4565 + $0x6c] sm:$0xf]
      %v4583 = vld [vmem:[%s4565 + $0x70] sm:$0xf]
      %v4584 = vld [vmem:[%s4565 + $0x7c] sm:$0x8]
      %v4585 = vld [vmem:[%s4565 + $0x80] sm:$0xf]
      %v4586 = vld [vmem:[%s4565 + $0x84] sm:$0xf]
      %v4587 = vld [vmem:[%s4565 + $0x90] sm:$0x8]
      %v4588 = vld [vmem:[%s4565 + $0x94] sm:$0xf]
      %v4589 = vld [vmem:[%s4565 + $0x98] sm:$0xf]
      %v4591 = vshrl.u32 %v4566, 16
      %v4593 = vrot.slane %v4591, 7
      %v4594 = vrot.slane %v4593, 4
      %v4596 = vshrl.u32 %v4567, 16
      %v4598 = vrot.slane %v4596, 7
      %v4599 = vshll.u32 %v4567, 16
      %v4601 = vor.u32 %v4598, %v4599
      %v4602 = vsel %vm632, %v4594, %v4601
      %v4603 = vrot.slane %v4598, 4
      %v4605 = vshrl.u32 %v4568, 16
      %v4607 = vrot.slane %v4605, 7
      %v4608 = vshll.u32 %v4568, 16
      %v4610 = vor.u32 %v4607, %v4608
      %v4611 = vsel %vm632, %v4603, %v4610
      %v4613 = vshrl.u32 %v4569, 16
      %v4615 = vrot.slane %v4613, 7
      %v4616 = vrot.slane %v4615, 4
      %v4618 = vshrl.u32 %v4570, 16
      %v4620 = vrot.slane %v4618, 7
      %v4621 = vshll.u32 %v4570, 16
      %v4623 = vor.u32 %v4620, %v4621
      %v4624 = vsel %vm632, %v4616, %v4623
      %v4625 = vrot.slane %v4620, 4
      %v4627 = vshrl.u32 %v4571, 16
      %v4629 = vrot.slane %v4627, 7
      %v4630 = vshll.u32 %v4571, 16
      %v4632 = vor.u32 %v4629, %v4630
      %v4633 = vsel %vm632, %v4625, %v4632
      %v4635 = vshrl.u32 %v4572, 16
      %v4637 = vrot.slane %v4635, 7
      %v4638 = vrot.slane %v4637, 4
      %v4640 = vshrl.u32 %v4573, 16
      %v4642 = vrot.slane %v4640, 7
      %v4643 = vshll.u32 %v4573, 16
      %v4645 = vor.u32 %v4642, %v4643
      %v4646 = vsel %vm632, %v4638, %v4645
      %v4647 = vrot.slane %v4642, 4
      %v4649 = vshrl.u32 %v4574, 16
      %v4651 = vrot.slane %v4649, 7
      %v4652 = vshll.u32 %v4574, 16
      %v4654 = vor.u32 %v4651, %v4652
      %v4655 = vsel %vm632, %v4647, %v4654
      %v4657 = vshrl.u32 %v4575, 16
      %v4659 = vrot.slane %v4657, 7
      %v4660 = vrot.slane %v4659, 4
      %v4662 = vshrl.u32 %v4576, 16
      %v4664 = vrot.slane %v4662, 7
      %v4665 = vshll.u32 %v4576, 16
      %v4667 = vor.u32 %v4664, %v4665
      %v4668 = vsel %vm632, %v4660, %v4667
      %v4669 = vrot.slane %v4664, 4
      %v4671 = vshrl.u32 %v4577, 16
      %v4673 = vrot.slane %v4671, 7
      %v4674 = vshll.u32 %v4577, 16
      %v4676 = vor.u32 %v4673, %v4674
      %v4677 = vsel %vm632, %v4669, %v4676
      %v4679 = vshrl.u32 %v4578, 16
      %v4681 = vrot.slane %v4679, 7
      %v4682 = vrot.slane %v4681, 4
      %v4684 = vshrl.u32 %v4579, 16
      %v4686 = vrot.slane %v4684, 7
      %v4687 = vshll.u32 %v4579, 16
      %v4689 = vor.u32 %v4686, %v4687
      %v4690 = vsel %vm632, %v4682, %v4689
      %v4691 = vrot.slane %v4686, 4
      %v4693 = vshrl.u32 %v4580, 16
      %v4695 = vrot.slane %v4693, 7
      %v4696 = vshll.u32 %v4580, 16
      %v4698 = vor.u32 %v4695, %v4696
      %v4699 = vsel %vm632, %v4691, %v4698
      %v4701 = vshrl.u32 %v4581, 16
      %v4703 = vrot.slane %v4701, 7
      %v4704 = vrot.slane %v4703, 4
      %v4706 = vshrl.u32 %v4582, 16
      %v4708 = vrot.slane %v4706, 7
      %v4709 = vshll.u32 %v4582, 16
      %v4711 = vor.u32 %v4708, %v4709
      %v4712 = vsel %vm632, %v4704, %v4711
      %v4713 = vrot.slane %v4708, 4
      %v4715 = vshrl.u32 %v4583, 16
      %v4717 = vrot.slane %v4715, 7
      %v4718 = vshll.u32 %v4583, 16
      %v4720 = vor.u32 %v4717, %v4718
      %v4721 = vsel %vm632, %v4713, %v4720
      %v4723 = vshrl.u32 %v4584, 16
      %v4725 = vrot.slane %v4723, 7
      %v4726 = vrot.slane %v4725, 4
      %v4728 = vshrl.u32 %v4585, 16
      %v4730 = vrot.slane %v4728, 7
      %v4731 = vshll.u32 %v4585, 16
      %v4733 = vor.u32 %v4730, %v4731
      %v4734 = vsel %vm632, %v4726, %v4733
      %v4735 = vrot.slane %v4730, 4
      %v4737 = vshrl.u32 %v4586, 16
      %v4739 = vrot.slane %v4737, 7
      %v4740 = vshll.u32 %v4586, 16
      %v4742 = vor.u32 %v4739, %v4740
      %v4743 = vsel %vm632, %v4735, %v4742
      %v4745 = vshrl.u32 %v4587, 16
      %v4747 = vrot.slane %v4745, 7
      %v4748 = vrot.slane %v4747, 4
      %v4750 = vshrl.u32 %v4588, 16
      %v4752 = vrot.slane %v4750, 7
      %v4753 = vshll.u32 %v4588, 16
      %v4755 = vor.u32 %v4752, %v4753
      %v4756 = vsel %vm632, %v4748, %v4755
      %v4757 = vrot.slane %v4752, 4
      %v4759 = vshrl.u32 %v4589, 16
      %v4761 = vrot.slane %v4759, 7
      %v4762 = vshll.u32 %v4589, 16
      %v4764 = vor.u32 %v4761, %v4762
      %v4765 = vsel %vm632, %v4757, %v4764
      %v4766 = vld [vmem:[%s2354] sm:$0xf]
      %v4767 = vunpack.c.l.b16 %v4602
      %v4768 = vunpack.c.l.b16 %v4611
      %v4769 = vunpack.c.l.b16 %v4624
      %v4770 = vunpack.c.l.b16 %v4633
      %v4771 = vunpack.c.l.b16 %v4646
      %v4772 = vunpack.c.l.b16 %v4655
      %v4773 = vunpack.c.l.b16 %v4668
      %v4774 = vunpack.c.l.b16 %v4677
      %v4775 = vunpack.c.l.b16 %v4690
      %v4776 = vunpack.c.l.b16 %v4699
      %v4777 = vunpack.c.l.b16 %v4712
      %v4778 = vunpack.c.l.b16 %v4721
      %v4779 = vunpack.c.l.b16 %v4734
      %v4780 = vunpack.c.l.b16 %v4743
      %v4781 = vunpack.c.l.b16 %v4756
      %v4782 = vunpack.c.l.b16 %v4765
      %v4783 = vpack.c.b16 %v4768, %v4767
      %v4784 = vpack.c.b16 %v4770, %v4769
      %v4785 = vpack.c.b16 %v4772, %v4771
      %v4786 = vpack.c.b16 %v4774, %v4773
      %v4787 = vpack.c.b16 %v4776, %v4775
      %v4788 = vpack.c.b16 %v4778, %v4777
      %v4789 = vpack.c.b16 %v4780, %v4779
      %v4790 = vpack.c.b16 %v4782, %v4781
      %v4792 = vsel %vm852, %v4783, 0
      %v4795 = vsel %vm852, %v4784, 0
      %v4798 = vsel %vm852, %v4785, 0
      %v4801 = vsel %vm852, %v4786, 0
      %v4804 = vsel %vm852, %v4787, 0
      %v4807 = vsel %vm852, %v4788, 0
      %v4810 = vsel %vm852, %v4789, 0
      %v4813 = vsel %vm852, %v4790, 0
      %v4816 = vsel %vm877, %v4766, 0
      %4818 = vmatpush.bf16.msra.mxu0 0
      %4819 = vmatpush.bf16.msra.mxu0 0
      %4820 = vmatpush.bf16.msra.mxu0 0
      %4821 = vmatpush.bf16.msra.mxu0 0
      %4822 = vmatpush.bf16.msra.mxu0 0
      %4823 = vmatpush.bf16.msra.mxu0 0
      %4824 = vmatpush.bf16.msra.mxu0 0
      %4825 = vmatpush.bf16.msra.mxu0 %v4816
      %4826 = vmatmul.bf16.gmra.mxu0 %v4792
      %v4827 = vpop.f32.mrf.mxu0
      %v4828 = vadd.f32 0.0, %v4827
      %v4829 = vpop.f32.mrf.mxu0
      %v4830 = vadd.f32 0.0, %v4829
      %4831 = vmatmul.bf16.gmra.mxu0 %v4795
      %v4832 = vpop.f32.mrf.mxu0
      %v4833 = vadd.f32 0.0, %v4832
      %v4834 = vpop.f32.mrf.mxu0
      %v4835 = vadd.f32 0.0, %v4834
      %4836 = vmatmul.bf16.gmra.mxu0 %v4798
      %v4837 = vpop.f32.mrf.mxu0
      %v4838 = vadd.f32 0.0, %v4837
      %v4839 = vpop.f32.mrf.mxu0
      %v4840 = vadd.f32 0.0, %v4839
      %4841 = vmatmul.bf16.gmra.mxu0 %v4801
      %v4842 = vpop.f32.mrf.mxu0
      %v4843 = vadd.f32 0.0, %v4842
      %v4844 = vpop.f32.mrf.mxu0
      %v4845 = vadd.f32 0.0, %v4844
      %4846 = vmatmul.bf16.gmra.mxu0 %v4804
      %v4847 = vpop.f32.mrf.mxu0
      %v4848 = vadd.f32 0.0, %v4847
      %v4849 = vpop.f32.mrf.mxu0
      %v4850 = vadd.f32 0.0, %v4849
      %4851 = vmatmul.bf16.gmra.mxu0 %v4807
      %v4852 = vpop.f32.mrf.mxu0
      %v4853 = vadd.f32 0.0, %v4852
      %v4854 = vpop.f32.mrf.mxu0
      %v4855 = vadd.f32 0.0, %v4854
      %4856 = vmatmul.bf16.gmra.mxu0 %v4810
      %v4857 = vpop.f32.mrf.mxu0
      %v4858 = vadd.f32 0.0, %v4857
      %v4859 = vpop.f32.mrf.mxu0
      %v4860 = vadd.f32 0.0, %v4859
      %4861 = vmatmul.bf16.gmra.mxu0 %v4813
      %v4862 = vpop.f32.mrf.mxu0
      %v4863 = vadd.f32 0.0, %v4862
      %v4864 = vpop.f32.mrf.mxu0
      %v4865 = vadd.f32 0.0, %v4864
      %4866 = vdwg.mxu0
      %v4867 = vadd.f32 %v4549, %v4828
      %v4868 = vadd.f32 %v4550, %v4830
      %v4869 = vadd.f32 %v4551, %v4833
      %v4870 = vadd.f32 %v4552, %v4835
      %v4871 = vadd.f32 %v4553, %v4838
      %v4872 = vadd.f32 %v4554, %v4840
      %v4873 = vadd.f32 %v4555, %v4843
      %v4874 = vadd.f32 %v4556, %v4845
      %v4875 = vadd.f32 %v4557, %v4848
      %v4876 = vadd.f32 %v4558, %v4850
      %v4877 = vadd.f32 %v4559, %v4853
      %v4878 = vadd.f32 %v4560, %v4855
      %v4879 = vadd.f32 %v4561, %v4858
      %v4880 = vadd.f32 %v4562, %v4860
      %v4881 = vadd.f32 %v4563, %v4863
      %v4882 = vadd.f32 %v4564, %v4865
      %v4883 = vld [vmem:[%s2472] sm:$0xf]
      %v4900 = vunpack.c.l.b16 %v4567
      %v4901 = vunpack.c.l.b16 %v4568
      %v4902 = vunpack.c.l.b16 %v4570
      %v4903 = vunpack.c.l.b16 %v4571
      %v4904 = vunpack.c.l.b16 %v4573
      %v4905 = vunpack.c.l.b16 %v4574
      %v4906 = vunpack.c.l.b16 %v4576
      %v4907 = vunpack.c.l.b16 %v4577
      %v4908 = vunpack.c.l.b16 %v4579
      %v4909 = vunpack.c.l.b16 %v4580
      %v4910 = vunpack.c.l.b16 %v4582
      %v4911 = vunpack.c.l.b16 %v4583
      %v4912 = vunpack.c.l.b16 %v4585
      %v4913 = vunpack.c.l.b16 %v4586
      %v4914 = vunpack.c.l.b16 %v4588
      %v4915 = vunpack.c.l.b16 %v4589
      %v4916 = vpack.c.b16 %v4901, %v4900
      %v4917 = vpack.c.b16 %v4903, %v4902
      %v4918 = vpack.c.b16 %v4905, %v4904
      %v4919 = vpack.c.b16 %v4907, %v4906
      %v4920 = vpack.c.b16 %v4909, %v4908
      %v4921 = vpack.c.b16 %v4911, %v4910
      %v4922 = vpack.c.b16 %v4913, %v4912
      %v4923 = vpack.c.b16 %v4915, %v4914
      %v4925 = vsel %vm852, %v4916, 0
      %v4928 = vsel %vm852, %v4917, 0
      %v4931 = vsel %vm852, %v4918, 0
      %v4934 = vsel %vm852, %v4919, 0
      %v4937 = vsel %vm852, %v4920, 0
      %v4940 = vsel %vm852, %v4921, 0
      %v4943 = vsel %vm852, %v4922, 0
      %v4946 = vsel %vm852, %v4923, 0
      %v4949 = vsel %vm877, %v4883, 0
      %4951 = vmatpush.bf16.msra.mxu0 0
      %4952 = vmatpush.bf16.msra.mxu0 0
      %4953 = vmatpush.bf16.msra.mxu0 0
      %4954 = vmatpush.bf16.msra.mxu0 0
      %4955 = vmatpush.bf16.msra.mxu0 0
      %4956 = vmatpush.bf16.msra.mxu0 0
      %4957 = vmatpush.bf16.msra.mxu0 0
      %4958 = vmatpush.bf16.msra.mxu0 %v4949
      %4959 = vmatmul.bf16.gmra.mxu0 %v4925
      %v4960 = vpop.f32.mrf.mxu0
      %v4961 = vadd.f32 0.0, %v4960
      %v4962 = vpop.f32.mrf.mxu0
      %v4963 = vadd.f32 0.0, %v4962
      %4964 = vmatmul.bf16.gmra.mxu0 %v4928
      %v4965 = vpop.f32.mrf.mxu0
      %v4966 = vadd.f32 0.0, %v4965
      %v4967 = vpop.f32.mrf.mxu0
      %v4968 = vadd.f32 0.0, %v4967
      %4969 = vmatmul.bf16.gmra.mxu0 %v4931
      %v4970 = vpop.f32.mrf.mxu0
      %v4971 = vadd.f32 0.0, %v4970
      %v4972 = vpop.f32.mrf.mxu0
      %v4973 = vadd.f32 0.0, %v4972
      %4974 = vmatmul.bf16.gmra.mxu0 %v4934
      %v4975 = vpop.f32.mrf.mxu0
      %v4976 = vadd.f32 0.0, %v4975
      %v4977 = vpop.f32.mrf.mxu0
      %v4978 = vadd.f32 0.0, %v4977
      %4979 = vmatmul.bf16.gmra.mxu0 %v4937
      %v4980 = vpop.f32.mrf.mxu0
      %v4981 = vadd.f32 0.0, %v4980
      %v4982 = vpop.f32.mrf.mxu0
      %v4983 = vadd.f32 0.0, %v4982
      %4984 = vmatmul.bf16.gmra.mxu0 %v4940
      %v4985 = vpop.f32.mrf.mxu0
      %v4986 = vadd.f32 0.0, %v4985
      %v4987 = vpop.f32.mrf.mxu0
      %v4988 = vadd.f32 0.0, %v4987
      %4989 = vmatmul.bf16.gmra.mxu0 %v4943
      %v4990 = vpop.f32.mrf.mxu0
      %v4991 = vadd.f32 0.0, %v4990
      %v4992 = vpop.f32.mrf.mxu0
      %v4993 = vadd.f32 0.0, %v4992
      %4994 = vmatmul.bf16.gmra.mxu0 %v4946
      %v4995 = vpop.f32.mrf.mxu0
      %v4996 = vadd.f32 0.0, %v4995
      %v4997 = vpop.f32.mrf.mxu0
      %v4998 = vadd.f32 0.0, %v4997
      %4999 = vdwg.mxu0
      %v5000 = vadd.f32 %v4867, %v4961
      %v5001 = vadd.f32 %v4868, %v4963
      %v5002 = vadd.f32 %v4869, %v4966
      %v5003 = vadd.f32 %v4870, %v4968
      %v5004 = vadd.f32 %v4871, %v4971
      %v5005 = vadd.f32 %v4872, %v4973
      %v5006 = vadd.f32 %v4873, %v4976
      %v5007 = vadd.f32 %v4874, %v4978
      %v5008 = vadd.f32 %v4875, %v4981
      %v5009 = vadd.f32 %v4876, %v4983
      %v5010 = vadd.f32 %v4877, %v4986
      %v5011 = vadd.f32 %v4878, %v4988
      %v5012 = vadd.f32 %v4879, %v4991
      %v5013 = vadd.f32 %v4880, %v4993
      %v5014 = vadd.f32 %v4881, %v4996
      %v5015 = vadd.f32 %v4882, %v4998
      %v5016 = vld [vmem:[%s4565 + $0x8] sm:$0xf]
      %v5017 = vld [vmem:[%s4565 + $0xc] sm:$0xf]
      %v5018 = vld [vmem:[%s4565 + $0x10] sm:$0x1]
      %v5019 = vld [vmem:[%s4565 + $0x1c] sm:$0xf]
      %v5020 = vld [vmem:[%s4565 + $0x20] sm:$0xf]
      %v5021 = vld [vmem:[%s4565 + $0x24] sm:$0x1]
      %v5022 = vld [vmem:[%s4565 + $0x30] sm:$0xf]
      %v5023 = vld [vmem:[%s4565 + $0x34] sm:$0xf]
      %v5024 = vld [vmem:[%s4565 + $0x38] sm:$0x1]
      %v5025 = vld [vmem:[%s4565 + $0x44] sm:$0xf]
      %v5026 = vld [vmem:[%s4565 + $0x48] sm:$0xf]
      %v5027 = vld [vmem:[%s4565 + $0x4c] sm:$0x1]
      %v5028 = vld [vmem:[%s4565 + $0x58] sm:$0xf]
      %v5029 = vld [vmem:[%s4565 + $0x5c] sm:$0xf]
      %v5030 = vld [vmem:[%s4565 + $0x60] sm:$0x1]
      %v5031 = vld [vmem:[%s4565 + $0x6c] sm:$0xf]
      %v5032 = vld [vmem:[%s4565 + $0x70] sm:$0xf]
      %v5033 = vld [vmem:[%s4565 + $0x74] sm:$0x1]
      %v5034 = vld [vmem:[%s4565 + $0x80] sm:$0xf]
      %v5035 = vld [vmem:[%s4565 + $0x84] sm:$0xf]
      %v5036 = vld [vmem:[%s4565 + $0x88] sm:$0x1]
      %v5037 = vld [vmem:[%s4565 + $0x94] sm:$0xf]
      %v5038 = vld [vmem:[%s4565 + $0x98] sm:$0xf]
      %v5039 = vld [vmem:[%s4565 + $0x9c] sm:$0x1]
      %v5041 = vshrl.u32 %v5016, 16
      %v5043 = vrot.slane %v5041, 4
      %v5044 = vshll.u32 %v5016, 16
      %v5046 = vrot.slane %v5044, 5
      %v5047 = vor.u32 %v5043, %v5046
      %v5048 = vrot.slane %v5047, 4
      %v5050 = vshll.u32 %v5017, 16
      %v5052 = vrot.slane %v5050, 5
      %v5053 = vsel %vm1056, %v5048, %v5052
      %v5054 = vshrl.u32 %v5017, 16
      %v5056 = vrot.slane %v5054, 4
      %v5057 = vor.u32 %v5056, %v5052
      %v5058 = vrot.slane %v5057, 4
      %v5060 = vshll.u32 %v5018, 16
      %v5062 = vrot.slane %v5060, 5
      %v5063 = vsel %vm1056, %v5058, %v5062
      %v5065 = vshrl.u32 %v5019, 16
      %v5067 = vrot.slane %v5065, 4
      %v5068 = vshll.u32 %v5019, 16
      %v5070 = vrot.slane %v5068, 5
      %v5071 = vor.u32 %v5067, %v5070
      %v5072 = vrot.slane %v5071, 4
      %v5074 = vshll.u32 %v5020, 16
      %v5076 = vrot.slane %v5074, 5
      %v5077 = vsel %vm1056, %v5072, %v5076
      %v5078 = vshrl.u32 %v5020, 16
      %v5080 = vrot.slane %v5078, 4
      %v5081 = vor.u32 %v5080, %v5076
      %v5082 = vrot.slane %v5081, 4
      %v5084 = vshll.u32 %v5021, 16
      %v5086 = vrot.slane %v5084, 5
      %v5087 = vsel %vm1056, %v5082, %v5086
      %v5089 = vshrl.u32 %v5022, 16
      %v5091 = vrot.slane %v5089, 4
      %v5092 = vshll.u32 %v5022, 16
      %v5094 = vrot.slane %v5092, 5
      %v5095 = vor.u32 %v5091, %v5094
      %v5096 = vrot.slane %v5095, 4
      %v5098 = vshll.u32 %v5023, 16
      %v5100 = vrot.slane %v5098, 5
      %v5101 = vsel %vm1056, %v5096, %v5100
      %v5102 = vshrl.u32 %v5023, 16
      %v5104 = vrot.slane %v5102, 4
      %v5105 = vor.u32 %v5104, %v5100
      %v5106 = vrot.slane %v5105, 4
      %v5108 = vshll.u32 %v5024, 16
      %v5110 = vrot.slane %v5108, 5
      %v5111 = vsel %vm1056, %v5106, %v5110
      %v5113 = vshrl.u32 %v5025, 16
      %v5115 = vrot.slane %v5113, 4
      %v5116 = vshll.u32 %v5025, 16
      %v5118 = vrot.slane %v5116, 5
      %v5119 = vor.u32 %v5115, %v5118
      %v5120 = vrot.slane %v5119, 4
      %v5122 = vshll.u32 %v5026, 16
      %v5124 = vrot.slane %v5122, 5
      %v5125 = vsel %vm1056, %v5120, %v5124
      %v5126 = vshrl.u32 %v5026, 16
      %v5128 = vrot.slane %v5126, 4
      %v5129 = vor.u32 %v5128, %v5124
      %v5130 = vrot.slane %v5129, 4
      %v5132 = vshll.u32 %v5027, 16
      %v5134 = vrot.slane %v5132, 5
      %v5135 = vsel %vm1056, %v5130, %v5134
      %v5137 = vshrl.u32 %v5028, 16
      %v5139 = vrot.slane %v5137, 4
      %v5140 = vshll.u32 %v5028, 16
      %v5142 = vrot.slane %v5140, 5
      %v5143 = vor.u32 %v5139, %v5142
      %v5144 = vrot.slane %v5143, 4
      %v5146 = vshll.u32 %v5029, 16
      %v5148 = vrot.slane %v5146, 5
      %v5149 = vsel %vm1056, %v5144, %v5148
      %v5150 = vshrl.u32 %v5029, 16
      %v5152 = vrot.slane %v5150, 4
      %v5153 = vor.u32 %v5152, %v5148
      %v5154 = vrot.slane %v5153, 4
      %v5156 = vshll.u32 %v5030, 16
      %v5158 = vrot.slane %v5156, 5
      %v5159 = vsel %vm1056, %v5154, %v5158
      %v5161 = vshrl.u32 %v5031, 16
      %v5163 = vrot.slane %v5161, 4
      %v5164 = vshll.u32 %v5031, 16
      %v5166 = vrot.slane %v5164, 5
      %v5167 = vor.u32 %v5163, %v5166
      %v5168 = vrot.slane %v5167, 4
      %v5170 = vshll.u32 %v5032, 16
      %v5172 = vrot.slane %v5170, 5
      %v5173 = vsel %vm1056, %v5168, %v5172
      %v5174 = vshrl.u32 %v5032, 16
      %v5176 = vrot.slane %v5174, 4
      %v5177 = vor.u32 %v5176, %v5172
      %v5178 = vrot.slane %v5177, 4
      %v5180 = vshll.u32 %v5033, 16
      %v5182 = vrot.slane %v5180, 5
      %v5183 = vsel %vm1056, %v5178, %v5182
      %v5185 = vshrl.u32 %v5034, 16
      %v5187 = vrot.slane %v5185, 4
      %v5188 = vshll.u32 %v5034, 16
      %v5190 = vrot.slane %v5188, 5
      %v5191 = vor.u32 %v5187, %v5190
      %v5192 = vrot.slane %v5191, 4
      %v5194 = vshll.u32 %v5035, 16
      %v5196 = vrot.slane %v5194, 5
      %v5197 = vsel %vm1056, %v5192, %v5196
      %v5198 = vshrl.u32 %v5035, 16
      %v5200 = vrot.slane %v5198, 4
      %v5201 = vor.u32 %v5200, %v5196
      %v5202 = vrot.slane %v5201, 4
      %v5204 = vshll.u32 %v5036, 16
      %v5206 = vrot.slane %v5204, 5
      %v5207 = vsel %vm1056, %v5202, %v5206
      %v5209 = vshrl.u32 %v5037, 16
      %v5211 = vrot.slane %v5209, 4
      %v5212 = vshll.u32 %v5037, 16
      %v5214 = vrot.slane %v5212, 5
      %v5215 = vor.u32 %v5211, %v5214
      %v5216 = vrot.slane %v5215, 4
      %v5218 = vshll.u32 %v5038, 16
      %v5220 = vrot.slane %v5218, 5
      %v5221 = vsel %vm1056, %v5216, %v5220
      %v5222 = vshrl.u32 %v5038, 16
      %v5224 = vrot.slane %v5222, 4
      %v5225 = vor.u32 %v5224, %v5220
      %v5226 = vrot.slane %v5225, 4
      %v5228 = vshll.u32 %v5039, 16
      %v5230 = vrot.slane %v5228, 5
      %v5231 = vsel %vm1056, %v5226, %v5230
      %v5232 = vld [vmem:[%s2822] sm:$0xf]
      %v5233 = vunpack.c.l.b16 %v5053
      %v5234 = vunpack.c.l.b16 %v5063
      %v5235 = vunpack.c.l.b16 %v5077
      %v5236 = vunpack.c.l.b16 %v5087
      %v5237 = vunpack.c.l.b16 %v5101
      %v5238 = vunpack.c.l.b16 %v5111
      %v5239 = vunpack.c.l.b16 %v5125
      %v5240 = vunpack.c.l.b16 %v5135
      %v5241 = vunpack.c.l.b16 %v5149
      %v5242 = vunpack.c.l.b16 %v5159
      %v5243 = vunpack.c.l.b16 %v5173
      %v5244 = vunpack.c.l.b16 %v5183
      %v5245 = vunpack.c.l.b16 %v5197
      %v5246 = vunpack.c.l.b16 %v5207
      %v5247 = vunpack.c.l.b16 %v5221
      %v5248 = vunpack.c.l.b16 %v5231
      %v5249 = vpack.c.b16 %v5234, %v5233
      %v5250 = vpack.c.b16 %v5236, %v5235
      %v5251 = vpack.c.b16 %v5238, %v5237
      %v5252 = vpack.c.b16 %v5240, %v5239
      %v5253 = vpack.c.b16 %v5242, %v5241
      %v5254 = vpack.c.b16 %v5244, %v5243
      %v5255 = vpack.c.b16 %v5246, %v5245
      %v5256 = vpack.c.b16 %v5248, %v5247
      %v5258 = vsel %vm852, %v5249, 0
      %v5261 = vsel %vm852, %v5250, 0
      %v5264 = vsel %vm852, %v5251, 0
      %v5267 = vsel %vm852, %v5252, 0
      %v5270 = vsel %vm852, %v5253, 0
      %v5273 = vsel %vm852, %v5254, 0
      %v5276 = vsel %vm852, %v5255, 0
      %v5279 = vsel %vm852, %v5256, 0
      %v5282 = vsel %vm877, %v5232, 0
      %5284 = vmatpush.bf16.msra.mxu0 0
      %5285 = vmatpush.bf16.msra.mxu0 0
      %5286 = vmatpush.bf16.msra.mxu0 0
      %5287 = vmatpush.bf16.msra.mxu0 0
      %5288 = vmatpush.bf16.msra.mxu0 0
      %5289 = vmatpush.bf16.msra.mxu0 0
      %5290 = vmatpush.bf16.msra.mxu0 0
      %5291 = vmatpush.bf16.msra.mxu0 %v5282
      %5292 = vmatmul.bf16.gmra.mxu0 %v5258
      %v5293 = vpop.f32.mrf.mxu0
      %v5294 = vadd.f32 0.0, %v5293
      %v5295 = vpop.f32.mrf.mxu0
      %v5296 = vadd.f32 0.0, %v5295
      %5297 = vmatmul.bf16.gmra.mxu0 %v5261
      %v5298 = vpop.f32.mrf.mxu0
      %v5299 = vadd.f32 0.0, %v5298
      %v5300 = vpop.f32.mrf.mxu0
      %v5301 = vadd.f32 0.0, %v5300
      %5302 = vmatmul.bf16.gmra.mxu0 %v5264
      %v5303 = vpop.f32.mrf.mxu0
      %v5304 = vadd.f32 0.0, %v5303
      %v5305 = vpop.f32.mrf.mxu0
      %v5306 = vadd.f32 0.0, %v5305
      %5307 = vmatmul.bf16.gmra.mxu0 %v5267
      %v5308 = vpop.f32.mrf.mxu0
      %v5309 = vadd.f32 0.0, %v5308
      %v5310 = vpop.f32.mrf.mxu0
      %v5311 = vadd.f32 0.0, %v5310
      %5312 = vmatmul.bf16.gmra.mxu0 %v5270
      %v5313 = vpop.f32.mrf.mxu0
      %v5314 = vadd.f32 0.0, %v5313
      %v5315 = vpop.f32.mrf.mxu0
      %v5316 = vadd.f32 0.0, %v5315
      %5317 = vmatmul.bf16.gmra.mxu0 %v5273
      %v5318 = vpop.f32.mrf.mxu0
      %v5319 = vadd.f32 0.0, %v5318
      %v5320 = vpop.f32.mrf.mxu0
      %v5321 = vadd.f32 0.0, %v5320
      %5322 = vmatmul.bf16.gmra.mxu0 %v5276
      %v5323 = vpop.f32.mrf.mxu0
      %v5324 = vadd.f32 0.0, %v5323
      %v5325 = vpop.f32.mrf.mxu0
      %v5326 = vadd.f32 0.0, %v5325
      %5327 = vmatmul.bf16.gmra.mxu0 %v5279
      %v5328 = vpop.f32.mrf.mxu0
      %v5329 = vadd.f32 0.0, %v5328
      %v5330 = vpop.f32.mrf.mxu0
      %v5331 = vadd.f32 0.0, %v5330
      %5332 = vdwg.mxu0
      %v5333 = vadd.f32 %v5000, %v5294
      %v5334 = vadd.f32 %v5001, %v5296
      %v5335 = vadd.f32 %v5002, %v5299
      %v5336 = vadd.f32 %v5003, %v5301
      %v5337 = vadd.f32 %v5004, %v5304
      %v5338 = vadd.f32 %v5005, %v5306
      %v5339 = vadd.f32 %v5006, %v5309
      %v5340 = vadd.f32 %v5007, %v5311
      %v5341 = vadd.f32 %v5008, %v5314
      %v5342 = vadd.f32 %v5009, %v5316
      %v5343 = vadd.f32 %v5010, %v5319
      %v5344 = vadd.f32 %v5011, %v5321
      %v5345 = vadd.f32 %v5012, %v5324
      %v5346 = vadd.f32 %v5013, %v5326
      %v5347 = vadd.f32 %v5014, %v5329
      %v5348 = vadd.f32 %v5015, %v5331
      %v5349 = vld [vmem:[%s2] sm:$0x1]
      %v5351 = vperm.slane %v5349, 0
      %v5353 = vmul.f32 %v5333, %v5351
      %v5354 = vmul.f32 %v5334, %v5351
      %v5355 = vmul.f32 %v5335, %v5351
      %v5356 = vmul.f32 %v5336, %v5351
      %v5357 = vmul.f32 %v5337, %v5351
      %v5358 = vmul.f32 %v5338, %v5351
      %v5359 = vmul.f32 %v5339, %v5351
      %v5360 = vmul.f32 %v5340, %v5351
      %v5361 = vmul.f32 %v5341, %v5351
      %v5362 = vmul.f32 %v5342, %v5351
      %v5363 = vmul.f32 %v5343, %v5351
      %v5364 = vmul.f32 %v5344, %v5351
      %v5365 = vmul.f32 %v5345, %v5351
      %v5366 = vmul.f32 %v5346, %v5351
      %v5367 = vmul.f32 %v5347, %v5351
      %v5368 = vmul.f32 %v5348, %v5351
      %v5369 = vld [vmem:[%s3] sm:$0x1]
      %v5371 = vperm.slane %v5369, 0
      %v5373 = vadd.f32 %v5353, %v5371
      %v5374 = vadd.f32 %v5354, %v5371
      %v5375 = vadd.f32 %v5355, %v5371
      %v5376 = vadd.f32 %v5356, %v5371
      %v5377 = vadd.f32 %v5357, %v5371
      %v5378 = vadd.f32 %v5358, %v5371
      %v5379 = vadd.f32 %v5359, %v5371
      %v5380 = vadd.f32 %v5360, %v5371
      %v5381 = vadd.f32 %v5361, %v5371
      %v5382 = vadd.f32 %v5362, %v5371
      %v5383 = vadd.f32 %v5363, %v5371
      %v5384 = vadd.f32 %v5364, %v5371
      %v5385 = vadd.f32 %v5365, %v5371
      %v5386 = vadd.f32 %v5366, %v5371
      %v5387 = vadd.f32 %v5367, %v5371
      %v5388 = vadd.f32 %v5368, %v5371
      %v5389 = vmax.f32 %v5373, 0.0
      %v5390 = vmax.f32 %v5374, 0.0
      %v5391 = vmax.f32 %v5375, 0.0
      %v5392 = vmax.f32 %v5376, 0.0
      %v5393 = vmax.f32 %v5377, 0.0
      %v5394 = vmax.f32 %v5378, 0.0
      %v5395 = vmax.f32 %v5379, 0.0
      %v5396 = vmax.f32 %v5380, 0.0
      %v5397 = vmax.f32 %v5381, 0.0
      %v5398 = vmax.f32 %v5382, 0.0
      %v5399 = vmax.f32 %v5383, 0.0
      %v5400 = vmax.f32 %v5384, 0.0
      %v5401 = vmax.f32 %v5385, 0.0
      %v5402 = vmax.f32 %v5386, 0.0
      %v5403 = vmax.f32 %v5387, 0.0
      %v5404 = vmax.f32 %v5388, 0.0
      %v5405 = vpack.c.bf16 %v5389, %v5389
      %v5406 = vpack.c.bf16 %v5390, %v5390
      %v5407 = vpack.c.bf16 %v5391, %v5391
      %v5408 = vpack.c.bf16 %v5392, %v5392
      %v5409 = vpack.c.bf16 %v5393, %v5393
      %v5410 = vpack.c.bf16 %v5394, %v5394
      %v5411 = vpack.c.bf16 %v5395, %v5395
      %v5412 = vpack.c.bf16 %v5396, %v5396
      %v5413 = vpack.c.bf16 %v5397, %v5397
      %v5414 = vpack.c.bf16 %v5398, %v5398
      %v5415 = vpack.c.bf16 %v5399, %v5399
      %v5416 = vpack.c.bf16 %v5400, %v5400
      %v5417 = vpack.c.bf16 %v5401, %v5401
      %v5418 = vpack.c.bf16 %v5402, %v5402
      %v5419 = vpack.c.bf16 %v5403, %v5403
      %v5420 = vpack.c.bf16 %v5404, %v5404
      %s5421 = scalar_lea.vmem [#allocation3], 180
      %5422 = vst.msk [vmem:[%s5421 + $0x8] sm:$0xf] %vm527, %v5405
      %5423 = vst.msk [vmem:[%s5421 + $0xc] sm:$0xf] %vm527, %v5406
      %5424 = vst.msk [vmem:[%s5421 + $0x1c] sm:$0xf] %vm527, %v5407
      %5425 = vst.msk [vmem:[%s5421 + $0x20] sm:$0xf] %vm527, %v5408
      %5426 = vst.msk [vmem:[%s5421 + $0x30] sm:$0xf] %vm527, %v5409
      %5427 = vst.msk [vmem:[%s5421 + $0x34] sm:$0xf] %vm527, %v5410
      %5428 = vst.msk [vmem:[%s5421 + $0x44] sm:$0xf] %vm527, %v5411
      %5429 = vst.msk [vmem:[%s5421 + $0x48] sm:$0xf] %vm527, %v5412
      %5430 = vst.msk [vmem:[%s5421 + $0x58] sm:$0xf] %vm527, %v5413
      %5431 = vst.msk [vmem:[%s5421 + $0x5c] sm:$0xf] %vm527, %v5414
      %5432 = vst.msk [vmem:[%s5421 + $0x6c] sm:$0xf] %vm527, %v5415
      %5433 = vst.msk [vmem:[%s5421 + $0x70] sm:$0xf] %vm527, %v5416
      %5434 = vst.msk [vmem:[%s5421 + $0x80] sm:$0xf] %vm527, %v5417
      %5435 = vst.msk [vmem:[%s5421 + $0x84] sm:$0xf] %vm527, %v5418
      %5436 = vst.msk [vmem:[%s5421 + $0x94] sm:$0xf] %vm527, %v5419
      %5437 = vst.msk [vmem:[%s5421 + $0x98] sm:$0xf] %vm527, %v5420
      %v5438 = vld [vmem:[#allocation3 + $0x4] sm:$0x8]
      %v5439 = vld [vmem:[#allocation3 + $0x8] sm:$0xf]
      %v5440 = vld [vmem:[#allocation3 + $0xc] sm:$0xf]
      %v5441 = vld [vmem:[#allocation3 + $0x18] sm:$0x8]
      %v5442 = vld [vmem:[#allocation3 + $0x1c] sm:$0xf]
      %v5443 = vld [vmem:[#allocation3 + $0x20] sm:$0xf]
      %v5444 = vld [vmem:[#allocation3 + $0x2c] sm:$0x8]
      %v5445 = vld [vmem:[#allocation3 + $0x30] sm:$0xf]
      %v5446 = vld [vmem:[#allocation3 + $0x34] sm:$0xf]
      %v5447 = vld [vmem:[#allocation3 + $0x40] sm:$0x8]
      %v5448 = vld [vmem:[#allocation3 + $0x44] sm:$0xf]
      %v5449 = vld [vmem:[#allocation3 + $0x48] sm:$0xf]
      %v5450 = vld [vmem:[#allocation3 + $0x54] sm:$0x8]
      %v5451 = vld [vmem:[#allocation3 + $0x58] sm:$0xf]
      %v5452 = vld [vmem:[#allocation3 + $0x5c] sm:$0xf]
      %v5453 = vld [vmem:[#allocation3 + $0x68] sm:$0x8]
      %v5454 = vld [vmem:[#allocation3 + $0x6c] sm:$0xf]
      %v5455 = vld [vmem:[#allocation3 + $0x70] sm:$0xf]
      %v5456 = vld [vmem:[#allocation3 + $0x7c] sm:$0x8]
      %v5457 = vld [vmem:[#allocation3 + $0x80] sm:$0xf]
      %v5458 = vld [vmem:[#allocation3 + $0x84] sm:$0xf]
      %v5459 = vld [vmem:[#allocation3 + $0x90] sm:$0x8]
      %v5460 = vld [vmem:[#allocation3 + $0x94] sm:$0xf]
      %v5461 = vld [vmem:[#allocation3 + $0x98] sm:$0xf]
      %v5463 = vshrl.u32 %v5438, 16
      %v5465 = vrot.slane %v5463, 7
      %v5466 = vrot.slane %v5465, 4
      %v5468 = vshrl.u32 %v5439, 16
      %v5470 = vrot.slane %v5468, 7
      %v5471 = vshll.u32 %v5439, 16
      %v5473 = vor.u32 %v5470, %v5471
      %v5474 = vsel %vm632, %v5466, %v5473
      %v5475 = vrot.slane %v5470, 4
      %v5477 = vshrl.u32 %v5440, 16
      %v5479 = vrot.slane %v5477, 7
      %v5480 = vshll.u32 %v5440, 16
      %v5482 = vor.u32 %v5479, %v5480
      %v5483 = vsel %vm632, %v5475, %v5482
      %v5485 = vshrl.u32 %v5441, 16
      %v5487 = vrot.slane %v5485, 7
      %v5488 = vrot.slane %v5487, 4
      %v5490 = vshrl.u32 %v5442, 16
      %v5492 = vrot.slane %v5490, 7
      %v5493 = vshll.u32 %v5442, 16
      %v5495 = vor.u32 %v5492, %v5493
      %v5496 = vsel %vm632, %v5488, %v5495
      %v5497 = vrot.slane %v5492, 4
      %v5499 = vshrl.u32 %v5443, 16
      %v5501 = vrot.slane %v5499, 7
      %v5502 = vshll.u32 %v5443, 16
      %v5504 = vor.u32 %v5501, %v5502
      %v5505 = vsel %vm632, %v5497, %v5504
      %v5507 = vshrl.u32 %v5444, 16
      %v5509 = vrot.slane %v5507, 7
      %v5510 = vrot.slane %v5509, 4
      %v5512 = vshrl.u32 %v5445, 16
      %v5514 = vrot.slane %v5512, 7
      %v5515 = vshll.u32 %v5445, 16
      %v5517 = vor.u32 %v5514, %v5515
      %v5518 = vsel %vm632, %v5510, %v5517
      %v5519 = vrot.slane %v5514, 4
      %v5521 = vshrl.u32 %v5446, 16
      %v5523 = vrot.slane %v5521, 7
      %v5524 = vshll.u32 %v5446, 16
      %v5526 = vor.u32 %v5523, %v5524
      %v5527 = vsel %vm632, %v5519, %v5526
      %v5529 = vshrl.u32 %v5447, 16
      %v5531 = vrot.slane %v5529, 7
      %v5532 = vrot.slane %v5531, 4
      %v5534 = vshrl.u32 %v5448, 16
      %v5536 = vrot.slane %v5534, 7
      %v5537 = vshll.u32 %v5448, 16
      %v5539 = vor.u32 %v5536, %v5537
      %v5540 = vsel %vm632, %v5532, %v5539
      %v5541 = vrot.slane %v5536, 4
      %v5543 = vshrl.u32 %v5449, 16
      %v5545 = vrot.slane %v5543, 7
      %v5546 = vshll.u32 %v5449, 16
      %v5548 = vor.u32 %v5545, %v5546
      %v5549 = vsel %vm632, %v5541, %v5548
      %v5551 = vshrl.u32 %v5450, 16
      %v5553 = vrot.slane %v5551, 7
      %v5554 = vrot.slane %v5553, 4
      %v5556 = vshrl.u32 %v5451, 16
      %v5558 = vrot.slane %v5556, 7
      %v5559 = vshll.u32 %v5451, 16
      %v5561 = vor.u32 %v5558, %v5559
      %v5562 = vsel %vm632, %v5554, %v5561
      %v5563 = vrot.slane %v5558, 4
      %v5565 = vshrl.u32 %v5452, 16
      %v5567 = vrot.slane %v5565, 7
      %v5568 = vshll.u32 %v5452, 16
      %v5570 = vor.u32 %v5567, %v5568
      %v5571 = vsel %vm632, %v5563, %v5570
      %v5573 = vshrl.u32 %v5453, 16
      %v5575 = vrot.slane %v5573, 7
      %v5576 = vrot.slane %v5575, 4
      %v5578 = vshrl.u32 %v5454, 16
      %v5580 = vrot.slane %v5578, 7
      %v5581 = vshll.u32 %v5454, 16
      %v5583 = vor.u32 %v5580, %v5581
      %v5584 = vsel %vm632, %v5576, %v5583
      %v5585 = vrot.slane %v5580, 4
      %v5587 = vshrl.u32 %v5455, 16
      %v5589 = vrot.slane %v5587, 7
      %v5590 = vshll.u32 %v5455, 16
      %v5592 = vor.u32 %v5589, %v5590
      %v5593 = vsel %vm632, %v5585, %v5592
      %v5595 = vshrl.u32 %v5456, 16
      %v5597 = vrot.slane %v5595, 7
      %v5598 = vrot.slane %v5597, 4
      %v5600 = vshrl.u32 %v5457, 16
      %v5602 = vrot.slane %v5600, 7
      %v5603 = vshll.u32 %v5457, 16
      %v5605 = vor.u32 %v5602, %v5603
      %v5606 = vsel %vm632, %v5598, %v5605
      %v5607 = vrot.slane %v5602, 4
      %v5609 = vshrl.u32 %v5458, 16
      %v5611 = vrot.slane %v5609, 7
      %v5612 = vshll.u32 %v5458, 16
      %v5614 = vor.u32 %v5611, %v5612
      %v5615 = vsel %vm632, %v5607, %v5614
      %v5617 = vshrl.u32 %v5459, 16
      %v5619 = vrot.slane %v5617, 7
      %v5620 = vrot.slane %v5619, 4
      %v5622 = vshrl.u32 %v5460, 16
      %v5624 = vrot.slane %v5622, 7
      %v5625 = vshll.u32 %v5460, 16
      %v5627 = vor.u32 %v5624, %v5625
      %v5628 = vsel %vm632, %v5620, %v5627
      %v5629 = vrot.slane %v5624, 4
      %v5631 = vshrl.u32 %v5461, 16
      %v5633 = vrot.slane %v5631, 7
      %v5634 = vshll.u32 %v5461, 16
      %v5636 = vor.u32 %v5633, %v5634
      %v5637 = vsel %vm632, %v5629, %v5636
      %v5638 = vld [vmem:[%s4] sm:$0x3]
      %s5639 = scalar_lea.vmem %s4, 2
      %v5640 = vld [vmem:[%s5639] sm:$0x3]
      %v5657 = vunpack.c.l.b16 %v5439
      %v5658 = vunpack.c.l.b16 %v5440
      %v5659 = vunpack.c.l.b16 %v5442
      %v5660 = vunpack.c.l.b16 %v5443
      %v5661 = vunpack.c.l.b16 %v5445
      %v5662 = vunpack.c.l.b16 %v5446
      %v5663 = vunpack.c.l.b16 %v5448
      %v5664 = vunpack.c.l.b16 %v5449
      %v5665 = vunpack.c.l.b16 %v5451
      %v5666 = vunpack.c.l.b16 %v5452
      %v5667 = vunpack.c.l.b16 %v5454
      %v5668 = vunpack.c.l.b16 %v5455
      %v5669 = vunpack.c.l.b16 %v5457
      %v5670 = vunpack.c.l.b16 %v5458
      %v5671 = vunpack.c.l.b16 %v5460
      %v5672 = vunpack.c.l.b16 %v5461
      %v5673 = vpack.c.b16 %v5658, %v5657
      %v5674 = vpack.c.b16 %v5660, %v5659
      %v5675 = vpack.c.b16 %v5662, %v5661
      %v5676 = vpack.c.b16 %v5664, %v5663
      %v5677 = vpack.c.b16 %v5666, %v5665
      %v5678 = vpack.c.b16 %v5668, %v5667
      %v5679 = vpack.c.b16 %v5670, %v5669
      %v5680 = vpack.c.b16 %v5672, %v5671
      %vm5681 = vcmask 31744
      %v5683 = vsel %vm5681, %v5673, 0
      %v5686 = vsel %vm5681, %v5674, 0
      %v5689 = vsel %vm5681, %v5675, 0
      %v5692 = vsel %vm5681, %v5676, 0
      %v5695 = vsel %vm5681, %v5677, 0
      %v5698 = vsel %vm5681, %v5678, 0
      %v5701 = vsel %vm5681, %v5679, 0
      %v5704 = vsel %vm5681, %v5680, 0
      %vm5706 = vcmask 1041408
      %v5708 = vsel %vm5706, %v5640, 0
      %5710 = vmatpush.bf16.msra.mxu0 0
      %5711 = vmatpush.bf16.msra.mxu0 0
      %5712 = vmatpush.bf16.msra.mxu0 0
      %5713 = vmatpush.bf16.msra.mxu0 0
      %5714 = vmatpush.bf16.msra.mxu0 0
      %5715 = vmatpush.bf16.msra.mxu0 0
      %5716 = vmatpush.bf16.msra.mxu0 0
      %5717 = vmatpush.bf16.msra.mxu0 %v5708
      %5718 = vmatmul.bf16.gmra.mxu0 %v5683
      %v5719 = vpop.f32.mrf.mxu0
      %v5720 = vadd.f32 0.0, %v5719
      %v5721 = vpop.f32.mrf.mxu0
      %v5722 = vadd.f32 0.0, %v5721
      %5723 = vmatmul.bf16.gmra.mxu0 %v5686
      %v5724 = vpop.f32.mrf.mxu0
      %v5725 = vadd.f32 0.0, %v5724
      %v5726 = vpop.f32.mrf.mxu0
      %v5727 = vadd.f32 0.0, %v5726
      %5728 = vmatmul.bf16.gmra.mxu0 %v5689
      %v5729 = vpop.f32.mrf.mxu0
      %v5730 = vadd.f32 0.0, %v5729
      %v5731 = vpop.f32.mrf.mxu0
      %v5732 = vadd.f32 0.0, %v5731
      %5733 = vmatmul.bf16.gmra.mxu0 %v5692
      %v5734 = vpop.f32.mrf.mxu0
      %v5735 = vadd.f32 0.0, %v5734
      %v5736 = vpop.f32.mrf.mxu0
      %v5737 = vadd.f32 0.0, %v5736
      %5738 = vmatmul.bf16.gmra.mxu0 %v5695
      %v5739 = vpop.f32.mrf.mxu0
      %v5740 = vadd.f32 0.0, %v5739
      %v5741 = vpop.f32.mrf.mxu0
      %v5742 = vadd.f32 0.0, %v5741
      %5743 = vmatmul.bf16.gmra.mxu0 %v5698
      %v5744 = vpop.f32.mrf.mxu0
      %v5745 = vadd.f32 0.0, %v5744
      %v5746 = vpop.f32.mrf.mxu0
      %v5747 = vadd.f32 0.0, %v5746
      %5748 = vmatmul.bf16.gmra.mxu0 %v5701
      %v5749 = vpop.f32.mrf.mxu0
      %v5750 = vadd.f32 0.0, %v5749
      %v5751 = vpop.f32.mrf.mxu0
      %v5752 = vadd.f32 0.0, %v5751
      %5753 = vmatmul.bf16.gmra.mxu0 %v5704
      %v5754 = vpop.f32.mrf.mxu0
      %v5755 = vadd.f32 0.0, %v5754
      %v5756 = vpop.f32.mrf.mxu0
      %v5757 = vadd.f32 0.0, %v5756
      %5758 = vdwg.mxu0
      %v5759 = vunpack.c.l.b16 %v5474
      %v5760 = vunpack.c.l.b16 %v5483
      %v5761 = vunpack.c.l.b16 %v5496
      %v5762 = vunpack.c.l.b16 %v5505
      %v5763 = vunpack.c.l.b16 %v5518
      %v5764 = vunpack.c.l.b16 %v5527
      %v5765 = vunpack.c.l.b16 %v5540
      %v5766 = vunpack.c.l.b16 %v5549
      %v5767 = vunpack.c.l.b16 %v5562
      %v5768 = vunpack.c.l.b16 %v5571
      %v5769 = vunpack.c.l.b16 %v5584
      %v5770 = vunpack.c.l.b16 %v5593
      %v5771 = vunpack.c.l.b16 %v5606
      %v5772 = vunpack.c.l.b16 %v5615
      %v5773 = vunpack.c.l.b16 %v5628
      %v5774 = vunpack.c.l.b16 %v5637
      %v5775 = vpack.c.b16 %v5760, %v5759
      %v5776 = vpack.c.b16 %v5762, %v5761
      %v5777 = vpack.c.b16 %v5764, %v5763
      %v5778 = vpack.c.b16 %v5766, %v5765
      %v5779 = vpack.c.b16 %v5768, %v5767
      %v5780 = vpack.c.b16 %v5770, %v5769
      %v5781 = vpack.c.b16 %v5772, %v5771
      %v5782 = vpack.c.b16 %v5774, %v5773
      %v5784 = vsel %vm5681, %v5775, 0
      %v5787 = vsel %vm5681, %v5776, 0
      %v5790 = vsel %vm5681, %v5777, 0
      %v5793 = vsel %vm5681, %v5778, 0
      %v5796 = vsel %vm5681, %v5779, 0
      %v5799 = vsel %vm5681, %v5780, 0
      %v5802 = vsel %vm5681, %v5781, 0
      %v5805 = vsel %vm5681, %v5782, 0
      %v5808 = vsel %vm5706, %v5638, 0
      %5810 = vmatpush.bf16.msra.mxu0 0
      %5811 = vmatpush.bf16.msra.mxu0 0
      %5812 = vmatpush.bf16.msra.mxu0 0
      %5813 = vmatpush.bf16.msra.mxu0 0
      %5814 = vmatpush.bf16.msra.mxu0 0
      %5815 = vmatpush.bf16.msra.mxu0 0
      %5816 = vmatpush.bf16.msra.mxu0 0
      %5817 = vmatpush.bf16.msra.mxu0 %v5808
      %5818 = vmatmul.bf16.gmra.mxu0 %v5784
      %v5819 = vpop.f32.mrf.mxu0
      %v5820 = vadd.f32 %v5720, %v5819
      %v5821 = vpop.f32.mrf.mxu0
      %v5822 = vadd.f32 %v5722, %v5821
      %5823 = vmatmul.bf16.gmra.mxu0 %v5787
      %v5824 = vpop.f32.mrf.mxu0
      %v5825 = vadd.f32 %v5725, %v5824
      %v5826 = vpop.f32.mrf.mxu0
      %v5827 = vadd.f32 %v5727, %v5826
      %5828 = vmatmul.bf16.gmra.mxu0 %v5790
      %v5829 = vpop.f32.mrf.mxu0
      %v5830 = vadd.f32 %v5730, %v5829
      %v5831 = vpop.f32.mrf.mxu0
      %v5832 = vadd.f32 %v5732, %v5831
      %5833 = vmatmul.bf16.gmra.mxu0 %v5793
      %v5834 = vpop.f32.mrf.mxu0
      %v5835 = vadd.f32 %v5735, %v5834
      %v5836 = vpop.f32.mrf.mxu0
      %v5837 = vadd.f32 %v5737, %v5836
      %5838 = vmatmul.bf16.gmra.mxu0 %v5796
      %v5839 = vpop.f32.mrf.mxu0
      %v5840 = vadd.f32 %v5740, %v5839
      %v5841 = vpop.f32.mrf.mxu0
      %v5842 = vadd.f32 %v5742, %v5841
      %5843 = vmatmul.bf16.gmra.mxu0 %v5799
      %v5844 = vpop.f32.mrf.mxu0
      %v5845 = vadd.f32 %v5745, %v5844
      %v5846 = vpop.f32.mrf.mxu0
      %v5847 = vadd.f32 %v5747, %v5846
      %5848 = vmatmul.bf16.gmra.mxu0 %v5802
      %v5849 = vpop.f32.mrf.mxu0
      %v5850 = vadd.f32 %v5750, %v5849
      %v5851 = vpop.f32.mrf.mxu0
      %v5852 = vadd.f32 %v5752, %v5851
      %5853 = vmatmul.bf16.gmra.mxu0 %v5805
      %v5854 = vpop.f32.mrf.mxu0
      %v5855 = vadd.f32 %v5755, %v5854
      %v5856 = vpop.f32.mrf.mxu0
      %v5857 = vadd.f32 %v5757, %v5856
      %5858 = vdwg.mxu0
      %v5859 = vld [vmem:[#allocation3 + $0x8] sm:$0xf]
      %v5860 = vld [vmem:[#allocation3 + $0xc] sm:$0xf]
      %v5861 = vld [vmem:[#allocation3 + $0x10] sm:$0x1]
      %v5862 = vld [vmem:[#allocation3 + $0x1c] sm:$0xf]
      %v5863 = vld [vmem:[#allocation3 + $0x20] sm:$0xf]
      %v5864 = vld [vmem:[#allocation3 + $0x24] sm:$0x1]
      %v5865 = vld [vmem:[#allocation3 + $0x30] sm:$0xf]
      %v5866 = vld [vmem:[#allocation3 + $0x34] sm:$0xf]
      %v5867 = vld [vmem:[#allocation3 + $0x38] sm:$0x1]
      %v5868 = vld [vmem:[#allocation3 + $0x44] sm:$0xf]
      %v5869 = vld [vmem:[#allocation3 + $0x48] sm:$0xf]
      %v5870 = vld [vmem:[#allocation3 + $0x4c] sm:$0x1]
      %v5871 = vld [vmem:[#allocation3 + $0x58] sm:$0xf]
      %v5872 = vld [vmem:[#allocation3 + $0x5c] sm:$0xf]
      %v5873 = vld [vmem:[#allocation3 + $0x60] sm:$0x1]
      %v5874 = vld [vmem:[#allocation3 + $0x6c] sm:$0xf]
      %v5875 = vld [vmem:[#allocation3 + $0x70] sm:$0xf]
      %v5876 = vld [vmem:[#allocation3 + $0x74] sm:$0x1]
      %v5877 = vld [vmem:[#allocation3 + $0x80] sm:$0xf]
      %v5878 = vld [vmem:[#allocation3 + $0x84] sm:$0xf]
      %v5879 = vld [vmem:[#allocation3 + $0x88] sm:$0x1]
      %v5880 = vld [vmem:[#allocation3 + $0x94] sm:$0xf]
      %v5881 = vld [vmem:[#allocation3 + $0x98] sm:$0xf]
      %v5882 = vld [vmem:[#allocation3 + $0x9c] sm:$0x1]
      %v5884 = vshrl.u32 %v5859, 16
      %v5886 = vrot.slane %v5884, 4
      %v5887 = vshll.u32 %v5859, 16
      %v5889 = vrot.slane %v5887, 5
      %v5890 = vor.u32 %v5886, %v5889
      %v5891 = vrot.slane %v5890, 4
      %v5893 = vshll.u32 %v5860, 16
      %v5895 = vrot.slane %v5893, 5
      %v5896 = vsel %vm1056, %v5891, %v5895
      %v5897 = vshrl.u32 %v5860, 16
      %v5899 = vrot.slane %v5897, 4
      %v5900 = vor.u32 %v5899, %v5895
      %v5901 = vrot.slane %v5900, 4
      %v5903 = vshll.u32 %v5861, 16
      %v5905 = vrot.slane %v5903, 5
      %v5906 = vsel %vm1056, %v5901, %v5905
      %v5908 = vshrl.u32 %v5862, 16
      %v5910 = vrot.slane %v5908, 4
      %v5911 = vshll.u32 %v5862, 16
      %v5913 = vrot.slane %v5911, 5
      %v5914 = vor.u32 %v5910, %v5913
      %v5915 = vrot.slane %v5914, 4
      %v5917 = vshll.u32 %v5863, 16
      %v5919 = vrot.slane %v5917, 5
      %v5920 = vsel %vm1056, %v5915, %v5919
      %v5921 = vshrl.u32 %v5863, 16
      %v5923 = vrot.slane %v5921, 4
      %v5924 = vor.u32 %v5923, %v5919
      %v5925 = vrot.slane %v5924, 4
      %v5927 = vshll.u32 %v5864, 16
      %v5929 = vrot.slane %v5927, 5
      %v5930 = vsel %vm1056, %v5925, %v5929
      %v5932 = vshrl.u32 %v5865, 16
      %v5934 = vrot.slane %v5932, 4
      %v5935 = vshll.u32 %v5865, 16
      %v5937 = vrot.slane %v5935, 5
      %v5938 = vor.u32 %v5934, %v5937
      %v5939 = vrot.slane %v5938, 4
      %v5941 = vshll.u32 %v5866, 16
      %v5943 = vrot.slane %v5941, 5
      %v5944 = vsel %vm1056, %v5939, %v5943
      %v5945 = vshrl.u32 %v5866, 16
      %v5947 = vrot.slane %v5945, 4
      %v5948 = vor.u32 %v5947, %v5943
      %v5949 = vrot.slane %v5948, 4
      %v5951 = vshll.u32 %v5867, 16
      %v5953 = vrot.slane %v5951, 5
      %v5954 = vsel %vm1056, %v5949, %v5953
      %v5956 = vshrl.u32 %v5868, 16
      %v5958 = vrot.slane %v5956, 4
      %v5959 = vshll.u32 %v5868, 16
      %v5961 = vrot.slane %v5959, 5
      %v5962 = vor.u32 %v5958, %v5961
      %v5963 = vrot.slane %v5962, 4
      %v5965 = vshll.u32 %v5869, 16
      %v5967 = vrot.slane %v5965, 5
      %v5968 = vsel %vm1056, %v5963, %v5967
      %v5969 = vshrl.u32 %v5869, 16
      %v5971 = vrot.slane %v5969, 4
      %v5972 = vor.u32 %v5971, %v5967
      %v5973 = vrot.slane %v5972, 4
      %v5975 = vshll.u32 %v5870, 16
      %v5977 = vrot.slane %v5975, 5
      %v5978 = vsel %vm1056, %v5973, %v5977
      %v5980 = vshrl.u32 %v5871, 16
      %v5982 = vrot.slane %v5980, 4
      %v5983 = vshll.u32 %v5871, 16
      %v5985 = vrot.slane %v5983, 5
      %v5986 = vor.u32 %v5982, %v5985
      %v5987 = vrot.slane %v5986, 4
      %v5989 = vshll.u32 %v5872, 16
      %v5991 = vrot.slane %v5989, 5
      %v5992 = vsel %vm1056, %v5987, %v5991
      %v5993 = vshrl.u32 %v5872, 16
      %v5995 = vrot.slane %v5993, 4
      %v5996 = vor.u32 %v5995, %v5991
      %v5997 = vrot.slane %v5996, 4
      %v5999 = vshll.u32 %v5873, 16
      %v6001 = vrot.slane %v5999, 5
      %v6002 = vsel %vm1056, %v5997, %v6001
      %v6004 = vshrl.u32 %v5874, 16
      %v6006 = vrot.slane %v6004, 4
      %v6007 = vshll.u32 %v5874, 16
      %v6009 = vrot.slane %v6007, 5
      %v6010 = vor.u32 %v6006, %v6009
      %v6011 = vrot.slane %v6010, 4
      %v6013 = vshll.u32 %v5875, 16
      %v6015 = vrot.slane %v6013, 5
      %v6016 = vsel %vm1056, %v6011, %v6015
      %v6017 = vshrl.u32 %v5875, 16
      %v6019 = vrot.slane %v6017, 4
      %v6020 = vor.u32 %v6019, %v6015
      %v6021 = vrot.slane %v6020, 4
      %v6023 = vshll.u32 %v5876, 16
      %v6025 = vrot.slane %v6023, 5
      %v6026 = vsel %vm1056, %v6021, %v6025
      %v6028 = vshrl.u32 %v5877, 16
      %v6030 = vrot.slane %v6028, 4
      %v6031 = vshll.u32 %v5877, 16
      %v6033 = vrot.slane %v6031, 5
      %v6034 = vor.u32 %v6030, %v6033
      %v6035 = vrot.slane %v6034, 4
      %v6037 = vshll.u32 %v5878, 16
      %v6039 = vrot.slane %v6037, 5
      %v6040 = vsel %vm1056, %v6035, %v6039
      %v6041 = vshrl.u32 %v5878, 16
      %v6043 = vrot.slane %v6041, 4
      %v6044 = vor.u32 %v6043, %v6039
      %v6045 = vrot.slane %v6044, 4
      %v6047 = vshll.u32 %v5879, 16
      %v6049 = vrot.slane %v6047, 5
      %v6050 = vsel %vm1056, %v6045, %v6049
      %v6052 = vshrl.u32 %v5880, 16
      %v6054 = vrot.slane %v6052, 4
      %v6055 = vshll.u32 %v5880, 16
      %v6057 = vrot.slane %v6055, 5
      %v6058 = vor.u32 %v6054, %v6057
      %v6059 = vrot.slane %v6058, 4
      %v6061 = vshll.u32 %v5881, 16
      %v6063 = vrot.slane %v6061, 5
      %v6064 = vsel %vm1056, %v6059, %v6063
      %v6065 = vshrl.u32 %v5881, 16
      %v6067 = vrot.slane %v6065, 4
      %v6068 = vor.u32 %v6067, %v6063
      %v6069 = vrot.slane %v6068, 4
      %v6071 = vshll.u32 %v5882, 16
      %v6073 = vrot.slane %v6071, 5
      %v6074 = vsel %vm1056, %v6069, %v6073
      %s6075 = scalar_lea.vmem %s4, 4
      %v6076 = vld [vmem:[%s6075] sm:$0x3]
      %v6077 = vunpack.c.l.b16 %v5896
      %v6078 = vunpack.c.l.b16 %v5906
      %v6079 = vunpack.c.l.b16 %v5920
      %v6080 = vunpack.c.l.b16 %v5930
      %v6081 = vunpack.c.l.b16 %v5944
      %v6082 = vunpack.c.l.b16 %v5954
      %v6083 = vunpack.c.l.b16 %v5968
      %v6084 = vunpack.c.l.b16 %v5978
      %v6085 = vunpack.c.l.b16 %v5992
      %v6086 = vunpack.c.l.b16 %v6002
      %v6087 = vunpack.c.l.b16 %v6016
      %v6088 = vunpack.c.l.b16 %v6026
      %v6089 = vunpack.c.l.b16 %v6040
      %v6090 = vunpack.c.l.b16 %v6050
      %v6091 = vunpack.c.l.b16 %v6064
      %v6092 = vunpack.c.l.b16 %v6074
      %v6093 = vpack.c.b16 %v6078, %v6077
      %v6094 = vpack.c.b16 %v6080, %v6079
      %v6095 = vpack.c.b16 %v6082, %v6081
      %v6096 = vpack.c.b16 %v6084, %v6083
      %v6097 = vpack.c.b16 %v6086, %v6085
      %v6098 = vpack.c.b16 %v6088, %v6087
      %v6099 = vpack.c.b16 %v6090, %v6089
      %v6100 = vpack.c.b16 %v6092, %v6091
      %v6102 = vsel %vm5681, %v6093, 0
      %v6105 = vsel %vm5681, %v6094, 0
      %v6108 = vsel %vm5681, %v6095, 0
      %v6111 = vsel %vm5681, %v6096, 0
      %v6114 = vsel %vm5681, %v6097, 0
      %v6117 = vsel %vm5681, %v6098, 0
      %v6120 = vsel %vm5681, %v6099, 0
      %v6123 = vsel %vm5681, %v6100, 0
      %v6126 = vsel %vm5706, %v6076, 0
      %6128 = vmatpush.bf16.msra.mxu0 0
      %6129 = vmatpush.bf16.msra.mxu0 0
      %6130 = vmatpush.bf16.msra.mxu0 0
      %6131 = vmatpush.bf16.msra.mxu0 0
      %6132 = vmatpush.bf16.msra.mxu0 0
      %6133 = vmatpush.bf16.msra.mxu0 0
      %6134 = vmatpush.bf16.msra.mxu0 0
      %6135 = vmatpush.bf16.msra.mxu0 %v6126
      %6136 = vmatmul.bf16.gmra.mxu0 %v6102
      %v6137 = vpop.f32.mrf.mxu0
      %v6138 = vadd.f32 0.0, %v6137
      %v6139 = vpop.f32.mrf.mxu0
      %v6140 = vadd.f32 0.0, %v6139
      %6141 = vmatmul.bf16.gmra.mxu0 %v6105
      %v6142 = vpop.f32.mrf.mxu0
      %v6143 = vadd.f32 0.0, %v6142
      %v6144 = vpop.f32.mrf.mxu0
      %v6145 = vadd.f32 0.0, %v6144
      %6146 = vmatmul.bf16.gmra.mxu0 %v6108
      %v6147 = vpop.f32.mrf.mxu0
      %v6148 = vadd.f32 0.0, %v6147
      %v6149 = vpop.f32.mrf.mxu0
      %v6150 = vadd.f32 0.0, %v6149
      %6151 = vmatmul.bf16.gmra.mxu0 %v6111
      %v6152 = vpop.f32.mrf.mxu0
      %v6153 = vadd.f32 0.0, %v6152
      %v6154 = vpop.f32.mrf.mxu0
      %v6155 = vadd.f32 0.0, %v6154
      %6156 = vmatmul.bf16.gmra.mxu0 %v6114
      %v6157 = vpop.f32.mrf.mxu0
      %v6158 = vadd.f32 0.0, %v6157
      %v6159 = vpop.f32.mrf.mxu0
      %v6160 = vadd.f32 0.0, %v6159
      %6161 = vmatmul.bf16.gmra.mxu0 %v6117
      %v6162 = vpop.f32.mrf.mxu0
      %v6163 = vadd.f32 0.0, %v6162
      %v6164 = vpop.f32.mrf.mxu0
      %v6165 = vadd.f32 0.0, %v6164
      %6166 = vmatmul.bf16.gmra.mxu0 %v6120
      %v6167 = vpop.f32.mrf.mxu0
      %v6168 = vadd.f32 0.0, %v6167
      %v6169 = vpop.f32.mrf.mxu0
      %v6170 = vadd.f32 0.0, %v6169
      %6171 = vmatmul.bf16.gmra.mxu0 %v6123
      %v6172 = vpop.f32.mrf.mxu0
      %v6173 = vadd.f32 0.0, %v6172
      %v6174 = vpop.f32.mrf.mxu0
      %v6175 = vadd.f32 0.0, %v6174
      %6176 = vdwg.mxu0
      %v6177 = vadd.f32 %v5820, %v6138
      %v6178 = vadd.f32 %v5822, %v6140
      %v6179 = vadd.f32 %v5825, %v6143
      %v6180 = vadd.f32 %v5827, %v6145
      %v6181 = vadd.f32 %v5830, %v6148
      %v6182 = vadd.f32 %v5832, %v6150
      %v6183 = vadd.f32 %v5835, %v6153
      %v6184 = vadd.f32 %v5837, %v6155
      %v6185 = vadd.f32 %v5840, %v6158
      %v6186 = vadd.f32 %v5842, %v6160
      %v6187 = vadd.f32 %v5845, %v6163
      %v6188 = vadd.f32 %v5847, %v6165
      %v6189 = vadd.f32 %v5850, %v6168
      %v6190 = vadd.f32 %v5852, %v6170
      %v6191 = vadd.f32 %v5855, %v6173
      %v6192 = vadd.f32 %v5857, %v6175
      %v6193 = vld [vmem:[%s3012 + $0x4] sm:$0x8]
      %v6194 = vld [vmem:[%s3012 + $0x8] sm:$0xf]
      %v6195 = vld [vmem:[%s3012 + $0xc] sm:$0xf]
      %v6196 = vld [vmem:[%s3012 + $0x18] sm:$0x8]
      %v6197 = vld [vmem:[%s3012 + $0x1c] sm:$0xf]
      %v6198 = vld [vmem:[%s3012 + $0x20] sm:$0xf]
      %v6199 = vld [vmem:[%s3012 + $0x2c] sm:$0x8]
      %v6200 = vld [vmem:[%s3012 + $0x30] sm:$0xf]
      %v6201 = vld [vmem:[%s3012 + $0x34] sm:$0xf]
      %v6202 = vld [vmem:[%s3012 + $0x40] sm:$0x8]
      %v6203 = vld [vmem:[%s3012 + $0x44] sm:$0xf]
      %v6204 = vld [vmem:[%s3012 + $0x48] sm:$0xf]
      %v6205 = vld [vmem:[%s3012 + $0x54] sm:$0x8]
      %v6206 = vld [vmem:[%s3012 + $0x58] sm:$0xf]
      %v6207 = vld [vmem:[%s3012 + $0x5c] sm:$0xf]
      %v6208 = vld [vmem:[%s3012 + $0x68] sm:$0x8]
      %v6209 = vld [vmem:[%s3012 + $0x6c] sm:$0xf]
      %v6210 = vld [vmem:[%s3012 + $0x70] sm:$0xf]
      %v6211 = vld [vmem:[%s3012 + $0x7c] sm:$0x8]
      %v6212 = vld [vmem:[%s3012 + $0x80] sm:$0xf]
      %v6213 = vld [vmem:[%s3012 + $0x84] sm:$0xf]
      %v6214 = vld [vmem:[%s3012 + $0x90] sm:$0x8]
      %v6215 = vld [vmem:[%s3012 + $0x94] sm:$0xf]
      %v6216 = vld [vmem:[%s3012 + $0x98] sm:$0xf]
      %v6218 = vshrl.u32 %v6193, 16
      %v6220 = vrot.slane %v6218, 7
      %v6221 = vrot.slane %v6220, 4
      %v6223 = vshrl.u32 %v6194, 16
      %v6225 = vrot.slane %v6223, 7
      %v6226 = vshll.u32 %v6194, 16
      %v6228 = vor.u32 %v6225, %v6226
      %v6229 = vsel %vm632, %v6221, %v6228
      %v6230 = vrot.slane %v6225, 4
      %v6232 = vshrl.u32 %v6195, 16
      %v6234 = vrot.slane %v6232, 7
      %v6235 = vshll.u32 %v6195, 16
      %v6237 = vor.u32 %v6234, %v6235
      %v6238 = vsel %vm632, %v6230, %v6237
      %v6240 = vshrl.u32 %v6196, 16
      %v6242 = vrot.slane %v6240, 7
      %v6243 = vrot.slane %v6242, 4
      %v6245 = vshrl.u32 %v6197, 16
      %v6247 = vrot.slane %v6245, 7
      %v6248 = vshll.u32 %v6197, 16
      %v6250 = vor.u32 %v6247, %v6248
      %v6251 = vsel %vm632, %v6243, %v6250
      %v6252 = vrot.slane %v6247, 4
      %v6254 = vshrl.u32 %v6198, 16
      %v6256 = vrot.slane %v6254, 7
      %v6257 = vshll.u32 %v6198, 16
      %v6259 = vor.u32 %v6256, %v6257
      %v6260 = vsel %vm632, %v6252, %v6259
      %v6262 = vshrl.u32 %v6199, 16
      %v6264 = vrot.slane %v6262, 7
      %v6265 = vrot.slane %v6264, 4
      %v6267 = vshrl.u32 %v6200, 16
      %v6269 = vrot.slane %v6267, 7
      %v6270 = vshll.u32 %v6200, 16
      %v6272 = vor.u32 %v6269, %v6270
      %v6273 = vsel %vm632, %v6265, %v6272
      %v6274 = vrot.slane %v6269, 4
      %v6276 = vshrl.u32 %v6201, 16
      %v6278 = vrot.slane %v6276, 7
      %v6279 = vshll.u32 %v6201, 16
      %v6281 = vor.u32 %v6278, %v6279
      %v6282 = vsel %vm632, %v6274, %v6281
      %v6284 = vshrl.u32 %v6202, 16
      %v6286 = vrot.slane %v6284, 7
      %v6287 = vrot.slane %v6286, 4
      %v6289 = vshrl.u32 %v6203, 16
      %v6291 = vrot.slane %v6289, 7
      %v6292 = vshll.u32 %v6203, 16
      %v6294 = vor.u32 %v6291, %v6292
      %v6295 = vsel %vm632, %v6287, %v6294
      %v6296 = vrot.slane %v6291, 4
      %v6298 = vshrl.u32 %v6204, 16
      %v6300 = vrot.slane %v6298, 7
      %v6301 = vshll.u32 %v6204, 16
      %v6303 = vor.u32 %v6300, %v6301
      %v6304 = vsel %vm632, %v6296, %v6303
      %v6306 = vshrl.u32 %v6205, 16
      %v6308 = vrot.slane %v6306, 7
      %v6309 = vrot.slane %v6308, 4
      %v6311 = vshrl.u32 %v6206, 16
      %v6313 = vrot.slane %v6311, 7
      %v6314 = vshll.u32 %v6206, 16
      %v6316 = vor.u32 %v6313, %v6314
      %v6317 = vsel %vm632, %v6309, %v6316
      %v6318 = vrot.slane %v6313, 4
      %v6320 = vshrl.u32 %v6207, 16
      %v6322 = vrot.slane %v6320, 7
      %v6323 = vshll.u32 %v6207, 16
      %v6325 = vor.u32 %v6322, %v6323
      %v6326 = vsel %vm632, %v6318, %v6325
      %v6328 = vshrl.u32 %v6208, 16
      %v6330 = vrot.slane %v6328, 7
      %v6331 = vrot.slane %v6330, 4
      %v6333 = vshrl.u32 %v6209, 16
      %v6335 = vrot.slane %v6333, 7
      %v6336 = vshll.u32 %v6209, 16
      %v6338 = vor.u32 %v6335, %v6336
      %v6339 = vsel %vm632, %v6331, %v6338
      %v6340 = vrot.slane %v6335, 4
      %v6342 = vshrl.u32 %v6210, 16
      %v6344 = vrot.slane %v6342, 7
      %v6345 = vshll.u32 %v6210, 16
      %v6347 = vor.u32 %v6344, %v6345
      %v6348 = vsel %vm632, %v6340, %v6347
      %v6350 = vshrl.u32 %v6211, 16
      %v6352 = vrot.slane %v6350, 7
      %v6353 = vrot.slane %v6352, 4
      %v6355 = vshrl.u32 %v6212, 16
      %v6357 = vrot.slane %v6355, 7
      %v6358 = vshll.u32 %v6212, 16
      %v6360 = vor.u32 %v6357, %v6358
      %v6361 = vsel %vm632, %v6353, %v6360
      %v6362 = vrot.slane %v6357, 4
      %v6364 = vshrl.u32 %v6213, 16
      %v6366 = vrot.slane %v6364, 7
      %v6367 = vshll.u32 %v6213, 16
      %v6369 = vor.u32 %v6366, %v6367
      %v6370 = vsel %vm632, %v6362, %v6369
      %v6372 = vshrl.u32 %v6214, 16
      %v6374 = vrot.slane %v6372, 7
      %v6375 = vrot.slane %v6374, 4
      %v6377 = vshrl.u32 %v6215, 16
      %v6379 = vrot.slane %v6377, 7
      %v6380 = vshll.u32 %v6215, 16
      %v6382 = vor.u32 %v6379, %v6380
      %v6383 = vsel %vm632, %v6375, %v6382
      %v6384 = vrot.slane %v6379, 4
      %v6386 = vshrl.u32 %v6216, 16
      %v6388 = vrot.slane %v6386, 7
      %v6389 = vshll.u32 %v6216, 16
      %v6391 = vor.u32 %v6388, %v6389
      %v6392 = vsel %vm632, %v6384, %v6391
      %s6393 = scalar_lea.vmem %s4, 6
      %v6394 = vld [vmem:[%s6393] sm:$0x3]
      %v6395 = vunpack.c.l.b16 %v6229
      %v6396 = vunpack.c.l.b16 %v6238
      %v6397 = vunpack.c.l.b16 %v6251
      %v6398 = vunpack.c.l.b16 %v6260
      %v6399 = vunpack.c.l.b16 %v6273
      %v6400 = vunpack.c.l.b16 %v6282
      %v6401 = vunpack.c.l.b16 %v6295
      %v6402 = vunpack.c.l.b16 %v6304
      %v6403 = vunpack.c.l.b16 %v6317
      %v6404 = vunpack.c.l.b16 %v6326
      %v6405 = vunpack.c.l.b16 %v6339
      %v6406 = vunpack.c.l.b16 %v6348
      %v6407 = vunpack.c.l.b16 %v6361
      %v6408 = vunpack.c.l.b16 %v6370
      %v6409 = vunpack.c.l.b16 %v6383
      %v6410 = vunpack.c.l.b16 %v6392
      %v6411 = vpack.c.b16 %v6396, %v6395
      %v6412 = vpack.c.b16 %v6398, %v6397
      %v6413 = vpack.c.b16 %v6400, %v6399
      %v6414 = vpack.c.b16 %v6402, %v6401
      %v6415 = vpack.c.b16 %v6404, %v6403
      %v6416 = vpack.c.b16 %v6406, %v6405
      %v6417 = vpack.c.b16 %v6408, %v6407
      %v6418 = vpack.c.b16 %v6410, %v6409
      %v6420 = vsel %vm5681, %v6411, 0
      %v6423 = vsel %vm5681, %v6412, 0
      %v6426 = vsel %vm5681, %v6413, 0
      %v6429 = vsel %vm5681, %v6414, 0
      %v6432 = vsel %vm5681, %v6415, 0
      %v6435 = vsel %vm5681, %v6416, 0
      %v6438 = vsel %vm5681, %v6417, 0
      %v6441 = vsel %vm5681, %v6418, 0
      %v6444 = vsel %vm5706, %v6394, 0
      %6446 = vmatpush.bf16.msra.mxu0 0
      %6447 = vmatpush.bf16.msra.mxu0 0
      %6448 = vmatpush.bf16.msra.mxu0 0
      %6449 = vmatpush.bf16.msra.mxu0 0
      %6450 = vmatpush.bf16.msra.mxu0 0
      %6451 = vmatpush.bf16.msra.mxu0 0
      %6452 = vmatpush.bf16.msra.mxu0 0
      %6453 = vmatpush.bf16.msra.mxu0 %v6444
      %6454 = vmatmul.bf16.gmra.mxu0 %v6420
      %v6455 = vpop.f32.mrf.mxu0
      %v6456 = vadd.f32 0.0, %v6455
      %v6457 = vpop.f32.mrf.mxu0
      %v6458 = vadd.f32 0.0, %v6457
      %6459 = vmatmul.bf16.gmra.mxu0 %v6423
      %v6460 = vpop.f32.mrf.mxu0
      %v6461 = vadd.f32 0.0, %v6460
      %v6462 = vpop.f32.mrf.mxu0
      %v6463 = vadd.f32 0.0, %v6462
      %6464 = vmatmul.bf16.gmra.mxu0 %v6426
      %v6465 = vpop.f32.mrf.mxu0
      %v6466 = vadd.f32 0.0, %v6465
      %v6467 = vpop.f32.mrf.mxu0
      %v6468 = vadd.f32 0.0, %v6467
      %6469 = vmatmul.bf16.gmra.mxu0 %v6429
      %v6470 = vpop.f32.mrf.mxu0
      %v6471 = vadd.f32 0.0, %v6470
      %v6472 = vpop.f32.mrf.mxu0
      %v6473 = vadd.f32 0.0, %v6472
      %6474 = vmatmul.bf16.gmra.mxu0 %v6432
      %v6475 = vpop.f32.mrf.mxu0
      %v6476 = vadd.f32 0.0, %v6475
      %v6477 = vpop.f32.mrf.mxu0
      %v6478 = vadd.f32 0.0, %v6477
      %6479 = vmatmul.bf16.gmra.mxu0 %v6435
      %v6480 = vpop.f32.mrf.mxu0
      %v6481 = vadd.f32 0.0, %v6480
      %v6482 = vpop.f32.mrf.mxu0
      %v6483 = vadd.f32 0.0, %v6482
      %6484 = vmatmul.bf16.gmra.mxu0 %v6438
      %v6485 = vpop.f32.mrf.mxu0
      %v6486 = vadd.f32 0.0, %v6485
      %v6487 = vpop.f32.mrf.mxu0
      %v6488 = vadd.f32 0.0, %v6487
      %6489 = vmatmul.bf16.gmra.mxu0 %v6441
      %v6490 = vpop.f32.mrf.mxu0
      %v6491 = vadd.f32 0.0, %v6490
      %v6492 = vpop.f32.mrf.mxu0
      %v6493 = vadd.f32 0.0, %v6492
      %6494 = vdwg.mxu0
      %v6495 = vadd.f32 %v6177, %v6456
      %v6496 = vadd.f32 %v6178, %v6458
      %v6497 = vadd.f32 %v6179, %v6461
      %v6498 = vadd.f32 %v6180, %v6463
      %v6499 = vadd.f32 %v6181, %v6466
      %v6500 = vadd.f32 %v6182, %v6468
      %v6501 = vadd.f32 %v6183, %v6471
      %v6502 = vadd.f32 %v6184, %v6473
      %v6503 = vadd.f32 %v6185, %v6476
      %v6504 = vadd.f32 %v6186, %v6478
      %v6505 = vadd.f32 %v6187, %v6481
      %v6506 = vadd.f32 %v6188, %v6483
      %v6507 = vadd.f32 %v6189, %v6486
      %v6508 = vadd.f32 %v6190, %v6488
      %v6509 = vadd.f32 %v6191, %v6491
      %v6510 = vadd.f32 %v6192, %v6493
      %s6511 = scalar_lea.vmem %s4, 8
      %v6512 = vld [vmem:[%s6511] sm:$0x3]
      %v6529 = vunpack.c.l.b16 %v6194
      %v6530 = vunpack.c.l.b16 %v6195
      %v6531 = vunpack.c.l.b16 %v6197
      %v6532 = vunpack.c.l.b16 %v6198
      %v6533 = vunpack.c.l.b16 %v6200
      %v6534 = vunpack.c.l.b16 %v6201
      %v6535 = vunpack.c.l.b16 %v6203
      %v6536 = vunpack.c.l.b16 %v6204
      %v6537 = vunpack.c.l.b16 %v6206
      %v6538 = vunpack.c.l.b16 %v6207
      %v6539 = vunpack.c.l.b16 %v6209
      %v6540 = vunpack.c.l.b16 %v6210
      %v6541 = vunpack.c.l.b16 %v6212
      %v6542 = vunpack.c.l.b16 %v6213
      %v6543 = vunpack.c.l.b16 %v6215
      %v6544 = vunpack.c.l.b16 %v6216
      %v6545 = vpack.c.b16 %v6530, %v6529
      %v6546 = vpack.c.b16 %v6532, %v6531
      %v6547 = vpack.c.b16 %v6534, %v6533
      %v6548 = vpack.c.b16 %v6536, %v6535
      %v6549 = vpack.c.b16 %v6538, %v6537
      %v6550 = vpack.c.b16 %v6540, %v6539
      %v6551 = vpack.c.b16 %v6542, %v6541
      %v6552 = vpack.c.b16 %v6544, %v6543
      %v6554 = vsel %vm5681, %v6545, 0
      %v6557 = vsel %vm5681, %v6546, 0
      %v6560 = vsel %vm5681, %v6547, 0
      %v6563 = vsel %vm5681, %v6548, 0
      %v6566 = vsel %vm5681, %v6549, 0
      %v6569 = vsel %vm5681, %v6550, 0
      %v6572 = vsel %vm5681, %v6551, 0
      %v6575 = vsel %vm5681, %v6552, 0
      %v6578 = vsel %vm5706, %v6512, 0
      %6580 = vmatpush.bf16.msra.mxu0 0
      %6581 = vmatpush.bf16.msra.mxu0 0
      %6582 = vmatpush.bf16.msra.mxu0 0
      %6583 = vmatpush.bf16.msra.mxu0 0
      %6584 = vmatpush.bf16.msra.mxu0 0
      %6585 = vmatpush.bf16.msra.mxu0 0
      %6586 = vmatpush.bf16.msra.mxu0 0
      %6587 = vmatpush.bf16.msra.mxu0 %v6578
      %6588 = vmatmul.bf16.gmra.mxu0 %v6554
      %v6589 = vpop.f32.mrf.mxu0
      %v6590 = vadd.f32 0.0, %v6589
      %v6591 = vpop.f32.mrf.mxu0
      %v6592 = vadd.f32 0.0, %v6591
      %6593 = vmatmul.bf16.gmra.mxu0 %v6557
      %v6594 = vpop.f32.mrf.mxu0
      %v6595 = vadd.f32 0.0, %v6594
      %v6596 = vpop.f32.mrf.mxu0
      %v6597 = vadd.f32 0.0, %v6596
      %6598 = vmatmul.bf16.gmra.mxu0 %v6560
      %v6599 = vpop.f32.mrf.mxu0
      %v6600 = vadd.f32 0.0, %v6599
      %v6601 = vpop.f32.mrf.mxu0
      %v6602 = vadd.f32 0.0, %v6601
      %6603 = vmatmul.bf16.gmra.mxu0 %v6563
      %v6604 = vpop.f32.mrf.mxu0
      %v6605 = vadd.f32 0.0, %v6604
      %v6606 = vpop.f32.mrf.mxu0
      %v6607 = vadd.f32 0.0, %v6606
      %6608 = vmatmul.bf16.gmra.mxu0 %v6566
      %v6609 = vpop.f32.mrf.mxu0
      %v6610 = vadd.f32 0.0, %v6609
      %v6611 = vpop.f32.mrf.mxu0
      %v6612 = vadd.f32 0.0, %v6611
      %6613 = vmatmul.bf16.gmra.mxu0 %v6569
      %v6614 = vpop.f32.mrf.mxu0
      %v6615 = vadd.f32 0.0, %v6614
      %v6616 = vpop.f32.mrf.mxu0
      %v6617 = vadd.f32 0.0, %v6616
      %6618 = vmatmul.bf16.gmra.mxu0 %v6572
      %v6619 = vpop.f32.mrf.mxu0
      %v6620 = vadd.f32 0.0, %v6619
      %v6621 = vpop.f32.mrf.mxu0
      %v6622 = vadd.f32 0.0, %v6621
      %6623 = vmatmul.bf16.gmra.mxu0 %v6575
      %v6624 = vpop.f32.mrf.mxu0
      %v6625 = vadd.f32 0.0, %v6624
      %v6626 = vpop.f32.mrf.mxu0
      %v6627 = vadd.f32 0.0, %v6626
      %6628 = vdwg.mxu0
      %v6629 = vadd.f32 %v6495, %v6590
      %v6630 = vadd.f32 %v6496, %v6592
      %v6631 = vadd.f32 %v6497, %v6595
      %v6632 = vadd.f32 %v6498, %v6597
      %v6633 = vadd.f32 %v6499, %v6600
      %v6634 = vadd.f32 %v6500, %v6602
      %v6635 = vadd.f32 %v6501, %v6605
      %v6636 = vadd.f32 %v6502, %v6607
      %v6637 = vadd.f32 %v6503, %v6610
      %v6638 = vadd.f32 %v6504, %v6612
      %v6639 = vadd.f32 %v6505, %v6615
      %v6640 = vadd.f32 %v6506, %v6617
      %v6641 = vadd.f32 %v6507, %v6620
      %v6642 = vadd.f32 %v6508, %v6622
      %v6643 = vadd.f32 %v6509, %v6625
      %v6644 = vadd.f32 %v6510, %v6627
      %v6645 = vld [vmem:[%s3012 + $0x8] sm:$0xf]
      %v6646 = vld [vmem:[%s3012 + $0xc] sm:$0xf]
      %v6647 = vld [vmem:[%s3012 + $0x10] sm:$0x1]
      %v6648 = vld [vmem:[%s3012 + $0x1c] sm:$0xf]
      %v6649 = vld [vmem:[%s3012 + $0x20] sm:$0xf]
      %v6650 = vld [vmem:[%s3012 + $0x24] sm:$0x1]
      %v6651 = vld [vmem:[%s3012 + $0x30] sm:$0xf]
      %v6652 = vld [vmem:[%s3012 + $0x34] sm:$0xf]
      %v6653 = vld [vmem:[%s3012 + $0x38] sm:$0x1]
      %v6654 = vld [vmem:[%s3012 + $0x44] sm:$0xf]
      %v6655 = vld [vmem:[%s3012 + $0x48] sm:$0xf]
      %v6656 = vld [vmem:[%s3012 + $0x4c] sm:$0x1]
      %v6657 = vld [vmem:[%s3012 + $0x58] sm:$0xf]
      %v6658 = vld [vmem:[%s3012 + $0x5c] sm:$0xf]
      %v6659 = vld [vmem:[%s3012 + $0x60] sm:$0x1]
      %v6660 = vld [vmem:[%s3012 + $0x6c] sm:$0xf]
      %v6661 = vld [vmem:[%s3012 + $0x70] sm:$0xf]
      %v6662 = vld [vmem:[%s3012 + $0x74] sm:$0x1]
      %v6663 = vld [vmem:[%s3012 + $0x80] sm:$0xf]
      %v6664 = vld [vmem:[%s3012 + $0x84] sm:$0xf]
      %v6665 = vld [vmem:[%s3012 + $0x88] sm:$0x1]
      %v6666 = vld [vmem:[%s3012 + $0x94] sm:$0xf]
      %v6667 = vld [vmem:[%s3012 + $0x98] sm:$0xf]
      %v6668 = vld [vmem:[%s3012 + $0x9c] sm:$0x1]
      %v6670 = vshrl.u32 %v6645, 16
      %v6672 = vrot.slane %v6670, 4
      %v6673 = vshll.u32 %v6645, 16
      %v6675 = vrot.slane %v6673, 5
      %v6676 = vor.u32 %v6672, %v6675
      %v6677 = vrot.slane %v6676, 4
      %v6679 = vshll.u32 %v6646, 16
      %v6681 = vrot.slane %v6679, 5
      %v6682 = vsel %vm1056, %v6677, %v6681
      %v6683 = vshrl.u32 %v6646, 16
      %v6685 = vrot.slane %v6683, 4
      %v6686 = vor.u32 %v6685, %v6681
      %v6687 = vrot.slane %v6686, 4
      %v6689 = vshll.u32 %v6647, 16
      %v6691 = vrot.slane %v6689, 5
      %v6692 = vsel %vm1056, %v6687, %v6691
      %v6694 = vshrl.u32 %v6648, 16
      %v6696 = vrot.slane %v6694, 4
      %v6697 = vshll.u32 %v6648, 16
      %v6699 = vrot.slane %v6697, 5
      %v6700 = vor.u32 %v6696, %v6699
      %v6701 = vrot.slane %v6700, 4
      %v6703 = vshll.u32 %v6649, 16
      %v6705 = vrot.slane %v6703, 5
      %v6706 = vsel %vm1056, %v6701, %v6705
      %v6707 = vshrl.u32 %v6649, 16
      %v6709 = vrot.slane %v6707, 4
      %v6710 = vor.u32 %v6709, %v6705
      %v6711 = vrot.slane %v6710, 4
      %v6713 = vshll.u32 %v6650, 16
      %v6715 = vrot.slane %v6713, 5
      %v6716 = vsel %vm1056, %v6711, %v6715
      %v6718 = vshrl.u32 %v6651, 16
      %v6720 = vrot.slane %v6718, 4
      %v6721 = vshll.u32 %v6651, 16
      %v6723 = vrot.slane %v6721, 5
      %v6724 = vor.u32 %v6720, %v6723
      %v6725 = vrot.slane %v6724, 4
      %v6727 = vshll.u32 %v6652, 16
      %v6729 = vrot.slane %v6727, 5
      %v6730 = vsel %vm1056, %v6725, %v6729
      %v6731 = vshrl.u32 %v6652, 16
      %v6733 = vrot.slane %v6731, 4
      %v6734 = vor.u32 %v6733, %v6729
      %v6735 = vrot.slane %v6734, 4
      %v6737 = vshll.u32 %v6653, 16
      %v6739 = vrot.slane %v6737, 5
      %v6740 = vsel %vm1056, %v6735, %v6739
      %v6742 = vshrl.u32 %v6654, 16
      %v6744 = vrot.slane %v6742, 4
      %v6745 = vshll.u32 %v6654, 16
      %v6747 = vrot.slane %v6745, 5
      %v6748 = vor.u32 %v6744, %v6747
      %v6749 = vrot.slane %v6748, 4
      %v6751 = vshll.u32 %v6655, 16
      %v6753 = vrot.slane %v6751, 5
      %v6754 = vsel %vm1056, %v6749, %v6753
      %v6755 = vshrl.u32 %v6655, 16
      %v6757 = vrot.slane %v6755, 4
      %v6758 = vor.u32 %v6757, %v6753
      %v6759 = vrot.slane %v6758, 4
      %v6761 = vshll.u32 %v6656, 16
      %v6763 = vrot.slane %v6761, 5
      %v6764 = vsel %vm1056, %v6759, %v6763
      %v6766 = vshrl.u32 %v6657, 16
      %v6768 = vrot.slane %v6766, 4
      %v6769 = vshll.u32 %v6657, 16
      %v6771 = vrot.slane %v6769, 5
      %v6772 = vor.u32 %v6768, %v6771
      %v6773 = vrot.slane %v6772, 4
      %v6775 = vshll.u32 %v6658, 16
      %v6777 = vrot.slane %v6775, 5
      %v6778 = vsel %vm1056, %v6773, %v6777
      %v6779 = vshrl.u32 %v6658, 16
      %v6781 = vrot.slane %v6779, 4
      %v6782 = vor.u32 %v6781, %v6777
      %v6783 = vrot.slane %v6782, 4
      %v6785 = vshll.u32 %v6659, 16
      %v6787 = vrot.slane %v6785, 5
      %v6788 = vsel %vm1056, %v6783, %v6787
      %v6790 = vshrl.u32 %v6660, 16
      %v6792 = vrot.slane %v6790, 4
      %v6793 = vshll.u32 %v6660, 16
      %v6795 = vrot.slane %v6793, 5
      %v6796 = vor.u32 %v6792, %v6795
      %v6797 = vrot.slane %v6796, 4
      %v6799 = vshll.u32 %v6661, 16
      %v6801 = vrot.slane %v6799, 5
      %v6802 = vsel %vm1056, %v6797, %v6801
      %v6803 = vshrl.u32 %v6661, 16
      %v6805 = vrot.slane %v6803, 4
      %v6806 = vor.u32 %v6805, %v6801
      %v6807 = vrot.slane %v6806, 4
      %v6809 = vshll.u32 %v6662, 16
      %v6811 = vrot.slane %v6809, 5
      %v6812 = vsel %vm1056, %v6807, %v6811
      %v6814 = vshrl.u32 %v6663, 16
      %v6816 = vrot.slane %v6814, 4
      %v6817 = vshll.u32 %v6663, 16
      %v6819 = vrot.slane %v6817, 5
      %v6820 = vor.u32 %v6816, %v6819
      %v6821 = vrot.slane %v6820, 4
      %v6823 = vshll.u32 %v6664, 16
      %v6825 = vrot.slane %v6823, 5
      %v6826 = vsel %vm1056, %v6821, %v6825
      %v6827 = vshrl.u32 %v6664, 16
      %v6829 = vrot.slane %v6827, 4
      %v6830 = vor.u32 %v6829, %v6825
      %v6831 = vrot.slane %v6830, 4
      %v6833 = vshll.u32 %v6665, 16
      %v6835 = vrot.slane %v6833, 5
      %v6836 = vsel %vm1056, %v6831, %v6835
      %v6838 = vshrl.u32 %v6666, 16
      %v6840 = vrot.slane %v6838, 4
      %v6841 = vshll.u32 %v6666, 16
      %v6843 = vrot.slane %v6841, 5
      %v6844 = vor.u32 %v6840, %v6843
      %v6845 = vrot.slane %v6844, 4
      %v6847 = vshll.u32 %v6667, 16
      %v6849 = vrot.slane %v6847, 5
      %v6850 = vsel %vm1056, %v6845, %v6849
      %v6851 = vshrl.u32 %v6667, 16
      %v6853 = vrot.slane %v6851, 4
      %v6854 = vor.u32 %v6853, %v6849
      %v6855 = vrot.slane %v6854, 4
      %v6857 = vshll.u32 %v6668, 16
      %v6859 = vrot.slane %v6857, 5
      %v6860 = vsel %vm1056, %v6855, %v6859
      %s6861 = scalar_lea.vmem %s4, 10
      %v6862 = vld [vmem:[%s6861] sm:$0x3]
      %v6863 = vunpack.c.l.b16 %v6682
      %v6864 = vunpack.c.l.b16 %v6692
      %v6865 = vunpack.c.l.b16 %v6706
      %v6866 = vunpack.c.l.b16 %v6716
      %v6867 = vunpack.c.l.b16 %v6730
      %v6868 = vunpack.c.l.b16 %v6740
      %v6869 = vunpack.c.l.b16 %v6754
      %v6870 = vunpack.c.l.b16 %v6764
      %v6871 = vunpack.c.l.b16 %v6778
      %v6872 = vunpack.c.l.b16 %v6788
      %v6873 = vunpack.c.l.b16 %v6802
      %v6874 = vunpack.c.l.b16 %v6812
      %v6875 = vunpack.c.l.b16 %v6826
      %v6876 = vunpack.c.l.b16 %v6836
      %v6877 = vunpack.c.l.b16 %v6850
      %v6878 = vunpack.c.l.b16 %v6860
      %v6879 = vpack.c.b16 %v6864, %v6863
      %v6880 = vpack.c.b16 %v6866, %v6865
      %v6881 = vpack.c.b16 %v6868, %v6867
      %v6882 = vpack.c.b16 %v6870, %v6869
      %v6883 = vpack.c.b16 %v6872, %v6871
      %v6884 = vpack.c.b16 %v6874, %v6873
      %v6885 = vpack.c.b16 %v6876, %v6875
      %v6886 = vpack.c.b16 %v6878, %v6877
      %v6888 = vsel %vm5681, %v6879, 0
      %v6891 = vsel %vm5681, %v6880, 0
      %v6894 = vsel %vm5681, %v6881, 0
      %v6897 = vsel %vm5681, %v6882, 0
      %v6900 = vsel %vm5681, %v6883, 0
      %v6903 = vsel %vm5681, %v6884, 0
      %v6906 = vsel %vm5681, %v6885, 0
      %v6909 = vsel %vm5681, %v6886, 0
      %v6912 = vsel %vm5706, %v6862, 0
      %6914 = vmatpush.bf16.msra.mxu0 0
      %6915 = vmatpush.bf16.msra.mxu0 0
      %6916 = vmatpush.bf16.msra.mxu0 0
      %6917 = vmatpush.bf16.msra.mxu0 0
      %6918 = vmatpush.bf16.msra.mxu0 0
      %6919 = vmatpush.bf16.msra.mxu0 0
      %6920 = vmatpush.bf16.msra.mxu0 0
      %6921 = vmatpush.bf16.msra.mxu0 %v6912
      %6922 = vmatmul.bf16.gmra.mxu0 %v6888
      %v6923 = vpop.f32.mrf.mxu0
      %v6924 = vadd.f32 0.0, %v6923
      %v6925 = vpop.f32.mrf.mxu0
      %v6926 = vadd.f32 0.0, %v6925
      %6927 = vmatmul.bf16.gmra.mxu0 %v6891
      %v6928 = vpop.f32.mrf.mxu0
      %v6929 = vadd.f32 0.0, %v6928
      %v6930 = vpop.f32.mrf.mxu0
      %v6931 = vadd.f32 0.0, %v6930
      %6932 = vmatmul.bf16.gmra.mxu0 %v6894
      %v6933 = vpop.f32.mrf.mxu0
      %v6934 = vadd.f32 0.0, %v6933
      %v6935 = vpop.f32.mrf.mxu0
      %v6936 = vadd.f32 0.0, %v6935
      %6937 = vmatmul.bf16.gmra.mxu0 %v6897
      %v6938 = vpop.f32.mrf.mxu0
      %v6939 = vadd.f32 0.0, %v6938
      %v6940 = vpop.f32.mrf.mxu0
      %v6941 = vadd.f32 0.0, %v6940
      %6942 = vmatmul.bf16.gmra.mxu0 %v6900
      %v6943 = vpop.f32.mrf.mxu0
      %v6944 = vadd.f32 0.0, %v6943
      %v6945 = vpop.f32.mrf.mxu0
      %v6946 = vadd.f32 0.0, %v6945
      %6947 = vmatmul.bf16.gmra.mxu0 %v6903
      %v6948 = vpop.f32.mrf.mxu0
      %v6949 = vadd.f32 0.0, %v6948
      %v6950 = vpop.f32.mrf.mxu0
      %v6951 = vadd.f32 0.0, %v6950
      %6952 = vmatmul.bf16.gmra.mxu0 %v6906
      %v6953 = vpop.f32.mrf.mxu0
      %v6954 = vadd.f32 0.0, %v6953
      %v6955 = vpop.f32.mrf.mxu0
      %v6956 = vadd.f32 0.0, %v6955
      %6957 = vmatmul.bf16.gmra.mxu0 %v6909
      %v6958 = vpop.f32.mrf.mxu0
      %v6959 = vadd.f32 0.0, %v6958
      %v6960 = vpop.f32.mrf.mxu0
      %v6961 = vadd.f32 0.0, %v6960
      %6962 = vdwg.mxu0
      %v6963 = vadd.f32 %v6629, %v6924
      %v6964 = vadd.f32 %v6630, %v6926
      %v6965 = vadd.f32 %v6631, %v6929
      %v6966 = vadd.f32 %v6632, %v6931
      %v6967 = vadd.f32 %v6633, %v6934
      %v6968 = vadd.f32 %v6634, %v6936
      %v6969 = vadd.f32 %v6635, %v6939
      %v6970 = vadd.f32 %v6636, %v6941
      %v6971 = vadd.f32 %v6637, %v6944
      %v6972 = vadd.f32 %v6638, %v6946
      %v6973 = vadd.f32 %v6639, %v6949
      %v6974 = vadd.f32 %v6640, %v6951
      %v6975 = vadd.f32 %v6641, %v6954
      %v6976 = vadd.f32 %v6642, %v6956
      %v6977 = vadd.f32 %v6643, %v6959
      %v6978 = vadd.f32 %v6644, %v6961
      %s6979 = scalar_lea.vmem [#allocation3], 40
      %v6980 = vld [vmem:[%s6979 + $0x4] sm:$0x8]
      %v6981 = vld [vmem:[%s6979 + $0x8] sm:$0xf]
      %v6982 = vld [vmem:[%s6979 + $0xc] sm:$0xf]
      %v6983 = vld [vmem:[%s6979 + $0x18] sm:$0x8]
      %v6984 = vld [vmem:[%s6979 + $0x1c] sm:$0xf]
      %v6985 = vld [vmem:[%s6979 + $0x20] sm:$0xf]
      %v6986 = vld [vmem:[%s6979 + $0x2c] sm:$0x8]
      %v6987 = vld [vmem:[%s6979 + $0x30] sm:$0xf]
      %v6988 = vld [vmem:[%s6979 + $0x34] sm:$0xf]
      %v6989 = vld [vmem:[%s6979 + $0x40] sm:$0x8]
      %v6990 = vld [vmem:[%s6979 + $0x44] sm:$0xf]
      %v6991 = vld [vmem:[%s6979 + $0x48] sm:$0xf]
      %v6992 = vld [vmem:[%s6979 + $0x54] sm:$0x8]
      %v6993 = vld [vmem:[%s6979 + $0x58] sm:$0xf]
      %v6994 = vld [vmem:[%s6979 + $0x5c] sm:$0xf]
      %v6995 = vld [vmem:[%s6979 + $0x68] sm:$0x8]
      %v6996 = vld [vmem:[%s6979 + $0x6c] sm:$0xf]
      %v6997 = vld [vmem:[%s6979 + $0x70] sm:$0xf]
      %v6998 = vld [vmem:[%s6979 + $0x7c] sm:$0x8]
      %v6999 = vld [vmem:[%s6979 + $0x80] sm:$0xf]
      %v7000 = vld [vmem:[%s6979 + $0x84] sm:$0xf]
      %v7001 = vld [vmem:[%s6979 + $0x90] sm:$0x8]
      %v7002 = vld [vmem:[%s6979 + $0x94] sm:$0xf]
      %v7003 = vld [vmem:[%s6979 + $0x98] sm:$0xf]
      %v7005 = vshrl.u32 %v6980, 16
      %v7007 = vrot.slane %v7005, 7
      %v7008 = vrot.slane %v7007, 4
      %v7010 = vshrl.u32 %v6981, 16
      %v7012 = vrot.slane %v7010, 7
      %v7013 = vshll.u32 %v6981, 16
      %v7015 = vor.u32 %v7012, %v7013
      %v7016 = vsel %vm632, %v7008, %v7015
      %v7017 = vrot.slane %v7012, 4
      %v7019 = vshrl.u32 %v6982, 16
      %v7021 = vrot.slane %v7019, 7
      %v7022 = vshll.u32 %v6982, 16
      %v7024 = vor.u32 %v7021, %v7022
      %v7025 = vsel %vm632, %v7017, %v7024
      %v7027 = vshrl.u32 %v6983, 16
      %v7029 = vrot.slane %v7027, 7
      %v7030 = vrot.slane %v7029, 4
      %v7032 = vshrl.u32 %v6984, 16
      %v7034 = vrot.slane %v7032, 7
      %v7035 = vshll.u32 %v6984, 16
      %v7037 = vor.u32 %v7034, %v7035
      %v7038 = vsel %vm632, %v7030, %v7037
      %v7039 = vrot.slane %v7034, 4
      %v7041 = vshrl.u32 %v6985, 16
      %v7043 = vrot.slane %v7041, 7
      %v7044 = vshll.u32 %v6985, 16
      %v7046 = vor.u32 %v7043, %v7044
      %v7047 = vsel %vm632, %v7039, %v7046
      %v7049 = vshrl.u32 %v6986, 16
      %v7051 = vrot.slane %v7049, 7
      %v7052 = vrot.slane %v7051, 4
      %v7054 = vshrl.u32 %v6987, 16
      %v7056 = vrot.slane %v7054, 7
      %v7057 = vshll.u32 %v6987, 16
      %v7059 = vor.u32 %v7056, %v7057
      %v7060 = vsel %vm632, %v7052, %v7059
      %v7061 = vrot.slane %v7056, 4
      %v7063 = vshrl.u32 %v6988, 16
      %v7065 = vrot.slane %v7063, 7
      %v7066 = vshll.u32 %v6988, 16
      %v7068 = vor.u32 %v7065, %v7066
      %v7069 = vsel %vm632, %v7061, %v7068
      %v7071 = vshrl.u32 %v6989, 16
      %v7073 = vrot.slane %v7071, 7
      %v7074 = vrot.slane %v7073, 4
      %v7076 = vshrl.u32 %v6990, 16
      %v7078 = vrot.slane %v7076, 7
      %v7079 = vshll.u32 %v6990, 16
      %v7081 = vor.u32 %v7078, %v7079
      %v7082 = vsel %vm632, %v7074, %v7081
      %v7083 = vrot.slane %v7078, 4
      %v7085 = vshrl.u32 %v6991, 16
      %v7087 = vrot.slane %v7085, 7
      %v7088 = vshll.u32 %v6991, 16
      %v7090 = vor.u32 %v7087, %v7088
      %v7091 = vsel %vm632, %v7083, %v7090
      %v7093 = vshrl.u32 %v6992, 16
      %v7095 = vrot.slane %v7093, 7
      %v7096 = vrot.slane %v7095, 4
      %v7098 = vshrl.u32 %v6993, 16
      %v7100 = vrot.slane %v7098, 7
      %v7101 = vshll.u32 %v6993, 16
      %v7103 = vor.u32 %v7100, %v7101
      %v7104 = vsel %vm632, %v7096, %v7103
      %v7105 = vrot.slane %v7100, 4
      %v7107 = vshrl.u32 %v6994, 16
      %v7109 = vrot.slane %v7107, 7
      %v7110 = vshll.u32 %v6994, 16
      %v7112 = vor.u32 %v7109, %v7110
      %v7113 = vsel %vm632, %v7105, %v7112
      %v7115 = vshrl.u32 %v6995, 16
      %v7117 = vrot.slane %v7115, 7
      %v7118 = vrot.slane %v7117, 4
      %v7120 = vshrl.u32 %v6996, 16
      %v7122 = vrot.slane %v7120, 7
      %v7123 = vshll.u32 %v6996, 16
      %v7125 = vor.u32 %v7122, %v7123
      %v7126 = vsel %vm632, %v7118, %v7125
      %v7127 = vrot.slane %v7122, 4
      %v7129 = vshrl.u32 %v6997, 16
      %v7131 = vrot.slane %v7129, 7
      %v7132 = vshll.u32 %v6997, 16
      %v7134 = vor.u32 %v7131, %v7132
      %v7135 = vsel %vm632, %v7127, %v7134
      %v7137 = vshrl.u32 %v6998, 16
      %v7139 = vrot.slane %v7137, 7
      %v7140 = vrot.slane %v7139, 4
      %v7142 = vshrl.u32 %v6999, 16
      %v7144 = vrot.slane %v7142, 7
      %v7145 = vshll.u32 %v6999, 16
      %v7147 = vor.u32 %v7144, %v7145
      %v7148 = vsel %vm632, %v7140, %v7147
      %v7149 = vrot.slane %v7144, 4
      %v7151 = vshrl.u32 %v7000, 16
      %v7153 = vrot.slane %v7151, 7
      %v7154 = vshll.u32 %v7000, 16
      %v7156 = vor.u32 %v7153, %v7154
      %v7157 = vsel %vm632, %v7149, %v7156
      %v7159 = vshrl.u32 %v7001, 16
      %v7161 = vrot.slane %v7159, 7
      %v7162 = vrot.slane %v7161, 4
      %v7164 = vshrl.u32 %v7002, 16
      %v7166 = vrot.slane %v7164, 7
      %v7167 = vshll.u32 %v7002, 16
      %v7169 = vor.u32 %v7166, %v7167
      %v7170 = vsel %vm632, %v7162, %v7169
      %v7171 = vrot.slane %v7166, 4
      %v7173 = vshrl.u32 %v7003, 16
      %v7175 = vrot.slane %v7173, 7
      %v7176 = vshll.u32 %v7003, 16
      %v7178 = vor.u32 %v7175, %v7176
      %v7179 = vsel %vm632, %v7171, %v7178
      %s7180 = scalar_lea.vmem %s4, 12
      %v7181 = vld [vmem:[%s7180] sm:$0x3]
      %v7182 = vunpack.c.l.b16 %v7016
      %v7183 = vunpack.c.l.b16 %v7025
      %v7184 = vunpack.c.l.b16 %v7038
      %v7185 = vunpack.c.l.b16 %v7047
      %v7186 = vunpack.c.l.b16 %v7060
      %v7187 = vunpack.c.l.b16 %v7069
      %v7188 = vunpack.c.l.b16 %v7082
      %v7189 = vunpack.c.l.b16 %v7091
      %v7190 = vunpack.c.l.b16 %v7104
      %v7191 = vunpack.c.l.b16 %v7113
      %v7192 = vunpack.c.l.b16 %v7126
      %v7193 = vunpack.c.l.b16 %v7135
      %v7194 = vunpack.c.l.b16 %v7148
      %v7195 = vunpack.c.l.b16 %v7157
      %v7196 = vunpack.c.l.b16 %v7170
      %v7197 = vunpack.c.l.b16 %v7179
      %v7198 = vpack.c.b16 %v7183, %v7182
      %v7199 = vpack.c.b16 %v7185, %v7184
      %v7200 = vpack.c.b16 %v7187, %v7186
      %v7201 = vpack.c.b16 %v7189, %v7188
      %v7202 = vpack.c.b16 %v7191, %v7190
      %v7203 = vpack.c.b16 %v7193, %v7192
      %v7204 = vpack.c.b16 %v7195, %v7194
      %v7205 = vpack.c.b16 %v7197, %v7196
      %v7207 = vsel %vm5681, %v7198, 0
      %v7210 = vsel %vm5681, %v7199, 0
      %v7213 = vsel %vm5681, %v7200, 0
      %v7216 = vsel %vm5681, %v7201, 0
      %v7219 = vsel %vm5681, %v7202, 0
      %v7222 = vsel %vm5681, %v7203, 0
      %v7225 = vsel %vm5681, %v7204, 0
      %v7228 = vsel %vm5681, %v7205, 0
      %v7231 = vsel %vm5706, %v7181, 0
      %7233 = vmatpush.bf16.msra.mxu0 0
      %7234 = vmatpush.bf16.msra.mxu0 0
      %7235 = vmatpush.bf16.msra.mxu0 0
      %7236 = vmatpush.bf16.msra.mxu0 0
      %7237 = vmatpush.bf16.msra.mxu0 0
      %7238 = vmatpush.bf16.msra.mxu0 0
      %7239 = vmatpush.bf16.msra.mxu0 0
      %7240 = vmatpush.bf16.msra.mxu0 %v7231
      %7241 = vmatmul.bf16.gmra.mxu0 %v7207
      %v7242 = vpop.f32.mrf.mxu0
      %v7243 = vadd.f32 0.0, %v7242
      %v7244 = vpop.f32.mrf.mxu0
      %v7245 = vadd.f32 0.0, %v7244
      %7246 = vmatmul.bf16.gmra.mxu0 %v7210
      %v7247 = vpop.f32.mrf.mxu0
      %v7248 = vadd.f32 0.0, %v7247
      %v7249 = vpop.f32.mrf.mxu0
      %v7250 = vadd.f32 0.0, %v7249
      %7251 = vmatmul.bf16.gmra.mxu0 %v7213
      %v7252 = vpop.f32.mrf.mxu0
      %v7253 = vadd.f32 0.0, %v7252
      %v7254 = vpop.f32.mrf.mxu0
      %v7255 = vadd.f32 0.0, %v7254
      %7256 = vmatmul.bf16.gmra.mxu0 %v7216
      %v7257 = vpop.f32.mrf.mxu0
      %v7258 = vadd.f32 0.0, %v7257
      %v7259 = vpop.f32.mrf.mxu0
      %v7260 = vadd.f32 0.0, %v7259
      %7261 = vmatmul.bf16.gmra.mxu0 %v7219
      %v7262 = vpop.f32.mrf.mxu0
      %v7263 = vadd.f32 0.0, %v7262
      %v7264 = vpop.f32.mrf.mxu0
      %v7265 = vadd.f32 0.0, %v7264
      %7266 = vmatmul.bf16.gmra.mxu0 %v7222
      %v7267 = vpop.f32.mrf.mxu0
      %v7268 = vadd.f32 0.0, %v7267
      %v7269 = vpop.f32.mrf.mxu0
      %v7270 = vadd.f32 0.0, %v7269
      %7271 = vmatmul.bf16.gmra.mxu0 %v7225
      %v7272 = vpop.f32.mrf.mxu0
      %v7273 = vadd.f32 0.0, %v7272
      %v7274 = vpop.f32.mrf.mxu0
      %v7275 = vadd.f32 0.0, %v7274
      %7276 = vmatmul.bf16.gmra.mxu0 %v7228
      %v7277 = vpop.f32.mrf.mxu0
      %v7278 = vadd.f32 0.0, %v7277
      %v7279 = vpop.f32.mrf.mxu0
      %v7280 = vadd.f32 0.0, %v7279
      %7281 = vdwg.mxu0
      %v7282 = vadd.f32 %v6963, %v7243
      %v7283 = vadd.f32 %v6964, %v7245
      %v7284 = vadd.f32 %v6965, %v7248
      %v7285 = vadd.f32 %v6966, %v7250
      %v7286 = vadd.f32 %v6967, %v7253
      %v7287 = vadd.f32 %v6968, %v7255
      %v7288 = vadd.f32 %v6969, %v7258
      %v7289 = vadd.f32 %v6970, %v7260
      %v7290 = vadd.f32 %v6971, %v7263
      %v7291 = vadd.f32 %v6972, %v7265
      %v7292 = vadd.f32 %v6973, %v7268
      %v7293 = vadd.f32 %v6974, %v7270
      %v7294 = vadd.f32 %v6975, %v7273
      %v7295 = vadd.f32 %v6976, %v7275
      %v7296 = vadd.f32 %v6977, %v7278
      %v7297 = vadd.f32 %v6978, %v7280
      %s7298 = scalar_lea.vmem %s4, 14
      %v7299 = vld [vmem:[%s7298] sm:$0x3]
      %v7316 = vunpack.c.l.b16 %v6981
      %v7317 = vunpack.c.l.b16 %v6982
      %v7318 = vunpack.c.l.b16 %v6984
      %v7319 = vunpack.c.l.b16 %v6985
      %v7320 = vunpack.c.l.b16 %v6987
      %v7321 = vunpack.c.l.b16 %v6988
      %v7322 = vunpack.c.l.b16 %v6990
      %v7323 = vunpack.c.l.b16 %v6991
      %v7324 = vunpack.c.l.b16 %v6993
      %v7325 = vunpack.c.l.b16 %v6994
      %v7326 = vunpack.c.l.b16 %v6996
      %v7327 = vunpack.c.l.b16 %v6997
      %v7328 = vunpack.c.l.b16 %v6999
      %v7329 = vunpack.c.l.b16 %v7000
      %v7330 = vunpack.c.l.b16 %v7002
      %v7331 = vunpack.c.l.b16 %v7003
      %v7332 = vpack.c.b16 %v7317, %v7316
      %v7333 = vpack.c.b16 %v7319, %v7318
      %v7334 = vpack.c.b16 %v7321, %v7320
      %v7335 = vpack.c.b16 %v7323, %v7322
      %v7336 = vpack.c.b16 %v7325, %v7324
      %v7337 = vpack.c.b16 %v7327, %v7326
      %v7338 = vpack.c.b16 %v7329, %v7328
      %v7339 = vpack.c.b16 %v7331, %v7330
      %v7341 = vsel %vm5681, %v7332, 0
      %v7344 = vsel %vm5681, %v7333, 0
      %v7347 = vsel %vm5681, %v7334, 0
      %v7350 = vsel %vm5681, %v7335, 0
      %v7353 = vsel %vm5681, %v7336, 0
      %v7356 = vsel %vm5681, %v7337, 0
      %v7359 = vsel %vm5681, %v7338, 0
      %v7362 = vsel %vm5681, %v7339, 0
      %v7365 = vsel %vm5706, %v7299, 0
      %7367 = vmatpush.bf16.msra.mxu0 0
      %7368 = vmatpush.bf16.msra.mxu0 0
      %7369 = vmatpush.bf16.msra.mxu0 0
      %7370 = vmatpush.bf16.msra.mxu0 0
      %7371 = vmatpush.bf16.msra.mxu0 0
      %7372 = vmatpush.bf16.msra.mxu0 0
      %7373 = vmatpush.bf16.msra.mxu0 0
      %7374 = vmatpush.bf16.msra.mxu0 %v7365
      %7375 = vmatmul.bf16.gmra.mxu0 %v7341
      %v7376 = vpop.f32.mrf.mxu0
      %v7377 = vadd.f32 0.0, %v7376
      %v7378 = vpop.f32.mrf.mxu0
      %v7379 = vadd.f32 0.0, %v7378
      %7380 = vmatmul.bf16.gmra.mxu0 %v7344
      %v7381 = vpop.f32.mrf.mxu0
      %v7382 = vadd.f32 0.0, %v7381
      %v7383 = vpop.f32.mrf.mxu0
      %v7384 = vadd.f32 0.0, %v7383
      %7385 = vmatmul.bf16.gmra.mxu0 %v7347
      %v7386 = vpop.f32.mrf.mxu0
      %v7387 = vadd.f32 0.0, %v7386
      %v7388 = vpop.f32.mrf.mxu0
      %v7389 = vadd.f32 0.0, %v7388
      %7390 = vmatmul.bf16.gmra.mxu0 %v7350
      %v7391 = vpop.f32.mrf.mxu0
      %v7392 = vadd.f32 0.0, %v7391
      %v7393 = vpop.f32.mrf.mxu0
      %v7394 = vadd.f32 0.0, %v7393
      %7395 = vmatmul.bf16.gmra.mxu0 %v7353
      %v7396 = vpop.f32.mrf.mxu0
      %v7397 = vadd.f32 0.0, %v7396
      %v7398 = vpop.f32.mrf.mxu0
      %v7399 = vadd.f32 0.0, %v7398
      %7400 = vmatmul.bf16.gmra.mxu0 %v7356
      %v7401 = vpop.f32.mrf.mxu0
      %v7402 = vadd.f32 0.0, %v7401
      %v7403 = vpop.f32.mrf.mxu0
      %v7404 = vadd.f32 0.0, %v7403
      %7405 = vmatmul.bf16.gmra.mxu0 %v7359
      %v7406 = vpop.f32.mrf.mxu0
      %v7407 = vadd.f32 0.0, %v7406
      %v7408 = vpop.f32.mrf.mxu0
      %v7409 = vadd.f32 0.0, %v7408
      %7410 = vmatmul.bf16.gmra.mxu0 %v7362
      %v7411 = vpop.f32.mrf.mxu0
      %v7412 = vadd.f32 0.0, %v7411
      %v7413 = vpop.f32.mrf.mxu0
      %v7414 = vadd.f32 0.0, %v7413
      %7415 = vdwg.mxu0
      %v7416 = vadd.f32 %v7282, %v7377
      %v7417 = vadd.f32 %v7283, %v7379
      %v7418 = vadd.f32 %v7284, %v7382
      %v7419 = vadd.f32 %v7285, %v7384
      %v7420 = vadd.f32 %v7286, %v7387
      %v7421 = vadd.f32 %v7287, %v7389
      %v7422 = vadd.f32 %v7288, %v7392
      %v7423 = vadd.f32 %v7289, %v7394
      %v7424 = vadd.f32 %v7290, %v7397
      %v7425 = vadd.f32 %v7291, %v7399
      %v7426 = vadd.f32 %v7292, %v7402
      %v7427 = vadd.f32 %v7293, %v7404
      %v7428 = vadd.f32 %v7294, %v7407
      %v7429 = vadd.f32 %v7295, %v7409
      %v7430 = vadd.f32 %v7296, %v7412
      %v7431 = vadd.f32 %v7297, %v7414
      %v7432 = vld [vmem:[%s6979 + $0x8] sm:$0xf]
      %v7433 = vld [vmem:[%s6979 + $0xc] sm:$0xf]
      %v7434 = vld [vmem:[%s6979 + $0x10] sm:$0x1]
      %v7435 = vld [vmem:[%s6979 + $0x1c] sm:$0xf]
      %v7436 = vld [vmem:[%s6979 + $0x20] sm:$0xf]
      %v7437 = vld [vmem:[%s6979 + $0x24] sm:$0x1]
      %v7438 = vld [vmem:[%s6979 + $0x30] sm:$0xf]
      %v7439 = vld [vmem:[%s6979 + $0x34] sm:$0xf]
      %v7440 = vld [vmem:[%s6979 + $0x38] sm:$0x1]
      %v7441 = vld [vmem:[%s6979 + $0x44] sm:$0xf]
      %v7442 = vld [vmem:[%s6979 + $0x48] sm:$0xf]
      %v7443 = vld [vmem:[%s6979 + $0x4c] sm:$0x1]
      %v7444 = vld [vmem:[%s6979 + $0x58] sm:$0xf]
      %v7445 = vld [vmem:[%s6979 + $0x5c] sm:$0xf]
      %v7446 = vld [vmem:[%s6979 + $0x60] sm:$0x1]
      %v7447 = vld [vmem:[%s6979 + $0x6c] sm:$0xf]
      %v7448 = vld [vmem:[%s6979 + $0x70] sm:$0xf]
      %v7449 = vld [vmem:[%s6979 + $0x74] sm:$0x1]
      %v7450 = vld [vmem:[%s6979 + $0x80] sm:$0xf]
      %v7451 = vld [vmem:[%s6979 + $0x84] sm:$0xf]
      %v7452 = vld [vmem:[%s6979 + $0x88] sm:$0x1]
      %v7453 = vld [vmem:[%s6979 + $0x94] sm:$0xf]
      %v7454 = vld [vmem:[%s6979 + $0x98] sm:$0xf]
      %v7455 = vld [vmem:[%s6979 + $0x9c] sm:$0x1]
      %v7457 = vshrl.u32 %v7432, 16
      %v7459 = vrot.slane %v7457, 4
      %v7460 = vshll.u32 %v7432, 16
      %v7462 = vrot.slane %v7460, 5
      %v7463 = vor.u32 %v7459, %v7462
      %v7464 = vrot.slane %v7463, 4
      %v7466 = vshll.u32 %v7433, 16
      %v7468 = vrot.slane %v7466, 5
      %v7469 = vsel %vm1056, %v7464, %v7468
      %v7470 = vshrl.u32 %v7433, 16
      %v7472 = vrot.slane %v7470, 4
      %v7473 = vor.u32 %v7472, %v7468
      %v7474 = vrot.slane %v7473, 4
      %v7476 = vshll.u32 %v7434, 16
      %v7478 = vrot.slane %v7476, 5
      %v7479 = vsel %vm1056, %v7474, %v7478
      %v7481 = vshrl.u32 %v7435, 16
      %v7483 = vrot.slane %v7481, 4
      %v7484 = vshll.u32 %v7435, 16
      %v7486 = vrot.slane %v7484, 5
      %v7487 = vor.u32 %v7483, %v7486
      %v7488 = vrot.slane %v7487, 4
      %v7490 = vshll.u32 %v7436, 16
      %v7492 = vrot.slane %v7490, 5
      %v7493 = vsel %vm1056, %v7488, %v7492
      %v7494 = vshrl.u32 %v7436, 16
      %v7496 = vrot.slane %v7494, 4
      %v7497 = vor.u32 %v7496, %v7492
      %v7498 = vrot.slane %v7497, 4
      %v7500 = vshll.u32 %v7437, 16
      %v7502 = vrot.slane %v7500, 5
      %v7503 = vsel %vm1056, %v7498, %v7502
      %v7505 = vshrl.u32 %v7438, 16
      %v7507 = vrot.slane %v7505, 4
      %v7508 = vshll.u32 %v7438, 16
      %v7510 = vrot.slane %v7508, 5
      %v7511 = vor.u32 %v7507, %v7510
      %v7512 = vrot.slane %v7511, 4
      %v7514 = vshll.u32 %v7439, 16
      %v7516 = vrot.slane %v7514, 5
      %v7517 = vsel %vm1056, %v7512, %v7516
      %v7518 = vshrl.u32 %v7439, 16
      %v7520 = vrot.slane %v7518, 4
      %v7521 = vor.u32 %v7520, %v7516
      %v7522 = vrot.slane %v7521, 4
      %v7524 = vshll.u32 %v7440, 16
      %v7526 = vrot.slane %v7524, 5
      %v7527 = vsel %vm1056, %v7522, %v7526
      %v7529 = vshrl.u32 %v7441, 16
      %v7531 = vrot.slane %v7529, 4
      %v7532 = vshll.u32 %v7441, 16
      %v7534 = vrot.slane %v7532, 5
      %v7535 = vor.u32 %v7531, %v7534
      %v7536 = vrot.slane %v7535, 4
      %v7538 = vshll.u32 %v7442, 16
      %v7540 = vrot.slane %v7538, 5
      %v7541 = vsel %vm1056, %v7536, %v7540
      %v7542 = vshrl.u32 %v7442, 16
      %v7544 = vrot.slane %v7542, 4
      %v7545 = vor.u32 %v7544, %v7540
      %v7546 = vrot.slane %v7545, 4
      %v7548 = vshll.u32 %v7443, 16
      %v7550 = vrot.slane %v7548, 5
      %v7551 = vsel %vm1056, %v7546, %v7550
      %v7553 = vshrl.u32 %v7444, 16
      %v7555 = vrot.slane %v7553, 4
      %v7556 = vshll.u32 %v7444, 16
      %v7558 = vrot.slane %v7556, 5
      %v7559 = vor.u32 %v7555, %v7558
      %v7560 = vrot.slane %v7559, 4
      %v7562 = vshll.u32 %v7445, 16
      %v7564 = vrot.slane %v7562, 5
      %v7565 = vsel %vm1056, %v7560, %v7564
      %v7566 = vshrl.u32 %v7445, 16
      %v7568 = vrot.slane %v7566, 4
      %v7569 = vor.u32 %v7568, %v7564
      %v7570 = vrot.slane %v7569, 4
      %v7572 = vshll.u32 %v7446, 16
      %v7574 = vrot.slane %v7572, 5
      %v7575 = vsel %vm1056, %v7570, %v7574
      %v7577 = vshrl.u32 %v7447, 16
      %v7579 = vrot.slane %v7577, 4
      %v7580 = vshll.u32 %v7447, 16
      %v7582 = vrot.slane %v7580, 5
      %v7583 = vor.u32 %v7579, %v7582
      %v7584 = vrot.slane %v7583, 4
      %v7586 = vshll.u32 %v7448, 16
      %v7588 = vrot.slane %v7586, 5
      %v7589 = vsel %vm1056, %v7584, %v7588
      %v7590 = vshrl.u32 %v7448, 16
      %v7592 = vrot.slane %v7590, 4
      %v7593 = vor.u32 %v7592, %v7588
      %v7594 = vrot.slane %v7593, 4
      %v7596 = vshll.u32 %v7449, 16
      %v7598 = vrot.slane %v7596, 5
      %v7599 = vsel %vm1056, %v7594, %v7598
      %v7601 = vshrl.u32 %v7450, 16
      %v7603 = vrot.slane %v7601, 4
      %v7604 = vshll.u32 %v7450, 16
      %v7606 = vrot.slane %v7604, 5
      %v7607 = vor.u32 %v7603, %v7606
      %v7608 = vrot.slane %v7607, 4
      %v7610 = vshll.u32 %v7451, 16
      %v7612 = vrot.slane %v7610, 5
      %v7613 = vsel %vm1056, %v7608, %v7612
      %v7614 = vshrl.u32 %v7451, 16
      %v7616 = vrot.slane %v7614, 4
      %v7617 = vor.u32 %v7616, %v7612
      %v7618 = vrot.slane %v7617, 4
      %v7620 = vshll.u32 %v7452, 16
      %v7622 = vrot.slane %v7620, 5
      %v7623 = vsel %vm1056, %v7618, %v7622
      %v7625 = vshrl.u32 %v7453, 16
      %v7627 = vrot.slane %v7625, 4
      %v7628 = vshll.u32 %v7453, 16
      %v7630 = vrot.slane %v7628, 5
      %v7631 = vor.u32 %v7627, %v7630
      %v7632 = vrot.slane %v7631, 4
      %v7634 = vshll.u32 %v7454, 16
      %v7636 = vrot.slane %v7634, 5
      %v7637 = vsel %vm1056, %v7632, %v7636
      %v7638 = vshrl.u32 %v7454, 16
      %v7640 = vrot.slane %v7638, 4
      %v7641 = vor.u32 %v7640, %v7636
      %v7642 = vrot.slane %v7641, 4
      %v7644 = vshll.u32 %v7455, 16
      %v7646 = vrot.slane %v7644, 5
      %v7647 = vsel %vm1056, %v7642, %v7646
      %s7648 = scalar_lea.vmem %s4, 16
      %v7649 = vld [vmem:[%s7648] sm:$0x3]
      %v7650 = vunpack.c.l.b16 %v7469
      %v7651 = vunpack.c.l.b16 %v7479
      %v7652 = vunpack.c.l.b16 %v7493
      %v7653 = vunpack.c.l.b16 %v7503
      %v7654 = vunpack.c.l.b16 %v7517
      %v7655 = vunpack.c.l.b16 %v7527
      %v7656 = vunpack.c.l.b16 %v7541
      %v7657 = vunpack.c.l.b16 %v7551
      %v7658 = vunpack.c.l.b16 %v7565
      %v7659 = vunpack.c.l.b16 %v7575
      %v7660 = vunpack.c.l.b16 %v7589
      %v7661 = vunpack.c.l.b16 %v7599
      %v7662 = vunpack.c.l.b16 %v7613
      %v7663 = vunpack.c.l.b16 %v7623
      %v7664 = vunpack.c.l.b16 %v7637
      %v7665 = vunpack.c.l.b16 %v7647
      %v7666 = vpack.c.b16 %v7651, %v7650
      %v7667 = vpack.c.b16 %v7653, %v7652
      %v7668 = vpack.c.b16 %v7655, %v7654
      %v7669 = vpack.c.b16 %v7657, %v7656
      %v7670 = vpack.c.b16 %v7659, %v7658
      %v7671 = vpack.c.b16 %v7661, %v7660
      %v7672 = vpack.c.b16 %v7663, %v7662
      %v7673 = vpack.c.b16 %v7665, %v7664
      %v7675 = vsel %vm5681, %v7666, 0
      %v7678 = vsel %vm5681, %v7667, 0
      %v7681 = vsel %vm5681, %v7668, 0
      %v7684 = vsel %vm5681, %v7669, 0
      %v7687 = vsel %vm5681, %v7670, 0
      %v7690 = vsel %vm5681, %v7671, 0
      %v7693 = vsel %vm5681, %v7672, 0
      %v7696 = vsel %vm5681, %v7673, 0
      %v7699 = vsel %vm5706, %v7649, 0
      %7701 = vmatpush.bf16.msra.mxu0 0
      %7702 = vmatpush.bf16.msra.mxu0 0
      %7703 = vmatpush.bf16.msra.mxu0 0
      %7704 = vmatpush.bf16.msra.mxu0 0
      %7705 = vmatpush.bf16.msra.mxu0 0
      %7706 = vmatpush.bf16.msra.mxu0 0
      %7707 = vmatpush.bf16.msra.mxu0 0
      %7708 = vmatpush.bf16.msra.mxu0 %v7699
      %7709 = vmatmul.bf16.gmra.mxu0 %v7675
      %v7710 = vpop.f32.mrf.mxu0
      %v7711 = vadd.f32 0.0, %v7710
      %v7712 = vpop.f32.mrf.mxu0
      %v7713 = vadd.f32 0.0, %v7712
      %7714 = vmatmul.bf16.gmra.mxu0 %v7678
      %v7715 = vpop.f32.mrf.mxu0
      %v7716 = vadd.f32 0.0, %v7715
      %v7717 = vpop.f32.mrf.mxu0
      %v7718 = vadd.f32 0.0, %v7717
      %7719 = vmatmul.bf16.gmra.mxu0 %v7681
      %v7720 = vpop.f32.mrf.mxu0
      %v7721 = vadd.f32 0.0, %v7720
      %v7722 = vpop.f32.mrf.mxu0
      %v7723 = vadd.f32 0.0, %v7722
      %7724 = vmatmul.bf16.gmra.mxu0 %v7684
      %v7725 = vpop.f32.mrf.mxu0
      %v7726 = vadd.f32 0.0, %v7725
      %v7727 = vpop.f32.mrf.mxu0
      %v7728 = vadd.f32 0.0, %v7727
      %7729 = vmatmul.bf16.gmra.mxu0 %v7687
      %v7730 = vpop.f32.mrf.mxu0
      %v7731 = vadd.f32 0.0, %v7730
      %v7732 = vpop.f32.mrf.mxu0
      %v7733 = vadd.f32 0.0, %v7732
      %7734 = vmatmul.bf16.gmra.mxu0 %v7690
      %v7735 = vpop.f32.mrf.mxu0
      %v7736 = vadd.f32 0.0, %v7735
      %v7737 = vpop.f32.mrf.mxu0
      %v7738 = vadd.f32 0.0, %v7737
      %7739 = vmatmul.bf16.gmra.mxu0 %v7693
      %v7740 = vpop.f32.mrf.mxu0
      %v7741 = vadd.f32 0.0, %v7740
      %v7742 = vpop.f32.mrf.mxu0
      %v7743 = vadd.f32 0.0, %v7742
      %7744 = vmatmul.bf16.gmra.mxu0 %v7696
      %v7745 = vpop.f32.mrf.mxu0
      %v7746 = vadd.f32 0.0, %v7745
      %v7747 = vpop.f32.mrf.mxu0
      %v7748 = vadd.f32 0.0, %v7747
      %7749 = vdwg.mxu0
      %v7750 = vadd.f32 %v7416, %v7711
      %v7751 = vadd.f32 %v7417, %v7713
      %v7752 = vadd.f32 %v7418, %v7716
      %v7753 = vadd.f32 %v7419, %v7718
      %v7754 = vadd.f32 %v7420, %v7721
      %v7755 = vadd.f32 %v7421, %v7723
      %v7756 = vadd.f32 %v7422, %v7726
      %v7757 = vadd.f32 %v7423, %v7728
      %v7758 = vadd.f32 %v7424, %v7731
      %v7759 = vadd.f32 %v7425, %v7733
      %v7760 = vadd.f32 %v7426, %v7736
      %v7761 = vadd.f32 %v7427, %v7738
      %v7762 = vadd.f32 %v7428, %v7741
      %v7763 = vadd.f32 %v7429, %v7743
      %v7764 = vadd.f32 %v7430, %v7746
      %v7765 = vadd.f32 %v7431, %v7748
      %v7766 = vld [vmem:[%s5] sm:$0x1]
      %v7768 = vperm.slane %v7766, 0
      %v7770 = vmul.f32 %v7750, %v7768
      %v7771 = vmul.f32 %v7751, %v7768
      %v7772 = vmul.f32 %v7752, %v7768
      %v7773 = vmul.f32 %v7753, %v7768
      %v7774 = vmul.f32 %v7754, %v7768
      %v7775 = vmul.f32 %v7755, %v7768
      %v7776 = vmul.f32 %v7756, %v7768
      %v7777 = vmul.f32 %v7757, %v7768
      %v7778 = vmul.f32 %v7758, %v7768
      %v7779 = vmul.f32 %v7759, %v7768
      %v7780 = vmul.f32 %v7760, %v7768
      %v7781 = vmul.f32 %v7761, %v7768
      %v7782 = vmul.f32 %v7762, %v7768
      %v7783 = vmul.f32 %v7763, %v7768
      %v7784 = vmul.f32 %v7764, %v7768
      %v7785 = vmul.f32 %v7765, %v7768
      %v7786 = vld [vmem:[%s6] sm:$0x1]
      %v7788 = vperm.slane %v7786, 0
      %v7790 = vadd.f32 %v7770, %v7788
      %v7791 = vadd.f32 %v7771, %v7788
      %v7792 = vadd.f32 %v7772, %v7788
      %v7793 = vadd.f32 %v7773, %v7788
      %v7794 = vadd.f32 %v7774, %v7788
      %v7795 = vadd.f32 %v7775, %v7788
      %v7796 = vadd.f32 %v7776, %v7788
      %v7797 = vadd.f32 %v7777, %v7788
      %v7798 = vadd.f32 %v7778, %v7788
      %v7799 = vadd.f32 %v7779, %v7788
      %v7800 = vadd.f32 %v7780, %v7788
      %v7801 = vadd.f32 %v7781, %v7788
      %v7802 = vadd.f32 %v7782, %v7788
      %v7803 = vadd.f32 %v7783, %v7788
      %v7804 = vadd.f32 %v7784, %v7788
      %v7805 = vadd.f32 %v7785, %v7788
      %v7806 = vmax.f32 %v7790, 0.0
      %v7807 = vmax.f32 %v7791, 0.0
      %v7808 = vmax.f32 %v7792, 0.0
      %v7809 = vmax.f32 %v7793, 0.0
      %v7810 = vmax.f32 %v7794, 0.0
      %v7811 = vmax.f32 %v7795, 0.0
      %v7812 = vmax.f32 %v7796, 0.0
      %v7813 = vmax.f32 %v7797, 0.0
      %v7814 = vmax.f32 %v7798, 0.0
      %v7815 = vmax.f32 %v7799, 0.0
      %v7816 = vmax.f32 %v7800, 0.0
      %v7817 = vmax.f32 %v7801, 0.0
      %v7818 = vmax.f32 %v7802, 0.0
      %v7819 = vmax.f32 %v7803, 0.0
      %v7820 = vmax.f32 %v7804, 0.0
      %v7821 = vmax.f32 %v7805, 0.0
      %v7822 = vpack.c.bf16 %v7806, %v7806
      %v7823 = vpack.c.bf16 %v7807, %v7807
      %v7824 = vpack.c.bf16 %v7808, %v7808
      %v7825 = vpack.c.bf16 %v7809, %v7809
      %v7826 = vpack.c.bf16 %v7810, %v7810
      %v7827 = vpack.c.bf16 %v7811, %v7811
      %v7828 = vpack.c.bf16 %v7812, %v7812
      %v7829 = vpack.c.bf16 %v7813, %v7813
      %v7830 = vpack.c.bf16 %v7814, %v7814
      %v7831 = vpack.c.bf16 %v7815, %v7815
      %v7832 = vpack.c.bf16 %v7816, %v7816
      %v7833 = vpack.c.bf16 %v7817, %v7817
      %v7834 = vpack.c.bf16 %v7818, %v7818
      %v7835 = vpack.c.bf16 %v7819, %v7819
      %v7836 = vpack.c.bf16 %v7820, %v7820
      %v7837 = vpack.c.bf16 %v7821, %v7821
      %7838 = vst.msk [vmem:[%s278] sm:$0xf] %vm527, %v7822
      %7839 = vst.msk [vmem:[%s278 + $0x4] sm:$0xf] %vm527, %v7823
      %7840 = vst.msk [vmem:[%s278 + $0x8] sm:$0xf] %vm527, %v7824
      %7841 = vst.msk [vmem:[%s278 + $0xc] sm:$0xf] %vm527, %v7825
      %7842 = vst.msk [vmem:[%s278 + $0x10] sm:$0xf] %vm527, %v7826
      %7843 = vst.msk [vmem:[%s278 + $0x14] sm:$0xf] %vm527, %v7827
      %7844 = vst.msk [vmem:[%s278 + $0x18] sm:$0xf] %vm527, %v7828
      %7845 = vst.msk [vmem:[%s278 + $0x1c] sm:$0xf] %vm527, %v7829
      %7846 = vst.msk [vmem:[%s278 + $0x20] sm:$0xf] %vm527, %v7830
      %7847 = vst.msk [vmem:[%s278 + $0x24] sm:$0xf] %vm527, %v7831
      %7848 = vst.msk [vmem:[%s278 + $0x28] sm:$0xf] %vm527, %v7832
      %7849 = vst.msk [vmem:[%s278 + $0x2c] sm:$0xf] %vm527, %v7833
      %7850 = vst.msk [vmem:[%s278 + $0x30] sm:$0xf] %vm527, %v7834
      %7851 = vst.msk [vmem:[%s278 + $0x34] sm:$0xf] %vm527, %v7835
      %7852 = vst.msk [vmem:[%s278 + $0x38] sm:$0xf] %vm527, %v7836
      %7853 = vst.msk [vmem:[%s278 + $0x3c] sm:$0xf] %vm527, %v7837
      %s7854 = scalar_lea.vmem [#allocation3], 160
      %v7855 = vld [vmem:[%s7854 + $0x4] sm:$0x8]
      %v7856 = vld [vmem:[%s7854 + $0x8] sm:$0xf]
      %v7857 = vld [vmem:[%s7854 + $0xc] sm:$0xf]
      %v7858 = vld [vmem:[%s7854 + $0x18] sm:$0x8]
      %v7859 = vld [vmem:[%s7854 + $0x1c] sm:$0xf]
      %v7860 = vld [vmem:[%s7854 + $0x20] sm:$0xf]
      %v7861 = vld [vmem:[%s7854 + $0x2c] sm:$0x8]
      %v7862 = vld [vmem:[%s7854 + $0x30] sm:$0xf]
      %v7863 = vld [vmem:[%s7854 + $0x34] sm:$0xf]
      %v7864 = vld [vmem:[%s7854 + $0x40] sm:$0x8]
      %v7865 = vld [vmem:[%s7854 + $0x44] sm:$0xf]
      %v7866 = vld [vmem:[%s7854 + $0x48] sm:$0xf]
      %v7867 = vld [vmem:[%s7854 + $0x54] sm:$0x8]
      %v7868 = vld [vmem:[%s7854 + $0x58] sm:$0xf]
      %v7869 = vld [vmem:[%s7854 + $0x5c] sm:$0xf]
      %v7870 = vld [vmem:[%s7854 + $0x68] sm:$0x8]
      %v7871 = vld [vmem:[%s7854 + $0x6c] sm:$0xf]
      %v7872 = vld [vmem:[%s7854 + $0x70] sm:$0xf]
      %v7873 = vld [vmem:[%s7854 + $0x7c] sm:$0x8]
      %v7874 = vld [vmem:[%s7854 + $0x80] sm:$0xf]
      %v7875 = vld [vmem:[%s7854 + $0x84] sm:$0xf]
      %v7876 = vld [vmem:[%s7854 + $0x90] sm:$0x8]
      %v7877 = vld [vmem:[%s7854 + $0x94] sm:$0xf]
      %v7878 = vld [vmem:[%s7854 + $0x98] sm:$0xf]
      %v7880 = vshrl.u32 %v7855, 16
      %v7882 = vrot.slane %v7880, 7
      %v7883 = vrot.slane %v7882, 4
      %v7885 = vshrl.u32 %v7856, 16
      %v7887 = vrot.slane %v7885, 7
      %v7888 = vshll.u32 %v7856, 16
      %v7890 = vor.u32 %v7887, %v7888
      %v7891 = vsel %vm632, %v7883, %v7890
      %v7892 = vrot.slane %v7887, 4
      %v7894 = vshrl.u32 %v7857, 16
      %v7896 = vrot.slane %v7894, 7
      %v7897 = vshll.u32 %v7857, 16
      %v7899 = vor.u32 %v7896, %v7897
      %v7900 = vsel %vm632, %v7892, %v7899
      %v7902 = vshrl.u32 %v7858, 16
      %v7904 = vrot.slane %v7902, 7
      %v7905 = vrot.slane %v7904, 4
      %v7907 = vshrl.u32 %v7859, 16
      %v7909 = vrot.slane %v7907, 7
      %v7910 = vshll.u32 %v7859, 16
      %v7912 = vor.u32 %v7909, %v7910
      %v7913 = vsel %vm632, %v7905, %v7912
      %v7914 = vrot.slane %v7909, 4
      %v7916 = vshrl.u32 %v7860, 16
      %v7918 = vrot.slane %v7916, 7
      %v7919 = vshll.u32 %v7860, 16
      %v7921 = vor.u32 %v7918, %v7919
      %v7922 = vsel %vm632, %v7914, %v7921
      %v7924 = vshrl.u32 %v7861, 16
      %v7926 = vrot.slane %v7924, 7
      %v7927 = vrot.slane %v7926, 4
      %v7929 = vshrl.u32 %v7862, 16
      %v7931 = vrot.slane %v7929, 7
      %v7932 = vshll.u32 %v7862, 16
      %v7934 = vor.u32 %v7931, %v7932
      %v7935 = vsel %vm632, %v7927, %v7934
      %v7936 = vrot.slane %v7931, 4
      %v7938 = vshrl.u32 %v7863, 16
      %v7940 = vrot.slane %v7938, 7
      %v7941 = vshll.u32 %v7863, 16
      %v7943 = vor.u32 %v7940, %v7941
      %v7944 = vsel %vm632, %v7936, %v7943
      %v7946 = vshrl.u32 %v7864, 16
      %v7948 = vrot.slane %v7946, 7
      %v7949 = vrot.slane %v7948, 4
      %v7951 = vshrl.u32 %v7865, 16
      %v7953 = vrot.slane %v7951, 7
      %v7954 = vshll.u32 %v7865, 16
      %v7956 = vor.u32 %v7953, %v7954
      %v7957 = vsel %vm632, %v7949, %v7956
      %v7958 = vrot.slane %v7953, 4
      %v7960 = vshrl.u32 %v7866, 16
      %v7962 = vrot.slane %v7960, 7
      %v7963 = vshll.u32 %v7866, 16
      %v7965 = vor.u32 %v7962, %v7963
      %v7966 = vsel %vm632, %v7958, %v7965
      %v7968 = vshrl.u32 %v7867, 16
      %v7970 = vrot.slane %v7968, 7
      %v7971 = vrot.slane %v7970, 4
      %v7973 = vshrl.u32 %v7868, 16
      %v7975 = vrot.slane %v7973, 7
      %v7976 = vshll.u32 %v7868, 16
      %v7978 = vor.u32 %v7975, %v7976
      %v7979 = vsel %vm632, %v7971, %v7978
      %v7980 = vrot.slane %v7975, 4
      %v7982 = vshrl.u32 %v7869, 16
      %v7984 = vrot.slane %v7982, 7
      %v7985 = vshll.u32 %v7869, 16
      %v7987 = vor.u32 %v7984, %v7985
      %v7988 = vsel %vm632, %v7980, %v7987
      %v7990 = vshrl.u32 %v7870, 16
      %v7992 = vrot.slane %v7990, 7
      %v7993 = vrot.slane %v7992, 4
      %v7995 = vshrl.u32 %v7871, 16
      %v7997 = vrot.slane %v7995, 7
      %v7998 = vshll.u32 %v7871, 16
      %v8000 = vor.u32 %v7997, %v7998
      %v8001 = vsel %vm632, %v7993, %v8000
      %v8002 = vrot.slane %v7997, 4
      %v8004 = vshrl.u32 %v7872, 16
      %v8006 = vrot.slane %v8004, 7
      %v8007 = vshll.u32 %v7872, 16
      %v8009 = vor.u32 %v8006, %v8007
      %v8010 = vsel %vm632, %v8002, %v8009
      %v8012 = vshrl.u32 %v7873, 16
      %v8014 = vrot.slane %v8012, 7
      %v8015 = vrot.slane %v8014, 4
      %v8017 = vshrl.u32 %v7874, 16
      %v8019 = vrot.slane %v8017, 7
      %v8020 = vshll.u32 %v7874, 16
      %v8022 = vor.u32 %v8019, %v8020
      %v8023 = vsel %vm632, %v8015, %v8022
      %v8024 = vrot.slane %v8019, 4
      %v8026 = vshrl.u32 %v7875, 16
      %v8028 = vrot.slane %v8026, 7
      %v8029 = vshll.u32 %v7875, 16
      %v8031 = vor.u32 %v8028, %v8029
      %v8032 = vsel %vm632, %v8024, %v8031
      %v8034 = vshrl.u32 %v7876, 16
      %v8036 = vrot.slane %v8034, 7
      %v8037 = vrot.slane %v8036, 4
      %v8039 = vshrl.u32 %v7877, 16
      %v8041 = vrot.slane %v8039, 7
      %v8042 = vshll.u32 %v7877, 16
      %v8044 = vor.u32 %v8041, %v8042
      %v8045 = vsel %vm632, %v8037, %v8044
      %v8046 = vrot.slane %v8041, 4
      %v8048 = vshrl.u32 %v7878, 16
      %v8050 = vrot.slane %v8048, 7
      %v8051 = vshll.u32 %v7878, 16
      %v8053 = vor.u32 %v8050, %v8051
      %v8054 = vsel %vm632, %v8046, %v8053
      %v8055 = vld [vmem:[%s4] sm:$0x3]
      %v8056 = vld [vmem:[%s5639] sm:$0x3]
      %v8073 = vunpack.c.l.b16 %v7856
      %v8074 = vunpack.c.l.b16 %v7857
      %v8075 = vunpack.c.l.b16 %v7859
      %v8076 = vunpack.c.l.b16 %v7860
      %v8077 = vunpack.c.l.b16 %v7862
      %v8078 = vunpack.c.l.b16 %v7863
      %v8079 = vunpack.c.l.b16 %v7865
      %v8080 = vunpack.c.l.b16 %v7866
      %v8081 = vunpack.c.l.b16 %v7868
      %v8082 = vunpack.c.l.b16 %v7869
      %v8083 = vunpack.c.l.b16 %v7871
      %v8084 = vunpack.c.l.b16 %v7872
      %v8085 = vunpack.c.l.b16 %v7874
      %v8086 = vunpack.c.l.b16 %v7875
      %v8087 = vunpack.c.l.b16 %v7877
      %v8088 = vunpack.c.l.b16 %v7878
      %v8089 = vpack.c.b16 %v8074, %v8073
      %v8090 = vpack.c.b16 %v8076, %v8075
      %v8091 = vpack.c.b16 %v8078, %v8077
      %v8092 = vpack.c.b16 %v8080, %v8079
      %v8093 = vpack.c.b16 %v8082, %v8081
      %v8094 = vpack.c.b16 %v8084, %v8083
      %v8095 = vpack.c.b16 %v8086, %v8085
      %v8096 = vpack.c.b16 %v8088, %v8087
      %v8098 = vsel %vm5681, %v8089, 0
      %v8101 = vsel %vm5681, %v8090, 0
      %v8104 = vsel %vm5681, %v8091, 0
      %v8107 = vsel %vm5681, %v8092, 0
      %v8110 = vsel %vm5681, %v8093, 0
      %v8113 = vsel %vm5681, %v8094, 0
      %v8116 = vsel %vm5681, %v8095, 0
      %v8119 = vsel %vm5681, %v8096, 0
      %v8122 = vsel %vm5706, %v8056, 0
      %8124 = vmatpush.bf16.msra.mxu0 0
      %8125 = vmatpush.bf16.msra.mxu0 0
      %8126 = vmatpush.bf16.msra.mxu0 0
      %8127 = vmatpush.bf16.msra.mxu0 0
      %8128 = vmatpush.bf16.msra.mxu0 0
      %8129 = vmatpush.bf16.msra.mxu0 0
      %8130 = vmatpush.bf16.msra.mxu0 0
      %8131 = vmatpush.bf16.msra.mxu0 %v8122
      %8132 = vmatmul.bf16.gmra.mxu0 %v8098
      %v8133 = vpop.f32.mrf.mxu0
      %v8134 = vadd.f32 0.0, %v8133
      %v8135 = vpop.f32.mrf.mxu0
      %v8136 = vadd.f32 0.0, %v8135
      %8137 = vmatmul.bf16.gmra.mxu0 %v8101
      %v8138 = vpop.f32.mrf.mxu0
      %v8139 = vadd.f32 0.0, %v8138
      %v8140 = vpop.f32.mrf.mxu0
      %v8141 = vadd.f32 0.0, %v8140
      %8142 = vmatmul.bf16.gmra.mxu0 %v8104
      %v8143 = vpop.f32.mrf.mxu0
      %v8144 = vadd.f32 0.0, %v8143
      %v8145 = vpop.f32.mrf.mxu0
      %v8146 = vadd.f32 0.0, %v8145
      %8147 = vmatmul.bf16.gmra.mxu0 %v8107
      %v8148 = vpop.f32.mrf.mxu0
      %v8149 = vadd.f32 0.0, %v8148
      %v8150 = vpop.f32.mrf.mxu0
      %v8151 = vadd.f32 0.0, %v8150
      %8152 = vmatmul.bf16.gmra.mxu0 %v8110
      %v8153 = vpop.f32.mrf.mxu0
      %v8154 = vadd.f32 0.0, %v8153
      %v8155 = vpop.f32.mrf.mxu0
      %v8156 = vadd.f32 0.0, %v8155
      %8157 = vmatmul.bf16.gmra.mxu0 %v8113
      %v8158 = vpop.f32.mrf.mxu0
      %v8159 = vadd.f32 0.0, %v8158
      %v8160 = vpop.f32.mrf.mxu0
      %v8161 = vadd.f32 0.0, %v8160
      %8162 = vmatmul.bf16.gmra.mxu0 %v8116
      %v8163 = vpop.f32.mrf.mxu0
      %v8164 = vadd.f32 0.0, %v8163
      %v8165 = vpop.f32.mrf.mxu0
      %v8166 = vadd.f32 0.0, %v8165
      %8167 = vmatmul.bf16.gmra.mxu0 %v8119
      %v8168 = vpop.f32.mrf.mxu0
      %v8169 = vadd.f32 0.0, %v8168
      %v8170 = vpop.f32.mrf.mxu0
      %v8171 = vadd.f32 0.0, %v8170
      %8172 = vdwg.mxu0
      %v8173 = vunpack.c.l.b16 %v7891
      %v8174 = vunpack.c.l.b16 %v7900
      %v8175 = vunpack.c.l.b16 %v7913
      %v8176 = vunpack.c.l.b16 %v7922
      %v8177 = vunpack.c.l.b16 %v7935
      %v8178 = vunpack.c.l.b16 %v7944
      %v8179 = vunpack.c.l.b16 %v7957
      %v8180 = vunpack.c.l.b16 %v7966
      %v8181 = vunpack.c.l.b16 %v7979
      %v8182 = vunpack.c.l.b16 %v7988
      %v8183 = vunpack.c.l.b16 %v8001
      %v8184 = vunpack.c.l.b16 %v8010
      %v8185 = vunpack.c.l.b16 %v8023
      %v8186 = vunpack.c.l.b16 %v8032
      %v8187 = vunpack.c.l.b16 %v8045
      %v8188 = vunpack.c.l.b16 %v8054
      %v8189 = vpack.c.b16 %v8174, %v8173
      %v8190 = vpack.c.b16 %v8176, %v8175
      %v8191 = vpack.c.b16 %v8178, %v8177
      %v8192 = vpack.c.b16 %v8180, %v8179
      %v8193 = vpack.c.b16 %v8182, %v8181
      %v8194 = vpack.c.b16 %v8184, %v8183
      %v8195 = vpack.c.b16 %v8186, %v8185
      %v8196 = vpack.c.b16 %v8188, %v8187
      %v8198 = vsel %vm5681, %v8189, 0
      %v8201 = vsel %vm5681, %v8190, 0
      %v8204 = vsel %vm5681, %v8191, 0
      %v8207 = vsel %vm5681, %v8192, 0
      %v8210 = vsel %vm5681, %v8193, 0
      %v8213 = vsel %vm5681, %v8194, 0
      %v8216 = vsel %vm5681, %v8195, 0
      %v8219 = vsel %vm5681, %v8196, 0
      %v8222 = vsel %vm5706, %v8055, 0
      %8224 = vmatpush.bf16.msra.mxu0 0
      %8225 = vmatpush.bf16.msra.mxu0 0
      %8226 = vmatpush.bf16.msra.mxu0 0
      %8227 = vmatpush.bf16.msra.mxu0 0
      %8228 = vmatpush.bf16.msra.mxu0 0
      %8229 = vmatpush.bf16.msra.mxu0 0
      %8230 = vmatpush.bf16.msra.mxu0 0
      %8231 = vmatpush.bf16.msra.mxu0 %v8222
      %8232 = vmatmul.bf16.gmra.mxu0 %v8198
      %v8233 = vpop.f32.mrf.mxu0
      %v8234 = vadd.f32 %v8134, %v8233
      %v8235 = vpop.f32.mrf.mxu0
      %v8236 = vadd.f32 %v8136, %v8235
      %8237 = vmatmul.bf16.gmra.mxu0 %v8201
      %v8238 = vpop.f32.mrf.mxu0
      %v8239 = vadd.f32 %v8139, %v8238
      %v8240 = vpop.f32.mrf.mxu0
      %v8241 = vadd.f32 %v8141, %v8240
      %8242 = vmatmul.bf16.gmra.mxu0 %v8204
      %v8243 = vpop.f32.mrf.mxu0
      %v8244 = vadd.f32 %v8144, %v8243
      %v8245 = vpop.f32.mrf.mxu0
      %v8246 = vadd.f32 %v8146, %v8245
      %8247 = vmatmul.bf16.gmra.mxu0 %v8207
      %v8248 = vpop.f32.mrf.mxu0
      %v8249 = vadd.f32 %v8149, %v8248
      %v8250 = vpop.f32.mrf.mxu0
      %v8251 = vadd.f32 %v8151, %v8250
      %8252 = vmatmul.bf16.gmra.mxu0 %v8210
      %v8253 = vpop.f32.mrf.mxu0
      %v8254 = vadd.f32 %v8154, %v8253
      %v8255 = vpop.f32.mrf.mxu0
      %v8256 = vadd.f32 %v8156, %v8255
      %8257 = vmatmul.bf16.gmra.mxu0 %v8213
      %v8258 = vpop.f32.mrf.mxu0
      %v8259 = vadd.f32 %v8159, %v8258
      %v8260 = vpop.f32.mrf.mxu0
      %v8261 = vadd.f32 %v8161, %v8260
      %8262 = vmatmul.bf16.gmra.mxu0 %v8216
      %v8263 = vpop.f32.mrf.mxu0
      %v8264 = vadd.f32 %v8164, %v8263
      %v8265 = vpop.f32.mrf.mxu0
      %v8266 = vadd.f32 %v8166, %v8265
      %8267 = vmatmul.bf16.gmra.mxu0 %v8219
      %v8268 = vpop.f32.mrf.mxu0
      %v8269 = vadd.f32 %v8169, %v8268
      %v8270 = vpop.f32.mrf.mxu0
      %v8271 = vadd.f32 %v8171, %v8270
      %8272 = vdwg.mxu0
      %v8273 = vld [vmem:[%s7854 + $0x8] sm:$0xf]
      %v8274 = vld [vmem:[%s7854 + $0xc] sm:$0xf]
      %v8275 = vld [vmem:[%s7854 + $0x10] sm:$0x1]
      %v8276 = vld [vmem:[%s7854 + $0x1c] sm:$0xf]
      %v8277 = vld [vmem:[%s7854 + $0x20] sm:$0xf]
      %v8278 = vld [vmem:[%s7854 + $0x24] sm:$0x1]
      %v8279 = vld [vmem:[%s7854 + $0x30] sm:$0xf]
      %v8280 = vld [vmem:[%s7854 + $0x34] sm:$0xf]
      %v8281 = vld [vmem:[%s7854 + $0x38] sm:$0x1]
      %v8282 = vld [vmem:[%s7854 + $0x44] sm:$0xf]
      %v8283 = vld [vmem:[%s7854 + $0x48] sm:$0xf]
      %v8284 = vld [vmem:[%s7854 + $0x4c] sm:$0x1]
      %v8285 = vld [vmem:[%s7854 + $0x58] sm:$0xf]
      %v8286 = vld [vmem:[%s7854 + $0x5c] sm:$0xf]
      %v8287 = vld [vmem:[%s7854 + $0x60] sm:$0x1]
      %v8288 = vld [vmem:[%s7854 + $0x6c] sm:$0xf]
      %v8289 = vld [vmem:[%s7854 + $0x70] sm:$0xf]
      %v8290 = vld [vmem:[%s7854 + $0x74] sm:$0x1]
      %v8291 = vld [vmem:[%s7854 + $0x80] sm:$0xf]
      %v8292 = vld [vmem:[%s7854 + $0x84] sm:$0xf]
      %v8293 = vld [vmem:[%s7854 + $0x88] sm:$0x1]
      %v8294 = vld [vmem:[%s7854 + $0x94] sm:$0xf]
      %v8295 = vld [vmem:[%s7854 + $0x98] sm:$0xf]
      %v8296 = vld [vmem:[%s7854 + $0x9c] sm:$0x1]
      %v8298 = vshrl.u32 %v8273, 16
      %v8300 = vrot.slane %v8298, 4
      %v8301 = vshll.u32 %v8273, 16
      %v8303 = vrot.slane %v8301, 5
      %v8304 = vor.u32 %v8300, %v8303
      %v8305 = vrot.slane %v8304, 4
      %v8307 = vshll.u32 %v8274, 16
      %v8309 = vrot.slane %v8307, 5
      %v8310 = vsel %vm1056, %v8305, %v8309
      %v8311 = vshrl.u32 %v8274, 16
      %v8313 = vrot.slane %v8311, 4
      %v8314 = vor.u32 %v8313, %v8309
      %v8315 = vrot.slane %v8314, 4
      %v8317 = vshll.u32 %v8275, 16
      %v8319 = vrot.slane %v8317, 5
      %v8320 = vsel %vm1056, %v8315, %v8319
      %v8322 = vshrl.u32 %v8276, 16
      %v8324 = vrot.slane %v8322, 4
      %v8325 = vshll.u32 %v8276, 16
      %v8327 = vrot.slane %v8325, 5
      %v8328 = vor.u32 %v8324, %v8327
      %v8329 = vrot.slane %v8328, 4
      %v8331 = vshll.u32 %v8277, 16
      %v8333 = vrot.slane %v8331, 5
      %v8334 = vsel %vm1056, %v8329, %v8333
      %v8335 = vshrl.u32 %v8277, 16
      %v8337 = vrot.slane %v8335, 4
      %v8338 = vor.u32 %v8337, %v8333
      %v8339 = vrot.slane %v8338, 4
      %v8341 = vshll.u32 %v8278, 16
      %v8343 = vrot.slane %v8341, 5
      %v8344 = vsel %vm1056, %v8339, %v8343
      %v8346 = vshrl.u32 %v8279, 16
      %v8348 = vrot.slane %v8346, 4
      %v8349 = vshll.u32 %v8279, 16
      %v8351 = vrot.slane %v8349, 5
      %v8352 = vor.u32 %v8348, %v8351
      %v8353 = vrot.slane %v8352, 4
      %v8355 = vshll.u32 %v8280, 16
      %v8357 = vrot.slane %v8355, 5
      %v8358 = vsel %vm1056, %v8353, %v8357
      %v8359 = vshrl.u32 %v8280, 16
      %v8361 = vrot.slane %v8359, 4
      %v8362 = vor.u32 %v8361, %v8357
      %v8363 = vrot.slane %v8362, 4
      %v8365 = vshll.u32 %v8281, 16
      %v8367 = vrot.slane %v8365, 5
      %v8368 = vsel %vm1056, %v8363, %v8367
      %v8370 = vshrl.u32 %v8282, 16
      %v8372 = vrot.slane %v8370, 4
      %v8373 = vshll.u32 %v8282, 16
      %v8375 = vrot.slane %v8373, 5
      %v8376 = vor.u32 %v8372, %v8375
      %v8377 = vrot.slane %v8376, 4
      %v8379 = vshll.u32 %v8283, 16
      %v8381 = vrot.slane %v8379, 5
      %v8382 = vsel %vm1056, %v8377, %v8381
      %v8383 = vshrl.u32 %v8283, 16
      %v8385 = vrot.slane %v8383, 4
      %v8386 = vor.u32 %v8385, %v8381
      %v8387 = vrot.slane %v8386, 4
      %v8389 = vshll.u32 %v8284, 16
      %v8391 = vrot.slane %v8389, 5
      %v8392 = vsel %vm1056, %v8387, %v8391
      %v8394 = vshrl.u32 %v8285, 16
      %v8396 = vrot.slane %v8394, 4
      %v8397 = vshll.u32 %v8285, 16
      %v8399 = vrot.slane %v8397, 5
      %v8400 = vor.u32 %v8396, %v8399
      %v8401 = vrot.slane %v8400, 4
      %v8403 = vshll.u32 %v8286, 16
      %v8405 = vrot.slane %v8403, 5
      %v8406 = vsel %vm1056, %v8401, %v8405
      %v8407 = vshrl.u32 %v8286, 16
      %v8409 = vrot.slane %v8407, 4
      %v8410 = vor.u32 %v8409, %v8405
      %v8411 = vrot.slane %v8410, 4
      %v8413 = vshll.u32 %v8287, 16
      %v8415 = vrot.slane %v8413, 5
      %v8416 = vsel %vm1056, %v8411, %v8415
      %v8418 = vshrl.u32 %v8288, 16
      %v8420 = vrot.slane %v8418, 4
      %v8421 = vshll.u32 %v8288, 16
      %v8423 = vrot.slane %v8421, 5
      %v8424 = vor.u32 %v8420, %v8423
      %v8425 = vrot.slane %v8424, 4
      %v8427 = vshll.u32 %v8289, 16
      %v8429 = vrot.slane %v8427, 5
      %v8430 = vsel %vm1056, %v8425, %v8429
      %v8431 = vshrl.u32 %v8289, 16
      %v8433 = vrot.slane %v8431, 4
      %v8434 = vor.u32 %v8433, %v8429
      %v8435 = vrot.slane %v8434, 4
      %v8437 = vshll.u32 %v8290, 16
      %v8439 = vrot.slane %v8437, 5
      %v8440 = vsel %vm1056, %v8435, %v8439
      %v8442 = vshrl.u32 %v8291, 16
      %v8444 = vrot.slane %v8442, 4
      %v8445 = vshll.u32 %v8291, 16
      %v8447 = vrot.slane %v8445, 5
      %v8448 = vor.u32 %v8444, %v8447
      %v8449 = vrot.slane %v8448, 4
      %v8451 = vshll.u32 %v8292, 16
      %v8453 = vrot.slane %v8451, 5
      %v8454 = vsel %vm1056, %v8449, %v8453
      %v8455 = vshrl.u32 %v8292, 16
      %v8457 = vrot.slane %v8455, 4
      %v8458 = vor.u32 %v8457, %v8453
      %v8459 = vrot.slane %v8458, 4
      %v8461 = vshll.u32 %v8293, 16
      %v8463 = vrot.slane %v8461, 5
      %v8464 = vsel %vm1056, %v8459, %v8463
      %v8466 = vshrl.u32 %v8294, 16
      %v8468 = vrot.slane %v8466, 4
      %v8469 = vshll.u32 %v8294, 16
      %v8471 = vrot.slane %v8469, 5
      %v8472 = vor.u32 %v8468, %v8471
      %v8473 = vrot.slane %v8472, 4
      %v8475 = vshll.u32 %v8295, 16
      %v8477 = vrot.slane %v8475, 5
      %v8478 = vsel %vm1056, %v8473, %v8477
      %v8479 = vshrl.u32 %v8295, 16
      %v8481 = vrot.slane %v8479, 4
      %v8482 = vor.u32 %v8481, %v8477
      %v8483 = vrot.slane %v8482, 4
      %v8485 = vshll.u32 %v8296, 16
      %v8487 = vrot.slane %v8485, 5
      %v8488 = vsel %vm1056, %v8483, %v8487
      %v8489 = vld [vmem:[%s6075] sm:$0x3]
      %v8490 = vunpack.c.l.b16 %v8310
      %v8491 = vunpack.c.l.b16 %v8320
      %v8492 = vunpack.c.l.b16 %v8334
      %v8493 = vunpack.c.l.b16 %v8344
      %v8494 = vunpack.c.l.b16 %v8358
      %v8495 = vunpack.c.l.b16 %v8368
      %v8496 = vunpack.c.l.b16 %v8382
      %v8497 = vunpack.c.l.b16 %v8392
      %v8498 = vunpack.c.l.b16 %v8406
      %v8499 = vunpack.c.l.b16 %v8416
      %v8500 = vunpack.c.l.b16 %v8430
      %v8501 = vunpack.c.l.b16 %v8440
      %v8502 = vunpack.c.l.b16 %v8454
      %v8503 = vunpack.c.l.b16 %v8464
      %v8504 = vunpack.c.l.b16 %v8478
      %v8505 = vunpack.c.l.b16 %v8488
      %v8506 = vpack.c.b16 %v8491, %v8490
      %v8507 = vpack.c.b16 %v8493, %v8492
      %v8508 = vpack.c.b16 %v8495, %v8494
      %v8509 = vpack.c.b16 %v8497, %v8496
      %v8510 = vpack.c.b16 %v8499, %v8498
      %v8511 = vpack.c.b16 %v8501, %v8500
      %v8512 = vpack.c.b16 %v8503, %v8502
      %v8513 = vpack.c.b16 %v8505, %v8504
      %v8515 = vsel %vm5681, %v8506, 0
      %v8518 = vsel %vm5681, %v8507, 0
      %v8521 = vsel %vm5681, %v8508, 0
      %v8524 = vsel %vm5681, %v8509, 0
      %v8527 = vsel %vm5681, %v8510, 0
      %v8530 = vsel %vm5681, %v8511, 0
      %v8533 = vsel %vm5681, %v8512, 0
      %v8536 = vsel %vm5681, %v8513, 0
      %v8539 = vsel %vm5706, %v8489, 0
      %8541 = vmatpush.bf16.msra.mxu0 0
      %8542 = vmatpush.bf16.msra.mxu0 0
      %8543 = vmatpush.bf16.msra.mxu0 0
      %8544 = vmatpush.bf16.msra.mxu0 0
      %8545 = vmatpush.bf16.msra.mxu0 0
      %8546 = vmatpush.bf16.msra.mxu0 0
      %8547 = vmatpush.bf16.msra.mxu0 0
      %8548 = vmatpush.bf16.msra.mxu0 %v8539
      %8549 = vmatmul.bf16.gmra.mxu0 %v8515
      %v8550 = vpop.f32.mrf.mxu0
      %v8551 = vadd.f32 0.0, %v8550
      %v8552 = vpop.f32.mrf.mxu0
      %v8553 = vadd.f32 0.0, %v8552
      %8554 = vmatmul.bf16.gmra.mxu0 %v8518
      %v8555 = vpop.f32.mrf.mxu0
      %v8556 = vadd.f32 0.0, %v8555
      %v8557 = vpop.f32.mrf.mxu0
      %v8558 = vadd.f32 0.0, %v8557
      %8559 = vmatmul.bf16.gmra.mxu0 %v8521
      %v8560 = vpop.f32.mrf.mxu0
      %v8561 = vadd.f32 0.0, %v8560
      %v8562 = vpop.f32.mrf.mxu0
      %v8563 = vadd.f32 0.0, %v8562
      %8564 = vmatmul.bf16.gmra.mxu0 %v8524
      %v8565 = vpop.f32.mrf.mxu0
      %v8566 = vadd.f32 0.0, %v8565
      %v8567 = vpop.f32.mrf.mxu0
      %v8568 = vadd.f32 0.0, %v8567
      %8569 = vmatmul.bf16.gmra.mxu0 %v8527
      %v8570 = vpop.f32.mrf.mxu0
      %v8571 = vadd.f32 0.0, %v8570
      %v8572 = vpop.f32.mrf.mxu0
      %v8573 = vadd.f32 0.0, %v8572
      %8574 = vmatmul.bf16.gmra.mxu0 %v8530
      %v8575 = vpop.f32.mrf.mxu0
      %v8576 = vadd.f32 0.0, %v8575
      %v8577 = vpop.f32.mrf.mxu0
      %v8578 = vadd.f32 0.0, %v8577
      %8579 = vmatmul.bf16.gmra.mxu0 %v8533
      %v8580 = vpop.f32.mrf.mxu0
      %v8581 = vadd.f32 0.0, %v8580
      %v8582 = vpop.f32.mrf.mxu0
      %v8583 = vadd.f32 0.0, %v8582
      %8584 = vmatmul.bf16.gmra.mxu0 %v8536
      %v8585 = vpop.f32.mrf.mxu0
      %v8586 = vadd.f32 0.0, %v8585
      %v8587 = vpop.f32.mrf.mxu0
      %v8588 = vadd.f32 0.0, %v8587
      %8589 = vdwg.mxu0
      %v8590 = vadd.f32 %v8234, %v8551
      %v8591 = vadd.f32 %v8236, %v8553
      %v8592 = vadd.f32 %v8239, %v8556
      %v8593 = vadd.f32 %v8241, %v8558
      %v8594 = vadd.f32 %v8244, %v8561
      %v8595 = vadd.f32 %v8246, %v8563
      %v8596 = vadd.f32 %v8249, %v8566
      %v8597 = vadd.f32 %v8251, %v8568
      %v8598 = vadd.f32 %v8254, %v8571
      %v8599 = vadd.f32 %v8256, %v8573
      %v8600 = vadd.f32 %v8259, %v8576
      %v8601 = vadd.f32 %v8261, %v8578
      %v8602 = vadd.f32 %v8264, %v8581
      %v8603 = vadd.f32 %v8266, %v8583
      %v8604 = vadd.f32 %v8269, %v8586
      %v8605 = vadd.f32 %v8271, %v8588
      %v8606 = vld [vmem:[%s5421 + $0x4] sm:$0x8]
      %v8607 = vld [vmem:[%s5421 + $0x8] sm:$0xf]
      %v8608 = vld [vmem:[%s5421 + $0xc] sm:$0xf]
      %v8609 = vld [vmem:[%s5421 + $0x18] sm:$0x8]
      %v8610 = vld [vmem:[%s5421 + $0x1c] sm:$0xf]
      %v8611 = vld [vmem:[%s5421 + $0x20] sm:$0xf]
      %v8612 = vld [vmem:[%s5421 + $0x2c] sm:$0x8]
      %v8613 = vld [vmem:[%s5421 + $0x30] sm:$0xf]
      %v8614 = vld [vmem:[%s5421 + $0x34] sm:$0xf]
      %v8615 = vld [vmem:[%s5421 + $0x40] sm:$0x8]
      %v8616 = vld [vmem:[%s5421 + $0x44] sm:$0xf]
      %v8617 = vld [vmem:[%s5421 + $0x48] sm:$0xf]
      %v8618 = vld [vmem:[%s5421 + $0x54] sm:$0x8]
      %v8619 = vld [vmem:[%s5421 + $0x58] sm:$0xf]
      %v8620 = vld [vmem:[%s5421 + $0x5c] sm:$0xf]
      %v8621 = vld [vmem:[%s5421 + $0x68] sm:$0x8]
      %v8622 = vld [vmem:[%s5421 + $0x6c] sm:$0xf]
      %v8623 = vld [vmem:[%s5421 + $0x70] sm:$0xf]
      %v8624 = vld [vmem:[%s5421 + $0x7c] sm:$0x8]
      %v8625 = vld [vmem:[%s5421 + $0x80] sm:$0xf]
      %v8626 = vld [vmem:[%s5421 + $0x84] sm:$0xf]
      %v8627 = vld [vmem:[%s5421 + $0x90] sm:$0x8]
      %v8628 = vld [vmem:[%s5421 + $0x94] sm:$0xf]
      %v8629 = vld [vmem:[%s5421 + $0x98] sm:$0xf]
      %v8631 = vshrl.u32 %v8606, 16
      %v8633 = vrot.slane %v8631, 7
      %v8634 = vrot.slane %v8633, 4
      %v8636 = vshrl.u32 %v8607, 16
      %v8638 = vrot.slane %v8636, 7
      %v8639 = vshll.u32 %v8607, 16
      %v8641 = vor.u32 %v8638, %v8639
      %v8642 = vsel %vm632, %v8634, %v8641
      %v8643 = vrot.slane %v8638, 4
      %v8645 = vshrl.u32 %v8608, 16
      %v8647 = vrot.slane %v8645, 7
      %v8648 = vshll.u32 %v8608, 16
      %v8650 = vor.u32 %v8647, %v8648
      %v8651 = vsel %vm632, %v8643, %v8650
      %v8653 = vshrl.u32 %v8609, 16
      %v8655 = vrot.slane %v8653, 7
      %v8656 = vrot.slane %v8655, 4
      %v8658 = vshrl.u32 %v8610, 16
      %v8660 = vrot.slane %v8658, 7
      %v8661 = vshll.u32 %v8610, 16
      %v8663 = vor.u32 %v8660, %v8661
      %v8664 = vsel %vm632, %v8656, %v8663
      %v8665 = vrot.slane %v8660, 4
      %v8667 = vshrl.u32 %v8611, 16
      %v8669 = vrot.slane %v8667, 7
      %v8670 = vshll.u32 %v8611, 16
      %v8672 = vor.u32 %v8669, %v8670
      %v8673 = vsel %vm632, %v8665, %v8672
      %v8675 = vshrl.u32 %v8612, 16
      %v8677 = vrot.slane %v8675, 7
      %v8678 = vrot.slane %v8677, 4
      %v8680 = vshrl.u32 %v8613, 16
      %v8682 = vrot.slane %v8680, 7
      %v8683 = vshll.u32 %v8613, 16
      %v8685 = vor.u32 %v8682, %v8683
      %v8686 = vsel %vm632, %v8678, %v8685
      %v8687 = vrot.slane %v8682, 4
      %v8689 = vshrl.u32 %v8614, 16
      %v8691 = vrot.slane %v8689, 7
      %v8692 = vshll.u32 %v8614, 16
      %v8694 = vor.u32 %v8691, %v8692
      %v8695 = vsel %vm632, %v8687, %v8694
      %v8697 = vshrl.u32 %v8615, 16
      %v8699 = vrot.slane %v8697, 7
      %v8700 = vrot.slane %v8699, 4
      %v8702 = vshrl.u32 %v8616, 16
      %v8704 = vrot.slane %v8702, 7
      %v8705 = vshll.u32 %v8616, 16
      %v8707 = vor.u32 %v8704, %v8705
      %v8708 = vsel %vm632, %v8700, %v8707
      %v8709 = vrot.slane %v8704, 4
      %v8711 = vshrl.u32 %v8617, 16
      %v8713 = vrot.slane %v8711, 7
      %v8714 = vshll.u32 %v8617, 16
      %v8716 = vor.u32 %v8713, %v8714
      %v8717 = vsel %vm632, %v8709, %v8716
      %v8719 = vshrl.u32 %v8618, 16
      %v8721 = vrot.slane %v8719, 7
      %v8722 = vrot.slane %v8721, 4
      %v8724 = vshrl.u32 %v8619, 16
      %v8726 = vrot.slane %v8724, 7
      %v8727 = vshll.u32 %v8619, 16
      %v8729 = vor.u32 %v8726, %v8727
      %v8730 = vsel %vm632, %v8722, %v8729
      %v8731 = vrot.slane %v8726, 4
      %v8733 = vshrl.u32 %v8620, 16
      %v8735 = vrot.slane %v8733, 7
      %v8736 = vshll.u32 %v8620, 16
      %v8738 = vor.u32 %v8735, %v8736
      %v8739 = vsel %vm632, %v8731, %v8738
      %v8741 = vshrl.u32 %v8621, 16
      %v8743 = vrot.slane %v8741, 7
      %v8744 = vrot.slane %v8743, 4
      %v8746 = vshrl.u32 %v8622, 16
      %v8748 = vrot.slane %v8746, 7
      %v8749 = vshll.u32 %v8622, 16
      %v8751 = vor.u32 %v8748, %v8749
      %v8752 = vsel %vm632, %v8744, %v8751
      %v8753 = vrot.slane %v8748, 4
      %v8755 = vshrl.u32 %v8623, 16
      %v8757 = vrot.slane %v8755, 7
      %v8758 = vshll.u32 %v8623, 16
      %v8760 = vor.u32 %v8757, %v8758
      %v8761 = vsel %vm632, %v8753, %v8760
      %v8763 = vshrl.u32 %v8624, 16
      %v8765 = vrot.slane %v8763, 7
      %v8766 = vrot.slane %v8765, 4
      %v8768 = vshrl.u32 %v8625, 16
      %v8770 = vrot.slane %v8768, 7
      %v8771 = vshll.u32 %v8625, 16
      %v8773 = vor.u32 %v8770, %v8771
      %v8774 = vsel %vm632, %v8766, %v8773
      %v8775 = vrot.slane %v8770, 4
      %v8777 = vshrl.u32 %v8626, 16
      %v8779 = vrot.slane %v8777, 7
      %v8780 = vshll.u32 %v8626, 16
      %v8782 = vor.u32 %v8779, %v8780
      %v8783 = vsel %vm632, %v8775, %v8782
      %v8785 = vshrl.u32 %v8627, 16
      %v8787 = vrot.slane %v8785, 7
      %v8788 = vrot.slane %v8787, 4
      %v8790 = vshrl.u32 %v8628, 16
      %v8792 = vrot.slane %v8790, 7
      %v8793 = vshll.u32 %v8628, 16
      %v8795 = vor.u32 %v8792, %v8793
      %v8796 = vsel %vm632, %v8788, %v8795
      %v8797 = vrot.slane %v8792, 4
      %v8799 = vshrl.u32 %v8629, 16
      %v8801 = vrot.slane %v8799, 7
      %v8802 = vshll.u32 %v8629, 16
      %v8804 = vor.u32 %v8801, %v8802
      %v8805 = vsel %vm632, %v8797, %v8804
      %v8806 = vld [vmem:[%s6393] sm:$0x3]
      %v8807 = vunpack.c.l.b16 %v8642
      %v8808 = vunpack.c.l.b16 %v8651
      %v8809 = vunpack.c.l.b16 %v8664
      %v8810 = vunpack.c.l.b16 %v8673
      %v8811 = vunpack.c.l.b16 %v8686
      %v8812 = vunpack.c.l.b16 %v8695
      %v8813 = vunpack.c.l.b16 %v8708
      %v8814 = vunpack.c.l.b16 %v8717
      %v8815 = vunpack.c.l.b16 %v8730
      %v8816 = vunpack.c.l.b16 %v8739
      %v8817 = vunpack.c.l.b16 %v8752
      %v8818 = vunpack.c.l.b16 %v8761
      %v8819 = vunpack.c.l.b16 %v8774
      %v8820 = vunpack.c.l.b16 %v8783
      %v8821 = vunpack.c.l.b16 %v8796
      %v8822 = vunpack.c.l.b16 %v8805
      %v8823 = vpack.c.b16 %v8808, %v8807
      %v8824 = vpack.c.b16 %v8810, %v8809
      %v8825 = vpack.c.b16 %v8812, %v8811
      %v8826 = vpack.c.b16 %v8814, %v8813
      %v8827 = vpack.c.b16 %v8816, %v8815
      %v8828 = vpack.c.b16 %v8818, %v8817
      %v8829 = vpack.c.b16 %v8820, %v8819
      %v8830 = vpack.c.b16 %v8822, %v8821
      %v8832 = vsel %vm5681, %v8823, 0
      %v8835 = vsel %vm5681, %v8824, 0
      %v8838 = vsel %vm5681, %v8825, 0
      %v8841 = vsel %vm5681, %v8826, 0
      %v8844 = vsel %vm5681, %v8827, 0
      %v8847 = vsel %vm5681, %v8828, 0
      %v8850 = vsel %vm5681, %v8829, 0
      %v8853 = vsel %vm5681, %v8830, 0
      %v8856 = vsel %vm5706, %v8806, 0
      %8858 = vmatpush.bf16.msra.mxu0 0
      %8859 = vmatpush.bf16.msra.mxu0 0
      %8860 = vmatpush.bf16.msra.mxu0 0
      %8861 = vmatpush.bf16.msra.mxu0 0
      %8862 = vmatpush.bf16.msra.mxu0 0
      %8863 = vmatpush.bf16.msra.mxu0 0
      %8864 = vmatpush.bf16.msra.mxu0 0
      %8865 = vmatpush.bf16.msra.mxu0 %v8856
      %8866 = vmatmul.bf16.gmra.mxu0 %v8832
      %v8867 = vpop.f32.mrf.mxu0
      %v8868 = vadd.f32 0.0, %v8867
      %v8869 = vpop.f32.mrf.mxu0
      %v8870 = vadd.f32 0.0, %v8869
      %8871 = vmatmul.bf16.gmra.mxu0 %v8835
      %v8872 = vpop.f32.mrf.mxu0
      %v8873 = vadd.f32 0.0, %v8872
      %v8874 = vpop.f32.mrf.mxu0
      %v8875 = vadd.f32 0.0, %v8874
      %8876 = vmatmul.bf16.gmra.mxu0 %v8838
      %v8877 = vpop.f32.mrf.mxu0
      %v8878 = vadd.f32 0.0, %v8877
      %v8879 = vpop.f32.mrf.mxu0
      %v8880 = vadd.f32 0.0, %v8879
      %8881 = vmatmul.bf16.gmra.mxu0 %v8841
      %v8882 = vpop.f32.mrf.mxu0
      %v8883 = vadd.f32 0.0, %v8882
      %v8884 = vpop.f32.mrf.mxu0
      %v8885 = vadd.f32 0.0, %v8884
      %8886 = vmatmul.bf16.gmra.mxu0 %v8844
      %v8887 = vpop.f32.mrf.mxu0
      %v8888 = vadd.f32 0.0, %v8887
      %v8889 = vpop.f32.mrf.mxu0
      %v8890 = vadd.f32 0.0, %v8889
      %8891 = vmatmul.bf16.gmra.mxu0 %v8847
      %v8892 = vpop.f32.mrf.mxu0
      %v8893 = vadd.f32 0.0, %v8892
      %v8894 = vpop.f32.mrf.mxu0
      %v8895 = vadd.f32 0.0, %v8894
      %8896 = vmatmul.bf16.gmra.mxu0 %v8850
      %v8897 = vpop.f32.mrf.mxu0
      %v8898 = vadd.f32 0.0, %v8897
      %v8899 = vpop.f32.mrf.mxu0
      %v8900 = vadd.f32 0.0, %v8899
      %8901 = vmatmul.bf16.gmra.mxu0 %v8853
      %v8902 = vpop.f32.mrf.mxu0
      %v8903 = vadd.f32 0.0, %v8902
      %v8904 = vpop.f32.mrf.mxu0
      %v8905 = vadd.f32 0.0, %v8904
      %8906 = vdwg.mxu0
      %v8907 = vadd.f32 %v8590, %v8868
      %v8908 = vadd.f32 %v8591, %v8870
      %v8909 = vadd.f32 %v8592, %v8873
      %v8910 = vadd.f32 %v8593, %v8875
      %v8911 = vadd.f32 %v8594, %v8878
      %v8912 = vadd.f32 %v8595, %v8880
      %v8913 = vadd.f32 %v8596, %v8883
      %v8914 = vadd.f32 %v8597, %v8885
      %v8915 = vadd.f32 %v8598, %v8888
      %v8916 = vadd.f32 %v8599, %v8890
      %v8917 = vadd.f32 %v8600, %v8893
      %v8918 = vadd.f32 %v8601, %v8895
      %v8919 = vadd.f32 %v8602, %v8898
      %v8920 = vadd.f32 %v8603, %v8900
      %v8921 = vadd.f32 %v8604, %v8903
      %v8922 = vadd.f32 %v8605, %v8905
      %v8923 = vld [vmem:[%s6511] sm:$0x3]
      %v8940 = vunpack.c.l.b16 %v8607
      %v8941 = vunpack.c.l.b16 %v8608
      %v8942 = vunpack.c.l.b16 %v8610
      %v8943 = vunpack.c.l.b16 %v8611
      %v8944 = vunpack.c.l.b16 %v8613
      %v8945 = vunpack.c.l.b16 %v8614
      %v8946 = vunpack.c.l.b16 %v8616
      %v8947 = vunpack.c.l.b16 %v8617
      %v8948 = vunpack.c.l.b16 %v8619
      %v8949 = vunpack.c.l.b16 %v8620
      %v8950 = vunpack.c.l.b16 %v8622
      %v8951 = vunpack.c.l.b16 %v8623
      %v8952 = vunpack.c.l.b16 %v8625
      %v8953 = vunpack.c.l.b16 %v8626
      %v8954 = vunpack.c.l.b16 %v8628
      %v8955 = vunpack.c.l.b16 %v8629
      %v8956 = vpack.c.b16 %v8941, %v8940
      %v8957 = vpack.c.b16 %v8943, %v8942
      %v8958 = vpack.c.b16 %v8945, %v8944
      %v8959 = vpack.c.b16 %v8947, %v8946
      %v8960 = vpack.c.b16 %v8949, %v8948
      %v8961 = vpack.c.b16 %v8951, %v8950
      %v8962 = vpack.c.b16 %v8953, %v8952
      %v8963 = vpack.c.b16 %v8955, %v8954
      %v8965 = vsel %vm5681, %v8956, 0
      %v8968 = vsel %vm5681, %v8957, 0
      %v8971 = vsel %vm5681, %v8958, 0
      %v8974 = vsel %vm5681, %v8959, 0
      %v8977 = vsel %vm5681, %v8960, 0
      %v8980 = vsel %vm5681, %v8961, 0
      %v8983 = vsel %vm5681, %v8962, 0
      %v8986 = vsel %vm5681, %v8963, 0
      %v8989 = vsel %vm5706, %v8923, 0
      %8991 = vmatpush.bf16.msra.mxu0 0
      %8992 = vmatpush.bf16.msra.mxu0 0
      %8993 = vmatpush.bf16.msra.mxu0 0
      %8994 = vmatpush.bf16.msra.mxu0 0
      %8995 = vmatpush.bf16.msra.mxu0 0
      %8996 = vmatpush.bf16.msra.mxu0 0
      %8997 = vmatpush.bf16.msra.mxu0 0
      %8998 = vmatpush.bf16.msra.mxu0 %v8989
      %8999 = vmatmul.bf16.gmra.mxu0 %v8965
      %v9000 = vpop.f32.mrf.mxu0
      %v9001 = vadd.f32 0.0, %v9000
      %v9002 = vpop.f32.mrf.mxu0
      %v9003 = vadd.f32 0.0, %v9002
      %9004 = vmatmul.bf16.gmra.mxu0 %v8968
      %v9005 = vpop.f32.mrf.mxu0
      %v9006 = vadd.f32 0.0, %v9005
      %v9007 = vpop.f32.mrf.mxu0
      %v9008 = vadd.f32 0.0, %v9007
      %9009 = vmatmul.bf16.gmra.mxu0 %v8971
      %v9010 = vpop.f32.mrf.mxu0
      %v9011 = vadd.f32 0.0, %v9010
      %v9012 = vpop.f32.mrf.mxu0
      %v9013 = vadd.f32 0.0, %v9012
      %9014 = vmatmul.bf16.gmra.mxu0 %v8974
      %v9015 = vpop.f32.mrf.mxu0
      %v9016 = vadd.f32 0.0, %v9015
      %v9017 = vpop.f32.mrf.mxu0
      %v9018 = vadd.f32 0.0, %v9017
      %9019 = vmatmul.bf16.gmra.mxu0 %v8977
      %v9020 = vpop.f32.mrf.mxu0
      %v9021 = vadd.f32 0.0, %v9020
      %v9022 = vpop.f32.mrf.mxu0
      %v9023 = vadd.f32 0.0, %v9022
      %9024 = vmatmul.bf16.gmra.mxu0 %v8980
      %v9025 = vpop.f32.mrf.mxu0
      %v9026 = vadd.f32 0.0, %v9025
      %v9027 = vpop.f32.mrf.mxu0
      %v9028 = vadd.f32 0.0, %v9027
      %9029 = vmatmul.bf16.gmra.mxu0 %v8983
      %v9030 = vpop.f32.mrf.mxu0
      %v9031 = vadd.f32 0.0, %v9030
      %v9032 = vpop.f32.mrf.mxu0
      %v9033 = vadd.f32 0.0, %v9032
      %9034 = vmatmul.bf16.gmra.mxu0 %v8986
      %v9035 = vpop.f32.mrf.mxu0
      %v9036 = vadd.f32 0.0, %v9035
      %v9037 = vpop.f32.mrf.mxu0
      %v9038 = vadd.f32 0.0, %v9037
      %9039 = vdwg.mxu0
      %v9040 = vadd.f32 %v8907, %v9001
      %v9041 = vadd.f32 %v8908, %v9003
      %v9042 = vadd.f32 %v8909, %v9006
      %v9043 = vadd.f32 %v8910, %v9008
      %v9044 = vadd.f32 %v8911, %v9011
      %v9045 = vadd.f32 %v8912, %v9013
      %v9046 = vadd.f32 %v8913, %v9016
      %v9047 = vadd.f32 %v8914, %v9018
      %v9048 = vadd.f32 %v8915, %v9021
      %v9049 = vadd.f32 %v8916, %v9023
      %v9050 = vadd.f32 %v8917, %v9026
      %v9051 = vadd.f32 %v8918, %v9028
      %v9052 = vadd.f32 %v8919, %v9031
      %v9053 = vadd.f32 %v8920, %v9033
      %v9054 = vadd.f32 %v8921, %v9036
      %v9055 = vadd.f32 %v8922, %v9038
      %v9056 = vld [vmem:[%s5421 + $0x8] sm:$0xf]
      %v9057 = vld [vmem:[%s5421 + $0xc] sm:$0xf]
      %v9058 = vld [vmem:[%s5421 + $0x10] sm:$0x1]
      %v9059 = vld [vmem:[%s5421 + $0x1c] sm:$0xf]
      %v9060 = vld [vmem:[%s5421 + $0x20] sm:$0xf]
      %v9061 = vld [vmem:[%s5421 + $0x24] sm:$0x1]
      %v9062 = vld [vmem:[%s5421 + $0x30] sm:$0xf]
      %v9063 = vld [vmem:[%s5421 + $0x34] sm:$0xf]
      %v9064 = vld [vmem:[%s5421 + $0x38] sm:$0x1]
      %v9065 = vld [vmem:[%s5421 + $0x44] sm:$0xf]
      %v9066 = vld [vmem:[%s5421 + $0x48] sm:$0xf]
      %v9067 = vld [vmem:[%s5421 + $0x4c] sm:$0x1]
      %v9068 = vld [vmem:[%s5421 + $0x58] sm:$0xf]
      %v9069 = vld [vmem:[%s5421 + $0x5c] sm:$0xf]
      %v9070 = vld [vmem:[%s5421 + $0x60] sm:$0x1]
      %v9071 = vld [vmem:[%s5421 + $0x6c] sm:$0xf]
      %v9072 = vld [vmem:[%s5421 + $0x70] sm:$0xf]
      %v9073 = vld [vmem:[%s5421 + $0x74] sm:$0x1]
      %v9074 = vld [vmem:[%s5421 + $0x80] sm:$0xf]
      %v9075 = vld [vmem:[%s5421 + $0x84] sm:$0xf]
      %v9076 = vld [vmem:[%s5421 + $0x88] sm:$0x1]
      %v9077 = vld [vmem:[%s5421 + $0x94] sm:$0xf]
      %v9078 = vld [vmem:[%s5421 + $0x98] sm:$0xf]
      %v9079 = vld [vmem:[%s5421 + $0x9c] sm:$0x1]
      %v9081 = vshrl.u32 %v9056, 16
      %v9083 = vrot.slane %v9081, 4
      %v9084 = vshll.u32 %v9056, 16
      %v9086 = vrot.slane %v9084, 5
      %v9087 = vor.u32 %v9083, %v9086
      %v9088 = vrot.slane %v9087, 4
      %v9090 = vshll.u32 %v9057, 16
      %v9092 = vrot.slane %v9090, 5
      %v9093 = vsel %vm1056, %v9088, %v9092
      %v9094 = vshrl.u32 %v9057, 16
      %v9096 = vrot.slane %v9094, 4
      %v9097 = vor.u32 %v9096, %v9092
      %v9098 = vrot.slane %v9097, 4
      %v9100 = vshll.u32 %v9058, 16
      %v9102 = vrot.slane %v9100, 5
      %v9103 = vsel %vm1056, %v9098, %v9102
      %v9105 = vshrl.u32 %v9059, 16
      %v9107 = vrot.slane %v9105, 4
      %v9108 = vshll.u32 %v9059, 16
      %v9110 = vrot.slane %v9108, 5
      %v9111 = vor.u32 %v9107, %v9110
      %v9112 = vrot.slane %v9111, 4
      %v9114 = vshll.u32 %v9060, 16
      %v9116 = vrot.slane %v9114, 5
      %v9117 = vsel %vm1056, %v9112, %v9116
      %v9118 = vshrl.u32 %v9060, 16
      %v9120 = vrot.slane %v9118, 4
      %v9121 = vor.u32 %v9120, %v9116
      %v9122 = vrot.slane %v9121, 4
      %v9124 = vshll.u32 %v9061, 16
      %v9126 = vrot.slane %v9124, 5
      %v9127 = vsel %vm1056, %v9122, %v9126
      %v9129 = vshrl.u32 %v9062, 16
      %v9131 = vrot.slane %v9129, 4
      %v9132 = vshll.u32 %v9062, 16
      %v9134 = vrot.slane %v9132, 5
      %v9135 = vor.u32 %v9131, %v9134
      %v9136 = vrot.slane %v9135, 4
      %v9138 = vshll.u32 %v9063, 16
      %v9140 = vrot.slane %v9138, 5
      %v9141 = vsel %vm1056, %v9136, %v9140
      %v9142 = vshrl.u32 %v9063, 16
      %v9144 = vrot.slane %v9142, 4
      %v9145 = vor.u32 %v9144, %v9140
      %v9146 = vrot.slane %v9145, 4
      %v9148 = vshll.u32 %v9064, 16
      %v9150 = vrot.slane %v9148, 5
      %v9151 = vsel %vm1056, %v9146, %v9150
      %v9153 = vshrl.u32 %v9065, 16
      %v9155 = vrot.slane %v9153, 4
      %v9156 = vshll.u32 %v9065, 16
      %v9158 = vrot.slane %v9156, 5
      %v9159 = vor.u32 %v9155, %v9158
      %v9160 = vrot.slane %v9159, 4
      %v9162 = vshll.u32 %v9066, 16
      %v9164 = vrot.slane %v9162, 5
      %v9165 = vsel %vm1056, %v9160, %v9164
      %v9166 = vshrl.u32 %v9066, 16
      %v9168 = vrot.slane %v9166, 4
      %v9169 = vor.u32 %v9168, %v9164
      %v9170 = vrot.slane %v9169, 4
      %v9172 = vshll.u32 %v9067, 16
      %v9174 = vrot.slane %v9172, 5
      %v9175 = vsel %vm1056, %v9170, %v9174
      %v9177 = vshrl.u32 %v9068, 16
      %v9179 = vrot.slane %v9177, 4
      %v9180 = vshll.u32 %v9068, 16
      %v9182 = vrot.slane %v9180, 5
      %v9183 = vor.u32 %v9179, %v9182
      %v9184 = vrot.slane %v9183, 4
      %v9186 = vshll.u32 %v9069, 16
      %v9188 = vrot.slane %v9186, 5
      %v9189 = vsel %vm1056, %v9184, %v9188
      %v9190 = vshrl.u32 %v9069, 16
      %v9192 = vrot.slane %v9190, 4
      %v9193 = vor.u32 %v9192, %v9188
      %v9194 = vrot.slane %v9193, 4
      %v9196 = vshll.u32 %v9070, 16
      %v9198 = vrot.slane %v9196, 5
      %v9199 = vsel %vm1056, %v9194, %v9198
      %v9201 = vshrl.u32 %v9071, 16
      %v9203 = vrot.slane %v9201, 4
      %v9204 = vshll.u32 %v9071, 16
      %v9206 = vrot.slane %v9204, 5
      %v9207 = vor.u32 %v9203, %v9206
      %v9208 = vrot.slane %v9207, 4
      %v9210 = vshll.u32 %v9072, 16
      %v9212 = vrot.slane %v9210, 5
      %v9213 = vsel %vm1056, %v9208, %v9212
      %v9214 = vshrl.u32 %v9072, 16
      %v9216 = vrot.slane %v9214, 4
      %v9217 = vor.u32 %v9216, %v9212
      %v9218 = vrot.slane %v9217, 4
      %v9220 = vshll.u32 %v9073, 16
      %v9222 = vrot.slane %v9220, 5
      %v9223 = vsel %vm1056, %v9218, %v9222
      %v9225 = vshrl.u32 %v9074, 16
      %v9227 = vrot.slane %v9225, 4
      %v9228 = vshll.u32 %v9074, 16
      %v9230 = vrot.slane %v9228, 5
      %v9231 = vor.u32 %v9227, %v9230
      %v9232 = vrot.slane %v9231, 4
      %v9234 = vshll.u32 %v9075, 16
      %v9236 = vrot.slane %v9234, 5
      %v9237 = vsel %vm1056, %v9232, %v9236
      %v9238 = vshrl.u32 %v9075, 16
      %v9240 = vrot.slane %v9238, 4
      %v9241 = vor.u32 %v9240, %v9236
      %v9242 = vrot.slane %v9241, 4
      %v9244 = vshll.u32 %v9076, 16
      %v9246 = vrot.slane %v9244, 5
      %v9247 = vsel %vm1056, %v9242, %v9246
      %v9249 = vshrl.u32 %v9077, 16
      %v9251 = vrot.slane %v9249, 4
      %v9252 = vshll.u32 %v9077, 16
      %v9254 = vrot.slane %v9252, 5
      %v9255 = vor.u32 %v9251, %v9254
      %v9256 = vrot.slane %v9255, 4
      %v9258 = vshll.u32 %v9078, 16
      %v9260 = vrot.slane %v9258, 5
      %v9261 = vsel %vm1056, %v9256, %v9260
      %v9262 = vshrl.u32 %v9078, 16
      %v9264 = vrot.slane %v9262, 4
      %v9265 = vor.u32 %v9264, %v9260
      %v9266 = vrot.slane %v9265, 4
      %v9268 = vshll.u32 %v9079, 16
      %v9270 = vrot.slane %v9268, 5
      %v9271 = vsel %vm1056, %v9266, %v9270
      %v9272 = vld [vmem:[%s6861] sm:$0x3]
      %v9273 = vunpack.c.l.b16 %v9093
      %v9274 = vunpack.c.l.b16 %v9103
      %v9275 = vunpack.c.l.b16 %v9117
      %v9276 = vunpack.c.l.b16 %v9127
      %v9277 = vunpack.c.l.b16 %v9141
      %v9278 = vunpack.c.l.b16 %v9151
      %v9279 = vunpack.c.l.b16 %v9165
      %v9280 = vunpack.c.l.b16 %v9175
      %v9281 = vunpack.c.l.b16 %v9189
      %v9282 = vunpack.c.l.b16 %v9199
      %v9283 = vunpack.c.l.b16 %v9213
      %v9284 = vunpack.c.l.b16 %v9223
      %v9285 = vunpack.c.l.b16 %v9237
      %v9286 = vunpack.c.l.b16 %v9247
      %v9287 = vunpack.c.l.b16 %v9261
      %v9288 = vunpack.c.l.b16 %v9271
      %v9289 = vpack.c.b16 %v9274, %v9273
      %v9290 = vpack.c.b16 %v9276, %v9275
      %v9291 = vpack.c.b16 %v9278, %v9277
      %v9292 = vpack.c.b16 %v9280, %v9279
      %v9293 = vpack.c.b16 %v9282, %v9281
      %v9294 = vpack.c.b16 %v9284, %v9283
      %v9295 = vpack.c.b16 %v9286, %v9285
      %v9296 = vpack.c.b16 %v9288, %v9287
      %v9298 = vsel %vm5681, %v9289, 0
      %v9301 = vsel %vm5681, %v9290, 0
      %v9304 = vsel %vm5681, %v9291, 0
      %v9307 = vsel %vm5681, %v9292, 0
      %v9310 = vsel %vm5681, %v9293, 0
      %v9313 = vsel %vm5681, %v9294, 0
      %v9316 = vsel %vm5681, %v9295, 0
      %v9319 = vsel %vm5681, %v9296, 0
      %v9322 = vsel %vm5706, %v9272, 0
      %9324 = vmatpush.bf16.msra.mxu0 0
      %9325 = vmatpush.bf16.msra.mxu0 0
      %9326 = vmatpush.bf16.msra.mxu0 0
      %9327 = vmatpush.bf16.msra.mxu0 0
      %9328 = vmatpush.bf16.msra.mxu0 0
      %9329 = vmatpush.bf16.msra.mxu0 0
      %9330 = vmatpush.bf16.msra.mxu0 0
      %9331 = vmatpush.bf16.msra.mxu0 %v9322
      %9332 = vmatmul.bf16.gmra.mxu0 %v9298
      %v9333 = vpop.f32.mrf.mxu0
      %v9334 = vadd.f32 0.0, %v9333
      %v9335 = vpop.f32.mrf.mxu0
      %v9336 = vadd.f32 0.0, %v9335
      %9337 = vmatmul.bf16.gmra.mxu0 %v9301
      %v9338 = vpop.f32.mrf.mxu0
      %v9339 = vadd.f32 0.0, %v9338
      %v9340 = vpop.f32.mrf.mxu0
      %v9341 = vadd.f32 0.0, %v9340
      %9342 = vmatmul.bf16.gmra.mxu0 %v9304
      %v9343 = vpop.f32.mrf.mxu0
      %v9344 = vadd.f32 0.0, %v9343
      %v9345 = vpop.f32.mrf.mxu0
      %v9346 = vadd.f32 0.0, %v9345
      %9347 = vmatmul.bf16.gmra.mxu0 %v9307
      %v9348 = vpop.f32.mrf.mxu0
      %v9349 = vadd.f32 0.0, %v9348
      %v9350 = vpop.f32.mrf.mxu0
      %v9351 = vadd.f32 0.0, %v9350
      %9352 = vmatmul.bf16.gmra.mxu0 %v9310
      %v9353 = vpop.f32.mrf.mxu0
      %v9354 = vadd.f32 0.0, %v9353
      %v9355 = vpop.f32.mrf.mxu0
      %v9356 = vadd.f32 0.0, %v9355
      %9357 = vmatmul.bf16.gmra.mxu0 %v9313
      %v9358 = vpop.f32.mrf.mxu0
      %v9359 = vadd.f32 0.0, %v9358
      %v9360 = vpop.f32.mrf.mxu0
      %v9361 = vadd.f32 0.0, %v9360
      %9362 = vmatmul.bf16.gmra.mxu0 %v9316
      %v9363 = vpop.f32.mrf.mxu0
      %v9364 = vadd.f32 0.0, %v9363
      %v9365 = vpop.f32.mrf.mxu0
      %v9366 = vadd.f32 0.0, %v9365
      %9367 = vmatmul.bf16.gmra.mxu0 %v9319
      %v9368 = vpop.f32.mrf.mxu0
      %v9369 = vadd.f32 0.0, %v9368
      %v9370 = vpop.f32.mrf.mxu0
      %v9371 = vadd.f32 0.0, %v9370
      %9372 = vdwg.mxu0
      %v9373 = vadd.f32 %v9040, %v9334
      %v9374 = vadd.f32 %v9041, %v9336
      %v9375 = vadd.f32 %v9042, %v9339
      %v9376 = vadd.f32 %v9043, %v9341
      %v9377 = vadd.f32 %v9044, %v9344
      %v9378 = vadd.f32 %v9045, %v9346
      %v9379 = vadd.f32 %v9046, %v9349
      %v9380 = vadd.f32 %v9047, %v9351
      %v9381 = vadd.f32 %v9048, %v9354
      %v9382 = vadd.f32 %v9049, %v9356
      %v9383 = vadd.f32 %v9050, %v9359
      %v9384 = vadd.f32 %v9051, %v9361
      %v9385 = vadd.f32 %v9052, %v9364
      %v9386 = vadd.f32 %v9053, %v9366
      %v9387 = vadd.f32 %v9054, %v9369
      %v9388 = vadd.f32 %v9055, %v9371
      %s9389 = scalar_lea.vmem [#allocation3], 200
      %v9390 = vld [vmem:[%s9389 + $0x4] sm:$0x8]
      %v9391 = vld [vmem:[%s9389 + $0x8] sm:$0xf]
      %v9392 = vld [vmem:[%s9389 + $0xc] sm:$0xf]
      %v9393 = vld [vmem:[%s9389 + $0x18] sm:$0x8]
      %v9394 = vld [vmem:[%s9389 + $0x1c] sm:$0xf]
      %v9395 = vld [vmem:[%s9389 + $0x20] sm:$0xf]
      %v9396 = vld [vmem:[%s9389 + $0x2c] sm:$0x8]
      %v9397 = vld [vmem:[%s9389 + $0x30] sm:$0xf]
      %v9398 = vld [vmem:[%s9389 + $0x34] sm:$0xf]
      %v9399 = vld [vmem:[%s9389 + $0x40] sm:$0x8]
      %v9400 = vld [vmem:[%s9389 + $0x44] sm:$0xf]
      %v9401 = vld [vmem:[%s9389 + $0x48] sm:$0xf]
      %v9402 = vld [vmem:[%s9389 + $0x54] sm:$0x8]
      %v9403 = vld [vmem:[%s9389 + $0x58] sm:$0xf]
      %v9404 = vld [vmem:[%s9389 + $0x5c] sm:$0xf]
      %v9405 = vld [vmem:[%s9389 + $0x68] sm:$0x8]
      %v9406 = vld [vmem:[%s9389 + $0x6c] sm:$0xf]
      %v9407 = vld [vmem:[%s9389 + $0x70] sm:$0xf]
      %v9408 = vld [vmem:[%s9389 + $0x7c] sm:$0x8]
      %v9409 = vld [vmem:[%s9389 + $0x80] sm:$0xf]
      %v9410 = vld [vmem:[%s9389 + $0x84] sm:$0xf]
      %v9411 = vld [vmem:[%s9389 + $0x90] sm:$0x8]
      %v9412 = vld [vmem:[%s9389 + $0x94] sm:$0xf]
      %v9413 = vld [vmem:[%s9389 + $0x98] sm:$0xf]
      %v9415 = vshrl.u32 %v9390, 16
      %v9417 = vrot.slane %v9415, 7
      %v9418 = vrot.slane %v9417, 4
      %v9420 = vshrl.u32 %v9391, 16
      %v9422 = vrot.slane %v9420, 7
      %v9423 = vshll.u32 %v9391, 16
      %v9425 = vor.u32 %v9422, %v9423
      %v9426 = vsel %vm632, %v9418, %v9425
      %v9427 = vrot.slane %v9422, 4
      %v9429 = vshrl.u32 %v9392, 16
      %v9431 = vrot.slane %v9429, 7
      %v9432 = vshll.u32 %v9392, 16
      %v9434 = vor.u32 %v9431, %v9432
      %v9435 = vsel %vm632, %v9427, %v9434
      %v9437 = vshrl.u32 %v9393, 16
      %v9439 = vrot.slane %v9437, 7
      %v9440 = vrot.slane %v9439, 4
      %v9442 = vshrl.u32 %v9394, 16
      %v9444 = vrot.slane %v9442, 7
      %v9445 = vshll.u32 %v9394, 16
      %v9447 = vor.u32 %v9444, %v9445
      %v9448 = vsel %vm632, %v9440, %v9447
      %v9449 = vrot.slane %v9444, 4
      %v9451 = vshrl.u32 %v9395, 16
      %v9453 = vrot.slane %v9451, 7
      %v9454 = vshll.u32 %v9395, 16
      %v9456 = vor.u32 %v9453, %v9454
      %v9457 = vsel %vm632, %v9449, %v9456
      %v9459 = vshrl.u32 %v9396, 16
      %v9461 = vrot.slane %v9459, 7
      %v9462 = vrot.slane %v9461, 4
      %v9464 = vshrl.u32 %v9397, 16
      %v9466 = vrot.slane %v9464, 7
      %v9467 = vshll.u32 %v9397, 16
      %v9469 = vor.u32 %v9466, %v9467
      %v9470 = vsel %vm632, %v9462, %v9469
      %v9471 = vrot.slane %v9466, 4
      %v9473 = vshrl.u32 %v9398, 16
      %v9475 = vrot.slane %v9473, 7
      %v9476 = vshll.u32 %v9398, 16
      %v9478 = vor.u32 %v9475, %v9476
      %v9479 = vsel %vm632, %v9471, %v9478
      %v9481 = vshrl.u32 %v9399, 16
      %v9483 = vrot.slane %v9481, 7
      %v9484 = vrot.slane %v9483, 4
      %v9486 = vshrl.u32 %v9400, 16
      %v9488 = vrot.slane %v9486, 7
      %v9489 = vshll.u32 %v9400, 16
      %v9491 = vor.u32 %v9488, %v9489
      %v9492 = vsel %vm632, %v9484, %v9491
      %v9493 = vrot.slane %v9488, 4
      %v9495 = vshrl.u32 %v9401, 16
      %v9497 = vrot.slane %v9495, 7
      %v9498 = vshll.u32 %v9401, 16
      %v9500 = vor.u32 %v9497, %v9498
      %v9501 = vsel %vm632, %v9493, %v9500
      %v9503 = vshrl.u32 %v9402, 16
      %v9505 = vrot.slane %v9503, 7
      %v9506 = vrot.slane %v9505, 4
      %v9508 = vshrl.u32 %v9403, 16
      %v9510 = vrot.slane %v9508, 7
      %v9511 = vshll.u32 %v9403, 16
      %v9513 = vor.u32 %v9510, %v9511
      %v9514 = vsel %vm632, %v9506, %v9513
      %v9515 = vrot.slane %v9510, 4
      %v9517 = vshrl.u32 %v9404, 16
      %v9519 = vrot.slane %v9517, 7
      %v9520 = vshll.u32 %v9404, 16
      %v9522 = vor.u32 %v9519, %v9520
      %v9523 = vsel %vm632, %v9515, %v9522
      %v9525 = vshrl.u32 %v9405, 16
      %v9527 = vrot.slane %v9525, 7
      %v9528 = vrot.slane %v9527, 4
      %v9530 = vshrl.u32 %v9406, 16
      %v9532 = vrot.slane %v9530, 7
      %v9533 = vshll.u32 %v9406, 16
      %v9535 = vor.u32 %v9532, %v9533
      %v9536 = vsel %vm632, %v9528, %v9535
      %v9537 = vrot.slane %v9532, 4
      %v9539 = vshrl.u32 %v9407, 16
      %v9541 = vrot.slane %v9539, 7
      %v9542 = vshll.u32 %v9407, 16
      %v9544 = vor.u32 %v9541, %v9542
      %v9545 = vsel %vm632, %v9537, %v9544
      %v9547 = vshrl.u32 %v9408, 16
      %v9549 = vrot.slane %v9547, 7
      %v9550 = vrot.slane %v9549, 4
      %v9552 = vshrl.u32 %v9409, 16
      %v9554 = vrot.slane %v9552, 7
      %v9555 = vshll.u32 %v9409, 16
      %v9557 = vor.u32 %v9554, %v9555
      %v9558 = vsel %vm632, %v9550, %v9557
      %v9559 = vrot.slane %v9554, 4
      %v9561 = vshrl.u32 %v9410, 16
      %v9563 = vrot.slane %v9561, 7
      %v9564 = vshll.u32 %v9410, 16
      %v9566 = vor.u32 %v9563, %v9564
      %v9567 = vsel %vm632, %v9559, %v9566
      %v9569 = vshrl.u32 %v9411, 16
      %v9571 = vrot.slane %v9569, 7
      %v9572 = vrot.slane %v9571, 4
      %v9574 = vshrl.u32 %v9412, 16
      %v9576 = vrot.slane %v9574, 7
      %v9577 = vshll.u32 %v9412, 16
      %v9579 = vor.u32 %v9576, %v9577
      %v9580 = vsel %vm632, %v9572, %v9579
      %v9581 = vrot.slane %v9576, 4
      %v9583 = vshrl.u32 %v9413, 16
      %v9585 = vrot.slane %v9583, 7
      %v9586 = vshll.u32 %v9413, 16
      %v9588 = vor.u32 %v9585, %v9586
      %v9589 = vsel %vm632, %v9581, %v9588
      %v9590 = vld [vmem:[%s7180] sm:$0x3]
      %v9591 = vunpack.c.l.b16 %v9426
      %v9592 = vunpack.c.l.b16 %v9435
      %v9593 = vunpack.c.l.b16 %v9448
      %v9594 = vunpack.c.l.b16 %v9457
      %v9595 = vunpack.c.l.b16 %v9470
      %v9596 = vunpack.c.l.b16 %v9479
      %v9597 = vunpack.c.l.b16 %v9492
      %v9598 = vunpack.c.l.b16 %v9501
      %v9599 = vunpack.c.l.b16 %v9514
      %v9600 = vunpack.c.l.b16 %v9523
      %v9601 = vunpack.c.l.b16 %v9536
      %v9602 = vunpack.c.l.b16 %v9545
      %v9603 = vunpack.c.l.b16 %v9558
      %v9604 = vunpack.c.l.b16 %v9567
      %v9605 = vunpack.c.l.b16 %v9580
      %v9606 = vunpack.c.l.b16 %v9589
      %v9607 = vpack.c.b16 %v9592, %v9591
      %v9608 = vpack.c.b16 %v9594, %v9593
      %v9609 = vpack.c.b16 %v9596, %v9595
      %v9610 = vpack.c.b16 %v9598, %v9597
      %v9611 = vpack.c.b16 %v9600, %v9599
      %v9612 = vpack.c.b16 %v9602, %v9601
      %v9613 = vpack.c.b16 %v9604, %v9603
      %v9614 = vpack.c.b16 %v9606, %v9605
      %v9616 = vsel %vm5681, %v9607, 0
      %v9619 = vsel %vm5681, %v9608, 0
      %v9622 = vsel %vm5681, %v9609, 0
      %v9625 = vsel %vm5681, %v9610, 0
      %v9628 = vsel %vm5681, %v9611, 0
      %v9631 = vsel %vm5681, %v9612, 0
      %v9634 = vsel %vm5681, %v9613, 0
      %v9637 = vsel %vm5681, %v9614, 0
      %v9640 = vsel %vm5706, %v9590, 0
      %9642 = vmatpush.bf16.msra.mxu0 0
      %9643 = vmatpush.bf16.msra.mxu0 0
      %9644 = vmatpush.bf16.msra.mxu0 0
      %9645 = vmatpush.bf16.msra.mxu0 0
      %9646 = vmatpush.bf16.msra.mxu0 0
      %9647 = vmatpush.bf16.msra.mxu0 0
      %9648 = vmatpush.bf16.msra.mxu0 0
      %9649 = vmatpush.bf16.msra.mxu0 %v9640
      %9650 = vmatmul.bf16.gmra.mxu0 %v9616
      %v9651 = vpop.f32.mrf.mxu0
      %v9652 = vadd.f32 0.0, %v9651
      %v9653 = vpop.f32.mrf.mxu0
      %v9654 = vadd.f32 0.0, %v9653
      %9655 = vmatmul.bf16.gmra.mxu0 %v9619
      %v9656 = vpop.f32.mrf.mxu0
      %v9657 = vadd.f32 0.0, %v9656
      %v9658 = vpop.f32.mrf.mxu0
      %v9659 = vadd.f32 0.0, %v9658
      %9660 = vmatmul.bf16.gmra.mxu0 %v9622
      %v9661 = vpop.f32.mrf.mxu0
      %v9662 = vadd.f32 0.0, %v9661
      %v9663 = vpop.f32.mrf.mxu0
      %v9664 = vadd.f32 0.0, %v9663
      %9665 = vmatmul.bf16.gmra.mxu0 %v9625
      %v9666 = vpop.f32.mrf.mxu0
      %v9667 = vadd.f32 0.0, %v9666
      %v9668 = vpop.f32.mrf.mxu0
      %v9669 = vadd.f32 0.0, %v9668
      %9670 = vmatmul.bf16.gmra.mxu0 %v9628
      %v9671 = vpop.f32.mrf.mxu0
      %v9672 = vadd.f32 0.0, %v9671
      %v9673 = vpop.f32.mrf.mxu0
      %v9674 = vadd.f32 0.0, %v9673
      %9675 = vmatmul.bf16.gmra.mxu0 %v9631
      %v9676 = vpop.f32.mrf.mxu0
      %v9677 = vadd.f32 0.0, %v9676
      %v9678 = vpop.f32.mrf.mxu0
      %v9679 = vadd.f32 0.0, %v9678
      %9680 = vmatmul.bf16.gmra.mxu0 %v9634
      %v9681 = vpop.f32.mrf.mxu0
      %v9682 = vadd.f32 0.0, %v9681
      %v9683 = vpop.f32.mrf.mxu0
      %v9684 = vadd.f32 0.0, %v9683
      %9685 = vmatmul.bf16.gmra.mxu0 %v9637
      %v9686 = vpop.f32.mrf.mxu0
      %v9687 = vadd.f32 0.0, %v9686
      %v9688 = vpop.f32.mrf.mxu0
      %v9689 = vadd.f32 0.0, %v9688
      %9690 = vdwg.mxu0
      %v9691 = vadd.f32 %v9373, %v9652
      %v9692 = vadd.f32 %v9374, %v9654
      %v9693 = vadd.f32 %v9375, %v9657
      %v9694 = vadd.f32 %v9376, %v9659
      %v9695 = vadd.f32 %v9377, %v9662
      %v9696 = vadd.f32 %v9378, %v9664
      %v9697 = vadd.f32 %v9379, %v9667
      %v9698 = vadd.f32 %v9380, %v9669
      %v9699 = vadd.f32 %v9381, %v9672
      %v9700 = vadd.f32 %v9382, %v9674
      %v9701 = vadd.f32 %v9383, %v9677
      %v9702 = vadd.f32 %v9384, %v9679
      %v9703 = vadd.f32 %v9385, %v9682
      %v9704 = vadd.f32 %v9386, %v9684
      %v9705 = vadd.f32 %v9387, %v9687
      %v9706 = vadd.f32 %v9388, %v9689
      %v9707 = vld [vmem:[%s7298] sm:$0x3]
      %v9724 = vunpack.c.l.b16 %v9391
      %v9725 = vunpack.c.l.b16 %v9392
      %v9726 = vunpack.c.l.b16 %v9394
      %v9727 = vunpack.c.l.b16 %v9395
      %v9728 = vunpack.c.l.b16 %v9397
      %v9729 = vunpack.c.l.b16 %v9398
      %v9730 = vunpack.c.l.b16 %v9400
      %v9731 = vunpack.c.l.b16 %v9401
      %v9732 = vunpack.c.l.b16 %v9403
      %v9733 = vunpack.c.l.b16 %v9404
      %v9734 = vunpack.c.l.b16 %v9406
      %v9735 = vunpack.c.l.b16 %v9407
      %v9736 = vunpack.c.l.b16 %v9409
      %v9737 = vunpack.c.l.b16 %v9410
      %v9738 = vunpack.c.l.b16 %v9412
      %v9739 = vunpack.c.l.b16 %v9413
      %v9740 = vpack.c.b16 %v9725, %v9724
      %v9741 = vpack.c.b16 %v9727, %v9726
      %v9742 = vpack.c.b16 %v9729, %v9728
      %v9743 = vpack.c.b16 %v9731, %v9730
      %v9744 = vpack.c.b16 %v9733, %v9732
      %v9745 = vpack.c.b16 %v9735, %v9734
      %v9746 = vpack.c.b16 %v9737, %v9736
      %v9747 = vpack.c.b16 %v9739, %v9738
      %v9749 = vsel %vm5681, %v9740, 0
      %v9752 = vsel %vm5681, %v9741, 0
      %v9755 = vsel %vm5681, %v9742, 0
      %v9758 = vsel %vm5681, %v9743, 0
      %v9761 = vsel %vm5681, %v9744, 0
      %v9764 = vsel %vm5681, %v9745, 0
      %v9767 = vsel %vm5681, %v9746, 0
      %v9770 = vsel %vm5681, %v9747, 0
      %v9773 = vsel %vm5706, %v9707, 0
      %9775 = vmatpush.bf16.msra.mxu0 0
      %9776 = vmatpush.bf16.msra.mxu0 0
      %9777 = vmatpush.bf16.msra.mxu0 0
      %9778 = vmatpush.bf16.msra.mxu0 0
      %9779 = vmatpush.bf16.msra.mxu0 0
      %9780 = vmatpush.bf16.msra.mxu0 0
      %9781 = vmatpush.bf16.msra.mxu0 0
      %9782 = vmatpush.bf16.msra.mxu0 %v9773
      %9783 = vmatmul.bf16.gmra.mxu0 %v9749
      %v9784 = vpop.f32.mrf.mxu0
      %v9785 = vadd.f32 0.0, %v9784
      %v9786 = vpop.f32.mrf.mxu0
      %v9787 = vadd.f32 0.0, %v9786
      %9788 = vmatmul.bf16.gmra.mxu0 %v9752
      %v9789 = vpop.f32.mrf.mxu0
      %v9790 = vadd.f32 0.0, %v9789
      %v9791 = vpop.f32.mrf.mxu0
      %v9792 = vadd.f32 0.0, %v9791
      %9793 = vmatmul.bf16.gmra.mxu0 %v9755
      %v9794 = vpop.f32.mrf.mxu0
      %v9795 = vadd.f32 0.0, %v9794
      %v9796 = vpop.f32.mrf.mxu0
      %v9797 = vadd.f32 0.0, %v9796
      %9798 = vmatmul.bf16.gmra.mxu0 %v9758
      %v9799 = vpop.f32.mrf.mxu0
      %v9800 = vadd.f32 0.0, %v9799
      %v9801 = vpop.f32.mrf.mxu0
      %v9802 = vadd.f32 0.0, %v9801
      %9803 = vmatmul.bf16.gmra.mxu0 %v9761
      %v9804 = vpop.f32.mrf.mxu0
      %v9805 = vadd.f32 0.0, %v9804
      %v9806 = vpop.f32.mrf.mxu0
      %v9807 = vadd.f32 0.0, %v9806
      %9808 = vmatmul.bf16.gmra.mxu0 %v9764
      %v9809 = vpop.f32.mrf.mxu0
      %v9810 = vadd.f32 0.0, %v9809
      %v9811 = vpop.f32.mrf.mxu0
      %v9812 = vadd.f32 0.0, %v9811
      %9813 = vmatmul.bf16.gmra.mxu0 %v9767
      %v9814 = vpop.f32.mrf.mxu0
      %v9815 = vadd.f32 0.0, %v9814
      %v9816 = vpop.f32.mrf.mxu0
      %v9817 = vadd.f32 0.0, %v9816
      %9818 = vmatmul.bf16.gmra.mxu0 %v9770
      %v9819 = vpop.f32.mrf.mxu0
      %v9820 = vadd.f32 0.0, %v9819
      %v9821 = vpop.f32.mrf.mxu0
      %v9822 = vadd.f32 0.0, %v9821
      %9823 = vdwg.mxu0
      %v9824 = vadd.f32 %v9691, %v9785
      %v9825 = vadd.f32 %v9692, %v9787
      %v9826 = vadd.f32 %v9693, %v9790
      %v9827 = vadd.f32 %v9694, %v9792
      %v9828 = vadd.f32 %v9695, %v9795
      %v9829 = vadd.f32 %v9696, %v9797
      %v9830 = vadd.f32 %v9697, %v9800
      %v9831 = vadd.f32 %v9698, %v9802
      %v9832 = vadd.f32 %v9699, %v9805
      %v9833 = vadd.f32 %v9700, %v9807
      %v9834 = vadd.f32 %v9701, %v9810
      %v9835 = vadd.f32 %v9702, %v9812
      %v9836 = vadd.f32 %v9703, %v9815
      %v9837 = vadd.f32 %v9704, %v9817
      %v9838 = vadd.f32 %v9705, %v9820
      %v9839 = vadd.f32 %v9706, %v9822
      %v9840 = vld [vmem:[%s9389 + $0x8] sm:$0xf]
      %v9841 = vld [vmem:[%s9389 + $0xc] sm:$0xf]
      %v9842 = vld [vmem:[%s9389 + $0x10] sm:$0x1]
      %v9843 = vld [vmem:[%s9389 + $0x1c] sm:$0xf]
      %v9844 = vld [vmem:[%s9389 + $0x20] sm:$0xf]
      %v9845 = vld [vmem:[%s9389 + $0x24] sm:$0x1]
      %v9846 = vld [vmem:[%s9389 + $0x30] sm:$0xf]
      %v9847 = vld [vmem:[%s9389 + $0x34] sm:$0xf]
      %v9848 = vld [vmem:[%s9389 + $0x38] sm:$0x1]
      %v9849 = vld [vmem:[%s9389 + $0x44] sm:$0xf]
      %v9850 = vld [vmem:[%s9389 + $0x48] sm:$0xf]
      %v9851 = vld [vmem:[%s9389 + $0x4c] sm:$0x1]
      %v9852 = vld [vmem:[%s9389 + $0x58] sm:$0xf]
      %v9853 = vld [vmem:[%s9389 + $0x5c] sm:$0xf]
      %v9854 = vld [vmem:[%s9389 + $0x60] sm:$0x1]
      %v9855 = vld [vmem:[%s9389 + $0x6c] sm:$0xf]
      %v9856 = vld [vmem:[%s9389 + $0x70] sm:$0xf]
      %v9857 = vld [vmem:[%s9389 + $0x74] sm:$0x1]
      %v9858 = vld [vmem:[%s9389 + $0x80] sm:$0xf]
      %v9859 = vld [vmem:[%s9389 + $0x84] sm:$0xf]
      %v9860 = vld [vmem:[%s9389 + $0x88] sm:$0x1]
      %v9861 = vld [vmem:[%s9389 + $0x94] sm:$0xf]
      %v9862 = vld [vmem:[%s9389 + $0x98] sm:$0xf]
      %v9863 = vld [vmem:[%s9389 + $0x9c] sm:$0x1]
      %v9865 = vshrl.u32 %v9840, 16
      %v9867 = vrot.slane %v9865, 4
      %v9868 = vshll.u32 %v9840, 16
      %v9870 = vrot.slane %v9868, 5
      %v9871 = vor.u32 %v9867, %v9870
      %v9872 = vrot.slane %v9871, 4
      %v9874 = vshll.u32 %v9841, 16
      %v9876 = vrot.slane %v9874, 5
      %v9877 = vsel %vm1056, %v9872, %v9876
      %v9878 = vshrl.u32 %v9841, 16
      %v9880 = vrot.slane %v9878, 4
      %v9881 = vor.u32 %v9880, %v9876
      %v9882 = vrot.slane %v9881, 4
      %v9884 = vshll.u32 %v9842, 16
      %v9886 = vrot.slane %v9884, 5
      %v9887 = vsel %vm1056, %v9882, %v9886
      %v9889 = vshrl.u32 %v9843, 16
      %v9891 = vrot.slane %v9889, 4
      %v9892 = vshll.u32 %v9843, 16
      %v9894 = vrot.slane %v9892, 5
      %v9895 = vor.u32 %v9891, %v9894
      %v9896 = vrot.slane %v9895, 4
      %v9898 = vshll.u32 %v9844, 16
      %v9900 = vrot.slane %v9898, 5
      %v9901 = vsel %vm1056, %v9896, %v9900
      %v9902 = vshrl.u32 %v9844, 16
      %v9904 = vrot.slane %v9902, 4
      %v9905 = vor.u32 %v9904, %v9900
      %v9906 = vrot.slane %v9905, 4
      %v9908 = vshll.u32 %v9845, 16
      %v9910 = vrot.slane %v9908, 5
      %v9911 = vsel %vm1056, %v9906, %v9910
      %v9913 = vshrl.u32 %v9846, 16
      %v9915 = vrot.slane %v9913, 4
      %v9916 = vshll.u32 %v9846, 16
      %v9918 = vrot.slane %v9916, 5
      %v9919 = vor.u32 %v9915, %v9918
      %v9920 = vrot.slane %v9919, 4
      %v9922 = vshll.u32 %v9847, 16
      %v9924 = vrot.slane %v9922, 5
      %v9925 = vsel %vm1056, %v9920, %v9924
      %v9926 = vshrl.u32 %v9847, 16
      %v9928 = vrot.slane %v9926, 4
      %v9929 = vor.u32 %v9928, %v9924
      %v9930 = vrot.slane %v9929, 4
      %v9932 = vshll.u32 %v9848, 16
      %v9934 = vrot.slane %v9932, 5
      %v9935 = vsel %vm1056, %v9930, %v9934
      %v9937 = vshrl.u32 %v9849, 16
      %v9939 = vrot.slane %v9937, 4
      %v9940 = vshll.u32 %v9849, 16
      %v9942 = vrot.slane %v9940, 5
      %v9943 = vor.u32 %v9939, %v9942
      %v9944 = vrot.slane %v9943, 4
      %v9946 = vshll.u32 %v9850, 16
      %v9948 = vrot.slane %v9946, 5
      %v9949 = vsel %vm1056, %v9944, %v9948
      %v9950 = vshrl.u32 %v9850, 16
      %v9952 = vrot.slane %v9950, 4
      %v9953 = vor.u32 %v9952, %v9948
      %v9954 = vrot.slane %v9953, 4
      %v9956 = vshll.u32 %v9851, 16
      %v9958 = vrot.slane %v9956, 5
      %v9959 = vsel %vm1056, %v9954, %v9958
      %v9961 = vshrl.u32 %v9852, 16
      %v9963 = vrot.slane %v9961, 4
      %v9964 = vshll.u32 %v9852, 16
      %v9966 = vrot.slane %v9964, 5
      %v9967 = vor.u32 %v9963, %v9966
      %v9968 = vrot.slane %v9967, 4
      %v9970 = vshll.u32 %v9853, 16
      %v9972 = vrot.slane %v9970, 5
      %v9973 = vsel %vm1056, %v9968, %v9972
      %v9974 = vshrl.u32 %v9853, 16
      %v9976 = vrot.slane %v9974, 4
      %v9977 = vor.u32 %v9976, %v9972
      %v9978 = vrot.slane %v9977, 4
      %v9980 = vshll.u32 %v9854, 16
      %v9982 = vrot.slane %v9980, 5
      %v9983 = vsel %vm1056, %v9978, %v9982
      %v9985 = vshrl.u32 %v9855, 16
      %v9987 = vrot.slane %v9985, 4
      %v9988 = vshll.u32 %v9855, 16
      %v9990 = vrot.slane %v9988, 5
      %v9991 = vor.u32 %v9987, %v9990
      %v9992 = vrot.slane %v9991, 4
      %v9994 = vshll.u32 %v9856, 16
      %v9996 = vrot.slane %v9994, 5
      %v9997 = vsel %vm1056, %v9992, %v9996
      %v9998 = vshrl.u32 %v9856, 16
      %v10000 = vrot.slane %v9998, 4
      %v10001 = vor.u32 %v10000, %v9996
      %v10002 = vrot.slane %v10001, 4
      %v10004 = vshll.u32 %v9857, 16
      %v10006 = vrot.slane %v10004, 5
      %v10007 = vsel %vm1056, %v10002, %v10006
      %v10009 = vshrl.u32 %v9858, 16
      %v10011 = vrot.slane %v10009, 4
      %v10012 = vshll.u32 %v9858, 16
      %v10014 = vrot.slane %v10012, 5
      %v10015 = vor.u32 %v10011, %v10014
      %v10016 = vrot.slane %v10015, 4
      %v10018 = vshll.u32 %v9859, 16
      %v10020 = vrot.slane %v10018, 5
      %v10021 = vsel %vm1056, %v10016, %v10020
      %v10022 = vshrl.u32 %v9859, 16
      %v10024 = vrot.slane %v10022, 4
      %v10025 = vor.u32 %v10024, %v10020
      %v10026 = vrot.slane %v10025, 4
      %v10028 = vshll.u32 %v9860, 16
      %v10030 = vrot.slane %v10028, 5
      %v10031 = vsel %vm1056, %v10026, %v10030
      %v10033 = vshrl.u32 %v9861, 16
      %v10035 = vrot.slane %v10033, 4
      %v10036 = vshll.u32 %v9861, 16
      %v10038 = vrot.slane %v10036, 5
      %v10039 = vor.u32 %v10035, %v10038
      %v10040 = vrot.slane %v10039, 4
      %v10042 = vshll.u32 %v9862, 16
      %v10044 = vrot.slane %v10042, 5
      %v10045 = vsel %vm1056, %v10040, %v10044
      %v10046 = vshrl.u32 %v9862, 16
      %v10048 = vrot.slane %v10046, 4
      %v10049 = vor.u32 %v10048, %v10044
      %v10050 = vrot.slane %v10049, 4
      %v10052 = vshll.u32 %v9863, 16
      %v10054 = vrot.slane %v10052, 5
      %v10055 = vsel %vm1056, %v10050, %v10054
      %v10056 = vld [vmem:[%s7648] sm:$0x3]
      %v10057 = vunpack.c.l.b16 %v9877
      %v10058 = vunpack.c.l.b16 %v9887
      %v10059 = vunpack.c.l.b16 %v9901
      %v10060 = vunpack.c.l.b16 %v9911
      %v10061 = vunpack.c.l.b16 %v9925
      %v10062 = vunpack.c.l.b16 %v9935
      %v10063 = vunpack.c.l.b16 %v9949
      %v10064 = vunpack.c.l.b16 %v9959
      %v10065 = vunpack.c.l.b16 %v9973
      %v10066 = vunpack.c.l.b16 %v9983
      %v10067 = vunpack.c.l.b16 %v9997
      %v10068 = vunpack.c.l.b16 %v10007
      %v10069 = vunpack.c.l.b16 %v10021
      %v10070 = vunpack.c.l.b16 %v10031
      %v10071 = vunpack.c.l.b16 %v10045
      %v10072 = vunpack.c.l.b16 %v10055
      %v10073 = vpack.c.b16 %v10058, %v10057
      %v10074 = vpack.c.b16 %v10060, %v10059
      %v10075 = vpack.c.b16 %v10062, %v10061
      %v10076 = vpack.c.b16 %v10064, %v10063
      %v10077 = vpack.c.b16 %v10066, %v10065
      %v10078 = vpack.c.b16 %v10068, %v10067
      %v10079 = vpack.c.b16 %v10070, %v10069
      %v10080 = vpack.c.b16 %v10072, %v10071
      %v10082 = vsel %vm5681, %v10073, 0
      %v10085 = vsel %vm5681, %v10074, 0
      %v10088 = vsel %vm5681, %v10075, 0
      %v10091 = vsel %vm5681, %v10076, 0
      %v10094 = vsel %vm5681, %v10077, 0
      %v10097 = vsel %vm5681, %v10078, 0
      %v10100 = vsel %vm5681, %v10079, 0
      %v10103 = vsel %vm5681, %v10080, 0
      %v10106 = vsel %vm5706, %v10056, 0
      %10108 = vmatpush.bf16.msra.mxu0 0
      %10109 = vmatpush.bf16.msra.mxu0 0
      %10110 = vmatpush.bf16.msra.mxu0 0
      %10111 = vmatpush.bf16.msra.mxu0 0
      %10112 = vmatpush.bf16.msra.mxu0 0
      %10113 = vmatpush.bf16.msra.mxu0 0
      %10114 = vmatpush.bf16.msra.mxu0 0
      %10115 = vmatpush.bf16.msra.mxu0 %v10106
      %10116 = vmatmul.bf16.gmra.mxu0 %v10082
      %v10117 = vpop.f32.mrf.mxu0
      %v10118 = vadd.f32 0.0, %v10117
      %v10119 = vpop.f32.mrf.mxu0
      %v10120 = vadd.f32 0.0, %v10119
      %10121 = vmatmul.bf16.gmra.mxu0 %v10085
      %v10122 = vpop.f32.mrf.mxu0
      %v10123 = vadd.f32 0.0, %v10122
      %v10124 = vpop.f32.mrf.mxu0
      %v10125 = vadd.f32 0.0, %v10124
      %10126 = vmatmul.bf16.gmra.mxu0 %v10088
      %v10127 = vpop.f32.mrf.mxu0
      %v10128 = vadd.f32 0.0, %v10127
      %v10129 = vpop.f32.mrf.mxu0
      %v10130 = vadd.f32 0.0, %v10129
      %10131 = vmatmul.bf16.gmra.mxu0 %v10091
      %v10132 = vpop.f32.mrf.mxu0
      %v10133 = vadd.f32 0.0, %v10132
      %v10134 = vpop.f32.mrf.mxu0
      %v10135 = vadd.f32 0.0, %v10134
      %10136 = vmatmul.bf16.gmra.mxu0 %v10094
      %v10137 = vpop.f32.mrf.mxu0
      %v10138 = vadd.f32 0.0, %v10137
      %v10139 = vpop.f32.mrf.mxu0
      %v10140 = vadd.f32 0.0, %v10139
      %10141 = vmatmul.bf16.gmra.mxu0 %v10097
      %v10142 = vpop.f32.mrf.mxu0
      %v10143 = vadd.f32 0.0, %v10142
      %v10144 = vpop.f32.mrf.mxu0
      %v10145 = vadd.f32 0.0, %v10144
      %10146 = vmatmul.bf16.gmra.mxu0 %v10100
      %v10147 = vpop.f32.mrf.mxu0
      %v10148 = vadd.f32 0.0, %v10147
      %v10149 = vpop.f32.mrf.mxu0
      %v10150 = vadd.f32 0.0, %v10149
      %10151 = vmatmul.bf16.gmra.mxu0 %v10103
      %v10152 = vpop.f32.mrf.mxu0
      %v10153 = vadd.f32 0.0, %v10152
      %v10154 = vpop.f32.mrf.mxu0
      %v10155 = vadd.f32 0.0, %v10154
      %10156 = vdwg.mxu0
      %v10157 = vadd.f32 %v9824, %v10118
      %v10158 = vadd.f32 %v9825, %v10120
      %v10159 = vadd.f32 %v9826, %v10123
      %v10160 = vadd.f32 %v9827, %v10125
      %v10161 = vadd.f32 %v9828, %v10128
      %v10162 = vadd.f32 %v9829, %v10130
      %v10163 = vadd.f32 %v9830, %v10133
      %v10164 = vadd.f32 %v9831, %v10135
      %v10165 = vadd.f32 %v9832, %v10138
      %v10166 = vadd.f32 %v9833, %v10140
      %v10167 = vadd.f32 %v9834, %v10143
      %v10168 = vadd.f32 %v9835, %v10145
      %v10169 = vadd.f32 %v9836, %v10148
      %v10170 = vadd.f32 %v9837, %v10150
      %v10171 = vadd.f32 %v9838, %v10153
      %v10172 = vadd.f32 %v9839, %v10155
      %v10173 = vld [vmem:[%s5] sm:$0x1]
      %v10175 = vperm.slane %v10173, 0
      %v10177 = vmul.f32 %v10157, %v10175
      %v10178 = vmul.f32 %v10158, %v10175
      %v10179 = vmul.f32 %v10159, %v10175
      %v10180 = vmul.f32 %v10160, %v10175
      %v10181 = vmul.f32 %v10161, %v10175
      %v10182 = vmul.f32 %v10162, %v10175
      %v10183 = vmul.f32 %v10163, %v10175
      %v10184 = vmul.f32 %v10164, %v10175
      %v10185 = vmul.f32 %v10165, %v10175
      %v10186 = vmul.f32 %v10166, %v10175
      %v10187 = vmul.f32 %v10167, %v10175
      %v10188 = vmul.f32 %v10168, %v10175
      %v10189 = vmul.f32 %v10169, %v10175
      %v10190 = vmul.f32 %v10170, %v10175
      %v10191 = vmul.f32 %v10171, %v10175
      %v10192 = vmul.f32 %v10172, %v10175
      %v10193 = vld [vmem:[%s6] sm:$0x1]
      %v10195 = vperm.slane %v10193, 0
      %v10197 = vadd.f32 %v10177, %v10195
      %v10198 = vadd.f32 %v10178, %v10195
      %v10199 = vadd.f32 %v10179, %v10195
      %v10200 = vadd.f32 %v10180, %v10195
      %v10201 = vadd.f32 %v10181, %v10195
      %v10202 = vadd.f32 %v10182, %v10195
      %v10203 = vadd.f32 %v10183, %v10195
      %v10204 = vadd.f32 %v10184, %v10195
      %v10205 = vadd.f32 %v10185, %v10195
      %v10206 = vadd.f32 %v10186, %v10195
      %v10207 = vadd.f32 %v10187, %v10195
      %v10208 = vadd.f32 %v10188, %v10195
      %v10209 = vadd.f32 %v10189, %v10195
      %v10210 = vadd.f32 %v10190, %v10195
      %v10211 = vadd.f32 %v10191, %v10195
      %v10212 = vadd.f32 %v10192, %v10195
      %v10213 = vmax.f32 %v10197, 0.0
      %v10214 = vmax.f32 %v10198, 0.0
      %v10215 = vmax.f32 %v10199, 0.0
      %v10216 = vmax.f32 %v10200, 0.0
      %v10217 = vmax.f32 %v10201, 0.0
      %v10218 = vmax.f32 %v10202, 0.0
      %v10219 = vmax.f32 %v10203, 0.0
      %v10220 = vmax.f32 %v10204, 0.0
      %v10221 = vmax.f32 %v10205, 0.0
      %v10222 = vmax.f32 %v10206, 0.0
      %v10223 = vmax.f32 %v10207, 0.0
      %v10224 = vmax.f32 %v10208, 0.0
      %v10225 = vmax.f32 %v10209, 0.0
      %v10226 = vmax.f32 %v10210, 0.0
      %v10227 = vmax.f32 %v10211, 0.0
      %v10228 = vmax.f32 %v10212, 0.0
      %v10229 = vpack.c.bf16 %v10213, %v10213
      %v10230 = vpack.c.bf16 %v10214, %v10214
      %v10231 = vpack.c.bf16 %v10215, %v10215
      %v10232 = vpack.c.bf16 %v10216, %v10216
      %v10233 = vpack.c.bf16 %v10217, %v10217
      %v10234 = vpack.c.bf16 %v10218, %v10218
      %v10235 = vpack.c.bf16 %v10219, %v10219
      %v10236 = vpack.c.bf16 %v10220, %v10220
      %v10237 = vpack.c.bf16 %v10221, %v10221
      %v10238 = vpack.c.bf16 %v10222, %v10222
      %v10239 = vpack.c.bf16 %v10223, %v10223
      %v10240 = vpack.c.bf16 %v10224, %v10224
      %v10241 = vpack.c.bf16 %v10225, %v10225
      %v10242 = vpack.c.bf16 %v10226, %v10226
      %v10243 = vpack.c.bf16 %v10227, %v10227
      %v10244 = vpack.c.bf16 %v10228, %v10228
      %s10245 = scalar_lea.vmem %s278, 64
      %10246 = vst.msk [vmem:[%s10245] sm:$0xf] %vm527, %v10229
      %10247 = vst.msk [vmem:[%s10245 + $0x4] sm:$0xf] %vm527, %v10230
      %10248 = vst.msk [vmem:[%s10245 + $0x8] sm:$0xf] %vm527, %v10231
      %10249 = vst.msk [vmem:[%s10245 + $0xc] sm:$0xf] %vm527, %v10232
      %10250 = vst.msk [vmem:[%s10245 + $0x10] sm:$0xf] %vm527, %v10233
      %10251 = vst.msk [vmem:[%s10245 + $0x14] sm:$0xf] %vm527, %v10234
      %10252 = vst.msk [vmem:[%s10245 + $0x18] sm:$0xf] %vm527, %v10235
      %10253 = vst.msk [vmem:[%s10245 + $0x1c] sm:$0xf] %vm527, %v10236
      %10254 = vst.msk [vmem:[%s10245 + $0x20] sm:$0xf] %vm527, %v10237
      %10255 = vst.msk [vmem:[%s10245 + $0x24] sm:$0xf] %vm527, %v10238
      %10256 = vst.msk [vmem:[%s10245 + $0x28] sm:$0xf] %vm527, %v10239
      %10257 = vst.msk [vmem:[%s10245 + $0x2c] sm:$0xf] %vm527, %v10240
      %10258 = vst.msk [vmem:[%s10245 + $0x30] sm:$0xf] %vm527, %v10241
      %10259 = vst.msk [vmem:[%s10245 + $0x34] sm:$0xf] %vm527, %v10242
      %10260 = vst.msk [vmem:[%s10245 + $0x38] sm:$0xf] %vm527, %v10243
      %10261 = vst.msk [vmem:[%s10245 + $0x3c] sm:$0xf] %vm527, %v10244
      %p10262 = scmp.lt.s32.totalorder %s18, 1
      %s10263 = scalar_select %p10262, %s18, 1
      %s10264 = smul.addr %s10263, 32
      %s10265 = smul.addr %s10264, 4
      %s10266 = scalar_lea.vmem %s7, %s10265
      // Predicated region
      $region49: #{up_forward.1} parent=47 // pred_check
        %p10267 = pneg %p188
      $region50: #{up_forward.1} parent=47 // pred_check_branch
        %10269 = sbr.rel (%p10267) target = $region52
      $region51: #{up_forward.1} parent=47 // pred_region
        _
      $region52: #{up_forward.1} parent=47 // pred_fallthru
        _
    $region48: #{up_forward.1} parent=5 // pred_fallthru
      _
    %p10270 = scmp.le.s32.totalorder 2, %s13
    // Predicated region
    $region53: #{up_forward.1} parent=5 // pred_check
      %p10271 = pneg %p10270
    $region54: #{up_forward.1} parent=5 // pred_check_branch
      %10273 = sbr.rel (%p10271) target = $region56
    $region55: #{up_forward.1} parent=5 // pred_region
      %s10274 = ssub.s32 %s13, 2
      // Predicated region
      $region57: #{up_forward.1} parent=55 // pred_check
        %p10275 = pneg %p194
      $region58: #{up_forward.1} parent=55 // pred_check_branch
        %10277 = sbr.rel (%p10275) target = $region60
      $region59: #{up_forward.1} parent=55 // pred_region
        %p10278 = scmp.lt.s32.totalorder %s19, 1
        %s10279 = scalar_select %p10278, %s19, 1
        %s10280 = smul.addr %s10279, 32
        %s10281 = smul.addr %s10280, 4
        %s10282 = scalar_lea.vmem %s7, %s10281
      $region60: #{up_forward.1} parent=55 // pred_fallthru
        _
    $region56: #{up_forward.1} parent=5 // pred_fallthru
      _
  $region6: #{up_forward.1} parent=0 // loop_footer
    %s17 = sadd.s32 1, %s13
  $region7: #{up_forward.1} parent=0 // loop_footer_branch
    %12 = sbr.rel target = $region3
  $region8: #{up_forward.1} parent=0 // loop_exit
    _

</llo_original>
